<compile_context>
chip_gen: v5e
topology: v5e:2x2
jax: 0.10.0
libtpu: 0.0.40
codegen_flags: <defaults>
</compile_context>

<pallas_src>
import jax
import jax.numpy as jnp
from jax.experimental import pallas as pl
from jax.experimental.pallas import tpu as pltpu


def _split_bf16(v):
    """fp32 -> (hi, lo) bf16 pair with v ~= hi + lo (bf16x3 building block)."""
    hi = v.astype(jnp.bfloat16)
    lo = (v - hi.astype(jnp.float32)).astype(jnp.bfloat16)
    return hi, lo


def _make_conv1x1_kernel(b_tile):
    def kernel(w_ref, x_ref, o_ref):
        # w_ref: (C_out_t, C_in)  x_ref: (B_t, C_in, HW)  o_ref: (B_t, C_out_t, HW)
        w_hi, w_lo = _split_bf16(w_ref[...])
        for b in range(b_tile):  # static unroll over the images in this block
            x_hi, x_lo = _split_bf16(x_ref[b])
            # bf16x3: drop the lo*lo term; add the small terms first.
            acc = jnp.dot(w_hi, x_lo, preferred_element_type=jnp.float32)
            acc = acc + jnp.dot(w_lo, x_hi, preferred_element_type=jnp.float32)
            acc = acc + jnp.dot(w_hi, x_hi, preferred_element_type=jnp.float32)
            o_ref[b] = acc

    return kernel


def _num_tensorcores_per_device():
    """Heuristic: chips whose single JAX device spans two TensorCores."""
    try:
        kind = jax.devices()[0].device_kind.lower()
    except Exception:
        return 1
    if ("v4" in kind) or ("v5p" in kind) or ("v7" in kind) or ("tpu7" in kind):
        return 2
    return 1


def conv2d_1x1(x_nchw, weight_oihw):
    """x_nchw: (N, C_in, H, W) float32; weight_oihw: (C_out, C_in, 1, 1) float32."""
    n, c_in, h, w = x_nchw.shape
    c_out = weight_oihw.shape[0]
    hw = h * w

    # Free reshapes (channel-major already): no transposes, no HBM round trips.
    x_cm = x_nchw.reshape(n, c_in, hw)          # (N, C_in, HW)
    w_mat = weight_oihw.reshape(c_out, c_in)    # (C_out, C_in)

    # Pack several images per grid step (amortize per-step overhead for N > 1).
    b_tile = 1
    for cand in range(min(n, 4), 0, -1):
        if n % cand == 0:
            b_tile = cand
            break
    nb = n // b_tile

    # Split C_out across TensorCores when the device has two of them.
    cout_split = _num_tensorcores_per_device()
    if c_out % (cout_split * 8) != 0:
        cout_split = 1
    c_out_t = c_out // cout_split

    flops = 2 * n * hw * c_in * c_out
    bytes_accessed = 4 * (n * c_in * hw + c_in * c_out + n * c_out * hw)

    out = pl.pallas_call(
        _make_conv1x1_kernel(b_tile),
        out_shape=jax.ShapeDtypeStruct((n, c_out, hw), x_nchw.dtype),
        grid=(cout_split, nb),
        in_specs=[
            # Weight half (or full) -- re-used across the batch axis; stays
            # VMEM-resident while its block index is unchanged.
            pl.BlockSpec((c_out_t, c_in), lambda t, b: (t, 0)),
            # B_TILE images worth of activations per grid step.
            pl.BlockSpec((b_tile, c_in, hw), lambda t, b: (b, 0, 0)),
        ],
        out_specs=pl.BlockSpec((b_tile, c_out_t, hw), lambda t, b: (b, t, 0)),
        compiler_params=pltpu.CompilerParams(
            dimension_semantics=("parallel", "parallel"),
        ),
        cost_estimate=pl.CostEstimate(
            flops=flops, transcendentals=0, bytes_accessed=bytes_accessed
        ),
    )(w_mat, x_cm)

    # (N, C_out, HW) -> (N, C_out, H, W): free reshape.
    return out.reshape(n, c_out, h, w)


if __name__ == "__main__":
    key = jax.random.PRNGKey(0)
    k_x, k_w = jax.random.split(key)

    # Shapes implied by the module: Conv2d(576, 576, 1x1), input (1, 576, 14, 14)
    N, C_IN, C_OUT, H, W = 1, 576, 576, 14, 14

    x = jax.random.normal(k_x, (N, C_IN, H, W), dtype=jnp.float32)
    # Deterministic weight init (kaiming-uniform-like scale), shape (C_out, C_in, 1, 1)
    bound = 1.0 / (C_IN ** 0.5)
    weight = jax.random.uniform(
        k_w, (C_OUT, C_IN, 1, 1), dtype=jnp.float32, minval=-bound, maxval=bound
    )

    out = conv2d_1x1(x, weight)
    jax.block_until_ready(out)

    # Reference in true fp32 (pin HIGHEST so the comparison baseline is exact).
    ref = jnp.einsum(
        "nchw,oc->nohw", x, weight[:, :, 0, 0],
        precision=jax.lax.Precision.HIGHEST,
    )
    assert out.shape == (N, C_OUT, H, W)
    assert jnp.allclose(out, ref, atol=1e-4, rtol=1e-4)

    # Also exercise the batched (B_TILE > 1) path.
    x4 = jax.random.normal(jax.random.PRNGKey(1), (4, C_IN, H, W), dtype=jnp.float32)
    out4 = conv2d_1x1(x4, weight)
    jax.block_until_ready(out4)
    ref4 = jnp.einsum(
        "nchw,oc->nohw", x4, weight[:, :, 0, 0],
        precision=jax.lax.Precision.HIGHEST,
    )
    assert jnp.allclose(out4, ref4, atol=1e-4, rtol=1e-4)

    print("KERNEL_OK")
</pallas_src>

<mosaic_0001>
module attributes {stable_mosaic.version = 11 : i64} {
  func.func @kernel(%arg0: i32, %arg1: i32, %arg2: memref<576x576xf32, #tpu.memory_space<vmem>>, %arg3: memref<1x576x196xf32, #tpu.memory_space<vmem>>, %arg4: memref<1x576x196xf32, #tpu.memory_space<vmem>>) attributes {dimension_semantics = [#tpu.dimension_semantics<parallel>, #tpu.dimension_semantics<parallel>], iteration_bounds = array<i64: 1, 1>, scalar_prefetch = 0 : i64, scratch_operands = 0 : i64, tpu.core_type = #tpu.core_type<tc>, window_params = [{transform_indices = @transform_0, window_bounds = array<i64: 576, 576>}, {transform_indices = @transform_1, window_bounds = array<i64: 1, 576, 196>}, {transform_indices = @transform_2, window_bounds = array<i64: 1, 576, 196>}]} {
    %c0 = arith.constant 0 : index
    %c0_0 = arith.constant 0 : index
    %0 = vector.load %arg2[%c0, %c0_0] : memref<576x576xf32, #tpu.memory_space<vmem>>, vector<576x576xf32>
    %1 = arith.truncf %0 : vector<576x576xf32> to vector<576x576xbf16>
    %2 = arith.extf %1 : vector<576x576xbf16> to vector<576x576xf32>
    %3 = arith.subf %0, %2 : vector<576x576xf32>
    %4 = arith.truncf %3 : vector<576x576xf32> to vector<576x576xbf16>
    %c0_1 = arith.constant 0 : index
    %c0_2 = arith.constant 0 : index
    %c0_3 = arith.constant 0 : index
    %5 = vector.load %arg3[%c0_1, %c0_2, %c0_3] : memref<1x576x196xf32, #tpu.memory_space<vmem>>, vector<1x576x196xf32>
    %6 = vector.shape_cast %5 : vector<1x576x196xf32> to vector<576x196xf32>
    %7 = arith.truncf %6 : vector<576x196xf32> to vector<576x196xbf16>
    %8 = arith.extf %7 : vector<576x196xbf16> to vector<576x196xf32>
    %9 = arith.subf %6, %8 : vector<576x196xf32>
    %10 = arith.truncf %9 : vector<576x196xf32> to vector<576x196xbf16>
    %cst = arith.constant dense<0.000000e+00> : vector<576x196xf32>
    %11 = tpu.matmul %1, %10, %cst {dimension_numbers = #tpu.dot_dimension_numbers<[1], [0], [0], [1], [0, 0, 1, 1], [], []>} : vector<576x576xbf16>, vector<576x196xbf16>, vector<576x196xf32> -> vector<576x196xf32>
    %cst_4 = arith.constant dense<0.000000e+00> : vector<576x196xf32>
    %12 = tpu.matmul %4, %7, %cst_4 {dimension_numbers = #tpu.dot_dimension_numbers<[1], [0], [0], [1], [0, 0, 1, 1], [], []>} : vector<576x576xbf16>, vector<576x196xbf16>, vector<576x196xf32> -> vector<576x196xf32>
    %13 = arith.addf %11, %12 : vector<576x196xf32>
    %cst_5 = arith.constant dense<0.000000e+00> : vector<576x196xf32>
    %14 = tpu.matmul %1, %7, %cst_5 {dimension_numbers = #tpu.dot_dimension_numbers<[1], [0], [0], [1], [0, 0, 1, 1], [], []>} : vector<576x576xbf16>, vector<576x196xbf16>, vector<576x196xf32> -> vector<576x196xf32>
    %15 = arith.addf %13, %14 : vector<576x196xf32>
    %c0_6 = arith.constant 0 : index
    %c0_7 = arith.constant 0 : index
    %c0_8 = arith.constant 0 : index
    %16 = vector.load %arg4[%c0_6, %c0_7, %c0_8] : memref<1x576x196xf32, #tpu.memory_space<vmem>>, vector<1x576x196xf32>
    %17 = vector.shape_cast %16 : vector<1x576x196xf32> to vector<576x196xf32>
    %18 = vector.shape_cast %15 : vector<576x196xf32> to vector<1x576x196xf32>
    tpu.vector_store %arg4[%c0_6, %c0_7, %c0_8], %18 {strides = array<i32>} : memref<1x576x196xf32, #tpu.memory_space<vmem>>, vector<1x576x196xf32>,
    return
  }
  func.func @transform_0(%arg0: i32, %arg1: i32) -> (i32, i32) {
    %c0_i32 = arith.constant 0 : i32
    %c0_i32_0 = arith.constant 0 : i32
    return %arg0, %c0_i32 : i32, i32
  }
  func.func @transform_1(%arg0: i32, %arg1: i32) -> (i32, i32, i32) {
    %c0_i32 = arith.constant 0 : i32
    %c0_i32_0 = arith.constant 0 : i32
    %c0_i32_1 = arith.constant 0 : i32
    return %arg1, %c0_i32, %c0_i32_0 : i32, i32, i32
  }
  func.func @transform_2(%arg0: i32, %arg1: i32) -> (i32, i32, i32) {
    %c0_i32 = arith.constant 0 : i32
    %c0_i32_0 = arith.constant 0 : i32
    return %arg1, %arg0, %c0_i32 : i32, i32, i32
  }
}

</mosaic_0001>

<llo_original>
// kernel: tpu_custom_call.1
$region0: #{tpu_custom_call.1}
  #allocation0 [shape = 'u32[]', space=smem, size = 0x4, offset = 0x4, fixed_abs, tag = 'smem constant byte address 0x4 - core index']
  #allocation1 [shape = 'u32[72,128]{1,0:T(1,128)}', space=vmem, size = 0x9000, scoped, tag = 'internal scratch']
  %s0 = inlined_call_operand.hbm [shape: f32[576,576], index: 0, kind: input, shape index: {}]
  %s1 = inlined_call_operand.vmem [shape: f32[1,576,196], index: 1, kind: input, shape index: {}]
  %s2 = inlined_call_operand.vmem [shape: f32[1,576,196], index: 2, kind: output, shape index: {}]
  %s3 = sld [smem:[#allocation0]]
  $region22: #{tpu_custom_call.1} parent=0
    _
  %s5 = ssub.s32 1, %s3
  %s6 = scalar_select 0, %s5, %s3
  $region1: #{tpu_custom_call.1} parent=0
    #allocation2 [shape = 'u8[1474560]{0}', space=vmem, size = 0x168000, scoped, tag = 'input window, operand 0, single buffered']
    #allocation3 [shape = 's32[1]{0}', space=sflag, size = 0x4, scoped, tag = 'scoped memory for tpu_custom_call.1']
    %7 = vsyncpa [#allocation3], 0
    // Predicated region
    $region2: #{tpu_custom_call.1} parent=1 // pred_check
      _
    $region3: #{tpu_custom_call.1} parent=1 // pred_check_branch
      %9 = sbr.rel (0) target = $region5
    $region4: #{tpu_custom_call.1} parent=1 // pred_region
      %11 = vsyncadd [#allocation3], 0
      %s12 = sshll.u32 %s0, 4
      %s13 = int_to_ptr.hbm [resolvable:$true] %s12
      %s14 = sshll.u32 [#allocation2], 4
      %s15 = int_to_ptr.vmem [resolvable:$true] %s14
      %20 = dma.hbm_to_vmem [thread:$0]  %s13, 46080, %s15, [#allocation3], 640, 640, 40
    $region5: #{tpu_custom_call.1} parent=1 // pred_fallthru
      _
    // Predicated region
    $region6: #{tpu_custom_call.1} parent=1 // pred_check
      _
    $region7: #{tpu_custom_call.1} parent=1 // pred_check_branch
      %22 = sbr.rel (0) target = $region9
    $region8: #{tpu_custom_call.1} parent=1 // pred_region
      _
    $region9: #{tpu_custom_call.1} parent=1 // pred_fallthru
      _
    // Predicated region
    $region10: #{tpu_custom_call.1} parent=1 // pred_check
      _
    $region11: #{tpu_custom_call.1} parent=1 // pred_check_branch
      %24 = sbr.rel (0) target = $region13
    $region12: #{tpu_custom_call.1} parent=1 // pred_region
      %26 = dma.done [#allocation3], 46080
    $region13: #{tpu_custom_call.1} parent=1 // pred_fallthru
      _
    %v28 = vld [vmem:[#allocation2] sm:$0xff]
    %v29 = vld [vmem:[#allocation2 + $0x8] sm:$0xff]
    %v30 = vld [vmem:[#allocation2 + $0x10] sm:$0xff]
    %v31 = vld [vmem:[#allocation2 + $0x18] sm:$0xff]
    %v32 = vld [vmem:[#allocation2 + $0x20] sm:$0xff]
    %v33 = vld [vmem:[#allocation2 + $0x28] sm:$0xff]
    %v34 = vld [vmem:[#allocation2 + $0x30] sm:$0xff]
    %v35 = vld [vmem:[#allocation2 + $0x38] sm:$0xff]
    %v36 = vld [vmem:[#allocation2 + $0x40] sm:$0xff]
    %v37 = vld [vmem:[#allocation2 + $0x48] sm:$0xff]
    %v38 = vld [vmem:[#allocation2 + $0x50] sm:$0xff]
    %v39 = vld [vmem:[#allocation2 + $0x58] sm:$0xff]
    %v40 = vld [vmem:[#allocation2 + $0x60] sm:$0xff]
    %v41 = vld [vmem:[#allocation2 + $0x68] sm:$0xff]
    %v42 = vld [vmem:[#allocation2 + $0x70] sm:$0xff]
    %v43 = vld [vmem:[#allocation2 + $0x78] sm:$0xff]
    %v44 = vld [vmem:[#allocation2 + $0x80] sm:$0xff]
    %v45 = vld [vmem:[#allocation2 + $0x88] sm:$0xff]
    %v46 = vld [vmem:[#allocation2 + $0x90] sm:$0xff]
    %v47 = vld [vmem:[#allocation2 + $0x98] sm:$0xff]
    %v48 = vld [vmem:[#allocation2 + $0xa0] sm:$0xff]
    %v49 = vld [vmem:[#allocation2 + $0xa8] sm:$0xff]
    %v50 = vld [vmem:[#allocation2 + $0xb0] sm:$0xff]
    %v51 = vld [vmem:[#allocation2 + $0xb8] sm:$0xff]
    %v52 = vld [vmem:[#allocation2 + $0xc0] sm:$0xff]
    %v53 = vld [vmem:[#allocation2 + $0xc8] sm:$0xff]
    %v54 = vld [vmem:[#allocation2 + $0xd0] sm:$0xff]
    %v55 = vld [vmem:[#allocation2 + $0xd8] sm:$0xff]
    %v56 = vld [vmem:[#allocation2 + $0xe0] sm:$0xff]
    %v57 = vld [vmem:[#allocation2 + $0xe8] sm:$0xff]
    %v58 = vld [vmem:[#allocation2 + $0xf0] sm:$0xff]
    %v59 = vld [vmem:[#allocation2 + $0xf8] sm:$0xff]
    %v60 = vld [vmem:[#allocation2 + $0x100] sm:$0xff]
    %v61 = vld [vmem:[#allocation2 + $0x108] sm:$0xff]
    %v62 = vld [vmem:[#allocation2 + $0x110] sm:$0xff]
    %v63 = vld [vmem:[#allocation2 + $0x118] sm:$0xff]
    %v64 = vld [vmem:[#allocation2 + $0x120] sm:$0xff]
    %v65 = vld [vmem:[#allocation2 + $0x128] sm:$0xff]
    %v66 = vld [vmem:[#allocation2 + $0x130] sm:$0xff]
    %v67 = vld [vmem:[#allocation2 + $0x138] sm:$0xff]
    %v68 = vld [vmem:[#allocation2 + $0x140] sm:$0xff]
    %v69 = vld [vmem:[#allocation2 + $0x148] sm:$0xff]
    %v70 = vld [vmem:[#allocation2 + $0x150] sm:$0xff]
    %v71 = vld [vmem:[#allocation2 + $0x158] sm:$0xff]
    %v72 = vld [vmem:[#allocation2 + $0x160] sm:$0xff]
    %v73 = vld [vmem:[#allocation2 + $0x168] sm:$0xff]
    %v74 = vld [vmem:[#allocation2 + $0x170] sm:$0xff]
    %v75 = vld [vmem:[#allocation2 + $0x178] sm:$0xff]
    %v76 = vld [vmem:[#allocation2 + $0x180] sm:$0xff]
    %v77 = vld [vmem:[#allocation2 + $0x188] sm:$0xff]
    %v78 = vld [vmem:[#allocation2 + $0x190] sm:$0xff]
    %v79 = vld [vmem:[#allocation2 + $0x198] sm:$0xff]
    %v80 = vld [vmem:[#allocation2 + $0x1a0] sm:$0xff]
    %v81 = vld [vmem:[#allocation2 + $0x1a8] sm:$0xff]
    %v82 = vld [vmem:[#allocation2 + $0x1b0] sm:$0xff]
    %v83 = vld [vmem:[#allocation2 + $0x1b8] sm:$0xff]
    %v84 = vld [vmem:[#allocation2 + $0x1c0] sm:$0xff]
    %v85 = vld [vmem:[#allocation2 + $0x1c8] sm:$0xff]
    %v86 = vld [vmem:[#allocation2 + $0x1d0] sm:$0xff]
    %v87 = vld [vmem:[#allocation2 + $0x1d8] sm:$0xff]
    %v88 = vld [vmem:[#allocation2 + $0x1e0] sm:$0xff]
    %v89 = vld [vmem:[#allocation2 + $0x1e8] sm:$0xff]
    %v90 = vld [vmem:[#allocation2 + $0x1f0] sm:$0xff]
    %v91 = vld [vmem:[#allocation2 + $0x1f8] sm:$0xff]
    %v92 = vld [vmem:[#allocation2 + $0x200] sm:$0xff]
    %v93 = vld [vmem:[#allocation2 + $0x208] sm:$0xff]
    %v94 = vld [vmem:[#allocation2 + $0x210] sm:$0xff]
    %v95 = vld [vmem:[#allocation2 + $0x218] sm:$0xff]
    %v96 = vld [vmem:[#allocation2 + $0x220] sm:$0xff]
    %v97 = vld [vmem:[#allocation2 + $0x228] sm:$0xff]
    %v98 = vld [vmem:[#allocation2 + $0x230] sm:$0xff]
    %v99 = vld [vmem:[#allocation2 + $0x238] sm:$0xff]
    %v100 = vld [vmem:[#allocation2 + $0x240] sm:$0xff]
    %v101 = vld [vmem:[#allocation2 + $0x248] sm:$0xff]
    %v102 = vld [vmem:[#allocation2 + $0x250] sm:$0xff]
    %v103 = vld [vmem:[#allocation2 + $0x258] sm:$0xff]
    %v104 = vld [vmem:[#allocation2 + $0x260] sm:$0xff]
    %v105 = vld [vmem:[#allocation2 + $0x268] sm:$0xff]
    %v106 = vld [vmem:[#allocation2 + $0x270] sm:$0xff]
    %v107 = vld [vmem:[#allocation2 + $0x278] sm:$0xff]
    %v108 = vld [vmem:[#allocation2 + $0x280] sm:$0xff]
    %v109 = vld [vmem:[#allocation2 + $0x288] sm:$0xff]
    %v110 = vld [vmem:[#allocation2 + $0x290] sm:$0xff]
    %v111 = vld [vmem:[#allocation2 + $0x298] sm:$0xff]
    %v112 = vld [vmem:[#allocation2 + $0x2a0] sm:$0xff]
    %v113 = vld [vmem:[#allocation2 + $0x2a8] sm:$0xff]
    %v114 = vld [vmem:[#allocation2 + $0x2b0] sm:$0xff]
    %v115 = vld [vmem:[#allocation2 + $0x2b8] sm:$0xff]
    %v116 = vld [vmem:[#allocation2 + $0x2c0] sm:$0xff]
    %v117 = vld [vmem:[#allocation2 + $0x2c8] sm:$0xff]
    %v118 = vld [vmem:[#allocation2 + $0x2d0] sm:$0xff]
    %v119 = vld [vmem:[#allocation2 + $0x2d8] sm:$0xff]
    %v120 = vld [vmem:[#allocation2 + $0x2e0] sm:$0xff]
    %v121 = vld [vmem:[#allocation2 + $0x2e8] sm:$0xff]
    %v122 = vld [vmem:[#allocation2 + $0x2f0] sm:$0xff]
    %v123 = vld [vmem:[#allocation2 + $0x2f8] sm:$0xff]
    %v124 = vld [vmem:[#allocation2 + $0x300] sm:$0xff]
    %v125 = vld [vmem:[#allocation2 + $0x308] sm:$0xff]
    %v126 = vld [vmem:[#allocation2 + $0x310] sm:$0xff]
    %v127 = vld [vmem:[#allocation2 + $0x318] sm:$0xff]
    %v128 = vld [vmem:[#allocation2 + $0x320] sm:$0xff]
    %v129 = vld [vmem:[#allocation2 + $0x328] sm:$0xff]
    %v130 = vld [vmem:[#allocation2 + $0x330] sm:$0xff]
    %v131 = vld [vmem:[#allocation2 + $0x338] sm:$0xff]
    %v132 = vld [vmem:[#allocation2 + $0x340] sm:$0xff]
    %v133 = vld [vmem:[#allocation2 + $0x348] sm:$0xff]
    %v134 = vld [vmem:[#allocation2 + $0x350] sm:$0xff]
    %v135 = vld [vmem:[#allocation2 + $0x358] sm:$0xff]
    %v136 = vld [vmem:[#allocation2 + $0x360] sm:$0xff]
    %v137 = vld [vmem:[#allocation2 + $0x368] sm:$0xff]
    %v138 = vld [vmem:[#allocation2 + $0x370] sm:$0xff]
    %v139 = vld [vmem:[#allocation2 + $0x378] sm:$0xff]
    %v140 = vld [vmem:[#allocation2 + $0x380] sm:$0xff]
    %v141 = vld [vmem:[#allocation2 + $0x388] sm:$0xff]
    %v142 = vld [vmem:[#allocation2 + $0x390] sm:$0xff]
    %v143 = vld [vmem:[#allocation2 + $0x398] sm:$0xff]
    %v144 = vld [vmem:[#allocation2 + $0x3a0] sm:$0xff]
    %v145 = vld [vmem:[#allocation2 + $0x3a8] sm:$0xff]
    %v146 = vld [vmem:[#allocation2 + $0x3b0] sm:$0xff]
    %v147 = vld [vmem:[#allocation2 + $0x3b8] sm:$0xff]
    %v148 = vld [vmem:[#allocation2 + $0x3c0] sm:$0xff]
    %v149 = vld [vmem:[#allocation2 + $0x3c8] sm:$0xff]
    %v150 = vld [vmem:[#allocation2 + $0x3d0] sm:$0xff]
    %v151 = vld [vmem:[#allocation2 + $0x3d8] sm:$0xff]
    %v152 = vld [vmem:[#allocation2 + $0x3e0] sm:$0xff]
    %v153 = vld [vmem:[#allocation2 + $0x3e8] sm:$0xff]
    %v154 = vld [vmem:[#allocation2 + $0x3f0] sm:$0xff]
    %v155 = vld [vmem:[#allocation2 + $0x3f8] sm:$0xff]
    %v156 = vld [vmem:[#allocation2 + $0x400] sm:$0xff]
    %v157 = vld [vmem:[#allocation2 + $0x408] sm:$0xff]
    %v158 = vld [vmem:[#allocation2 + $0x410] sm:$0xff]
    %v159 = vld [vmem:[#allocation2 + $0x418] sm:$0xff]
    %v160 = vld [vmem:[#allocation2 + $0x420] sm:$0xff]
    %v161 = vld [vmem:[#allocation2 + $0x428] sm:$0xff]
    %v162 = vld [vmem:[#allocation2 + $0x430] sm:$0xff]
    %v163 = vld [vmem:[#allocation2 + $0x438] sm:$0xff]
    %v164 = vld [vmem:[#allocation2 + $0x440] sm:$0xff]
    %v165 = vld [vmem:[#allocation2 + $0x448] sm:$0xff]
    %v166 = vld [vmem:[#allocation2 + $0x450] sm:$0xff]
    %v167 = vld [vmem:[#allocation2 + $0x458] sm:$0xff]
    %v168 = vld [vmem:[#allocation2 + $0x460] sm:$0xff]
    %v169 = vld [vmem:[#allocation2 + $0x468] sm:$0xff]
    %v170 = vld [vmem:[#allocation2 + $0x470] sm:$0xff]
    %v171 = vld [vmem:[#allocation2 + $0x478] sm:$0xff]
    %v172 = vld [vmem:[#allocation2 + $0x480] sm:$0xff]
    %v173 = vld [vmem:[#allocation2 + $0x488] sm:$0xff]
    %v174 = vld [vmem:[#allocation2 + $0x490] sm:$0xff]
    %v175 = vld [vmem:[#allocation2 + $0x498] sm:$0xff]
    %v176 = vld [vmem:[#allocation2 + $0x4a0] sm:$0xff]
    %v177 = vld [vmem:[#allocation2 + $0x4a8] sm:$0xff]
    %v178 = vld [vmem:[#allocation2 + $0x4b0] sm:$0xff]
    %v179 = vld [vmem:[#allocation2 + $0x4b8] sm:$0xff]
    %v180 = vld [vmem:[#allocation2 + $0x4c0] sm:$0xff]
    %v181 = vld [vmem:[#allocation2 + $0x4c8] sm:$0xff]
    %v182 = vld [vmem:[#allocation2 + $0x4d0] sm:$0xff]
    %v183 = vld [vmem:[#allocation2 + $0x4d8] sm:$0xff]
    %v184 = vld [vmem:[#allocation2 + $0x4e0] sm:$0xff]
    %v185 = vld [vmem:[#allocation2 + $0x4e8] sm:$0xff]
    %v186 = vld [vmem:[#allocation2 + $0x4f0] sm:$0xff]
    %v187 = vld [vmem:[#allocation2 + $0x4f8] sm:$0xff]
    %v188 = vld [vmem:[#allocation2 + $0x500] sm:$0xff]
    %v189 = vld [vmem:[#allocation2 + $0x508] sm:$0xff]
    %v190 = vld [vmem:[#allocation2 + $0x510] sm:$0xff]
    %v191 = vld [vmem:[#allocation2 + $0x518] sm:$0xff]
    %v192 = vld [vmem:[#allocation2 + $0x520] sm:$0xff]
    %v193 = vld [vmem:[#allocation2 + $0x528] sm:$0xff]
    %v194 = vld [vmem:[#allocation2 + $0x530] sm:$0xff]
    %v195 = vld [vmem:[#allocation2 + $0x538] sm:$0xff]
    %v196 = vld [vmem:[#allocation2 + $0x540] sm:$0xff]
    %v197 = vld [vmem:[#allocation2 + $0x548] sm:$0xff]
    %v198 = vld [vmem:[#allocation2 + $0x550] sm:$0xff]
    %v199 = vld [vmem:[#allocation2 + $0x558] sm:$0xff]
    %v200 = vld [vmem:[#allocation2 + $0x560] sm:$0xff]
    %v201 = vld [vmem:[#allocation2 + $0x568] sm:$0xff]
    %v202 = vld [vmem:[#allocation2 + $0x570] sm:$0xff]
    %v203 = vld [vmem:[#allocation2 + $0x578] sm:$0xff]
    %v204 = vld [vmem:[#allocation2 + $0x580] sm:$0xff]
    %v205 = vld [vmem:[#allocation2 + $0x588] sm:$0xff]
    %v206 = vld [vmem:[#allocation2 + $0x590] sm:$0xff]
    %v207 = vld [vmem:[#allocation2 + $0x598] sm:$0xff]
    %v208 = vld [vmem:[#allocation2 + $0x5a0] sm:$0xff]
    %v209 = vld [vmem:[#allocation2 + $0x5a8] sm:$0xff]
    %v210 = vld [vmem:[#allocation2 + $0x5b0] sm:$0xff]
    %v211 = vld [vmem:[#allocation2 + $0x5b8] sm:$0xff]
    %v212 = vld [vmem:[#allocation2 + $0x5c0] sm:$0xff]
    %v213 = vld [vmem:[#allocation2 + $0x5c8] sm:$0xff]
    %v214 = vld [vmem:[#allocation2 + $0x5d0] sm:$0xff]
    %v215 = vld [vmem:[#allocation2 + $0x5d8] sm:$0xff]
    %v216 = vld [vmem:[#allocation2 + $0x5e0] sm:$0xff]
    %v217 = vld [vmem:[#allocation2 + $0x5e8] sm:$0xff]
    %v218 = vld [vmem:[#allocation2 + $0x5f0] sm:$0xff]
    %v219 = vld [vmem:[#allocation2 + $0x5f8] sm:$0xff]
    %v220 = vld [vmem:[#allocation2 + $0x600] sm:$0xff]
    %v221 = vld [vmem:[#allocation2 + $0x608] sm:$0xff]
    %v222 = vld [vmem:[#allocation2 + $0x610] sm:$0xff]
    %v223 = vld [vmem:[#allocation2 + $0x618] sm:$0xff]
    %v224 = vld [vmem:[#allocation2 + $0x620] sm:$0xff]
    %v225 = vld [vmem:[#allocation2 + $0x628] sm:$0xff]
    %v226 = vld [vmem:[#allocation2 + $0x630] sm:$0xff]
    %v227 = vld [vmem:[#allocation2 + $0x638] sm:$0xff]
    %v228 = vld [vmem:[#allocation2 + $0x640] sm:$0xff]
    %v229 = vld [vmem:[#allocation2 + $0x648] sm:$0xff]
    %v230 = vld [vmem:[#allocation2 + $0x650] sm:$0xff]
    %v231 = vld [vmem:[#allocation2 + $0x658] sm:$0xff]
    %v232 = vld [vmem:[#allocation2 + $0x660] sm:$0xff]
    %v233 = vld [vmem:[#allocation2 + $0x668] sm:$0xff]
    %v234 = vld [vmem:[#allocation2 + $0x670] sm:$0xff]
    %v235 = vld [vmem:[#allocation2 + $0x678] sm:$0xff]
    %v236 = vld [vmem:[#allocation2 + $0x680] sm:$0xff]
    %v237 = vld [vmem:[#allocation2 + $0x688] sm:$0xff]
    %v238 = vld [vmem:[#allocation2 + $0x690] sm:$0xff]
    %v239 = vld [vmem:[#allocation2 + $0x698] sm:$0xff]
    %v240 = vld [vmem:[#allocation2 + $0x6a0] sm:$0xff]
    %v241 = vld [vmem:[#allocation2 + $0x6a8] sm:$0xff]
    %v242 = vld [vmem:[#allocation2 + $0x6b0] sm:$0xff]
    %v243 = vld [vmem:[#allocation2 + $0x6b8] sm:$0xff]
    %v244 = vld [vmem:[#allocation2 + $0x6c0] sm:$0xff]
    %v245 = vld [vmem:[#allocation2 + $0x6c8] sm:$0xff]
    %v246 = vld [vmem:[#allocation2 + $0x6d0] sm:$0xff]
    %v247 = vld [vmem:[#allocation2 + $0x6d8] sm:$0xff]
    %v248 = vld [vmem:[#allocation2 + $0x6e0] sm:$0xff]
    %v249 = vld [vmem:[#allocation2 + $0x6e8] sm:$0xff]
    %v250 = vld [vmem:[#allocation2 + $0x6f0] sm:$0xff]
    %v251 = vld [vmem:[#allocation2 + $0x6f8] sm:$0xff]
    %v252 = vld [vmem:[#allocation2 + $0x700] sm:$0xff]
    %v253 = vld [vmem:[#allocation2 + $0x708] sm:$0xff]
    %v254 = vld [vmem:[#allocation2 + $0x710] sm:$0xff]
    %v255 = vld [vmem:[#allocation2 + $0x718] sm:$0xff]
    %v256 = vld [vmem:[#allocation2 + $0x720] sm:$0xff]
    %v257 = vld [vmem:[#allocation2 + $0x728] sm:$0xff]
    %v258 = vld [vmem:[#allocation2 + $0x730] sm:$0xff]
    %v259 = vld [vmem:[#allocation2 + $0x738] sm:$0xff]
    %v260 = vld [vmem:[#allocation2 + $0x740] sm:$0xff]
    %v261 = vld [vmem:[#allocation2 + $0x748] sm:$0xff]
    %v262 = vld [vmem:[#allocation2 + $0x750] sm:$0xff]
    %v263 = vld [vmem:[#allocation2 + $0x758] sm:$0xff]
    %v264 = vld [vmem:[#allocation2 + $0x760] sm:$0xff]
    %v265 = vld [vmem:[#allocation2 + $0x768] sm:$0xff]
    %v266 = vld [vmem:[#allocation2 + $0x770] sm:$0xff]
    %v267 = vld [vmem:[#allocation2 + $0x778] sm:$0xff]
    %v268 = vld [vmem:[#allocation2 + $0x780] sm:$0xff]
    %v269 = vld [vmem:[#allocation2 + $0x788] sm:$0xff]
    %v270 = vld [vmem:[#allocation2 + $0x790] sm:$0xff]
    %v271 = vld [vmem:[#allocation2 + $0x798] sm:$0xff]
    %v272 = vld [vmem:[#allocation2 + $0x7a0] sm:$0xff]
    %v273 = vld [vmem:[#allocation2 + $0x7a8] sm:$0xff]
    %v274 = vld [vmem:[#allocation2 + $0x7b0] sm:$0xff]
    %v275 = vld [vmem:[#allocation2 + $0x7b8] sm:$0xff]
    %v276 = vld [vmem:[#allocation2 + $0x7c0] sm:$0xff]
    %v277 = vld [vmem:[#allocation2 + $0x7c8] sm:$0xff]
    %v278 = vld [vmem:[#allocation2 + $0x7d0] sm:$0xff]
    %v279 = vld [vmem:[#allocation2 + $0x7d8] sm:$0xff]
    %v280 = vld [vmem:[#allocation2 + $0x7e0] sm:$0xff]
    %v281 = vld [vmem:[#allocation2 + $0x7e8] sm:$0xff]
    %v282 = vld [vmem:[#allocation2 + $0x7f0] sm:$0xff]
    %v283 = vld [vmem:[#allocation2 + $0x7f8] sm:$0xff]
    %v284 = vld [vmem:[#allocation2 + $0x800] sm:$0xff]
    %v285 = vld [vmem:[#allocation2 + $0x808] sm:$0xff]
    %v286 = vld [vmem:[#allocation2 + $0x810] sm:$0xff]
    %v287 = vld [vmem:[#allocation2 + $0x818] sm:$0xff]
    %v288 = vld [vmem:[#allocation2 + $0x820] sm:$0xff]
    %v289 = vld [vmem:[#allocation2 + $0x828] sm:$0xff]
    %v290 = vld [vmem:[#allocation2 + $0x830] sm:$0xff]
    %v291 = vld [vmem:[#allocation2 + $0x838] sm:$0xff]
    %v292 = vld [vmem:[#allocation2 + $0x840] sm:$0xff]
    %v293 = vld [vmem:[#allocation2 + $0x848] sm:$0xff]
    %v294 = vld [vmem:[#allocation2 + $0x850] sm:$0xff]
    %v295 = vld [vmem:[#allocation2 + $0x858] sm:$0xff]
    %v296 = vld [vmem:[#allocation2 + $0x860] sm:$0xff]
    %v297 = vld [vmem:[#allocation2 + $0x868] sm:$0xff]
    %v298 = vld [vmem:[#allocation2 + $0x870] sm:$0xff]
    %v299 = vld [vmem:[#allocation2 + $0x878] sm:$0xff]
    %v300 = vld [vmem:[#allocation2 + $0x880] sm:$0xff]
    %v301 = vld [vmem:[#allocation2 + $0x888] sm:$0xff]
    %v302 = vld [vmem:[#allocation2 + $0x890] sm:$0xff]
    %v303 = vld [vmem:[#allocation2 + $0x898] sm:$0xff]
    %v304 = vld [vmem:[#allocation2 + $0x8a0] sm:$0xff]
    %v305 = vld [vmem:[#allocation2 + $0x8a8] sm:$0xff]
    %v306 = vld [vmem:[#allocation2 + $0x8b0] sm:$0xff]
    %v307 = vld [vmem:[#allocation2 + $0x8b8] sm:$0xff]
    %v308 = vld [vmem:[#allocation2 + $0x8c0] sm:$0xff]
    %v309 = vld [vmem:[#allocation2 + $0x8c8] sm:$0xff]
    %v310 = vld [vmem:[#allocation2 + $0x8d0] sm:$0xff]
    %v311 = vld [vmem:[#allocation2 + $0x8d8] sm:$0xff]
    %v312 = vld [vmem:[#allocation2 + $0x8e0] sm:$0xff]
    %v313 = vld [vmem:[#allocation2 + $0x8e8] sm:$0xff]
    %v314 = vld [vmem:[#allocation2 + $0x8f0] sm:$0xff]
    %v315 = vld [vmem:[#allocation2 + $0x8f8] sm:$0xff]
    %v316 = vld [vmem:[#allocation2 + $0x900] sm:$0xff]
    %v317 = vld [vmem:[#allocation2 + $0x908] sm:$0xff]
    %v318 = vld [vmem:[#allocation2 + $0x910] sm:$0xff]
    %v319 = vld [vmem:[#allocation2 + $0x918] sm:$0xff]
    %v320 = vld [vmem:[#allocation2 + $0x920] sm:$0xff]
    %v321 = vld [vmem:[#allocation2 + $0x928] sm:$0xff]
    %v322 = vld [vmem:[#allocation2 + $0x930] sm:$0xff]
    %v323 = vld [vmem:[#allocation2 + $0x938] sm:$0xff]
    %v324 = vld [vmem:[#allocation2 + $0x940] sm:$0xff]
    %v325 = vld [vmem:[#allocation2 + $0x948] sm:$0xff]
    %v326 = vld [vmem:[#allocation2 + $0x950] sm:$0xff]
    %v327 = vld [vmem:[#allocation2 + $0x958] sm:$0xff]
    %v328 = vld [vmem:[#allocation2 + $0x960] sm:$0xff]
    %v329 = vld [vmem:[#allocation2 + $0x968] sm:$0xff]
    %v330 = vld [vmem:[#allocation2 + $0x970] sm:$0xff]
    %v331 = vld [vmem:[#allocation2 + $0x978] sm:$0xff]
    %v332 = vld [vmem:[#allocation2 + $0x980] sm:$0xff]
    %v333 = vld [vmem:[#allocation2 + $0x988] sm:$0xff]
    %v334 = vld [vmem:[#allocation2 + $0x990] sm:$0xff]
    %v335 = vld [vmem:[#allocation2 + $0x998] sm:$0xff]
    %v336 = vld [vmem:[#allocation2 + $0x9a0] sm:$0xff]
    %v337 = vld [vmem:[#allocation2 + $0x9a8] sm:$0xff]
    %v338 = vld [vmem:[#allocation2 + $0x9b0] sm:$0xff]
    %v339 = vld [vmem:[#allocation2 + $0x9b8] sm:$0xff]
    %v340 = vld [vmem:[#allocation2 + $0x9c0] sm:$0xff]
    %v341 = vld [vmem:[#allocation2 + $0x9c8] sm:$0xff]
    %v342 = vld [vmem:[#allocation2 + $0x9d0] sm:$0xff]
    %v343 = vld [vmem:[#allocation2 + $0x9d8] sm:$0xff]
    %v344 = vld [vmem:[#allocation2 + $0x9e0] sm:$0xff]
    %v345 = vld [vmem:[#allocation2 + $0x9e8] sm:$0xff]
    %v346 = vld [vmem:[#allocation2 + $0x9f0] sm:$0xff]
    %v347 = vld [vmem:[#allocation2 + $0x9f8] sm:$0xff]
    %v348 = vld [vmem:[#allocation2 + $0xa00] sm:$0xff]
    %v349 = vld [vmem:[#allocation2 + $0xa08] sm:$0xff]
    %v350 = vld [vmem:[#allocation2 + $0xa10] sm:$0xff]
    %v351 = vld [vmem:[#allocation2 + $0xa18] sm:$0xff]
    %v352 = vld [vmem:[#allocation2 + $0xa20] sm:$0xff]
    %v353 = vld [vmem:[#allocation2 + $0xa28] sm:$0xff]
    %v354 = vld [vmem:[#allocation2 + $0xa30] sm:$0xff]
    %v355 = vld [vmem:[#allocation2 + $0xa38] sm:$0xff]
    %v356 = vld [vmem:[#allocation2 + $0xa40] sm:$0xff]
    %v357 = vld [vmem:[#allocation2 + $0xa48] sm:$0xff]
    %v358 = vld [vmem:[#allocation2 + $0xa50] sm:$0xff]
    %v359 = vld [vmem:[#allocation2 + $0xa58] sm:$0xff]
    %v360 = vld [vmem:[#allocation2 + $0xa60] sm:$0xff]
    %v361 = vld [vmem:[#allocation2 + $0xa68] sm:$0xff]
    %v362 = vld [vmem:[#allocation2 + $0xa70] sm:$0xff]
    %v363 = vld [vmem:[#allocation2 + $0xa78] sm:$0xff]
    %v364 = vld [vmem:[#allocation2 + $0xa80] sm:$0xff]
    %v365 = vld [vmem:[#allocation2 + $0xa88] sm:$0xff]
    %v366 = vld [vmem:[#allocation2 + $0xa90] sm:$0xff]
    %v367 = vld [vmem:[#allocation2 + $0xa98] sm:$0xff]
    %v368 = vld [vmem:[#allocation2 + $0xaa0] sm:$0xff]
    %v369 = vld [vmem:[#allocation2 + $0xaa8] sm:$0xff]
    %v370 = vld [vmem:[#allocation2 + $0xab0] sm:$0xff]
    %v371 = vld [vmem:[#allocation2 + $0xab8] sm:$0xff]
    %v372 = vld [vmem:[#allocation2 + $0xac0] sm:$0xff]
    %v373 = vld [vmem:[#allocation2 + $0xac8] sm:$0xff]
    %v374 = vld [vmem:[#allocation2 + $0xad0] sm:$0xff]
    %v375 = vld [vmem:[#allocation2 + $0xad8] sm:$0xff]
    %v376 = vld [vmem:[#allocation2 + $0xae0] sm:$0xff]
    %v377 = vld [vmem:[#allocation2 + $0xae8] sm:$0xff]
    %v378 = vld [vmem:[#allocation2 + $0xaf0] sm:$0xff]
    %v379 = vld [vmem:[#allocation2 + $0xaf8] sm:$0xff]
    %v380 = vld [vmem:[#allocation2 + $0xb00] sm:$0xff]
    %v381 = vld [vmem:[#allocation2 + $0xb08] sm:$0xff]
    %v382 = vld [vmem:[#allocation2 + $0xb10] sm:$0xff]
    %v383 = vld [vmem:[#allocation2 + $0xb18] sm:$0xff]
    %v384 = vld [vmem:[#allocation2 + $0xb20] sm:$0xff]
    %v385 = vld [vmem:[#allocation2 + $0xb28] sm:$0xff]
    %v386 = vld [vmem:[#allocation2 + $0xb30] sm:$0xff]
    %v387 = vld [vmem:[#allocation2 + $0xb38] sm:$0xff]
    %v388 = vpack.c.bf16 %v29, %v28
    %v389 = vpack.c.bf16 %v31, %v30
    %v390 = vpack.c.bf16 %v32, %v32
    %v391 = vpack.c.bf16 %v34, %v33
    %v392 = vpack.c.bf16 %v36, %v35
    %v393 = vpack.c.bf16 %v37, %v37
    %v394 = vpack.c.bf16 %v39, %v38
    %v395 = vpack.c.bf16 %v41, %v40
    %v396 = vpack.c.bf16 %v42, %v42
    %v397 = vpack.c.bf16 %v44, %v43
    %v398 = vpack.c.bf16 %v46, %v45
    %v399 = vpack.c.bf16 %v47, %v47
    %v400 = vpack.c.bf16 %v49, %v48
    %v401 = vpack.c.bf16 %v51, %v50
    %v402 = vpack.c.bf16 %v52, %v52
    %v403 = vpack.c.bf16 %v54, %v53
    %v404 = vpack.c.bf16 %v56, %v55
    %v405 = vpack.c.bf16 %v57, %v57
    %v406 = vpack.c.bf16 %v59, %v58
    %v407 = vpack.c.bf16 %v61, %v60
    %v408 = vpack.c.bf16 %v62, %v62
    %v409 = vpack.c.bf16 %v64, %v63
    %v410 = vpack.c.bf16 %v66, %v65
    %v411 = vpack.c.bf16 %v67, %v67
    %v412 = vpack.c.bf16 %v69, %v68
    %v413 = vpack.c.bf16 %v71, %v70
    %v414 = vpack.c.bf16 %v72, %v72
    %v415 = vpack.c.bf16 %v74, %v73
    %v416 = vpack.c.bf16 %v76, %v75
    %v417 = vpack.c.bf16 %v77, %v77
    %v418 = vpack.c.bf16 %v79, %v78
    %v419 = vpack.c.bf16 %v81, %v80
    %v420 = vpack.c.bf16 %v82, %v82
    %v421 = vpack.c.bf16 %v84, %v83
    %v422 = vpack.c.bf16 %v86, %v85
    %v423 = vpack.c.bf16 %v87, %v87
    %v424 = vpack.c.bf16 %v89, %v88
    %v425 = vpack.c.bf16 %v91, %v90
    %v426 = vpack.c.bf16 %v92, %v92
    %v427 = vpack.c.bf16 %v94, %v93
    %v428 = vpack.c.bf16 %v96, %v95
    %v429 = vpack.c.bf16 %v97, %v97
    %v430 = vpack.c.bf16 %v99, %v98
    %v431 = vpack.c.bf16 %v101, %v100
    %v432 = vpack.c.bf16 %v102, %v102
    %v433 = vpack.c.bf16 %v104, %v103
    %v434 = vpack.c.bf16 %v106, %v105
    %v435 = vpack.c.bf16 %v107, %v107
    %v436 = vpack.c.bf16 %v109, %v108
    %v437 = vpack.c.bf16 %v111, %v110
    %v438 = vpack.c.bf16 %v112, %v112
    %v439 = vpack.c.bf16 %v114, %v113
    %v440 = vpack.c.bf16 %v116, %v115
    %v441 = vpack.c.bf16 %v117, %v117
    %v442 = vpack.c.bf16 %v119, %v118
    %v443 = vpack.c.bf16 %v121, %v120
    %v444 = vpack.c.bf16 %v122, %v122
    %v445 = vpack.c.bf16 %v124, %v123
    %v446 = vpack.c.bf16 %v126, %v125
    %v447 = vpack.c.bf16 %v127, %v127
    %v448 = vpack.c.bf16 %v129, %v128
    %v449 = vpack.c.bf16 %v131, %v130
    %v450 = vpack.c.bf16 %v132, %v132
    %v451 = vpack.c.bf16 %v134, %v133
    %v452 = vpack.c.bf16 %v136, %v135
    %v453 = vpack.c.bf16 %v137, %v137
    %v454 = vpack.c.bf16 %v139, %v138
    %v455 = vpack.c.bf16 %v141, %v140
    %v456 = vpack.c.bf16 %v142, %v142
    %v457 = vpack.c.bf16 %v144, %v143
    %v458 = vpack.c.bf16 %v146, %v145
    %v459 = vpack.c.bf16 %v147, %v147
    %v460 = vpack.c.bf16 %v149, %v148
    %v461 = vpack.c.bf16 %v151, %v150
    %v462 = vpack.c.bf16 %v152, %v152
    %v463 = vpack.c.bf16 %v154, %v153
    %v464 = vpack.c.bf16 %v156, %v155
    %v465 = vpack.c.bf16 %v157, %v157
    %v466 = vpack.c.bf16 %v159, %v158
    %v467 = vpack.c.bf16 %v161, %v160
    %v468 = vpack.c.bf16 %v162, %v162
    %v469 = vpack.c.bf16 %v164, %v163
    %v470 = vpack.c.bf16 %v166, %v165
    %v471 = vpack.c.bf16 %v167, %v167
    %v472 = vpack.c.bf16 %v169, %v168
    %v473 = vpack.c.bf16 %v171, %v170
    %v474 = vpack.c.bf16 %v172, %v172
    %v475 = vpack.c.bf16 %v174, %v173
    %v476 = vpack.c.bf16 %v176, %v175
    %v477 = vpack.c.bf16 %v177, %v177
    %v478 = vpack.c.bf16 %v179, %v178
    %v479 = vpack.c.bf16 %v181, %v180
    %v480 = vpack.c.bf16 %v182, %v182
    %v481 = vpack.c.bf16 %v184, %v183
    %v482 = vpack.c.bf16 %v186, %v185
    %v483 = vpack.c.bf16 %v187, %v187
    %v484 = vpack.c.bf16 %v189, %v188
    %v485 = vpack.c.bf16 %v191, %v190
    %v486 = vpack.c.bf16 %v192, %v192
    %v487 = vpack.c.bf16 %v194, %v193
    %v488 = vpack.c.bf16 %v196, %v195
    %v489 = vpack.c.bf16 %v197, %v197
    %v490 = vpack.c.bf16 %v199, %v198
    %v491 = vpack.c.bf16 %v201, %v200
    %v492 = vpack.c.bf16 %v202, %v202
    %v493 = vpack.c.bf16 %v204, %v203
    %v494 = vpack.c.bf16 %v206, %v205
    %v495 = vpack.c.bf16 %v207, %v207
    %v496 = vpack.c.bf16 %v209, %v208
    %v497 = vpack.c.bf16 %v211, %v210
    %v498 = vpack.c.bf16 %v212, %v212
    %v499 = vpack.c.bf16 %v214, %v213
    %v500 = vpack.c.bf16 %v216, %v215
    %v501 = vpack.c.bf16 %v217, %v217
    %v502 = vpack.c.bf16 %v219, %v218
    %v503 = vpack.c.bf16 %v221, %v220
    %v504 = vpack.c.bf16 %v222, %v222
    %v505 = vpack.c.bf16 %v224, %v223
    %v506 = vpack.c.bf16 %v226, %v225
    %v507 = vpack.c.bf16 %v227, %v227
    %v508 = vpack.c.bf16 %v229, %v228
    %v509 = vpack.c.bf16 %v231, %v230
    %v510 = vpack.c.bf16 %v232, %v232
    %v511 = vpack.c.bf16 %v234, %v233
    %v512 = vpack.c.bf16 %v236, %v235
    %v513 = vpack.c.bf16 %v237, %v237
    %v514 = vpack.c.bf16 %v239, %v238
    %v515 = vpack.c.bf16 %v241, %v240
    %v516 = vpack.c.bf16 %v242, %v242
    %v517 = vpack.c.bf16 %v244, %v243
    %v518 = vpack.c.bf16 %v246, %v245
    %v519 = vpack.c.bf16 %v247, %v247
    %v520 = vpack.c.bf16 %v249, %v248
    %v521 = vpack.c.bf16 %v251, %v250
    %v522 = vpack.c.bf16 %v252, %v252
    %v523 = vpack.c.bf16 %v254, %v253
    %v524 = vpack.c.bf16 %v256, %v255
    %v525 = vpack.c.bf16 %v257, %v257
    %v526 = vpack.c.bf16 %v259, %v258
    %v527 = vpack.c.bf16 %v261, %v260
    %v528 = vpack.c.bf16 %v262, %v262
    %v529 = vpack.c.bf16 %v264, %v263
    %v530 = vpack.c.bf16 %v266, %v265
    %v531 = vpack.c.bf16 %v267, %v267
    %v532 = vpack.c.bf16 %v269, %v268
    %v533 = vpack.c.bf16 %v271, %v270
    %v534 = vpack.c.bf16 %v272, %v272
    %v535 = vpack.c.bf16 %v274, %v273
    %v536 = vpack.c.bf16 %v276, %v275
    %v537 = vpack.c.bf16 %v277, %v277
    %v538 = vpack.c.bf16 %v279, %v278
    %v539 = vpack.c.bf16 %v281, %v280
    %v540 = vpack.c.bf16 %v282, %v282
    %v541 = vpack.c.bf16 %v284, %v283
    %v542 = vpack.c.bf16 %v286, %v285
    %v543 = vpack.c.bf16 %v287, %v287
    %v544 = vpack.c.bf16 %v289, %v288
    %v545 = vpack.c.bf16 %v291, %v290
    %v546 = vpack.c.bf16 %v292, %v292
    %v547 = vpack.c.bf16 %v294, %v293
    %v548 = vpack.c.bf16 %v296, %v295
    %v549 = vpack.c.bf16 %v297, %v297
    %v550 = vpack.c.bf16 %v299, %v298
    %v551 = vpack.c.bf16 %v301, %v300
    %v552 = vpack.c.bf16 %v302, %v302
    %v553 = vpack.c.bf16 %v304, %v303
    %v554 = vpack.c.bf16 %v306, %v305
    %v555 = vpack.c.bf16 %v307, %v307
    %v556 = vpack.c.bf16 %v309, %v308
    %v557 = vpack.c.bf16 %v311, %v310
    %v558 = vpack.c.bf16 %v312, %v312
    %v559 = vpack.c.bf16 %v314, %v313
    %v560 = vpack.c.bf16 %v316, %v315
    %v561 = vpack.c.bf16 %v317, %v317
    %v562 = vpack.c.bf16 %v319, %v318
    %v563 = vpack.c.bf16 %v321, %v320
    %v564 = vpack.c.bf16 %v322, %v322
    %v565 = vpack.c.bf16 %v324, %v323
    %v566 = vpack.c.bf16 %v326, %v325
    %v567 = vpack.c.bf16 %v327, %v327
    %v568 = vpack.c.bf16 %v329, %v328
    %v569 = vpack.c.bf16 %v331, %v330
    %v570 = vpack.c.bf16 %v332, %v332
    %v571 = vpack.c.bf16 %v334, %v333
    %v572 = vpack.c.bf16 %v336, %v335
    %v573 = vpack.c.bf16 %v337, %v337
    %v574 = vpack.c.bf16 %v339, %v338
    %v575 = vpack.c.bf16 %v341, %v340
    %v576 = vpack.c.bf16 %v342, %v342
    %v577 = vpack.c.bf16 %v344, %v343
    %v578 = vpack.c.bf16 %v346, %v345
    %v579 = vpack.c.bf16 %v347, %v347
    %v580 = vpack.c.bf16 %v349, %v348
    %v581 = vpack.c.bf16 %v351, %v350
    %v582 = vpack.c.bf16 %v352, %v352
    %v583 = vpack.c.bf16 %v354, %v353
    %v584 = vpack.c.bf16 %v356, %v355
    %v585 = vpack.c.bf16 %v357, %v357
    %v586 = vpack.c.bf16 %v359, %v358
    %v587 = vpack.c.bf16 %v361, %v360
    %v588 = vpack.c.bf16 %v362, %v362
    %v589 = vpack.c.bf16 %v364, %v363
    %v590 = vpack.c.bf16 %v366, %v365
    %v591 = vpack.c.bf16 %v367, %v367
    %v592 = vpack.c.bf16 %v369, %v368
    %v593 = vpack.c.bf16 %v371, %v370
    %v594 = vpack.c.bf16 %v372, %v372
    %v595 = vpack.c.bf16 %v374, %v373
    %v596 = vpack.c.bf16 %v376, %v375
    %v597 = vpack.c.bf16 %v377, %v377
    %v598 = vpack.c.bf16 %v379, %v378
    %v599 = vpack.c.bf16 %v381, %v380
    %v600 = vpack.c.bf16 %v382, %v382
    %v601 = vpack.c.bf16 %v384, %v383
    %v602 = vpack.c.bf16 %v386, %v385
    %v603 = vpack.c.bf16 %v387, %v387
    %v604 = vunpack.c.l.bf16 %v388
    %v605 = vunpack.c.h.bf16 %v388
    %v606 = vunpack.c.l.bf16 %v389
    %v607 = vunpack.c.h.bf16 %v389
    %v608 = vunpack.c.l.bf16 %v390
    %v609 = vunpack.c.l.bf16 %v391
    %v610 = vunpack.c.h.bf16 %v391
    %v611 = vunpack.c.l.bf16 %v392
    %v612 = vunpack.c.h.bf16 %v392
    %v613 = vunpack.c.l.bf16 %v393
    %v614 = vunpack.c.l.bf16 %v394
    %v615 = vunpack.c.h.bf16 %v394
    %v616 = vunpack.c.l.bf16 %v395
    %v617 = vunpack.c.h.bf16 %v395
    %v618 = vunpack.c.l.bf16 %v396
    %v619 = vunpack.c.l.bf16 %v397
    %v620 = vunpack.c.h.bf16 %v397
    %v621 = vunpack.c.l.bf16 %v398
    %v622 = vunpack.c.h.bf16 %v398
    %v623 = vunpack.c.l.bf16 %v399
    %v624 = vunpack.c.l.bf16 %v400
    %v625 = vunpack.c.h.bf16 %v400
    %v626 = vunpack.c.l.bf16 %v401
    %v627 = vunpack.c.h.bf16 %v401
    %v628 = vunpack.c.l.bf16 %v402
    %v629 = vunpack.c.l.bf16 %v403
    %v630 = vunpack.c.h.bf16 %v403
    %v631 = vunpack.c.l.bf16 %v404
    %v632 = vunpack.c.h.bf16 %v404
    %v633 = vunpack.c.l.bf16 %v405
    %v634 = vunpack.c.l.bf16 %v406
    %v635 = vunpack.c.h.bf16 %v406
    %v636 = vunpack.c.l.bf16 %v407
    %v637 = vunpack.c.h.bf16 %v407
    %v638 = vunpack.c.l.bf16 %v408
    %v639 = vunpack.c.l.bf16 %v409
    %v640 = vunpack.c.h.bf16 %v409
    %v641 = vunpack.c.l.bf16 %v410
    %v642 = vunpack.c.h.bf16 %v410
    %v643 = vunpack.c.l.bf16 %v411
    %v644 = vunpack.c.l.bf16 %v412
    %v645 = vunpack.c.h.bf16 %v412
    %v646 = vunpack.c.l.bf16 %v413
    %v647 = vunpack.c.h.bf16 %v413
    %v648 = vunpack.c.l.bf16 %v414
    %v649 = vunpack.c.l.bf16 %v415
    %v650 = vunpack.c.h.bf16 %v415
    %v651 = vunpack.c.l.bf16 %v416
    %v652 = vunpack.c.h.bf16 %v416
    %v653 = vunpack.c.l.bf16 %v417
    %v654 = vunpack.c.l.bf16 %v418
    %v655 = vunpack.c.h.bf16 %v418
    %v656 = vunpack.c.l.bf16 %v419
    %v657 = vunpack.c.h.bf16 %v419
    %v658 = vunpack.c.l.bf16 %v420
    %v659 = vunpack.c.l.bf16 %v421
    %v660 = vunpack.c.h.bf16 %v421
    %v661 = vunpack.c.l.bf16 %v422
    %v662 = vunpack.c.h.bf16 %v422
    %v663 = vunpack.c.l.bf16 %v423
    %v664 = vunpack.c.l.bf16 %v424
    %v665 = vunpack.c.h.bf16 %v424
    %v666 = vunpack.c.l.bf16 %v425
    %v667 = vunpack.c.h.bf16 %v425
    %v668 = vunpack.c.l.bf16 %v426
    %v669 = vunpack.c.l.bf16 %v427
    %v670 = vunpack.c.h.bf16 %v427
    %v671 = vunpack.c.l.bf16 %v428
    %v672 = vunpack.c.h.bf16 %v428
    %v673 = vunpack.c.l.bf16 %v429
    %v674 = vunpack.c.l.bf16 %v430
    %v675 = vunpack.c.h.bf16 %v430
    %v676 = vunpack.c.l.bf16 %v431
    %v677 = vunpack.c.h.bf16 %v431
    %v678 = vunpack.c.l.bf16 %v432
    %v679 = vunpack.c.l.bf16 %v433
    %v680 = vunpack.c.h.bf16 %v433
    %v681 = vunpack.c.l.bf16 %v434
    %v682 = vunpack.c.h.bf16 %v434
    %v683 = vunpack.c.l.bf16 %v435
    %v684 = vunpack.c.l.bf16 %v436
    %v685 = vunpack.c.h.bf16 %v436
    %v686 = vunpack.c.l.bf16 %v437
    %v687 = vunpack.c.h.bf16 %v437
    %v688 = vunpack.c.l.bf16 %v438
    %v689 = vunpack.c.l.bf16 %v439
    %v690 = vunpack.c.h.bf16 %v439
    %v691 = vunpack.c.l.bf16 %v440
    %v692 = vunpack.c.h.bf16 %v440
    %v693 = vunpack.c.l.bf16 %v441
    %v694 = vunpack.c.l.bf16 %v442
    %v695 = vunpack.c.h.bf16 %v442
    %v696 = vunpack.c.l.bf16 %v443
    %v697 = vunpack.c.h.bf16 %v443
    %v698 = vunpack.c.l.bf16 %v444
    %v699 = vunpack.c.l.bf16 %v445
    %v700 = vunpack.c.h.bf16 %v445
    %v701 = vunpack.c.l.bf16 %v446
    %v702 = vunpack.c.h.bf16 %v446
    %v703 = vunpack.c.l.bf16 %v447
    %v704 = vunpack.c.l.bf16 %v448
    %v705 = vunpack.c.h.bf16 %v448
    %v706 = vunpack.c.l.bf16 %v449
    %v707 = vunpack.c.h.bf16 %v449
    %v708 = vunpack.c.l.bf16 %v450
    %v709 = vunpack.c.l.bf16 %v451
    %v710 = vunpack.c.h.bf16 %v451
    %v711 = vunpack.c.l.bf16 %v452
    %v712 = vunpack.c.h.bf16 %v452
    %v713 = vunpack.c.l.bf16 %v453
    %v714 = vunpack.c.l.bf16 %v454
    %v715 = vunpack.c.h.bf16 %v454
    %v716 = vunpack.c.l.bf16 %v455
    %v717 = vunpack.c.h.bf16 %v455
    %v718 = vunpack.c.l.bf16 %v456
    %v719 = vunpack.c.l.bf16 %v457
    %v720 = vunpack.c.h.bf16 %v457
    %v721 = vunpack.c.l.bf16 %v458
    %v722 = vunpack.c.h.bf16 %v458
    %v723 = vunpack.c.l.bf16 %v459
    %v724 = vunpack.c.l.bf16 %v460
    %v725 = vunpack.c.h.bf16 %v460
    %v726 = vunpack.c.l.bf16 %v461
    %v727 = vunpack.c.h.bf16 %v461
    %v728 = vunpack.c.l.bf16 %v462
    %v729 = vunpack.c.l.bf16 %v463
    %v730 = vunpack.c.h.bf16 %v463
    %v731 = vunpack.c.l.bf16 %v464
    %v732 = vunpack.c.h.bf16 %v464
    %v733 = vunpack.c.l.bf16 %v465
    %v734 = vunpack.c.l.bf16 %v466
    %v735 = vunpack.c.h.bf16 %v466
    %v736 = vunpack.c.l.bf16 %v467
    %v737 = vunpack.c.h.bf16 %v467
    %v738 = vunpack.c.l.bf16 %v468
    %v739 = vunpack.c.l.bf16 %v469
    %v740 = vunpack.c.h.bf16 %v469
    %v741 = vunpack.c.l.bf16 %v470
    %v742 = vunpack.c.h.bf16 %v470
    %v743 = vunpack.c.l.bf16 %v471
    %v744 = vunpack.c.l.bf16 %v472
    %v745 = vunpack.c.h.bf16 %v472
    %v746 = vunpack.c.l.bf16 %v473
    %v747 = vunpack.c.h.bf16 %v473
    %v748 = vunpack.c.l.bf16 %v474
    %v749 = vunpack.c.l.bf16 %v475
    %v750 = vunpack.c.h.bf16 %v475
    %v751 = vunpack.c.l.bf16 %v476
    %v752 = vunpack.c.h.bf16 %v476
    %v753 = vunpack.c.l.bf16 %v477
    %v754 = vunpack.c.l.bf16 %v478
    %v755 = vunpack.c.h.bf16 %v478
    %v756 = vunpack.c.l.bf16 %v479
    %v757 = vunpack.c.h.bf16 %v479
    %v758 = vunpack.c.l.bf16 %v480
    %v759 = vunpack.c.l.bf16 %v481
    %v760 = vunpack.c.h.bf16 %v481
    %v761 = vunpack.c.l.bf16 %v482
    %v762 = vunpack.c.h.bf16 %v482
    %v763 = vunpack.c.l.bf16 %v483
    %v764 = vunpack.c.l.bf16 %v484
    %v765 = vunpack.c.h.bf16 %v484
    %v766 = vunpack.c.l.bf16 %v485
    %v767 = vunpack.c.h.bf16 %v485
    %v768 = vunpack.c.l.bf16 %v486
    %v769 = vunpack.c.l.bf16 %v487
    %v770 = vunpack.c.h.bf16 %v487
    %v771 = vunpack.c.l.bf16 %v488
    %v772 = vunpack.c.h.bf16 %v488
    %v773 = vunpack.c.l.bf16 %v489
    %v774 = vunpack.c.l.bf16 %v490
    %v775 = vunpack.c.h.bf16 %v490
    %v776 = vunpack.c.l.bf16 %v491
    %v777 = vunpack.c.h.bf16 %v491
    %v778 = vunpack.c.l.bf16 %v492
    %v779 = vunpack.c.l.bf16 %v493
    %v780 = vunpack.c.h.bf16 %v493
    %v781 = vunpack.c.l.bf16 %v494
    %v782 = vunpack.c.h.bf16 %v494
    %v783 = vunpack.c.l.bf16 %v495
    %v784 = vunpack.c.l.bf16 %v496
    %v785 = vunpack.c.h.bf16 %v496
    %v786 = vunpack.c.l.bf16 %v497
    %v787 = vunpack.c.h.bf16 %v497
    %v788 = vunpack.c.l.bf16 %v498
    %v789 = vunpack.c.l.bf16 %v499
    %v790 = vunpack.c.h.bf16 %v499
    %v791 = vunpack.c.l.bf16 %v500
    %v792 = vunpack.c.h.bf16 %v500
    %v793 = vunpack.c.l.bf16 %v501
    %v794 = vunpack.c.l.bf16 %v502
    %v795 = vunpack.c.h.bf16 %v502
    %v796 = vunpack.c.l.bf16 %v503
    %v797 = vunpack.c.h.bf16 %v503
    %v798 = vunpack.c.l.bf16 %v504
    %v799 = vunpack.c.l.bf16 %v505
    %v800 = vunpack.c.h.bf16 %v505
    %v801 = vunpack.c.l.bf16 %v506
    %v802 = vunpack.c.h.bf16 %v506
    %v803 = vunpack.c.l.bf16 %v507
    %v804 = vunpack.c.l.bf16 %v508
    %v805 = vunpack.c.h.bf16 %v508
    %v806 = vunpack.c.l.bf16 %v509
    %v807 = vunpack.c.h.bf16 %v509
    %v808 = vunpack.c.l.bf16 %v510
    %v809 = vunpack.c.l.bf16 %v511
    %v810 = vunpack.c.h.bf16 %v511
    %v811 = vunpack.c.l.bf16 %v512
    %v812 = vunpack.c.h.bf16 %v512
    %v813 = vunpack.c.l.bf16 %v513
    %v814 = vunpack.c.l.bf16 %v514
    %v815 = vunpack.c.h.bf16 %v514
    %v816 = vunpack.c.l.bf16 %v515
    %v817 = vunpack.c.h.bf16 %v515
    %v818 = vunpack.c.l.bf16 %v516
    %v819 = vunpack.c.l.bf16 %v517
    %v820 = vunpack.c.h.bf16 %v517
    %v821 = vunpack.c.l.bf16 %v518
    %v822 = vunpack.c.h.bf16 %v518
    %v823 = vunpack.c.l.bf16 %v519
    %v824 = vunpack.c.l.bf16 %v520
    %v825 = vunpack.c.h.bf16 %v520
    %v826 = vunpack.c.l.bf16 %v521
    %v827 = vunpack.c.h.bf16 %v521
    %v828 = vunpack.c.l.bf16 %v522
    %v829 = vunpack.c.l.bf16 %v523
    %v830 = vunpack.c.h.bf16 %v523
    %v831 = vunpack.c.l.bf16 %v524
    %v832 = vunpack.c.h.bf16 %v524
    %v833 = vunpack.c.l.bf16 %v525
    %v834 = vunpack.c.l.bf16 %v526
    %v835 = vunpack.c.h.bf16 %v526
    %v836 = vunpack.c.l.bf16 %v527
    %v837 = vunpack.c.h.bf16 %v527
    %v838 = vunpack.c.l.bf16 %v528
    %v839 = vunpack.c.l.bf16 %v529
    %v840 = vunpack.c.h.bf16 %v529
    %v841 = vunpack.c.l.bf16 %v530
    %v842 = vunpack.c.h.bf16 %v530
    %v843 = vunpack.c.l.bf16 %v531
    %v844 = vunpack.c.l.bf16 %v532
    %v845 = vunpack.c.h.bf16 %v532
    %v846 = vunpack.c.l.bf16 %v533
    %v847 = vunpack.c.h.bf16 %v533
    %v848 = vunpack.c.l.bf16 %v534
    %v849 = vunpack.c.l.bf16 %v535
    %v850 = vunpack.c.h.bf16 %v535
    %v851 = vunpack.c.l.bf16 %v536
    %v852 = vunpack.c.h.bf16 %v536
    %v853 = vunpack.c.l.bf16 %v537
    %v854 = vunpack.c.l.bf16 %v538
    %v855 = vunpack.c.h.bf16 %v538
    %v856 = vunpack.c.l.bf16 %v539
    %v857 = vunpack.c.h.bf16 %v539
    %v858 = vunpack.c.l.bf16 %v540
    %v859 = vunpack.c.l.bf16 %v541
    %v860 = vunpack.c.h.bf16 %v541
    %v861 = vunpack.c.l.bf16 %v542
    %v862 = vunpack.c.h.bf16 %v542
    %v863 = vunpack.c.l.bf16 %v543
    %v864 = vunpack.c.l.bf16 %v544
    %v865 = vunpack.c.h.bf16 %v544
    %v866 = vunpack.c.l.bf16 %v545
    %v867 = vunpack.c.h.bf16 %v545
    %v868 = vunpack.c.l.bf16 %v546
    %v869 = vunpack.c.l.bf16 %v547
    %v870 = vunpack.c.h.bf16 %v547
    %v871 = vunpack.c.l.bf16 %v548
    %v872 = vunpack.c.h.bf16 %v548
    %v873 = vunpack.c.l.bf16 %v549
    %v874 = vunpack.c.l.bf16 %v550
    %v875 = vunpack.c.h.bf16 %v550
    %v876 = vunpack.c.l.bf16 %v551
    %v877 = vunpack.c.h.bf16 %v551
    %v878 = vunpack.c.l.bf16 %v552
    %v879 = vunpack.c.l.bf16 %v553
    %v880 = vunpack.c.h.bf16 %v553
    %v881 = vunpack.c.l.bf16 %v554
    %v882 = vunpack.c.h.bf16 %v554
    %v883 = vunpack.c.l.bf16 %v555
    %v884 = vunpack.c.l.bf16 %v556
    %v885 = vunpack.c.h.bf16 %v556
    %v886 = vunpack.c.l.bf16 %v557
    %v887 = vunpack.c.h.bf16 %v557
    %v888 = vunpack.c.l.bf16 %v558
    %v889 = vunpack.c.l.bf16 %v559
    %v890 = vunpack.c.h.bf16 %v559
    %v891 = vunpack.c.l.bf16 %v560
    %v892 = vunpack.c.h.bf16 %v560
    %v893 = vunpack.c.l.bf16 %v561
    %v894 = vunpack.c.l.bf16 %v562
    %v895 = vunpack.c.h.bf16 %v562
    %v896 = vunpack.c.l.bf16 %v563
    %v897 = vunpack.c.h.bf16 %v563
    %v898 = vunpack.c.l.bf16 %v564
    %v899 = vunpack.c.l.bf16 %v565
    %v900 = vunpack.c.h.bf16 %v565
    %v901 = vunpack.c.l.bf16 %v566
    %v902 = vunpack.c.h.bf16 %v566
    %v903 = vunpack.c.l.bf16 %v567
    %v904 = vunpack.c.l.bf16 %v568
    %v905 = vunpack.c.h.bf16 %v568
    %v906 = vunpack.c.l.bf16 %v569
    %v907 = vunpack.c.h.bf16 %v569
    %v908 = vunpack.c.l.bf16 %v570
    %v909 = vunpack.c.l.bf16 %v571
    %v910 = vunpack.c.h.bf16 %v571
    %v911 = vunpack.c.l.bf16 %v572
    %v912 = vunpack.c.h.bf16 %v572
    %v913 = vunpack.c.l.bf16 %v573
    %v914 = vunpack.c.l.bf16 %v574
    %v915 = vunpack.c.h.bf16 %v574
    %v916 = vunpack.c.l.bf16 %v575
    %v917 = vunpack.c.h.bf16 %v575
    %v918 = vunpack.c.l.bf16 %v576
    %v919 = vunpack.c.l.bf16 %v577
    %v920 = vunpack.c.h.bf16 %v577
    %v921 = vunpack.c.l.bf16 %v578
    %v922 = vunpack.c.h.bf16 %v578
    %v923 = vunpack.c.l.bf16 %v579
    %v924 = vunpack.c.l.bf16 %v580
    %v925 = vunpack.c.h.bf16 %v580
    %v926 = vunpack.c.l.bf16 %v581
    %v927 = vunpack.c.h.bf16 %v581
    %v928 = vunpack.c.l.bf16 %v582
    %v929 = vunpack.c.l.bf16 %v583
    %v930 = vunpack.c.h.bf16 %v583
    %v931 = vunpack.c.l.bf16 %v584
    %v932 = vunpack.c.h.bf16 %v584
    %v933 = vunpack.c.l.bf16 %v585
    %v934 = vunpack.c.l.bf16 %v586
    %v935 = vunpack.c.h.bf16 %v586
    %v936 = vunpack.c.l.bf16 %v587
    %v937 = vunpack.c.h.bf16 %v587
    %v938 = vunpack.c.l.bf16 %v588
    %v939 = vunpack.c.l.bf16 %v589
    %v940 = vunpack.c.h.bf16 %v589
    %v941 = vunpack.c.l.bf16 %v590
    %v942 = vunpack.c.h.bf16 %v590
    %v943 = vunpack.c.l.bf16 %v591
    %v944 = vunpack.c.l.bf16 %v592
    %v945 = vunpack.c.h.bf16 %v592
    %v946 = vunpack.c.l.bf16 %v593
    %v947 = vunpack.c.h.bf16 %v593
    %v948 = vunpack.c.l.bf16 %v594
    %v949 = vunpack.c.l.bf16 %v595
    %v950 = vunpack.c.h.bf16 %v595
    %v951 = vunpack.c.l.bf16 %v596
    %v952 = vunpack.c.h.bf16 %v596
    %v953 = vunpack.c.l.bf16 %v597
    %v954 = vunpack.c.l.bf16 %v598
    %v955 = vunpack.c.h.bf16 %v598
    %v956 = vunpack.c.l.bf16 %v599
    %v957 = vunpack.c.h.bf16 %v599
    %v958 = vunpack.c.l.bf16 %v600
    %v959 = vunpack.c.l.bf16 %v601
    %v960 = vunpack.c.h.bf16 %v601
    %v961 = vunpack.c.l.bf16 %v602
    %v962 = vunpack.c.h.bf16 %v602
    %v963 = vunpack.c.l.bf16 %v603
    %v964 = vsub.f32 %v28, %v604
    %v965 = vsub.f32 %v29, %v605
    %v966 = vsub.f32 %v30, %v606
    %v967 = vsub.f32 %v31, %v607
    %v968 = vsub.f32 %v32, %v608
    %v969 = vsub.f32 %v33, %v609
    %v970 = vsub.f32 %v34, %v610
    %v971 = vsub.f32 %v35, %v611
    %v972 = vsub.f32 %v36, %v612
    %v973 = vsub.f32 %v37, %v613
    %v974 = vsub.f32 %v38, %v614
    %v975 = vsub.f32 %v39, %v615
    %v976 = vsub.f32 %v40, %v616
    %v977 = vsub.f32 %v41, %v617
    %v978 = vsub.f32 %v42, %v618
    %v979 = vsub.f32 %v43, %v619
    %v980 = vsub.f32 %v44, %v620
    %v981 = vsub.f32 %v45, %v621
    %v982 = vsub.f32 %v46, %v622
    %v983 = vsub.f32 %v47, %v623
    %v984 = vsub.f32 %v48, %v624
    %v985 = vsub.f32 %v49, %v625
    %v986 = vsub.f32 %v50, %v626
    %v987 = vsub.f32 %v51, %v627
    %v988 = vsub.f32 %v52, %v628
    %v989 = vsub.f32 %v53, %v629
    %v990 = vsub.f32 %v54, %v630
    %v991 = vsub.f32 %v55, %v631
    %v992 = vsub.f32 %v56, %v632
    %v993 = vsub.f32 %v57, %v633
    %v994 = vsub.f32 %v58, %v634
    %v995 = vsub.f32 %v59, %v635
    %v996 = vsub.f32 %v60, %v636
    %v997 = vsub.f32 %v61, %v637
    %v998 = vsub.f32 %v62, %v638
    %v999 = vsub.f32 %v63, %v639
    %v1000 = vsub.f32 %v64, %v640
    %v1001 = vsub.f32 %v65, %v641
    %v1002 = vsub.f32 %v66, %v642
    %v1003 = vsub.f32 %v67, %v643
    %v1004 = vsub.f32 %v68, %v644
    %v1005 = vsub.f32 %v69, %v645
    %v1006 = vsub.f32 %v70, %v646
    %v1007 = vsub.f32 %v71, %v647
    %v1008 = vsub.f32 %v72, %v648
    %v1009 = vsub.f32 %v73, %v649
    %v1010 = vsub.f32 %v74, %v650
    %v1011 = vsub.f32 %v75, %v651
    %v1012 = vsub.f32 %v76, %v652
    %v1013 = vsub.f32 %v77, %v653
    %v1014 = vsub.f32 %v78, %v654
    %v1015 = vsub.f32 %v79, %v655
    %v1016 = vsub.f32 %v80, %v656
    %v1017 = vsub.f32 %v81, %v657
    %v1018 = vsub.f32 %v82, %v658
    %v1019 = vsub.f32 %v83, %v659
    %v1020 = vsub.f32 %v84, %v660
    %v1021 = vsub.f32 %v85, %v661
    %v1022 = vsub.f32 %v86, %v662
    %v1023 = vsub.f32 %v87, %v663
    %v1024 = vsub.f32 %v88, %v664
    %v1025 = vsub.f32 %v89, %v665
    %v1026 = vsub.f32 %v90, %v666
    %v1027 = vsub.f32 %v91, %v667
    %v1028 = vsub.f32 %v92, %v668
    %v1029 = vsub.f32 %v93, %v669
    %v1030 = vsub.f32 %v94, %v670
    %v1031 = vsub.f32 %v95, %v671
    %v1032 = vsub.f32 %v96, %v672
    %v1033 = vsub.f32 %v97, %v673
    %v1034 = vsub.f32 %v98, %v674
    %v1035 = vsub.f32 %v99, %v675
    %v1036 = vsub.f32 %v100, %v676
    %v1037 = vsub.f32 %v101, %v677
    %v1038 = vsub.f32 %v102, %v678
    %v1039 = vsub.f32 %v103, %v679
    %v1040 = vsub.f32 %v104, %v680
    %v1041 = vsub.f32 %v105, %v681
    %v1042 = vsub.f32 %v106, %v682
    %v1043 = vsub.f32 %v107, %v683
    %v1044 = vsub.f32 %v108, %v684
    %v1045 = vsub.f32 %v109, %v685
    %v1046 = vsub.f32 %v110, %v686
    %v1047 = vsub.f32 %v111, %v687
    %v1048 = vsub.f32 %v112, %v688
    %v1049 = vsub.f32 %v113, %v689
    %v1050 = vsub.f32 %v114, %v690
    %v1051 = vsub.f32 %v115, %v691
    %v1052 = vsub.f32 %v116, %v692
    %v1053 = vsub.f32 %v117, %v693
    %v1054 = vsub.f32 %v118, %v694
    %v1055 = vsub.f32 %v119, %v695
    %v1056 = vsub.f32 %v120, %v696
    %v1057 = vsub.f32 %v121, %v697
    %v1058 = vsub.f32 %v122, %v698
    %v1059 = vsub.f32 %v123, %v699
    %v1060 = vsub.f32 %v124, %v700
    %v1061 = vsub.f32 %v125, %v701
    %v1062 = vsub.f32 %v126, %v702
    %v1063 = vsub.f32 %v127, %v703
    %v1064 = vsub.f32 %v128, %v704
    %v1065 = vsub.f32 %v129, %v705
    %v1066 = vsub.f32 %v130, %v706
    %v1067 = vsub.f32 %v131, %v707
    %v1068 = vsub.f32 %v132, %v708
    %v1069 = vsub.f32 %v133, %v709
    %v1070 = vsub.f32 %v134, %v710
    %v1071 = vsub.f32 %v135, %v711
    %v1072 = vsub.f32 %v136, %v712
    %v1073 = vsub.f32 %v137, %v713
    %v1074 = vsub.f32 %v138, %v714
    %v1075 = vsub.f32 %v139, %v715
    %v1076 = vsub.f32 %v140, %v716
    %v1077 = vsub.f32 %v141, %v717
    %v1078 = vsub.f32 %v142, %v718
    %v1079 = vsub.f32 %v143, %v719
    %v1080 = vsub.f32 %v144, %v720
    %v1081 = vsub.f32 %v145, %v721
    %v1082 = vsub.f32 %v146, %v722
    %v1083 = vsub.f32 %v147, %v723
    %v1084 = vsub.f32 %v148, %v724
    %v1085 = vsub.f32 %v149, %v725
    %v1086 = vsub.f32 %v150, %v726
    %v1087 = vsub.f32 %v151, %v727
    %v1088 = vsub.f32 %v152, %v728
    %v1089 = vsub.f32 %v153, %v729
    %v1090 = vsub.f32 %v154, %v730
    %v1091 = vsub.f32 %v155, %v731
    %v1092 = vsub.f32 %v156, %v732
    %v1093 = vsub.f32 %v157, %v733
    %v1094 = vsub.f32 %v158, %v734
    %v1095 = vsub.f32 %v159, %v735
    %v1096 = vsub.f32 %v160, %v736
    %v1097 = vsub.f32 %v161, %v737
    %v1098 = vsub.f32 %v162, %v738
    %v1099 = vsub.f32 %v163, %v739
    %v1100 = vsub.f32 %v164, %v740
    %v1101 = vsub.f32 %v165, %v741
    %v1102 = vsub.f32 %v166, %v742
    %v1103 = vsub.f32 %v167, %v743
    %v1104 = vsub.f32 %v168, %v744
    %v1105 = vsub.f32 %v169, %v745
    %v1106 = vsub.f32 %v170, %v746
    %v1107 = vsub.f32 %v171, %v747
    %v1108 = vsub.f32 %v172, %v748
    %v1109 = vsub.f32 %v173, %v749
    %v1110 = vsub.f32 %v174, %v750
    %v1111 = vsub.f32 %v175, %v751
    %v1112 = vsub.f32 %v176, %v752
    %v1113 = vsub.f32 %v177, %v753
    %v1114 = vsub.f32 %v178, %v754
    %v1115 = vsub.f32 %v179, %v755
    %v1116 = vsub.f32 %v180, %v756
    %v1117 = vsub.f32 %v181, %v757
    %v1118 = vsub.f32 %v182, %v758
    %v1119 = vsub.f32 %v183, %v759
    %v1120 = vsub.f32 %v184, %v760
    %v1121 = vsub.f32 %v185, %v761
    %v1122 = vsub.f32 %v186, %v762
    %v1123 = vsub.f32 %v187, %v763
    %v1124 = vsub.f32 %v188, %v764
    %v1125 = vsub.f32 %v189, %v765
    %v1126 = vsub.f32 %v190, %v766
    %v1127 = vsub.f32 %v191, %v767
    %v1128 = vsub.f32 %v192, %v768
    %v1129 = vsub.f32 %v193, %v769
    %v1130 = vsub.f32 %v194, %v770
    %v1131 = vsub.f32 %v195, %v771
    %v1132 = vsub.f32 %v196, %v772
    %v1133 = vsub.f32 %v197, %v773
    %v1134 = vsub.f32 %v198, %v774
    %v1135 = vsub.f32 %v199, %v775
    %v1136 = vsub.f32 %v200, %v776
    %v1137 = vsub.f32 %v201, %v777
    %v1138 = vsub.f32 %v202, %v778
    %v1139 = vsub.f32 %v203, %v779
    %v1140 = vsub.f32 %v204, %v780
    %v1141 = vsub.f32 %v205, %v781
    %v1142 = vsub.f32 %v206, %v782
    %v1143 = vsub.f32 %v207, %v783
    %v1144 = vsub.f32 %v208, %v784
    %v1145 = vsub.f32 %v209, %v785
    %v1146 = vsub.f32 %v210, %v786
    %v1147 = vsub.f32 %v211, %v787
    %v1148 = vsub.f32 %v212, %v788
    %v1149 = vsub.f32 %v213, %v789
    %v1150 = vsub.f32 %v214, %v790
    %v1151 = vsub.f32 %v215, %v791
    %v1152 = vsub.f32 %v216, %v792
    %v1153 = vsub.f32 %v217, %v793
    %v1154 = vsub.f32 %v218, %v794
    %v1155 = vsub.f32 %v219, %v795
    %v1156 = vsub.f32 %v220, %v796
    %v1157 = vsub.f32 %v221, %v797
    %v1158 = vsub.f32 %v222, %v798
    %v1159 = vsub.f32 %v223, %v799
    %v1160 = vsub.f32 %v224, %v800
    %v1161 = vsub.f32 %v225, %v801
    %v1162 = vsub.f32 %v226, %v802
    %v1163 = vsub.f32 %v227, %v803
    %v1164 = vsub.f32 %v228, %v804
    %v1165 = vsub.f32 %v229, %v805
    %v1166 = vsub.f32 %v230, %v806
    %v1167 = vsub.f32 %v231, %v807
    %v1168 = vsub.f32 %v232, %v808
    %v1169 = vsub.f32 %v233, %v809
    %v1170 = vsub.f32 %v234, %v810
    %v1171 = vsub.f32 %v235, %v811
    %v1172 = vsub.f32 %v236, %v812
    %v1173 = vsub.f32 %v237, %v813
    %v1174 = vsub.f32 %v238, %v814
    %v1175 = vsub.f32 %v239, %v815
    %v1176 = vsub.f32 %v240, %v816
    %v1177 = vsub.f32 %v241, %v817
    %v1178 = vsub.f32 %v242, %v818
    %v1179 = vsub.f32 %v243, %v819
    %v1180 = vsub.f32 %v244, %v820
    %v1181 = vsub.f32 %v245, %v821
    %v1182 = vsub.f32 %v246, %v822
    %v1183 = vsub.f32 %v247, %v823
    %v1184 = vsub.f32 %v248, %v824
    %v1185 = vsub.f32 %v249, %v825
    %v1186 = vsub.f32 %v250, %v826
    %v1187 = vsub.f32 %v251, %v827
    %v1188 = vsub.f32 %v252, %v828
    %v1189 = vsub.f32 %v253, %v829
    %v1190 = vsub.f32 %v254, %v830
    %v1191 = vsub.f32 %v255, %v831
    %v1192 = vsub.f32 %v256, %v832
    %v1193 = vsub.f32 %v257, %v833
    %v1194 = vsub.f32 %v258, %v834
    %v1195 = vsub.f32 %v259, %v835
    %v1196 = vsub.f32 %v260, %v836
    %v1197 = vsub.f32 %v261, %v837
    %v1198 = vsub.f32 %v262, %v838
    %v1199 = vsub.f32 %v263, %v839
    %v1200 = vsub.f32 %v264, %v840
    %v1201 = vsub.f32 %v265, %v841
    %v1202 = vsub.f32 %v266, %v842
    %v1203 = vsub.f32 %v267, %v843
    %v1204 = vsub.f32 %v268, %v844
    %v1205 = vsub.f32 %v269, %v845
    %v1206 = vsub.f32 %v270, %v846
    %v1207 = vsub.f32 %v271, %v847
    %v1208 = vsub.f32 %v272, %v848
    %v1209 = vsub.f32 %v273, %v849
    %v1210 = vsub.f32 %v274, %v850
    %v1211 = vsub.f32 %v275, %v851
    %v1212 = vsub.f32 %v276, %v852
    %v1213 = vsub.f32 %v277, %v853
    %v1214 = vsub.f32 %v278, %v854
    %v1215 = vsub.f32 %v279, %v855
    %v1216 = vsub.f32 %v280, %v856
    %v1217 = vsub.f32 %v281, %v857
    %v1218 = vsub.f32 %v282, %v858
    %v1219 = vsub.f32 %v283, %v859
    %v1220 = vsub.f32 %v284, %v860
    %v1221 = vsub.f32 %v285, %v861
    %v1222 = vsub.f32 %v286, %v862
    %v1223 = vsub.f32 %v287, %v863
    %v1224 = vsub.f32 %v288, %v864
    %v1225 = vsub.f32 %v289, %v865
    %v1226 = vsub.f32 %v290, %v866
    %v1227 = vsub.f32 %v291, %v867
    %v1228 = vsub.f32 %v292, %v868
    %v1229 = vsub.f32 %v293, %v869
    %v1230 = vsub.f32 %v294, %v870
    %v1231 = vsub.f32 %v295, %v871
    %v1232 = vsub.f32 %v296, %v872
    %v1233 = vsub.f32 %v297, %v873
    %v1234 = vsub.f32 %v298, %v874
    %v1235 = vsub.f32 %v299, %v875
    %v1236 = vsub.f32 %v300, %v876
    %v1237 = vsub.f32 %v301, %v877
    %v1238 = vsub.f32 %v302, %v878
    %v1239 = vsub.f32 %v303, %v879
    %v1240 = vsub.f32 %v304, %v880
    %v1241 = vsub.f32 %v305, %v881
    %v1242 = vsub.f32 %v306, %v882
    %v1243 = vsub.f32 %v307, %v883
    %v1244 = vsub.f32 %v308, %v884
    %v1245 = vsub.f32 %v309, %v885
    %v1246 = vsub.f32 %v310, %v886
    %v1247 = vsub.f32 %v311, %v887
    %v1248 = vsub.f32 %v312, %v888
    %v1249 = vsub.f32 %v313, %v889
    %v1250 = vsub.f32 %v314, %v890
    %v1251 = vsub.f32 %v315, %v891
    %v1252 = vsub.f32 %v316, %v892
    %v1253 = vsub.f32 %v317, %v893
    %v1254 = vsub.f32 %v318, %v894
    %v1255 = vsub.f32 %v319, %v895
    %v1256 = vsub.f32 %v320, %v896
    %v1257 = vsub.f32 %v321, %v897
    %v1258 = vsub.f32 %v322, %v898
    %v1259 = vsub.f32 %v323, %v899
    %v1260 = vsub.f32 %v324, %v900
    %v1261 = vsub.f32 %v325, %v901
    %v1262 = vsub.f32 %v326, %v902
    %v1263 = vsub.f32 %v327, %v903
    %v1264 = vsub.f32 %v328, %v904
    %v1265 = vsub.f32 %v329, %v905
    %v1266 = vsub.f32 %v330, %v906
    %v1267 = vsub.f32 %v331, %v907
    %v1268 = vsub.f32 %v332, %v908
    %v1269 = vsub.f32 %v333, %v909
    %v1270 = vsub.f32 %v334, %v910
    %v1271 = vsub.f32 %v335, %v911
    %v1272 = vsub.f32 %v336, %v912
    %v1273 = vsub.f32 %v337, %v913
    %v1274 = vsub.f32 %v338, %v914
    %v1275 = vsub.f32 %v339, %v915
    %v1276 = vsub.f32 %v340, %v916
    %v1277 = vsub.f32 %v341, %v917
    %v1278 = vsub.f32 %v342, %v918
    %v1279 = vsub.f32 %v343, %v919
    %v1280 = vsub.f32 %v344, %v920
    %v1281 = vsub.f32 %v345, %v921
    %v1282 = vsub.f32 %v346, %v922
    %v1283 = vsub.f32 %v347, %v923
    %v1284 = vsub.f32 %v348, %v924
    %v1285 = vsub.f32 %v349, %v925
    %v1286 = vsub.f32 %v350, %v926
    %v1287 = vsub.f32 %v351, %v927
    %v1288 = vsub.f32 %v352, %v928
    %v1289 = vsub.f32 %v353, %v929
    %v1290 = vsub.f32 %v354, %v930
    %v1291 = vsub.f32 %v355, %v931
    %v1292 = vsub.f32 %v356, %v932
    %v1293 = vsub.f32 %v357, %v933
    %v1294 = vsub.f32 %v358, %v934
    %v1295 = vsub.f32 %v359, %v935
    %v1296 = vsub.f32 %v360, %v936
    %v1297 = vsub.f32 %v361, %v937
    %v1298 = vsub.f32 %v362, %v938
    %v1299 = vsub.f32 %v363, %v939
    %v1300 = vsub.f32 %v364, %v940
    %v1301 = vsub.f32 %v365, %v941
    %v1302 = vsub.f32 %v366, %v942
    %v1303 = vsub.f32 %v367, %v943
    %v1304 = vsub.f32 %v368, %v944
    %v1305 = vsub.f32 %v369, %v945
    %v1306 = vsub.f32 %v370, %v946
    %v1307 = vsub.f32 %v371, %v947
    %v1308 = vsub.f32 %v372, %v948
    %v1309 = vsub.f32 %v373, %v949
    %v1310 = vsub.f32 %v374, %v950
    %v1311 = vsub.f32 %v375, %v951
    %v1312 = vsub.f32 %v376, %v952
    %v1313 = vsub.f32 %v377, %v953
    %v1314 = vsub.f32 %v378, %v954
    %v1315 = vsub.f32 %v379, %v955
    %v1316 = vsub.f32 %v380, %v956
    %v1317 = vsub.f32 %v381, %v957
    %v1318 = vsub.f32 %v382, %v958
    %v1319 = vsub.f32 %v383, %v959
    %v1320 = vsub.f32 %v384, %v960
    %v1321 = vsub.f32 %v385, %v961
    %v1322 = vsub.f32 %v386, %v962
    %v1323 = vsub.f32 %v387, %v963
    %v1324 = vpack.c.bf16 %v969, %v964
    %v1325 = vpack.c.bf16 %v970, %v965
    %v1326 = vpack.c.bf16 %v971, %v966
    %v1327 = vpack.c.bf16 %v972, %v967
    %v1328 = vpack.c.bf16 %v973, %v968
    %v1329 = vpack.c.bf16 %v979, %v974
    %v1330 = vpack.c.bf16 %v980, %v975
    %v1331 = vpack.c.bf16 %v981, %v976
    %v1332 = vpack.c.bf16 %v982, %v977
    %v1333 = vpack.c.bf16 %v983, %v978
    %v1334 = vpack.c.bf16 %v989, %v984
    %v1335 = vpack.c.bf16 %v990, %v985
    %v1336 = vpack.c.bf16 %v991, %v986
    %v1337 = vpack.c.bf16 %v992, %v987
    %v1338 = vpack.c.bf16 %v993, %v988
    %v1339 = vpack.c.bf16 %v999, %v994
    %v1340 = vpack.c.bf16 %v1000, %v995
    %v1341 = vpack.c.bf16 %v1001, %v996
    %v1342 = vpack.c.bf16 %v1002, %v997
    %v1343 = vpack.c.bf16 %v1003, %v998
    %v1344 = vpack.c.bf16 %v1009, %v1004
    %v1345 = vpack.c.bf16 %v1010, %v1005
    %v1346 = vpack.c.bf16 %v1011, %v1006
    %v1347 = vpack.c.bf16 %v1012, %v1007
    %v1348 = vpack.c.bf16 %v1013, %v1008
    %v1349 = vpack.c.bf16 %v1019, %v1014
    %v1350 = vpack.c.bf16 %v1020, %v1015
    %v1351 = vpack.c.bf16 %v1021, %v1016
    %v1352 = vpack.c.bf16 %v1022, %v1017
    %v1353 = vpack.c.bf16 %v1023, %v1018
    %v1354 = vpack.c.bf16 %v1029, %v1024
    %v1355 = vpack.c.bf16 %v1030, %v1025
    %v1356 = vpack.c.bf16 %v1031, %v1026
    %v1357 = vpack.c.bf16 %v1032, %v1027
    %v1358 = vpack.c.bf16 %v1033, %v1028
    %v1359 = vpack.c.bf16 %v1039, %v1034
    %v1360 = vpack.c.bf16 %v1040, %v1035
    %v1361 = vpack.c.bf16 %v1041, %v1036
    %v1362 = vpack.c.bf16 %v1042, %v1037
    %v1363 = vpack.c.bf16 %v1043, %v1038
    %v1364 = vpack.c.bf16 %v1049, %v1044
    %v1365 = vpack.c.bf16 %v1050, %v1045
    %v1366 = vpack.c.bf16 %v1051, %v1046
    %v1367 = vpack.c.bf16 %v1052, %v1047
    %v1368 = vpack.c.bf16 %v1053, %v1048
    %v1369 = vpack.c.bf16 %v1059, %v1054
    %v1370 = vpack.c.bf16 %v1060, %v1055
    %v1371 = vpack.c.bf16 %v1061, %v1056
    %v1372 = vpack.c.bf16 %v1062, %v1057
    %v1373 = vpack.c.bf16 %v1063, %v1058
    %v1374 = vpack.c.bf16 %v1069, %v1064
    %v1375 = vpack.c.bf16 %v1070, %v1065
    %v1376 = vpack.c.bf16 %v1071, %v1066
    %v1377 = vpack.c.bf16 %v1072, %v1067
    %v1378 = vpack.c.bf16 %v1073, %v1068
    %v1379 = vpack.c.bf16 %v1079, %v1074
    %v1380 = vpack.c.bf16 %v1080, %v1075
    %v1381 = vpack.c.bf16 %v1081, %v1076
    %v1382 = vpack.c.bf16 %v1082, %v1077
    %v1383 = vpack.c.bf16 %v1083, %v1078
    %v1384 = vpack.c.bf16 %v1089, %v1084
    %v1385 = vpack.c.bf16 %v1090, %v1085
    %v1386 = vpack.c.bf16 %v1091, %v1086
    %v1387 = vpack.c.bf16 %v1092, %v1087
    %v1388 = vpack.c.bf16 %v1093, %v1088
    %v1389 = vpack.c.bf16 %v1099, %v1094
    %v1390 = vpack.c.bf16 %v1100, %v1095
    %v1391 = vpack.c.bf16 %v1101, %v1096
    %v1392 = vpack.c.bf16 %v1102, %v1097
    %v1393 = vpack.c.bf16 %v1103, %v1098
    %v1394 = vpack.c.bf16 %v1109, %v1104
    %v1395 = vpack.c.bf16 %v1110, %v1105
    %v1396 = vpack.c.bf16 %v1111, %v1106
    %v1397 = vpack.c.bf16 %v1112, %v1107
    %v1398 = vpack.c.bf16 %v1113, %v1108
    %v1399 = vpack.c.bf16 %v1119, %v1114
    %v1400 = vpack.c.bf16 %v1120, %v1115
    %v1401 = vpack.c.bf16 %v1121, %v1116
    %v1402 = vpack.c.bf16 %v1122, %v1117
    %v1403 = vpack.c.bf16 %v1123, %v1118
    %v1404 = vpack.c.bf16 %v1129, %v1124
    %v1405 = vpack.c.bf16 %v1130, %v1125
    %v1406 = vpack.c.bf16 %v1131, %v1126
    %v1407 = vpack.c.bf16 %v1132, %v1127
    %v1408 = vpack.c.bf16 %v1133, %v1128
    %v1409 = vpack.c.bf16 %v1139, %v1134
    %v1410 = vpack.c.bf16 %v1140, %v1135
    %v1411 = vpack.c.bf16 %v1141, %v1136
    %v1412 = vpack.c.bf16 %v1142, %v1137
    %v1413 = vpack.c.bf16 %v1143, %v1138
    %v1414 = vpack.c.bf16 %v1149, %v1144
    %v1415 = vpack.c.bf16 %v1150, %v1145
    %v1416 = vpack.c.bf16 %v1151, %v1146
    %v1417 = vpack.c.bf16 %v1152, %v1147
    %v1418 = vpack.c.bf16 %v1153, %v1148
    %v1419 = vpack.c.bf16 %v1159, %v1154
    %v1420 = vpack.c.bf16 %v1160, %v1155
    %v1421 = vpack.c.bf16 %v1161, %v1156
    %v1422 = vpack.c.bf16 %v1162, %v1157
    %v1423 = vpack.c.bf16 %v1163, %v1158
    %v1424 = vpack.c.bf16 %v1169, %v1164
    %v1425 = vpack.c.bf16 %v1170, %v1165
    %v1426 = vpack.c.bf16 %v1171, %v1166
    %v1427 = vpack.c.bf16 %v1172, %v1167
    %v1428 = vpack.c.bf16 %v1173, %v1168
    %v1429 = vpack.c.bf16 %v1179, %v1174
    %v1430 = vpack.c.bf16 %v1180, %v1175
    %v1431 = vpack.c.bf16 %v1181, %v1176
    %v1432 = vpack.c.bf16 %v1182, %v1177
    %v1433 = vpack.c.bf16 %v1183, %v1178
    %v1434 = vpack.c.bf16 %v1189, %v1184
    %v1435 = vpack.c.bf16 %v1190, %v1185
    %v1436 = vpack.c.bf16 %v1191, %v1186
    %v1437 = vpack.c.bf16 %v1192, %v1187
    %v1438 = vpack.c.bf16 %v1193, %v1188
    %v1439 = vpack.c.bf16 %v1199, %v1194
    %v1440 = vpack.c.bf16 %v1200, %v1195
    %v1441 = vpack.c.bf16 %v1201, %v1196
    %v1442 = vpack.c.bf16 %v1202, %v1197
    %v1443 = vpack.c.bf16 %v1203, %v1198
    %v1444 = vpack.c.bf16 %v1209, %v1204
    %v1445 = vpack.c.bf16 %v1210, %v1205
    %v1446 = vpack.c.bf16 %v1211, %v1206
    %v1447 = vpack.c.bf16 %v1212, %v1207
    %v1448 = vpack.c.bf16 %v1213, %v1208
    %v1449 = vpack.c.bf16 %v1219, %v1214
    %v1450 = vpack.c.bf16 %v1220, %v1215
    %v1451 = vpack.c.bf16 %v1221, %v1216
    %v1452 = vpack.c.bf16 %v1222, %v1217
    %v1453 = vpack.c.bf16 %v1223, %v1218
    %v1454 = vpack.c.bf16 %v1229, %v1224
    %v1455 = vpack.c.bf16 %v1230, %v1225
    %v1456 = vpack.c.bf16 %v1231, %v1226
    %v1457 = vpack.c.bf16 %v1232, %v1227
    %v1458 = vpack.c.bf16 %v1233, %v1228
    %v1459 = vpack.c.bf16 %v1239, %v1234
    %v1460 = vpack.c.bf16 %v1240, %v1235
    %v1461 = vpack.c.bf16 %v1241, %v1236
    %v1462 = vpack.c.bf16 %v1242, %v1237
    %v1463 = vpack.c.bf16 %v1243, %v1238
    %v1464 = vpack.c.bf16 %v1249, %v1244
    %v1465 = vpack.c.bf16 %v1250, %v1245
    %v1466 = vpack.c.bf16 %v1251, %v1246
    %v1467 = vpack.c.bf16 %v1252, %v1247
    %v1468 = vpack.c.bf16 %v1253, %v1248
    %v1469 = vpack.c.bf16 %v1259, %v1254
    %v1470 = vpack.c.bf16 %v1260, %v1255
    %v1471 = vpack.c.bf16 %v1261, %v1256
    %v1472 = vpack.c.bf16 %v1262, %v1257
    %v1473 = vpack.c.bf16 %v1263, %v1258
    %v1474 = vpack.c.bf16 %v1269, %v1264
    %v1475 = vpack.c.bf16 %v1270, %v1265
    %v1476 = vpack.c.bf16 %v1271, %v1266
    %v1477 = vpack.c.bf16 %v1272, %v1267
    %v1478 = vpack.c.bf16 %v1273, %v1268
    %v1479 = vpack.c.bf16 %v1279, %v1274
    %v1480 = vpack.c.bf16 %v1280, %v1275
    %v1481 = vpack.c.bf16 %v1281, %v1276
    %v1482 = vpack.c.bf16 %v1282, %v1277
    %v1483 = vpack.c.bf16 %v1283, %v1278
    %v1484 = vpack.c.bf16 %v1289, %v1284
    %v1485 = vpack.c.bf16 %v1290, %v1285
    %v1486 = vpack.c.bf16 %v1291, %v1286
    %v1487 = vpack.c.bf16 %v1292, %v1287
    %v1488 = vpack.c.bf16 %v1293, %v1288
    %v1489 = vpack.c.bf16 %v1299, %v1294
    %v1490 = vpack.c.bf16 %v1300, %v1295
    %v1491 = vpack.c.bf16 %v1301, %v1296
    %v1492 = vpack.c.bf16 %v1302, %v1297
    %v1493 = vpack.c.bf16 %v1303, %v1298
    %v1494 = vpack.c.bf16 %v1309, %v1304
    %v1495 = vpack.c.bf16 %v1310, %v1305
    %v1496 = vpack.c.bf16 %v1311, %v1306
    %v1497 = vpack.c.bf16 %v1312, %v1307
    %v1498 = vpack.c.bf16 %v1313, %v1308
    %v1499 = vpack.c.bf16 %v1319, %v1314
    %v1500 = vpack.c.bf16 %v1320, %v1315
    %v1501 = vpack.c.bf16 %v1321, %v1316
    %v1502 = vpack.c.bf16 %v1322, %v1317
    %v1503 = vpack.c.bf16 %v1323, %v1318
    %v1504 = vld [vmem:[%s1] sm:$0xff]
    %v1505 = vld [vmem:[%s1 + $0x8] sm:$0xff]
    %v1506 = vld [vmem:[%s1 + $0x10] sm:$0xff]
    %v1507 = vld [vmem:[%s1 + $0x18] sm:$0xff]
    %v1508 = vld [vmem:[%s1 + $0x20] sm:$0xff]
    %v1509 = vld [vmem:[%s1 + $0x28] sm:$0xff]
    %v1510 = vld [vmem:[%s1 + $0x30] sm:$0xff]
    %v1511 = vld [vmem:[%s1 + $0x38] sm:$0xff]
    %v1512 = vld [vmem:[%s1 + $0x40] sm:$0xff]
    %v1513 = vld [vmem:[%s1 + $0x48] sm:$0xff]
    %v1514 = vld [vmem:[%s1 + $0x50] sm:$0xff]
    %v1515 = vld [vmem:[%s1 + $0x58] sm:$0xff]
    %v1516 = vld [vmem:[%s1 + $0x60] sm:$0xff]
    %v1517 = vld [vmem:[%s1 + $0x68] sm:$0xff]
    %v1518 = vld [vmem:[%s1 + $0x70] sm:$0xff]
    %v1519 = vld [vmem:[%s1 + $0x78] sm:$0xff]
    %v1520 = vld [vmem:[%s1 + $0x80] sm:$0xff]
    %v1521 = vld [vmem:[%s1 + $0x88] sm:$0xff]
    %v1522 = vld [vmem:[%s1 + $0x90] sm:$0xff]
    %v1523 = vld [vmem:[%s1 + $0x98] sm:$0xff]
    %v1524 = vld [vmem:[%s1 + $0xa0] sm:$0xff]
    %v1525 = vld [vmem:[%s1 + $0xa8] sm:$0xff]
    %v1526 = vld [vmem:[%s1 + $0xb0] sm:$0xff]
    %v1527 = vld [vmem:[%s1 + $0xb8] sm:$0xff]
    %v1528 = vld [vmem:[%s1 + $0xc0] sm:$0xff]
    %v1529 = vld [vmem:[%s1 + $0xc8] sm:$0xff]
    %v1530 = vld [vmem:[%s1 + $0xd0] sm:$0xff]
    %v1531 = vld [vmem:[%s1 + $0xd8] sm:$0xff]
    %v1532 = vld [vmem:[%s1 + $0xe0] sm:$0xff]
    %v1533 = vld [vmem:[%s1 + $0xe8] sm:$0xff]
    %v1534 = vld [vmem:[%s1 + $0xf0] sm:$0xff]
    %v1535 = vld [vmem:[%s1 + $0xf8] sm:$0xff]
    %v1536 = vld [vmem:[%s1 + $0x100] sm:$0xff]
    %v1537 = vld [vmem:[%s1 + $0x108] sm:$0xff]
    %v1538 = vld [vmem:[%s1 + $0x110] sm:$0xff]
    %v1539 = vld [vmem:[%s1 + $0x118] sm:$0xff]
    %v1540 = vld [vmem:[%s1 + $0x120] sm:$0xff]
    %v1541 = vld [vmem:[%s1 + $0x128] sm:$0xff]
    %v1542 = vld [vmem:[%s1 + $0x130] sm:$0xff]
    %v1543 = vld [vmem:[%s1 + $0x138] sm:$0xff]
    %v1544 = vld [vmem:[%s1 + $0x140] sm:$0xff]
    %v1545 = vld [vmem:[%s1 + $0x148] sm:$0xff]
    %v1546 = vld [vmem:[%s1 + $0x150] sm:$0xff]
    %v1547 = vld [vmem:[%s1 + $0x158] sm:$0xff]
    %v1548 = vld [vmem:[%s1 + $0x160] sm:$0xff]
    %v1549 = vld [vmem:[%s1 + $0x168] sm:$0xff]
    %v1550 = vld [vmem:[%s1 + $0x170] sm:$0xff]
    %v1551 = vld [vmem:[%s1 + $0x178] sm:$0xff]
    %v1552 = vld [vmem:[%s1 + $0x180] sm:$0xff]
    %v1553 = vld [vmem:[%s1 + $0x188] sm:$0xff]
    %v1554 = vld [vmem:[%s1 + $0x190] sm:$0xff]
    %v1555 = vld [vmem:[%s1 + $0x198] sm:$0xff]
    %v1556 = vld [vmem:[%s1 + $0x1a0] sm:$0xff]
    %v1557 = vld [vmem:[%s1 + $0x1a8] sm:$0xff]
    %v1558 = vld [vmem:[%s1 + $0x1b0] sm:$0xff]
    %v1559 = vld [vmem:[%s1 + $0x1b8] sm:$0xff]
    %v1560 = vld [vmem:[%s1 + $0x1c0] sm:$0xff]
    %v1561 = vld [vmem:[%s1 + $0x1c8] sm:$0xff]
    %v1562 = vld [vmem:[%s1 + $0x1d0] sm:$0xff]
    %v1563 = vld [vmem:[%s1 + $0x1d8] sm:$0xff]
    %v1564 = vld [vmem:[%s1 + $0x1e0] sm:$0xff]
    %v1565 = vld [vmem:[%s1 + $0x1e8] sm:$0xff]
    %v1566 = vld [vmem:[%s1 + $0x1f0] sm:$0xff]
    %v1567 = vld [vmem:[%s1 + $0x1f8] sm:$0xff]
    %v1568 = vld [vmem:[%s1 + $0x200] sm:$0xff]
    %v1569 = vld [vmem:[%s1 + $0x208] sm:$0xff]
    %v1570 = vld [vmem:[%s1 + $0x210] sm:$0xff]
    %v1571 = vld [vmem:[%s1 + $0x218] sm:$0xff]
    %v1572 = vld [vmem:[%s1 + $0x220] sm:$0xff]
    %v1573 = vld [vmem:[%s1 + $0x228] sm:$0xff]
    %v1574 = vld [vmem:[%s1 + $0x230] sm:$0xff]
    %v1575 = vld [vmem:[%s1 + $0x238] sm:$0xff]
    %v1576 = vld [vmem:[%s1 + $0x240] sm:$0xff]
    %v1577 = vld [vmem:[%s1 + $0x248] sm:$0xff]
    %v1578 = vld [vmem:[%s1 + $0x250] sm:$0xff]
    %v1579 = vld [vmem:[%s1 + $0x258] sm:$0xff]
    %v1580 = vld [vmem:[%s1 + $0x260] sm:$0xff]
    %v1581 = vld [vmem:[%s1 + $0x268] sm:$0xff]
    %v1582 = vld [vmem:[%s1 + $0x270] sm:$0xff]
    %v1583 = vld [vmem:[%s1 + $0x278] sm:$0xff]
    %v1584 = vld [vmem:[%s1 + $0x280] sm:$0xff]
    %v1585 = vld [vmem:[%s1 + $0x288] sm:$0xff]
    %v1586 = vld [vmem:[%s1 + $0x290] sm:$0xff]
    %v1587 = vld [vmem:[%s1 + $0x298] sm:$0xff]
    %v1588 = vld [vmem:[%s1 + $0x2a0] sm:$0xff]
    %v1589 = vld [vmem:[%s1 + $0x2a8] sm:$0xff]
    %v1590 = vld [vmem:[%s1 + $0x2b0] sm:$0xff]
    %v1591 = vld [vmem:[%s1 + $0x2b8] sm:$0xff]
    %v1592 = vld [vmem:[%s1 + $0x2c0] sm:$0xff]
    %v1593 = vld [vmem:[%s1 + $0x2c8] sm:$0xff]
    %v1594 = vld [vmem:[%s1 + $0x2d0] sm:$0xff]
    %v1595 = vld [vmem:[%s1 + $0x2d8] sm:$0xff]
    %v1596 = vld [vmem:[%s1 + $0x2e0] sm:$0xff]
    %v1597 = vld [vmem:[%s1 + $0x2e8] sm:$0xff]
    %v1598 = vld [vmem:[%s1 + $0x2f0] sm:$0xff]
    %v1599 = vld [vmem:[%s1 + $0x2f8] sm:$0xff]
    %v1600 = vld [vmem:[%s1 + $0x300] sm:$0xff]
    %v1601 = vld [vmem:[%s1 + $0x308] sm:$0xff]
    %v1602 = vld [vmem:[%s1 + $0x310] sm:$0xff]
    %v1603 = vld [vmem:[%s1 + $0x318] sm:$0xff]
    %v1604 = vld [vmem:[%s1 + $0x320] sm:$0xff]
    %v1605 = vld [vmem:[%s1 + $0x328] sm:$0xff]
    %v1606 = vld [vmem:[%s1 + $0x330] sm:$0xff]
    %v1607 = vld [vmem:[%s1 + $0x338] sm:$0xff]
    %v1608 = vld [vmem:[%s1 + $0x340] sm:$0xff]
    %v1609 = vld [vmem:[%s1 + $0x348] sm:$0xff]
    %v1610 = vld [vmem:[%s1 + $0x350] sm:$0xff]
    %v1611 = vld [vmem:[%s1 + $0x358] sm:$0xff]
    %v1612 = vld [vmem:[%s1 + $0x360] sm:$0xff]
    %v1613 = vld [vmem:[%s1 + $0x368] sm:$0xff]
    %v1614 = vld [vmem:[%s1 + $0x370] sm:$0xff]
    %v1615 = vld [vmem:[%s1 + $0x378] sm:$0xff]
    %v1616 = vld [vmem:[%s1 + $0x380] sm:$0xff]
    %v1617 = vld [vmem:[%s1 + $0x388] sm:$0xff]
    %v1618 = vld [vmem:[%s1 + $0x390] sm:$0xff]
    %v1619 = vld [vmem:[%s1 + $0x398] sm:$0xff]
    %v1620 = vld [vmem:[%s1 + $0x3a0] sm:$0xff]
    %v1621 = vld [vmem:[%s1 + $0x3a8] sm:$0xff]
    %v1622 = vld [vmem:[%s1 + $0x3b0] sm:$0xff]
    %v1623 = vld [vmem:[%s1 + $0x3b8] sm:$0xff]
    %v1624 = vld [vmem:[%s1 + $0x3c0] sm:$0xff]
    %v1625 = vld [vmem:[%s1 + $0x3c8] sm:$0xff]
    %v1626 = vld [vmem:[%s1 + $0x3d0] sm:$0xff]
    %v1627 = vld [vmem:[%s1 + $0x3d8] sm:$0xff]
    %v1628 = vld [vmem:[%s1 + $0x3e0] sm:$0xff]
    %v1629 = vld [vmem:[%s1 + $0x3e8] sm:$0xff]
    %v1630 = vld [vmem:[%s1 + $0x3f0] sm:$0xff]
    %v1631 = vld [vmem:[%s1 + $0x3f8] sm:$0xff]
    %v1632 = vld [vmem:[%s1 + $0x400] sm:$0xff]
    %v1633 = vld [vmem:[%s1 + $0x408] sm:$0xff]
    %v1634 = vld [vmem:[%s1 + $0x410] sm:$0xff]
    %v1635 = vld [vmem:[%s1 + $0x418] sm:$0xff]
    %v1636 = vld [vmem:[%s1 + $0x420] sm:$0xff]
    %v1637 = vld [vmem:[%s1 + $0x428] sm:$0xff]
    %v1638 = vld [vmem:[%s1 + $0x430] sm:$0xff]
    %v1639 = vld [vmem:[%s1 + $0x438] sm:$0xff]
    %v1640 = vld [vmem:[%s1 + $0x440] sm:$0xff]
    %v1641 = vld [vmem:[%s1 + $0x448] sm:$0xff]
    %v1642 = vld [vmem:[%s1 + $0x450] sm:$0xff]
    %v1643 = vld [vmem:[%s1 + $0x458] sm:$0xff]
    %v1644 = vld [vmem:[%s1 + $0x460] sm:$0xff]
    %v1645 = vld [vmem:[%s1 + $0x468] sm:$0xff]
    %v1646 = vld [vmem:[%s1 + $0x470] sm:$0xff]
    %v1647 = vld [vmem:[%s1 + $0x478] sm:$0xff]
    %v1648 = vpack.c.bf16 %v1505, %v1504
    %v1649 = vpack.c.bf16 %v1507, %v1506
    %v1650 = vpack.c.bf16 %v1509, %v1508
    %v1651 = vpack.c.bf16 %v1511, %v1510
    %v1652 = vpack.c.bf16 %v1513, %v1512
    %v1653 = vpack.c.bf16 %v1515, %v1514
    %v1654 = vpack.c.bf16 %v1517, %v1516
    %v1655 = vpack.c.bf16 %v1519, %v1518
    %v1656 = vpack.c.bf16 %v1521, %v1520
    %v1657 = vpack.c.bf16 %v1523, %v1522
    %v1658 = vpack.c.bf16 %v1525, %v1524
    %v1659 = vpack.c.bf16 %v1527, %v1526
    %v1660 = vpack.c.bf16 %v1529, %v1528
    %v1661 = vpack.c.bf16 %v1531, %v1530
    %v1662 = vpack.c.bf16 %v1533, %v1532
    %v1663 = vpack.c.bf16 %v1535, %v1534
    %v1664 = vpack.c.bf16 %v1537, %v1536
    %v1665 = vpack.c.bf16 %v1539, %v1538
    %v1666 = vpack.c.bf16 %v1541, %v1540
    %v1667 = vpack.c.bf16 %v1543, %v1542
    %v1668 = vpack.c.bf16 %v1545, %v1544
    %v1669 = vpack.c.bf16 %v1547, %v1546
    %v1670 = vpack.c.bf16 %v1549, %v1548
    %v1671 = vpack.c.bf16 %v1551, %v1550
    %v1672 = vpack.c.bf16 %v1553, %v1552
    %v1673 = vpack.c.bf16 %v1555, %v1554
    %v1674 = vpack.c.bf16 %v1557, %v1556
    %v1675 = vpack.c.bf16 %v1559, %v1558
    %v1676 = vpack.c.bf16 %v1561, %v1560
    %v1677 = vpack.c.bf16 %v1563, %v1562
    %v1678 = vpack.c.bf16 %v1565, %v1564
    %v1679 = vpack.c.bf16 %v1567, %v1566
    %v1680 = vpack.c.bf16 %v1569, %v1568
    %v1681 = vpack.c.bf16 %v1571, %v1570
    %v1682 = vpack.c.bf16 %v1573, %v1572
    %v1683 = vpack.c.bf16 %v1575, %v1574
    %v1684 = vpack.c.bf16 %v1577, %v1576
    %v1685 = vpack.c.bf16 %v1579, %v1578
    %v1686 = vpack.c.bf16 %v1581, %v1580
    %v1687 = vpack.c.bf16 %v1583, %v1582
    %v1688 = vpack.c.bf16 %v1585, %v1584
    %v1689 = vpack.c.bf16 %v1587, %v1586
    %v1690 = vpack.c.bf16 %v1589, %v1588
    %v1691 = vpack.c.bf16 %v1591, %v1590
    %v1692 = vpack.c.bf16 %v1593, %v1592
    %v1693 = vpack.c.bf16 %v1595, %v1594
    %v1694 = vpack.c.bf16 %v1597, %v1596
    %v1695 = vpack.c.bf16 %v1599, %v1598
    %v1696 = vpack.c.bf16 %v1601, %v1600
    %v1697 = vpack.c.bf16 %v1603, %v1602
    %v1698 = vpack.c.bf16 %v1605, %v1604
    %v1699 = vpack.c.bf16 %v1607, %v1606
    %v1700 = vpack.c.bf16 %v1609, %v1608
    %v1701 = vpack.c.bf16 %v1611, %v1610
    %v1702 = vpack.c.bf16 %v1613, %v1612
    %v1703 = vpack.c.bf16 %v1615, %v1614
    %v1704 = vpack.c.bf16 %v1617, %v1616
    %v1705 = vpack.c.bf16 %v1619, %v1618
    %v1706 = vpack.c.bf16 %v1621, %v1620
    %v1707 = vpack.c.bf16 %v1623, %v1622
    %v1708 = vpack.c.bf16 %v1625, %v1624
    %v1709 = vpack.c.bf16 %v1627, %v1626
    %v1710 = vpack.c.bf16 %v1629, %v1628
    %v1711 = vpack.c.bf16 %v1631, %v1630
    %v1712 = vpack.c.bf16 %v1633, %v1632
    %v1713 = vpack.c.bf16 %v1635, %v1634
    %v1714 = vpack.c.bf16 %v1637, %v1636
    %v1715 = vpack.c.bf16 %v1639, %v1638
    %v1716 = vpack.c.bf16 %v1641, %v1640
    %v1717 = vpack.c.bf16 %v1643, %v1642
    %v1718 = vpack.c.bf16 %v1645, %v1644
    %v1719 = vpack.c.bf16 %v1647, %v1646
    %v1720 = vunpack.c.l.bf16 %v1648
    %v1721 = vunpack.c.h.bf16 %v1648
    %v1722 = vunpack.c.l.bf16 %v1649
    %v1723 = vunpack.c.h.bf16 %v1649
    %v1724 = vunpack.c.l.bf16 %v1650
    %v1725 = vunpack.c.h.bf16 %v1650
    %v1726 = vunpack.c.l.bf16 %v1651
    %v1727 = vunpack.c.h.bf16 %v1651
    %v1728 = vunpack.c.l.bf16 %v1652
    %v1729 = vunpack.c.h.bf16 %v1652
    %v1730 = vunpack.c.l.bf16 %v1653
    %v1731 = vunpack.c.h.bf16 %v1653
    %v1732 = vunpack.c.l.bf16 %v1654
    %v1733 = vunpack.c.h.bf16 %v1654
    %v1734 = vunpack.c.l.bf16 %v1655
    %v1735 = vunpack.c.h.bf16 %v1655
    %v1736 = vunpack.c.l.bf16 %v1656
    %v1737 = vunpack.c.h.bf16 %v1656
    %v1738 = vunpack.c.l.bf16 %v1657
    %v1739 = vunpack.c.h.bf16 %v1657
    %v1740 = vunpack.c.l.bf16 %v1658
    %v1741 = vunpack.c.h.bf16 %v1658
    %v1742 = vunpack.c.l.bf16 %v1659
    %v1743 = vunpack.c.h.bf16 %v1659
    %v1744 = vunpack.c.l.bf16 %v1660
    %v1745 = vunpack.c.h.bf16 %v1660
    %v1746 = vunpack.c.l.bf16 %v1661
    %v1747 = vunpack.c.h.bf16 %v1661
    %v1748 = vunpack.c.l.bf16 %v1662
    %v1749 = vunpack.c.h.bf16 %v1662
    %v1750 = vunpack.c.l.bf16 %v1663
    %v1751 = vunpack.c.h.bf16 %v1663
    %v1752 = vunpack.c.l.bf16 %v1664
    %v1753 = vunpack.c.h.bf16 %v1664
    %v1754 = vunpack.c.l.bf16 %v1665
    %v1755 = vunpack.c.h.bf16 %v1665
    %v1756 = vunpack.c.l.bf16 %v1666
    %v1757 = vunpack.c.h.bf16 %v1666
    %v1758 = vunpack.c.l.bf16 %v1667
    %v1759 = vunpack.c.h.bf16 %v1667
    %v1760 = vunpack.c.l.bf16 %v1668
    %v1761 = vunpack.c.h.bf16 %v1668
    %v1762 = vunpack.c.l.bf16 %v1669
    %v1763 = vunpack.c.h.bf16 %v1669
    %v1764 = vunpack.c.l.bf16 %v1670
    %v1765 = vunpack.c.h.bf16 %v1670
    %v1766 = vunpack.c.l.bf16 %v1671
    %v1767 = vunpack.c.h.bf16 %v1671
    %v1768 = vunpack.c.l.bf16 %v1672
    %v1769 = vunpack.c.h.bf16 %v1672
    %v1770 = vunpack.c.l.bf16 %v1673
    %v1771 = vunpack.c.h.bf16 %v1673
    %v1772 = vunpack.c.l.bf16 %v1674
    %v1773 = vunpack.c.h.bf16 %v1674
    %v1774 = vunpack.c.l.bf16 %v1675
    %v1775 = vunpack.c.h.bf16 %v1675
    %v1776 = vunpack.c.l.bf16 %v1676
    %v1777 = vunpack.c.h.bf16 %v1676
    %v1778 = vunpack.c.l.bf16 %v1677
    %v1779 = vunpack.c.h.bf16 %v1677
    %v1780 = vunpack.c.l.bf16 %v1678
    %v1781 = vunpack.c.h.bf16 %v1678
    %v1782 = vunpack.c.l.bf16 %v1679
    %v1783 = vunpack.c.h.bf16 %v1679
    %v1784 = vunpack.c.l.bf16 %v1680
    %v1785 = vunpack.c.h.bf16 %v1680
    %v1786 = vunpack.c.l.bf16 %v1681
    %v1787 = vunpack.c.h.bf16 %v1681
    %v1788 = vunpack.c.l.bf16 %v1682
    %v1789 = vunpack.c.h.bf16 %v1682
    %v1790 = vunpack.c.l.bf16 %v1683
    %v1791 = vunpack.c.h.bf16 %v1683
    %v1792 = vunpack.c.l.bf16 %v1684
    %v1793 = vunpack.c.h.bf16 %v1684
    %v1794 = vunpack.c.l.bf16 %v1685
    %v1795 = vunpack.c.h.bf16 %v1685
    %v1796 = vunpack.c.l.bf16 %v1686
    %v1797 = vunpack.c.h.bf16 %v1686
    %v1798 = vunpack.c.l.bf16 %v1687
    %v1799 = vunpack.c.h.bf16 %v1687
    %v1800 = vunpack.c.l.bf16 %v1688
    %v1801 = vunpack.c.h.bf16 %v1688
    %v1802 = vunpack.c.l.bf16 %v1689
    %v1803 = vunpack.c.h.bf16 %v1689
    %v1804 = vunpack.c.l.bf16 %v1690
    %v1805 = vunpack.c.h.bf16 %v1690
    %v1806 = vunpack.c.l.bf16 %v1691
    %v1807 = vunpack.c.h.bf16 %v1691
    %v1808 = vunpack.c.l.bf16 %v1692
    %v1809 = vunpack.c.h.bf16 %v1692
    %v1810 = vunpack.c.l.bf16 %v1693
    %v1811 = vunpack.c.h.bf16 %v1693
    %v1812 = vunpack.c.l.bf16 %v1694
    %v1813 = vunpack.c.h.bf16 %v1694
    %v1814 = vunpack.c.l.bf16 %v1695
    %v1815 = vunpack.c.h.bf16 %v1695
    %v1816 = vunpack.c.l.bf16 %v1696
    %v1817 = vunpack.c.h.bf16 %v1696
    %v1818 = vunpack.c.l.bf16 %v1697
    %v1819 = vunpack.c.h.bf16 %v1697
    %v1820 = vunpack.c.l.bf16 %v1698
    %v1821 = vunpack.c.h.bf16 %v1698
    %v1822 = vunpack.c.l.bf16 %v1699
    %v1823 = vunpack.c.h.bf16 %v1699
    %v1824 = vunpack.c.l.bf16 %v1700
    %v1825 = vunpack.c.h.bf16 %v1700
    %v1826 = vunpack.c.l.bf16 %v1701
    %v1827 = vunpack.c.h.bf16 %v1701
    %v1828 = vunpack.c.l.bf16 %v1702
    %v1829 = vunpack.c.h.bf16 %v1702
    %v1830 = vunpack.c.l.bf16 %v1703
    %v1831 = vunpack.c.h.bf16 %v1703
    %v1832 = vunpack.c.l.bf16 %v1704
    %v1833 = vunpack.c.h.bf16 %v1704
    %v1834 = vunpack.c.l.bf16 %v1705
    %v1835 = vunpack.c.h.bf16 %v1705
    %v1836 = vunpack.c.l.bf16 %v1706
    %v1837 = vunpack.c.h.bf16 %v1706
    %v1838 = vunpack.c.l.bf16 %v1707
    %v1839 = vunpack.c.h.bf16 %v1707
    %v1840 = vunpack.c.l.bf16 %v1708
    %v1841 = vunpack.c.h.bf16 %v1708
    %v1842 = vunpack.c.l.bf16 %v1709
    %v1843 = vunpack.c.h.bf16 %v1709
    %v1844 = vunpack.c.l.bf16 %v1710
    %v1845 = vunpack.c.h.bf16 %v1710
    %v1846 = vunpack.c.l.bf16 %v1711
    %v1847 = vunpack.c.h.bf16 %v1711
    %v1848 = vunpack.c.l.bf16 %v1712
    %v1849 = vunpack.c.h.bf16 %v1712
    %v1850 = vunpack.c.l.bf16 %v1713
    %v1851 = vunpack.c.h.bf16 %v1713
    %v1852 = vunpack.c.l.bf16 %v1714
    %v1853 = vunpack.c.h.bf16 %v1714
    %v1854 = vunpack.c.l.bf16 %v1715
    %v1855 = vunpack.c.h.bf16 %v1715
    %v1856 = vunpack.c.l.bf16 %v1716
    %v1857 = vunpack.c.h.bf16 %v1716
    %v1858 = vunpack.c.l.bf16 %v1717
    %v1859 = vunpack.c.h.bf16 %v1717
    %v1860 = vunpack.c.l.bf16 %v1718
    %v1861 = vunpack.c.h.bf16 %v1718
    %v1862 = vunpack.c.l.bf16 %v1719
    %v1863 = vunpack.c.h.bf16 %v1719
    %v1864 = vsub.f32 %v1504, %v1720
    %v1865 = vsub.f32 %v1505, %v1721
    %v1866 = vsub.f32 %v1506, %v1722
    %v1867 = vsub.f32 %v1507, %v1723
    %v1868 = vsub.f32 %v1508, %v1724
    %v1869 = vsub.f32 %v1509, %v1725
    %v1870 = vsub.f32 %v1510, %v1726
    %v1871 = vsub.f32 %v1511, %v1727
    %v1872 = vsub.f32 %v1512, %v1728
    %v1873 = vsub.f32 %v1513, %v1729
    %v1874 = vsub.f32 %v1514, %v1730
    %v1875 = vsub.f32 %v1515, %v1731
    %v1876 = vsub.f32 %v1516, %v1732
    %v1877 = vsub.f32 %v1517, %v1733
    %v1878 = vsub.f32 %v1518, %v1734
    %v1879 = vsub.f32 %v1519, %v1735
    %v1880 = vsub.f32 %v1520, %v1736
    %v1881 = vsub.f32 %v1521, %v1737
    %v1882 = vsub.f32 %v1522, %v1738
    %v1883 = vsub.f32 %v1523, %v1739
    %v1884 = vsub.f32 %v1524, %v1740
    %v1885 = vsub.f32 %v1525, %v1741
    %v1886 = vsub.f32 %v1526, %v1742
    %v1887 = vsub.f32 %v1527, %v1743
    %v1888 = vsub.f32 %v1528, %v1744
    %v1889 = vsub.f32 %v1529, %v1745
    %v1890 = vsub.f32 %v1530, %v1746
    %v1891 = vsub.f32 %v1531, %v1747
    %v1892 = vsub.f32 %v1532, %v1748
    %v1893 = vsub.f32 %v1533, %v1749
    %v1894 = vsub.f32 %v1534, %v1750
    %v1895 = vsub.f32 %v1535, %v1751
    %v1896 = vsub.f32 %v1536, %v1752
    %v1897 = vsub.f32 %v1537, %v1753
    %v1898 = vsub.f32 %v1538, %v1754
    %v1899 = vsub.f32 %v1539, %v1755
    %v1900 = vsub.f32 %v1540, %v1756
    %v1901 = vsub.f32 %v1541, %v1757
    %v1902 = vsub.f32 %v1542, %v1758
    %v1903 = vsub.f32 %v1543, %v1759
    %v1904 = vsub.f32 %v1544, %v1760
    %v1905 = vsub.f32 %v1545, %v1761
    %v1906 = vsub.f32 %v1546, %v1762
    %v1907 = vsub.f32 %v1547, %v1763
    %v1908 = vsub.f32 %v1548, %v1764
    %v1909 = vsub.f32 %v1549, %v1765
    %v1910 = vsub.f32 %v1550, %v1766
    %v1911 = vsub.f32 %v1551, %v1767
    %v1912 = vsub.f32 %v1552, %v1768
    %v1913 = vsub.f32 %v1553, %v1769
    %v1914 = vsub.f32 %v1554, %v1770
    %v1915 = vsub.f32 %v1555, %v1771
    %v1916 = vsub.f32 %v1556, %v1772
    %v1917 = vsub.f32 %v1557, %v1773
    %v1918 = vsub.f32 %v1558, %v1774
    %v1919 = vsub.f32 %v1559, %v1775
    %v1920 = vsub.f32 %v1560, %v1776
    %v1921 = vsub.f32 %v1561, %v1777
    %v1922 = vsub.f32 %v1562, %v1778
    %v1923 = vsub.f32 %v1563, %v1779
    %v1924 = vsub.f32 %v1564, %v1780
    %v1925 = vsub.f32 %v1565, %v1781
    %v1926 = vsub.f32 %v1566, %v1782
    %v1927 = vsub.f32 %v1567, %v1783
    %v1928 = vsub.f32 %v1568, %v1784
    %v1929 = vsub.f32 %v1569, %v1785
    %v1930 = vsub.f32 %v1570, %v1786
    %v1931 = vsub.f32 %v1571, %v1787
    %v1932 = vsub.f32 %v1572, %v1788
    %v1933 = vsub.f32 %v1573, %v1789
    %v1934 = vsub.f32 %v1574, %v1790
    %v1935 = vsub.f32 %v1575, %v1791
    %v1936 = vsub.f32 %v1576, %v1792
    %v1937 = vsub.f32 %v1577, %v1793
    %v1938 = vsub.f32 %v1578, %v1794
    %v1939 = vsub.f32 %v1579, %v1795
    %v1940 = vsub.f32 %v1580, %v1796
    %v1941 = vsub.f32 %v1581, %v1797
    %v1942 = vsub.f32 %v1582, %v1798
    %v1943 = vsub.f32 %v1583, %v1799
    %v1944 = vsub.f32 %v1584, %v1800
    %v1945 = vsub.f32 %v1585, %v1801
    %v1946 = vsub.f32 %v1586, %v1802
    %v1947 = vsub.f32 %v1587, %v1803
    %v1948 = vsub.f32 %v1588, %v1804
    %v1949 = vsub.f32 %v1589, %v1805
    %v1950 = vsub.f32 %v1590, %v1806
    %v1951 = vsub.f32 %v1591, %v1807
    %v1952 = vsub.f32 %v1592, %v1808
    %v1953 = vsub.f32 %v1593, %v1809
    %v1954 = vsub.f32 %v1594, %v1810
    %v1955 = vsub.f32 %v1595, %v1811
    %v1956 = vsub.f32 %v1596, %v1812
    %v1957 = vsub.f32 %v1597, %v1813
    %v1958 = vsub.f32 %v1598, %v1814
    %v1959 = vsub.f32 %v1599, %v1815
    %v1960 = vsub.f32 %v1600, %v1816
    %v1961 = vsub.f32 %v1601, %v1817
    %v1962 = vsub.f32 %v1602, %v1818
    %v1963 = vsub.f32 %v1603, %v1819
    %v1964 = vsub.f32 %v1604, %v1820
    %v1965 = vsub.f32 %v1605, %v1821
    %v1966 = vsub.f32 %v1606, %v1822
    %v1967 = vsub.f32 %v1607, %v1823
    %v1968 = vsub.f32 %v1608, %v1824
    %v1969 = vsub.f32 %v1609, %v1825
    %v1970 = vsub.f32 %v1610, %v1826
    %v1971 = vsub.f32 %v1611, %v1827
    %v1972 = vsub.f32 %v1612, %v1828
    %v1973 = vsub.f32 %v1613, %v1829
    %v1974 = vsub.f32 %v1614, %v1830
    %v1975 = vsub.f32 %v1615, %v1831
    %v1976 = vsub.f32 %v1616, %v1832
    %v1977 = vsub.f32 %v1617, %v1833
    %v1978 = vsub.f32 %v1618, %v1834
    %v1979 = vsub.f32 %v1619, %v1835
    %v1980 = vsub.f32 %v1620, %v1836
    %v1981 = vsub.f32 %v1621, %v1837
    %v1982 = vsub.f32 %v1622, %v1838
    %v1983 = vsub.f32 %v1623, %v1839
    %v1984 = vsub.f32 %v1624, %v1840
    %v1985 = vsub.f32 %v1625, %v1841
    %v1986 = vsub.f32 %v1626, %v1842
    %v1987 = vsub.f32 %v1627, %v1843
    %v1988 = vsub.f32 %v1628, %v1844
    %v1989 = vsub.f32 %v1629, %v1845
    %v1990 = vsub.f32 %v1630, %v1846
    %v1991 = vsub.f32 %v1631, %v1847
    %v1992 = vsub.f32 %v1632, %v1848
    %v1993 = vsub.f32 %v1633, %v1849
    %v1994 = vsub.f32 %v1634, %v1850
    %v1995 = vsub.f32 %v1635, %v1851
    %v1996 = vsub.f32 %v1636, %v1852
    %v1997 = vsub.f32 %v1637, %v1853
    %v1998 = vsub.f32 %v1638, %v1854
    %v1999 = vsub.f32 %v1639, %v1855
    %v2000 = vsub.f32 %v1640, %v1856
    %v2001 = vsub.f32 %v1641, %v1857
    %v2002 = vsub.f32 %v1642, %v1858
    %v2003 = vsub.f32 %v1643, %v1859
    %v2004 = vsub.f32 %v1644, %v1860
    %v2005 = vsub.f32 %v1645, %v1861
    %v2006 = vsub.f32 %v1646, %v1862
    %v2007 = vsub.f32 %v1647, %v1863
    %v2008 = vpack.c.bf16 %v1866, %v1864
    %v2009 = vpack.c.bf16 %v1867, %v1865
    %v2010 = vpack.c.bf16 %v1870, %v1868
    %v2011 = vpack.c.bf16 %v1871, %v1869
    %v2012 = vpack.c.bf16 %v1874, %v1872
    %v2013 = vpack.c.bf16 %v1875, %v1873
    %v2014 = vpack.c.bf16 %v1878, %v1876
    %v2015 = vpack.c.bf16 %v1879, %v1877
    %v2016 = vpack.c.bf16 %v1882, %v1880
    %v2017 = vpack.c.bf16 %v1883, %v1881
    %v2018 = vpack.c.bf16 %v1886, %v1884
    %v2019 = vpack.c.bf16 %v1887, %v1885
    %v2020 = vpack.c.bf16 %v1890, %v1888
    %v2021 = vpack.c.bf16 %v1891, %v1889
    %v2022 = vpack.c.bf16 %v1894, %v1892
    %v2023 = vpack.c.bf16 %v1895, %v1893
    %v2024 = vpack.c.bf16 %v1898, %v1896
    %v2025 = vpack.c.bf16 %v1899, %v1897
    %v2026 = vpack.c.bf16 %v1902, %v1900
    %v2027 = vpack.c.bf16 %v1903, %v1901
    %v2028 = vpack.c.bf16 %v1906, %v1904
    %v2029 = vpack.c.bf16 %v1907, %v1905
    %v2030 = vpack.c.bf16 %v1910, %v1908
    %v2031 = vpack.c.bf16 %v1911, %v1909
    %v2032 = vpack.c.bf16 %v1914, %v1912
    %v2033 = vpack.c.bf16 %v1915, %v1913
    %v2034 = vpack.c.bf16 %v1918, %v1916
    %v2035 = vpack.c.bf16 %v1919, %v1917
    %v2036 = vpack.c.bf16 %v1922, %v1920
    %v2037 = vpack.c.bf16 %v1923, %v1921
    %v2038 = vpack.c.bf16 %v1926, %v1924
    %v2039 = vpack.c.bf16 %v1927, %v1925
    %v2040 = vpack.c.bf16 %v1930, %v1928
    %v2041 = vpack.c.bf16 %v1931, %v1929
    %v2042 = vpack.c.bf16 %v1934, %v1932
    %v2043 = vpack.c.bf16 %v1935, %v1933
    %v2044 = vpack.c.bf16 %v1938, %v1936
    %v2045 = vpack.c.bf16 %v1939, %v1937
    %v2046 = vpack.c.bf16 %v1942, %v1940
    %v2047 = vpack.c.bf16 %v1943, %v1941
    %v2048 = vpack.c.bf16 %v1946, %v1944
    %v2049 = vpack.c.bf16 %v1947, %v1945
    %v2050 = vpack.c.bf16 %v1950, %v1948
    %v2051 = vpack.c.bf16 %v1951, %v1949
    %v2052 = vpack.c.bf16 %v1954, %v1952
    %v2053 = vpack.c.bf16 %v1955, %v1953
    %v2054 = vpack.c.bf16 %v1958, %v1956
    %v2055 = vpack.c.bf16 %v1959, %v1957
    %v2056 = vpack.c.bf16 %v1962, %v1960
    %v2057 = vpack.c.bf16 %v1963, %v1961
    %v2058 = vpack.c.bf16 %v1966, %v1964
    %v2059 = vpack.c.bf16 %v1967, %v1965
    %v2060 = vpack.c.bf16 %v1970, %v1968
    %v2061 = vpack.c.bf16 %v1971, %v1969
    %v2062 = vpack.c.bf16 %v1974, %v1972
    %v2063 = vpack.c.bf16 %v1975, %v1973
    %v2064 = vpack.c.bf16 %v1978, %v1976
    %v2065 = vpack.c.bf16 %v1979, %v1977
    %v2066 = vpack.c.bf16 %v1982, %v1980
    %v2067 = vpack.c.bf16 %v1983, %v1981
    %v2068 = vpack.c.bf16 %v1986, %v1984
    %v2069 = vpack.c.bf16 %v1987, %v1985
    %v2070 = vpack.c.bf16 %v1990, %v1988
    %v2071 = vpack.c.bf16 %v1991, %v1989
    %v2072 = vpack.c.bf16 %v1994, %v1992
    %v2073 = vpack.c.bf16 %v1995, %v1993
    %v2074 = vpack.c.bf16 %v1998, %v1996
    %v2075 = vpack.c.bf16 %v1999, %v1997
    %v2076 = vpack.c.bf16 %v2002, %v2000
    %v2077 = vpack.c.bf16 %v2003, %v2001
    %v2078 = vpack.c.bf16 %v2006, %v2004
    %v2079 = vpack.c.bf16 %v2007, %v2005
    %v2152 = vunpack.c.l.b16 %v1648
    %v2153 = vunpack.c.h.b16 %v1648
    %v2154 = vunpack.c.l.b16 %v1649
    %v2155 = vunpack.c.h.b16 %v1649
    %v2156 = vunpack.c.l.b16 %v1650
    %v2157 = vunpack.c.h.b16 %v1650
    %v2158 = vunpack.c.l.b16 %v1651
    %v2159 = vunpack.c.h.b16 %v1651
    %v2160 = vunpack.c.l.b16 %v1652
    %v2161 = vunpack.c.h.b16 %v1652
    %v2162 = vunpack.c.l.b16 %v1653
    %v2163 = vunpack.c.h.b16 %v1653
    %v2164 = vunpack.c.l.b16 %v1654
    %v2165 = vunpack.c.h.b16 %v1654
    %v2166 = vunpack.c.l.b16 %v1655
    %v2167 = vunpack.c.h.b16 %v1655
    %v2168 = vunpack.c.l.b16 %v1656
    %v2169 = vunpack.c.h.b16 %v1656
    %v2170 = vunpack.c.l.b16 %v1657
    %v2171 = vunpack.c.h.b16 %v1657
    %v2172 = vunpack.c.l.b16 %v1658
    %v2173 = vunpack.c.h.b16 %v1658
    %v2174 = vunpack.c.l.b16 %v1659
    %v2175 = vunpack.c.h.b16 %v1659
    %v2176 = vunpack.c.l.b16 %v1660
    %v2177 = vunpack.c.h.b16 %v1660
    %v2178 = vunpack.c.l.b16 %v1661
    %v2179 = vunpack.c.h.b16 %v1661
    %v2180 = vunpack.c.l.b16 %v1662
    %v2181 = vunpack.c.h.b16 %v1662
    %v2182 = vunpack.c.l.b16 %v1663
    %v2183 = vunpack.c.h.b16 %v1663
    %v2184 = vunpack.c.l.b16 %v1664
    %v2185 = vunpack.c.h.b16 %v1664
    %v2186 = vunpack.c.l.b16 %v1665
    %v2187 = vunpack.c.h.b16 %v1665
    %v2188 = vunpack.c.l.b16 %v1666
    %v2189 = vunpack.c.h.b16 %v1666
    %v2190 = vunpack.c.l.b16 %v1667
    %v2191 = vunpack.c.h.b16 %v1667
    %v2192 = vunpack.c.l.b16 %v1668
    %v2193 = vunpack.c.h.b16 %v1668
    %v2194 = vunpack.c.l.b16 %v1669
    %v2195 = vunpack.c.h.b16 %v1669
    %v2196 = vunpack.c.l.b16 %v1670
    %v2197 = vunpack.c.h.b16 %v1670
    %v2198 = vunpack.c.l.b16 %v1671
    %v2199 = vunpack.c.h.b16 %v1671
    %v2200 = vunpack.c.l.b16 %v1672
    %v2201 = vunpack.c.h.b16 %v1672
    %v2202 = vunpack.c.l.b16 %v1673
    %v2203 = vunpack.c.h.b16 %v1673
    %v2204 = vunpack.c.l.b16 %v1674
    %v2205 = vunpack.c.h.b16 %v1674
    %v2206 = vunpack.c.l.b16 %v1675
    %v2207 = vunpack.c.h.b16 %v1675
    %v2208 = vunpack.c.l.b16 %v1676
    %v2209 = vunpack.c.h.b16 %v1676
    %v2210 = vunpack.c.l.b16 %v1677
    %v2211 = vunpack.c.h.b16 %v1677
    %v2212 = vunpack.c.l.b16 %v1678
    %v2213 = vunpack.c.h.b16 %v1678
    %v2214 = vunpack.c.l.b16 %v1679
    %v2215 = vunpack.c.h.b16 %v1679
    %v2216 = vunpack.c.l.b16 %v1680
    %v2217 = vunpack.c.h.b16 %v1680
    %v2218 = vunpack.c.l.b16 %v1681
    %v2219 = vunpack.c.h.b16 %v1681
    %v2220 = vunpack.c.l.b16 %v1682
    %v2221 = vunpack.c.h.b16 %v1682
    %v2222 = vunpack.c.l.b16 %v1683
    %v2223 = vunpack.c.h.b16 %v1683
    %v2224 = vunpack.c.l.b16 %v1684
    %v2225 = vunpack.c.h.b16 %v1684
    %v2226 = vunpack.c.l.b16 %v1685
    %v2227 = vunpack.c.h.b16 %v1685
    %v2228 = vunpack.c.l.b16 %v1686
    %v2229 = vunpack.c.h.b16 %v1686
    %v2230 = vunpack.c.l.b16 %v1687
    %v2231 = vunpack.c.h.b16 %v1687
    %v2232 = vunpack.c.l.b16 %v1688
    %v2233 = vunpack.c.h.b16 %v1688
    %v2234 = vunpack.c.l.b16 %v1689
    %v2235 = vunpack.c.h.b16 %v1689
    %v2236 = vunpack.c.l.b16 %v1690
    %v2237 = vunpack.c.h.b16 %v1690
    %v2238 = vunpack.c.l.b16 %v1691
    %v2239 = vunpack.c.h.b16 %v1691
    %v2240 = vunpack.c.l.b16 %v1692
    %v2241 = vunpack.c.h.b16 %v1692
    %v2242 = vunpack.c.l.b16 %v1693
    %v2243 = vunpack.c.h.b16 %v1693
    %v2244 = vunpack.c.l.b16 %v1694
    %v2245 = vunpack.c.h.b16 %v1694
    %v2246 = vunpack.c.l.b16 %v1695
    %v2247 = vunpack.c.h.b16 %v1695
    %v2248 = vunpack.c.l.b16 %v1696
    %v2249 = vunpack.c.h.b16 %v1696
    %v2250 = vunpack.c.l.b16 %v1697
    %v2251 = vunpack.c.h.b16 %v1697
    %v2252 = vunpack.c.l.b16 %v1698
    %v2253 = vunpack.c.h.b16 %v1698
    %v2254 = vunpack.c.l.b16 %v1699
    %v2255 = vunpack.c.h.b16 %v1699
    %v2256 = vunpack.c.l.b16 %v1700
    %v2257 = vunpack.c.h.b16 %v1700
    %v2258 = vunpack.c.l.b16 %v1701
    %v2259 = vunpack.c.h.b16 %v1701
    %v2260 = vunpack.c.l.b16 %v1702
    %v2261 = vunpack.c.h.b16 %v1702
    %v2262 = vunpack.c.l.b16 %v1703
    %v2263 = vunpack.c.h.b16 %v1703
    %v2264 = vunpack.c.l.b16 %v1704
    %v2265 = vunpack.c.h.b16 %v1704
    %v2266 = vunpack.c.l.b16 %v1705
    %v2267 = vunpack.c.h.b16 %v1705
    %v2268 = vunpack.c.l.b16 %v1706
    %v2269 = vunpack.c.h.b16 %v1706
    %v2270 = vunpack.c.l.b16 %v1707
    %v2271 = vunpack.c.h.b16 %v1707
    %v2272 = vunpack.c.l.b16 %v1708
    %v2273 = vunpack.c.h.b16 %v1708
    %v2274 = vunpack.c.l.b16 %v1709
    %v2275 = vunpack.c.h.b16 %v1709
    %v2276 = vunpack.c.l.b16 %v1710
    %v2277 = vunpack.c.h.b16 %v1710
    %v2278 = vunpack.c.l.b16 %v1711
    %v2279 = vunpack.c.h.b16 %v1711
    %v2280 = vunpack.c.l.b16 %v1712
    %v2281 = vunpack.c.h.b16 %v1712
    %v2282 = vunpack.c.l.b16 %v1713
    %v2283 = vunpack.c.h.b16 %v1713
    %v2284 = vunpack.c.l.b16 %v1714
    %v2285 = vunpack.c.h.b16 %v1714
    %v2286 = vunpack.c.l.b16 %v1715
    %v2287 = vunpack.c.h.b16 %v1715
    %v2288 = vunpack.c.l.b16 %v1716
    %v2289 = vunpack.c.h.b16 %v1716
    %v2290 = vunpack.c.l.b16 %v1717
    %v2291 = vunpack.c.h.b16 %v1717
    %v2292 = vunpack.c.l.b16 %v1718
    %v2293 = vunpack.c.h.b16 %v1718
    %v2294 = vunpack.c.l.b16 %v1719
    %v2295 = vunpack.c.h.b16 %v1719
    %v2296 = vpack.c.b16 %v2154, %v2152
    %v2297 = vpack.c.b16 %v2155, %v2153
    %v2298 = vpack.c.b16 %v2158, %v2156
    %v2299 = vpack.c.b16 %v2159, %v2157
    %v2300 = vpack.c.b16 %v2162, %v2160
    %v2301 = vpack.c.b16 %v2163, %v2161
    %v2302 = vpack.c.b16 %v2166, %v2164
    %v2303 = vpack.c.b16 %v2167, %v2165
    %v2304 = vpack.c.b16 %v2170, %v2168
    %v2305 = vpack.c.b16 %v2171, %v2169
    %v2306 = vpack.c.b16 %v2174, %v2172
    %v2307 = vpack.c.b16 %v2175, %v2173
    %v2308 = vpack.c.b16 %v2178, %v2176
    %v2309 = vpack.c.b16 %v2179, %v2177
    %v2310 = vpack.c.b16 %v2182, %v2180
    %v2311 = vpack.c.b16 %v2183, %v2181
    %v2312 = vpack.c.b16 %v2186, %v2184
    %v2313 = vpack.c.b16 %v2187, %v2185
    %v2314 = vpack.c.b16 %v2190, %v2188
    %v2315 = vpack.c.b16 %v2191, %v2189
    %v2316 = vpack.c.b16 %v2194, %v2192
    %v2317 = vpack.c.b16 %v2195, %v2193
    %v2318 = vpack.c.b16 %v2198, %v2196
    %v2319 = vpack.c.b16 %v2199, %v2197
    %v2320 = vpack.c.b16 %v2202, %v2200
    %v2321 = vpack.c.b16 %v2203, %v2201
    %v2322 = vpack.c.b16 %v2206, %v2204
    %v2323 = vpack.c.b16 %v2207, %v2205
    %v2324 = vpack.c.b16 %v2210, %v2208
    %v2325 = vpack.c.b16 %v2211, %v2209
    %v2326 = vpack.c.b16 %v2214, %v2212
    %v2327 = vpack.c.b16 %v2215, %v2213
    %v2328 = vpack.c.b16 %v2218, %v2216
    %v2329 = vpack.c.b16 %v2219, %v2217
    %v2330 = vpack.c.b16 %v2222, %v2220
    %v2331 = vpack.c.b16 %v2223, %v2221
    %v2332 = vpack.c.b16 %v2226, %v2224
    %v2333 = vpack.c.b16 %v2227, %v2225
    %v2334 = vpack.c.b16 %v2230, %v2228
    %v2335 = vpack.c.b16 %v2231, %v2229
    %v2336 = vpack.c.b16 %v2234, %v2232
    %v2337 = vpack.c.b16 %v2235, %v2233
    %v2338 = vpack.c.b16 %v2238, %v2236
    %v2339 = vpack.c.b16 %v2239, %v2237
    %v2340 = vpack.c.b16 %v2242, %v2240
    %v2341 = vpack.c.b16 %v2243, %v2241
    %v2342 = vpack.c.b16 %v2246, %v2244
    %v2343 = vpack.c.b16 %v2247, %v2245
    %v2344 = vpack.c.b16 %v2250, %v2248
    %v2345 = vpack.c.b16 %v2251, %v2249
    %v2346 = vpack.c.b16 %v2254, %v2252
    %v2347 = vpack.c.b16 %v2255, %v2253
    %v2348 = vpack.c.b16 %v2258, %v2256
    %v2349 = vpack.c.b16 %v2259, %v2257
    %v2350 = vpack.c.b16 %v2262, %v2260
    %v2351 = vpack.c.b16 %v2263, %v2261
    %v2352 = vpack.c.b16 %v2266, %v2264
    %v2353 = vpack.c.b16 %v2267, %v2265
    %v2354 = vpack.c.b16 %v2270, %v2268
    %v2355 = vpack.c.b16 %v2271, %v2269
    %v2356 = vpack.c.b16 %v2274, %v2272
    %v2357 = vpack.c.b16 %v2275, %v2273
    %v2358 = vpack.c.b16 %v2278, %v2276
    %v2359 = vpack.c.b16 %v2279, %v2277
    %v2360 = vpack.c.b16 %v2282, %v2280
    %v2361 = vpack.c.b16 %v2283, %v2281
    %v2362 = vpack.c.b16 %v2286, %v2284
    %v2363 = vpack.c.b16 %v2287, %v2285
    %v2364 = vpack.c.b16 %v2290, %v2288
    %v2365 = vpack.c.b16 %v2291, %v2289
    %v2366 = vpack.c.b16 %v2294, %v2292
    %v2367 = vpack.c.b16 %v2295, %v2293
    %vm2440 = vcmask 523264
    %v2442 = vsel %vm2440, %v1328, 0
    %v2445 = vsel %vm2440, %v1333, 0
    %v2448 = vsel %vm2440, %v1338, 0
    %v2451 = vsel %vm2440, %v1343, 0
    %v2454 = vsel %vm2440, %v1348, 0
    %v2457 = vsel %vm2440, %v1353, 0
    %v2460 = vsel %vm2440, %v1358, 0
    %v2463 = vsel %vm2440, %v1363, 0
    %v2466 = vsel %vm2440, %v1368, 0
    %v2469 = vsel %vm2440, %v1373, 0
    %v2472 = vsel %vm2440, %v1378, 0
    %v2475 = vsel %vm2440, %v1383, 0
    %v2478 = vsel %vm2440, %v1388, 0
    %v2481 = vsel %vm2440, %v1393, 0
    %v2484 = vsel %vm2440, %v1398, 0
    %v2487 = vsel %vm2440, %v1403, 0
    %v2490 = vsel %vm2440, %v1408, 0
    %v2493 = vsel %vm2440, %v1413, 0
    %v2496 = vsel %vm2440, %v1418, 0
    %v2499 = vsel %vm2440, %v1423, 0
    %v2502 = vsel %vm2440, %v1428, 0
    %v2505 = vsel %vm2440, %v1433, 0
    %v2508 = vsel %vm2440, %v1438, 0
    %v2511 = vsel %vm2440, %v1443, 0
    %v2514 = vsel %vm2440, %v1448, 0
    %v2517 = vsel %vm2440, %v1453, 0
    %v2520 = vsel %vm2440, %v1458, 0
    %v2523 = vsel %vm2440, %v1463, 0
    %v2526 = vsel %vm2440, %v1468, 0
    %v2529 = vsel %vm2440, %v1473, 0
    %v2532 = vsel %vm2440, %v1478, 0
    %v2535 = vsel %vm2440, %v1483, 0
    %v2538 = vsel %vm2440, %v1488, 0
    %v2541 = vsel %vm2440, %v1493, 0
    %v2544 = vsel %vm2440, %v1498, 0
    %v2547 = vsel %vm2440, %v1503, 0
    %2549 = vmatpush.bf16.msra.mxu0 %v2310
    %2550 = vmatpush.bf16.msra.mxu0 %v2308
    %2551 = vmatpush.bf16.msra.mxu0 %v2306
    %2552 = vmatpush.bf16.msra.mxu0 %v2304
    %2553 = vmatpush.bf16.msra.mxu0 %v2302
    %2554 = vmatpush.bf16.msra.mxu0 %v2300
    %2555 = vmatpush.bf16.msra.mxu0 %v2298
    %2556 = vmatpush.bf16.msra.mxu0 %v2296
    %2557 = vmatmul.bf16.gmra.mxu0 %v1324
    %v2558 = vpop.f32.mrf.mxu0
    %v2559 = vadd.f32 0.0, %v2558
    %v2560 = vpop.f32.mrf.mxu0
    %v2561 = vadd.f32 0.0, %v2560
    %2562 = vmatmul.bf16.gmra.mxu0 %v1329
    %v2563 = vpop.f32.mrf.mxu0
    %v2564 = vadd.f32 0.0, %v2563
    %v2565 = vpop.f32.mrf.mxu0
    %v2566 = vadd.f32 0.0, %v2565
    %2567 = vmatmul.bf16.gmra.mxu0 %v1334
    %v2568 = vpop.f32.mrf.mxu0
    %v2569 = vadd.f32 0.0, %v2568
    %v2570 = vpop.f32.mrf.mxu0
    %v2571 = vadd.f32 0.0, %v2570
    %2572 = vmatmul.bf16.gmra.mxu0 %v1339
    %v2573 = vpop.f32.mrf.mxu0
    %v2574 = vadd.f32 0.0, %v2573
    %v2575 = vpop.f32.mrf.mxu0
    %v2576 = vadd.f32 0.0, %v2575
    %2577 = vmatmul.bf16.gmra.mxu0 %v1344
    %v2578 = vpop.f32.mrf.mxu0
    %v2579 = vadd.f32 0.0, %v2578
    %v2580 = vpop.f32.mrf.mxu0
    %v2581 = vadd.f32 0.0, %v2580
    %2582 = vmatmul.bf16.gmra.mxu0 %v1349
    %v2583 = vpop.f32.mrf.mxu0
    %v2584 = vadd.f32 0.0, %v2583
    %v2585 = vpop.f32.mrf.mxu0
    %v2586 = vadd.f32 0.0, %v2585
    %2587 = vmatmul.bf16.gmra.mxu0 %v1354
    %v2588 = vpop.f32.mrf.mxu0
    %v2589 = vadd.f32 0.0, %v2588
    %v2590 = vpop.f32.mrf.mxu0
    %v2591 = vadd.f32 0.0, %v2590
    %2592 = vmatmul.bf16.gmra.mxu0 %v1359
    %v2593 = vpop.f32.mrf.mxu0
    %v2594 = vadd.f32 0.0, %v2593
    %v2595 = vpop.f32.mrf.mxu0
    %v2596 = vadd.f32 0.0, %v2595
    %2597 = vmatmul.bf16.gmra.mxu0 %v1364
    %v2598 = vpop.f32.mrf.mxu0
    %v2599 = vadd.f32 0.0, %v2598
    %v2600 = vpop.f32.mrf.mxu0
    %v2601 = vadd.f32 0.0, %v2600
    %2602 = vmatmul.bf16.gmra.mxu0 %v1369
    %v2603 = vpop.f32.mrf.mxu0
    %v2604 = vadd.f32 0.0, %v2603
    %v2605 = vpop.f32.mrf.mxu0
    %v2606 = vadd.f32 0.0, %v2605
    %2607 = vmatmul.bf16.gmra.mxu0 %v1374
    %v2608 = vpop.f32.mrf.mxu0
    %v2609 = vadd.f32 0.0, %v2608
    %v2610 = vpop.f32.mrf.mxu0
    %v2611 = vadd.f32 0.0, %v2610
    %2612 = vmatmul.bf16.gmra.mxu0 %v1379
    %v2613 = vpop.f32.mrf.mxu0
    %v2614 = vadd.f32 0.0, %v2613
    %v2615 = vpop.f32.mrf.mxu0
    %v2616 = vadd.f32 0.0, %v2615
    %2617 = vmatmul.bf16.gmra.mxu0 %v1384
    %v2618 = vpop.f32.mrf.mxu0
    %v2619 = vadd.f32 0.0, %v2618
    %v2620 = vpop.f32.mrf.mxu0
    %v2621 = vadd.f32 0.0, %v2620
    %2622 = vmatmul.bf16.gmra.mxu0 %v1389
    %v2623 = vpop.f32.mrf.mxu0
    %v2624 = vadd.f32 0.0, %v2623
    %v2625 = vpop.f32.mrf.mxu0
    %v2626 = vadd.f32 0.0, %v2625
    %2627 = vmatmul.bf16.gmra.mxu0 %v1394
    %v2628 = vpop.f32.mrf.mxu0
    %v2629 = vadd.f32 0.0, %v2628
    %v2630 = vpop.f32.mrf.mxu0
    %v2631 = vadd.f32 0.0, %v2630
    %2632 = vmatmul.bf16.gmra.mxu0 %v1399
    %v2633 = vpop.f32.mrf.mxu0
    %v2634 = vadd.f32 0.0, %v2633
    %v2635 = vpop.f32.mrf.mxu0
    %v2636 = vadd.f32 0.0, %v2635
    %2637 = vmatmul.bf16.gmra.mxu0 %v1404
    %v2638 = vpop.f32.mrf.mxu0
    %v2639 = vadd.f32 0.0, %v2638
    %v2640 = vpop.f32.mrf.mxu0
    %v2641 = vadd.f32 0.0, %v2640
    %2642 = vmatmul.bf16.gmra.mxu0 %v1409
    %v2643 = vpop.f32.mrf.mxu0
    %v2644 = vadd.f32 0.0, %v2643
    %v2645 = vpop.f32.mrf.mxu0
    %v2646 = vadd.f32 0.0, %v2645
    %2647 = vmatmul.bf16.gmra.mxu0 %v1414
    %v2648 = vpop.f32.mrf.mxu0
    %v2649 = vadd.f32 0.0, %v2648
    %v2650 = vpop.f32.mrf.mxu0
    %v2651 = vadd.f32 0.0, %v2650
    %2652 = vmatmul.bf16.gmra.mxu0 %v1419
    %v2653 = vpop.f32.mrf.mxu0
    %v2654 = vadd.f32 0.0, %v2653
    %v2655 = vpop.f32.mrf.mxu0
    %v2656 = vadd.f32 0.0, %v2655
    %2657 = vmatmul.bf16.gmra.mxu0 %v1424
    %v2658 = vpop.f32.mrf.mxu0
    %v2659 = vadd.f32 0.0, %v2658
    %v2660 = vpop.f32.mrf.mxu0
    %v2661 = vadd.f32 0.0, %v2660
    %2662 = vmatmul.bf16.gmra.mxu0 %v1429
    %v2663 = vpop.f32.mrf.mxu0
    %v2664 = vadd.f32 0.0, %v2663
    %v2665 = vpop.f32.mrf.mxu0
    %v2666 = vadd.f32 0.0, %v2665
    %2667 = vmatmul.bf16.gmra.mxu0 %v1434
    %v2668 = vpop.f32.mrf.mxu0
    %v2669 = vadd.f32 0.0, %v2668
    %v2670 = vpop.f32.mrf.mxu0
    %v2671 = vadd.f32 0.0, %v2670
    %2672 = vmatmul.bf16.gmra.mxu0 %v1439
    %v2673 = vpop.f32.mrf.mxu0
    %v2674 = vadd.f32 0.0, %v2673
    %v2675 = vpop.f32.mrf.mxu0
    %v2676 = vadd.f32 0.0, %v2675
    %2677 = vmatmul.bf16.gmra.mxu0 %v1444
    %v2678 = vpop.f32.mrf.mxu0
    %v2679 = vadd.f32 0.0, %v2678
    %v2680 = vpop.f32.mrf.mxu0
    %v2681 = vadd.f32 0.0, %v2680
    %2682 = vmatmul.bf16.gmra.mxu0 %v1449
    %v2683 = vpop.f32.mrf.mxu0
    %v2684 = vadd.f32 0.0, %v2683
    %v2685 = vpop.f32.mrf.mxu0
    %v2686 = vadd.f32 0.0, %v2685
    %2687 = vmatmul.bf16.gmra.mxu0 %v1454
    %v2688 = vpop.f32.mrf.mxu0
    %v2689 = vadd.f32 0.0, %v2688
    %v2690 = vpop.f32.mrf.mxu0
    %v2691 = vadd.f32 0.0, %v2690
    %2692 = vmatmul.bf16.gmra.mxu0 %v1459
    %v2693 = vpop.f32.mrf.mxu0
    %v2694 = vadd.f32 0.0, %v2693
    %v2695 = vpop.f32.mrf.mxu0
    %v2696 = vadd.f32 0.0, %v2695
    %2697 = vmatmul.bf16.gmra.mxu0 %v1464
    %v2698 = vpop.f32.mrf.mxu0
    %v2699 = vadd.f32 0.0, %v2698
    %v2700 = vpop.f32.mrf.mxu0
    %v2701 = vadd.f32 0.0, %v2700
    %2702 = vmatmul.bf16.gmra.mxu0 %v1469
    %v2703 = vpop.f32.mrf.mxu0
    %v2704 = vadd.f32 0.0, %v2703
    %v2705 = vpop.f32.mrf.mxu0
    %v2706 = vadd.f32 0.0, %v2705
    %2707 = vmatmul.bf16.gmra.mxu0 %v1474
    %v2708 = vpop.f32.mrf.mxu0
    %v2709 = vadd.f32 0.0, %v2708
    %v2710 = vpop.f32.mrf.mxu0
    %v2711 = vadd.f32 0.0, %v2710
    %2712 = vmatmul.bf16.gmra.mxu0 %v1479
    %v2713 = vpop.f32.mrf.mxu0
    %v2714 = vadd.f32 0.0, %v2713
    %v2715 = vpop.f32.mrf.mxu0
    %v2716 = vadd.f32 0.0, %v2715
    %2717 = vmatmul.bf16.gmra.mxu0 %v1484
    %v2718 = vpop.f32.mrf.mxu0
    %v2719 = vadd.f32 0.0, %v2718
    %v2720 = vpop.f32.mrf.mxu0
    %v2721 = vadd.f32 0.0, %v2720
    %2722 = vmatmul.bf16.gmra.mxu0 %v1489
    %v2723 = vpop.f32.mrf.mxu0
    %v2724 = vadd.f32 0.0, %v2723
    %v2725 = vpop.f32.mrf.mxu0
    %v2726 = vadd.f32 0.0, %v2725
    %2727 = vmatmul.bf16.gmra.mxu0 %v1494
    %v2728 = vpop.f32.mrf.mxu0
    %v2729 = vadd.f32 0.0, %v2728
    %v2730 = vpop.f32.mrf.mxu0
    %v2731 = vadd.f32 0.0, %v2730
    %2732 = vmatmul.bf16.gmra.mxu0 %v1499
    %v2733 = vpop.f32.mrf.mxu0
    %v2734 = vadd.f32 0.0, %v2733
    %v2735 = vpop.f32.mrf.mxu0
    %v2736 = vadd.f32 0.0, %v2735
    %2737 = vdwg.mxu0
    %2738 = vmatpush.bf16.msra.mxu0 %v2326
    %2739 = vmatpush.bf16.msra.mxu0 %v2324
    %2740 = vmatpush.bf16.msra.mxu0 %v2322
    %2741 = vmatpush.bf16.msra.mxu0 %v2320
    %2742 = vmatpush.bf16.msra.mxu0 %v2318
    %2743 = vmatpush.bf16.msra.mxu0 %v2316
    %2744 = vmatpush.bf16.msra.mxu0 %v2314
    %2745 = vmatpush.bf16.msra.mxu0 %v2312
    %2746 = vmatmul.bf16.gmra.mxu0 %v1325
    %v2747 = vpop.f32.mrf.mxu0
    %v2748 = vadd.f32 %v2559, %v2747
    %v2749 = vpop.f32.mrf.mxu0
    %v2750 = vadd.f32 %v2561, %v2749
    %2751 = vmatmul.bf16.gmra.mxu0 %v1330
    %v2752 = vpop.f32.mrf.mxu0
    %v2753 = vadd.f32 %v2564, %v2752
    %v2754 = vpop.f32.mrf.mxu0
    %v2755 = vadd.f32 %v2566, %v2754
    %2756 = vmatmul.bf16.gmra.mxu0 %v1335
    %v2757 = vpop.f32.mrf.mxu0
    %v2758 = vadd.f32 %v2569, %v2757
    %v2759 = vpop.f32.mrf.mxu0
    %v2760 = vadd.f32 %v2571, %v2759
    %2761 = vmatmul.bf16.gmra.mxu0 %v1340
    %v2762 = vpop.f32.mrf.mxu0
    %v2763 = vadd.f32 %v2574, %v2762
    %v2764 = vpop.f32.mrf.mxu0
    %v2765 = vadd.f32 %v2576, %v2764
    %2766 = vmatmul.bf16.gmra.mxu0 %v1345
    %v2767 = vpop.f32.mrf.mxu0
    %v2768 = vadd.f32 %v2579, %v2767
    %v2769 = vpop.f32.mrf.mxu0
    %v2770 = vadd.f32 %v2581, %v2769
    %2771 = vmatmul.bf16.gmra.mxu0 %v1350
    %v2772 = vpop.f32.mrf.mxu0
    %v2773 = vadd.f32 %v2584, %v2772
    %v2774 = vpop.f32.mrf.mxu0
    %v2775 = vadd.f32 %v2586, %v2774
    %2776 = vmatmul.bf16.gmra.mxu0 %v1355
    %v2777 = vpop.f32.mrf.mxu0
    %v2778 = vadd.f32 %v2589, %v2777
    %v2779 = vpop.f32.mrf.mxu0
    %v2780 = vadd.f32 %v2591, %v2779
    %2781 = vmatmul.bf16.gmra.mxu0 %v1360
    %v2782 = vpop.f32.mrf.mxu0
    %v2783 = vadd.f32 %v2594, %v2782
    %v2784 = vpop.f32.mrf.mxu0
    %v2785 = vadd.f32 %v2596, %v2784
    %2786 = vmatmul.bf16.gmra.mxu0 %v1365
    %v2787 = vpop.f32.mrf.mxu0
    %v2788 = vadd.f32 %v2599, %v2787
    %v2789 = vpop.f32.mrf.mxu0
    %v2790 = vadd.f32 %v2601, %v2789
    %2791 = vmatmul.bf16.gmra.mxu0 %v1370
    %v2792 = vpop.f32.mrf.mxu0
    %v2793 = vadd.f32 %v2604, %v2792
    %v2794 = vpop.f32.mrf.mxu0
    %v2795 = vadd.f32 %v2606, %v2794
    %2796 = vmatmul.bf16.gmra.mxu0 %v1375
    %v2797 = vpop.f32.mrf.mxu0
    %v2798 = vadd.f32 %v2609, %v2797
    %v2799 = vpop.f32.mrf.mxu0
    %v2800 = vadd.f32 %v2611, %v2799
    %2801 = vmatmul.bf16.gmra.mxu0 %v1380
    %v2802 = vpop.f32.mrf.mxu0
    %v2803 = vadd.f32 %v2614, %v2802
    %v2804 = vpop.f32.mrf.mxu0
    %v2805 = vadd.f32 %v2616, %v2804
    %2806 = vmatmul.bf16.gmra.mxu0 %v1385
    %v2807 = vpop.f32.mrf.mxu0
    %v2808 = vadd.f32 %v2619, %v2807
    %v2809 = vpop.f32.mrf.mxu0
    %v2810 = vadd.f32 %v2621, %v2809
    %2811 = vmatmul.bf16.gmra.mxu0 %v1390
    %v2812 = vpop.f32.mrf.mxu0
    %v2813 = vadd.f32 %v2624, %v2812
    %v2814 = vpop.f32.mrf.mxu0
    %v2815 = vadd.f32 %v2626, %v2814
    %2816 = vmatmul.bf16.gmra.mxu0 %v1395
    %v2817 = vpop.f32.mrf.mxu0
    %v2818 = vadd.f32 %v2629, %v2817
    %v2819 = vpop.f32.mrf.mxu0
    %v2820 = vadd.f32 %v2631, %v2819
    %2821 = vmatmul.bf16.gmra.mxu0 %v1400
    %v2822 = vpop.f32.mrf.mxu0
    %v2823 = vadd.f32 %v2634, %v2822
    %v2824 = vpop.f32.mrf.mxu0
    %v2825 = vadd.f32 %v2636, %v2824
    %2826 = vmatmul.bf16.gmra.mxu0 %v1405
    %v2827 = vpop.f32.mrf.mxu0
    %v2828 = vadd.f32 %v2639, %v2827
    %v2829 = vpop.f32.mrf.mxu0
    %v2830 = vadd.f32 %v2641, %v2829
    %2831 = vmatmul.bf16.gmra.mxu0 %v1410
    %v2832 = vpop.f32.mrf.mxu0
    %v2833 = vadd.f32 %v2644, %v2832
    %v2834 = vpop.f32.mrf.mxu0
    %v2835 = vadd.f32 %v2646, %v2834
    %2836 = vmatmul.bf16.gmra.mxu0 %v1415
    %v2837 = vpop.f32.mrf.mxu0
    %v2838 = vadd.f32 %v2649, %v2837
    %v2839 = vpop.f32.mrf.mxu0
    %v2840 = vadd.f32 %v2651, %v2839
    %2841 = vmatmul.bf16.gmra.mxu0 %v1420
    %v2842 = vpop.f32.mrf.mxu0
    %v2843 = vadd.f32 %v2654, %v2842
    %v2844 = vpop.f32.mrf.mxu0
    %v2845 = vadd.f32 %v2656, %v2844
    %2846 = vmatmul.bf16.gmra.mxu0 %v1425
    %v2847 = vpop.f32.mrf.mxu0
    %v2848 = vadd.f32 %v2659, %v2847
    %v2849 = vpop.f32.mrf.mxu0
    %v2850 = vadd.f32 %v2661, %v2849
    %2851 = vmatmul.bf16.gmra.mxu0 %v1430
    %v2852 = vpop.f32.mrf.mxu0
    %v2853 = vadd.f32 %v2664, %v2852
    %v2854 = vpop.f32.mrf.mxu0
    %v2855 = vadd.f32 %v2666, %v2854
    %2856 = vmatmul.bf16.gmra.mxu0 %v1435
    %v2857 = vpop.f32.mrf.mxu0
    %v2858 = vadd.f32 %v2669, %v2857
    %v2859 = vpop.f32.mrf.mxu0
    %v2860 = vadd.f32 %v2671, %v2859
    %2861 = vmatmul.bf16.gmra.mxu0 %v1440
    %v2862 = vpop.f32.mrf.mxu0
    %v2863 = vadd.f32 %v2674, %v2862
    %v2864 = vpop.f32.mrf.mxu0
    %v2865 = vadd.f32 %v2676, %v2864
    %2866 = vmatmul.bf16.gmra.mxu0 %v1445
    %v2867 = vpop.f32.mrf.mxu0
    %v2868 = vadd.f32 %v2679, %v2867
    %v2869 = vpop.f32.mrf.mxu0
    %v2870 = vadd.f32 %v2681, %v2869
    %2871 = vmatmul.bf16.gmra.mxu0 %v1450
    %v2872 = vpop.f32.mrf.mxu0
    %v2873 = vadd.f32 %v2684, %v2872
    %v2874 = vpop.f32.mrf.mxu0
    %v2875 = vadd.f32 %v2686, %v2874
    %2876 = vmatmul.bf16.gmra.mxu0 %v1455
    %v2877 = vpop.f32.mrf.mxu0
    %v2878 = vadd.f32 %v2689, %v2877
    %v2879 = vpop.f32.mrf.mxu0
    %v2880 = vadd.f32 %v2691, %v2879
    %2881 = vmatmul.bf16.gmra.mxu0 %v1460
    %v2882 = vpop.f32.mrf.mxu0
    %v2883 = vadd.f32 %v2694, %v2882
    %v2884 = vpop.f32.mrf.mxu0
    %v2885 = vadd.f32 %v2696, %v2884
    %2886 = vmatmul.bf16.gmra.mxu0 %v1465
    %v2887 = vpop.f32.mrf.mxu0
    %v2888 = vadd.f32 %v2699, %v2887
    %v2889 = vpop.f32.mrf.mxu0
    %v2890 = vadd.f32 %v2701, %v2889
    %2891 = vmatmul.bf16.gmra.mxu0 %v1470
    %v2892 = vpop.f32.mrf.mxu0
    %v2893 = vadd.f32 %v2704, %v2892
    %v2894 = vpop.f32.mrf.mxu0
    %v2895 = vadd.f32 %v2706, %v2894
    %2896 = vmatmul.bf16.gmra.mxu0 %v1475
    %v2897 = vpop.f32.mrf.mxu0
    %v2898 = vadd.f32 %v2709, %v2897
    %v2899 = vpop.f32.mrf.mxu0
    %v2900 = vadd.f32 %v2711, %v2899
    %2901 = vmatmul.bf16.gmra.mxu0 %v1480
    %v2902 = vpop.f32.mrf.mxu0
    %v2903 = vadd.f32 %v2714, %v2902
    %v2904 = vpop.f32.mrf.mxu0
    %v2905 = vadd.f32 %v2716, %v2904
    %2906 = vmatmul.bf16.gmra.mxu0 %v1485
    %v2907 = vpop.f32.mrf.mxu0
    %v2908 = vadd.f32 %v2719, %v2907
    %v2909 = vpop.f32.mrf.mxu0
    %v2910 = vadd.f32 %v2721, %v2909
    %2911 = vmatmul.bf16.gmra.mxu0 %v1490
    %v2912 = vpop.f32.mrf.mxu0
    %v2913 = vadd.f32 %v2724, %v2912
    %v2914 = vpop.f32.mrf.mxu0
    %v2915 = vadd.f32 %v2726, %v2914
    %2916 = vmatmul.bf16.gmra.mxu0 %v1495
    %v2917 = vpop.f32.mrf.mxu0
    %v2918 = vadd.f32 %v2729, %v2917
    %v2919 = vpop.f32.mrf.mxu0
    %v2920 = vadd.f32 %v2731, %v2919
    %2921 = vmatmul.bf16.gmra.mxu0 %v1500
    %v2922 = vpop.f32.mrf.mxu0
    %v2923 = vadd.f32 %v2734, %v2922
    %v2924 = vpop.f32.mrf.mxu0
    %v2925 = vadd.f32 %v2736, %v2924
    %2926 = vdwg.mxu0
    %2927 = vmatpush.bf16.msra.mxu0 %v2342
    %2928 = vmatpush.bf16.msra.mxu0 %v2340
    %2929 = vmatpush.bf16.msra.mxu0 %v2338
    %2930 = vmatpush.bf16.msra.mxu0 %v2336
    %2931 = vmatpush.bf16.msra.mxu0 %v2334
    %2932 = vmatpush.bf16.msra.mxu0 %v2332
    %2933 = vmatpush.bf16.msra.mxu0 %v2330
    %2934 = vmatpush.bf16.msra.mxu0 %v2328
    %2935 = vmatmul.bf16.gmra.mxu0 %v1326
    %v2936 = vpop.f32.mrf.mxu0
    %v2937 = vadd.f32 %v2748, %v2936
    %v2938 = vpop.f32.mrf.mxu0
    %v2939 = vadd.f32 %v2750, %v2938
    %2940 = vmatmul.bf16.gmra.mxu0 %v1331
    %v2941 = vpop.f32.mrf.mxu0
    %v2942 = vadd.f32 %v2753, %v2941
    %v2943 = vpop.f32.mrf.mxu0
    %v2944 = vadd.f32 %v2755, %v2943
    %2945 = vmatmul.bf16.gmra.mxu0 %v1336
    %v2946 = vpop.f32.mrf.mxu0
    %v2947 = vadd.f32 %v2758, %v2946
    %v2948 = vpop.f32.mrf.mxu0
    %v2949 = vadd.f32 %v2760, %v2948
    %2950 = vmatmul.bf16.gmra.mxu0 %v1341
    %v2951 = vpop.f32.mrf.mxu0
    %v2952 = vadd.f32 %v2763, %v2951
    %v2953 = vpop.f32.mrf.mxu0
    %v2954 = vadd.f32 %v2765, %v2953
    %2955 = vmatmul.bf16.gmra.mxu0 %v1346
    %v2956 = vpop.f32.mrf.mxu0
    %v2957 = vadd.f32 %v2768, %v2956
    %v2958 = vpop.f32.mrf.mxu0
    %v2959 = vadd.f32 %v2770, %v2958
    %2960 = vmatmul.bf16.gmra.mxu0 %v1351
    %v2961 = vpop.f32.mrf.mxu0
    %v2962 = vadd.f32 %v2773, %v2961
    %v2963 = vpop.f32.mrf.mxu0
    %v2964 = vadd.f32 %v2775, %v2963
    %2965 = vmatmul.bf16.gmra.mxu0 %v1356
    %v2966 = vpop.f32.mrf.mxu0
    %v2967 = vadd.f32 %v2778, %v2966
    %v2968 = vpop.f32.mrf.mxu0
    %v2969 = vadd.f32 %v2780, %v2968
    %2970 = vmatmul.bf16.gmra.mxu0 %v1361
    %v2971 = vpop.f32.mrf.mxu0
    %v2972 = vadd.f32 %v2783, %v2971
    %v2973 = vpop.f32.mrf.mxu0
    %v2974 = vadd.f32 %v2785, %v2973
    %2975 = vmatmul.bf16.gmra.mxu0 %v1366
    %v2976 = vpop.f32.mrf.mxu0
    %v2977 = vadd.f32 %v2788, %v2976
    %v2978 = vpop.f32.mrf.mxu0
    %v2979 = vadd.f32 %v2790, %v2978
    %2980 = vmatmul.bf16.gmra.mxu0 %v1371
    %v2981 = vpop.f32.mrf.mxu0
    %v2982 = vadd.f32 %v2793, %v2981
    %v2983 = vpop.f32.mrf.mxu0
    %v2984 = vadd.f32 %v2795, %v2983
    %2985 = vmatmul.bf16.gmra.mxu0 %v1376
    %v2986 = vpop.f32.mrf.mxu0
    %v2987 = vadd.f32 %v2798, %v2986
    %v2988 = vpop.f32.mrf.mxu0
    %v2989 = vadd.f32 %v2800, %v2988
    %2990 = vmatmul.bf16.gmra.mxu0 %v1381
    %v2991 = vpop.f32.mrf.mxu0
    %v2992 = vadd.f32 %v2803, %v2991
    %v2993 = vpop.f32.mrf.mxu0
    %v2994 = vadd.f32 %v2805, %v2993
    %2995 = vmatmul.bf16.gmra.mxu0 %v1386
    %v2996 = vpop.f32.mrf.mxu0
    %v2997 = vadd.f32 %v2808, %v2996
    %v2998 = vpop.f32.mrf.mxu0
    %v2999 = vadd.f32 %v2810, %v2998
    %3000 = vmatmul.bf16.gmra.mxu0 %v1391
    %v3001 = vpop.f32.mrf.mxu0
    %v3002 = vadd.f32 %v2813, %v3001
    %v3003 = vpop.f32.mrf.mxu0
    %v3004 = vadd.f32 %v2815, %v3003
    %3005 = vmatmul.bf16.gmra.mxu0 %v1396
    %v3006 = vpop.f32.mrf.mxu0
    %v3007 = vadd.f32 %v2818, %v3006
    %v3008 = vpop.f32.mrf.mxu0
    %v3009 = vadd.f32 %v2820, %v3008
    %3010 = vmatmul.bf16.gmra.mxu0 %v1401
    %v3011 = vpop.f32.mrf.mxu0
    %v3012 = vadd.f32 %v2823, %v3011
    %v3013 = vpop.f32.mrf.mxu0
    %v3014 = vadd.f32 %v2825, %v3013
    %3015 = vmatmul.bf16.gmra.mxu0 %v1406
    %v3016 = vpop.f32.mrf.mxu0
    %v3017 = vadd.f32 %v2828, %v3016
    %v3018 = vpop.f32.mrf.mxu0
    %v3019 = vadd.f32 %v2830, %v3018
    %3020 = vmatmul.bf16.gmra.mxu0 %v1411
    %v3021 = vpop.f32.mrf.mxu0
    %v3022 = vadd.f32 %v2833, %v3021
    %v3023 = vpop.f32.mrf.mxu0
    %v3024 = vadd.f32 %v2835, %v3023
    %3025 = vmatmul.bf16.gmra.mxu0 %v1416
    %v3026 = vpop.f32.mrf.mxu0
    %v3027 = vadd.f32 %v2838, %v3026
    %v3028 = vpop.f32.mrf.mxu0
    %v3029 = vadd.f32 %v2840, %v3028
    %3030 = vmatmul.bf16.gmra.mxu0 %v1421
    %v3031 = vpop.f32.mrf.mxu0
    %v3032 = vadd.f32 %v2843, %v3031
    %v3033 = vpop.f32.mrf.mxu0
    %v3034 = vadd.f32 %v2845, %v3033
    %3035 = vmatmul.bf16.gmra.mxu0 %v1426
    %v3036 = vpop.f32.mrf.mxu0
    %v3037 = vadd.f32 %v2848, %v3036
    %v3038 = vpop.f32.mrf.mxu0
    %v3039 = vadd.f32 %v2850, %v3038
    %3040 = vmatmul.bf16.gmra.mxu0 %v1431
    %v3041 = vpop.f32.mrf.mxu0
    %v3042 = vadd.f32 %v2853, %v3041
    %v3043 = vpop.f32.mrf.mxu0
    %v3044 = vadd.f32 %v2855, %v3043
    %3045 = vmatmul.bf16.gmra.mxu0 %v1436
    %v3046 = vpop.f32.mrf.mxu0
    %v3047 = vadd.f32 %v2858, %v3046
    %v3048 = vpop.f32.mrf.mxu0
    %v3049 = vadd.f32 %v2860, %v3048
    %3050 = vmatmul.bf16.gmra.mxu0 %v1441
    %v3051 = vpop.f32.mrf.mxu0
    %v3052 = vadd.f32 %v2863, %v3051
    %v3053 = vpop.f32.mrf.mxu0
    %v3054 = vadd.f32 %v2865, %v3053
    %3055 = vmatmul.bf16.gmra.mxu0 %v1446
    %v3056 = vpop.f32.mrf.mxu0
    %v3057 = vadd.f32 %v2868, %v3056
    %v3058 = vpop.f32.mrf.mxu0
    %v3059 = vadd.f32 %v2870, %v3058
    %3060 = vmatmul.bf16.gmra.mxu0 %v1451
    %v3061 = vpop.f32.mrf.mxu0
    %v3062 = vadd.f32 %v2873, %v3061
    %v3063 = vpop.f32.mrf.mxu0
    %v3064 = vadd.f32 %v2875, %v3063
    %3065 = vmatmul.bf16.gmra.mxu0 %v1456
    %v3066 = vpop.f32.mrf.mxu0
    %v3067 = vadd.f32 %v2878, %v3066
    %v3068 = vpop.f32.mrf.mxu0
    %v3069 = vadd.f32 %v2880, %v3068
    %3070 = vmatmul.bf16.gmra.mxu0 %v1461
    %v3071 = vpop.f32.mrf.mxu0
    %v3072 = vadd.f32 %v2883, %v3071
    %v3073 = vpop.f32.mrf.mxu0
    %v3074 = vadd.f32 %v2885, %v3073
    %3075 = vmatmul.bf16.gmra.mxu0 %v1466
    %v3076 = vpop.f32.mrf.mxu0
    %v3077 = vadd.f32 %v2888, %v3076
    %v3078 = vpop.f32.mrf.mxu0
    %v3079 = vadd.f32 %v2890, %v3078
    %3080 = vmatmul.bf16.gmra.mxu0 %v1471
    %v3081 = vpop.f32.mrf.mxu0
    %v3082 = vadd.f32 %v2893, %v3081
    %v3083 = vpop.f32.mrf.mxu0
    %v3084 = vadd.f32 %v2895, %v3083
    %3085 = vmatmul.bf16.gmra.mxu0 %v1476
    %v3086 = vpop.f32.mrf.mxu0
    %v3087 = vadd.f32 %v2898, %v3086
    %v3088 = vpop.f32.mrf.mxu0
    %v3089 = vadd.f32 %v2900, %v3088
    %3090 = vmatmul.bf16.gmra.mxu0 %v1481
    %v3091 = vpop.f32.mrf.mxu0
    %v3092 = vadd.f32 %v2903, %v3091
    %v3093 = vpop.f32.mrf.mxu0
    %v3094 = vadd.f32 %v2905, %v3093
    %3095 = vmatmul.bf16.gmra.mxu0 %v1486
    %v3096 = vpop.f32.mrf.mxu0
    %v3097 = vadd.f32 %v2908, %v3096
    %v3098 = vpop.f32.mrf.mxu0
    %v3099 = vadd.f32 %v2910, %v3098
    %3100 = vmatmul.bf16.gmra.mxu0 %v1491
    %v3101 = vpop.f32.mrf.mxu0
    %v3102 = vadd.f32 %v2913, %v3101
    %v3103 = vpop.f32.mrf.mxu0
    %v3104 = vadd.f32 %v2915, %v3103
    %3105 = vmatmul.bf16.gmra.mxu0 %v1496
    %v3106 = vpop.f32.mrf.mxu0
    %v3107 = vadd.f32 %v2918, %v3106
    %v3108 = vpop.f32.mrf.mxu0
    %v3109 = vadd.f32 %v2920, %v3108
    %3110 = vmatmul.bf16.gmra.mxu0 %v1501
    %v3111 = vpop.f32.mrf.mxu0
    %v3112 = vadd.f32 %v2923, %v3111
    %v3113 = vpop.f32.mrf.mxu0
    %v3114 = vadd.f32 %v2925, %v3113
    %3115 = vdwg.mxu0
    %3116 = vmatpush.bf16.msra.mxu0 %v2358
    %3117 = vmatpush.bf16.msra.mxu0 %v2356
    %3118 = vmatpush.bf16.msra.mxu0 %v2354
    %3119 = vmatpush.bf16.msra.mxu0 %v2352
    %3120 = vmatpush.bf16.msra.mxu0 %v2350
    %3121 = vmatpush.bf16.msra.mxu0 %v2348
    %3122 = vmatpush.bf16.msra.mxu0 %v2346
    %3123 = vmatpush.bf16.msra.mxu0 %v2344
    %3124 = vmatmul.bf16.gmra.mxu0 %v1327
    %v3125 = vpop.f32.mrf.mxu0
    %v3126 = vadd.f32 %v2937, %v3125
    %v3127 = vpop.f32.mrf.mxu0
    %v3128 = vadd.f32 %v2939, %v3127
    %3129 = vmatmul.bf16.gmra.mxu0 %v1332
    %v3130 = vpop.f32.mrf.mxu0
    %v3131 = vadd.f32 %v2942, %v3130
    %v3132 = vpop.f32.mrf.mxu0
    %v3133 = vadd.f32 %v2944, %v3132
    %3134 = vmatmul.bf16.gmra.mxu0 %v1337
    %v3135 = vpop.f32.mrf.mxu0
    %v3136 = vadd.f32 %v2947, %v3135
    %v3137 = vpop.f32.mrf.mxu0
    %v3138 = vadd.f32 %v2949, %v3137
    %3139 = vmatmul.bf16.gmra.mxu0 %v1342
    %v3140 = vpop.f32.mrf.mxu0
    %v3141 = vadd.f32 %v2952, %v3140
    %v3142 = vpop.f32.mrf.mxu0
    %v3143 = vadd.f32 %v2954, %v3142
    %3144 = vmatmul.bf16.gmra.mxu0 %v1347
    %v3145 = vpop.f32.mrf.mxu0
    %v3146 = vadd.f32 %v2957, %v3145
    %v3147 = vpop.f32.mrf.mxu0
    %v3148 = vadd.f32 %v2959, %v3147
    %3149 = vmatmul.bf16.gmra.mxu0 %v1352
    %v3150 = vpop.f32.mrf.mxu0
    %v3151 = vadd.f32 %v2962, %v3150
    %v3152 = vpop.f32.mrf.mxu0
    %v3153 = vadd.f32 %v2964, %v3152
    %3154 = vmatmul.bf16.gmra.mxu0 %v1357
    %v3155 = vpop.f32.mrf.mxu0
    %v3156 = vadd.f32 %v2967, %v3155
    %v3157 = vpop.f32.mrf.mxu0
    %v3158 = vadd.f32 %v2969, %v3157
    %3159 = vmatmul.bf16.gmra.mxu0 %v1362
    %v3160 = vpop.f32.mrf.mxu0
    %v3161 = vadd.f32 %v2972, %v3160
    %v3162 = vpop.f32.mrf.mxu0
    %v3163 = vadd.f32 %v2974, %v3162
    %3164 = vmatmul.bf16.gmra.mxu0 %v1367
    %v3165 = vpop.f32.mrf.mxu0
    %v3166 = vadd.f32 %v2977, %v3165
    %v3167 = vpop.f32.mrf.mxu0
    %v3168 = vadd.f32 %v2979, %v3167
    %3169 = vmatmul.bf16.gmra.mxu0 %v1372
    %v3170 = vpop.f32.mrf.mxu0
    %v3171 = vadd.f32 %v2982, %v3170
    %v3172 = vpop.f32.mrf.mxu0
    %v3173 = vadd.f32 %v2984, %v3172
    %3174 = vmatmul.bf16.gmra.mxu0 %v1377
    %v3175 = vpop.f32.mrf.mxu0
    %v3176 = vadd.f32 %v2987, %v3175
    %v3177 = vpop.f32.mrf.mxu0
    %v3178 = vadd.f32 %v2989, %v3177
    %3179 = vmatmul.bf16.gmra.mxu0 %v1382
    %v3180 = vpop.f32.mrf.mxu0
    %v3181 = vadd.f32 %v2992, %v3180
    %v3182 = vpop.f32.mrf.mxu0
    %v3183 = vadd.f32 %v2994, %v3182
    %3184 = vmatmul.bf16.gmra.mxu0 %v1387
    %v3185 = vpop.f32.mrf.mxu0
    %v3186 = vadd.f32 %v2997, %v3185
    %v3187 = vpop.f32.mrf.mxu0
    %v3188 = vadd.f32 %v2999, %v3187
    %3189 = vmatmul.bf16.gmra.mxu0 %v1392
    %v3190 = vpop.f32.mrf.mxu0
    %v3191 = vadd.f32 %v3002, %v3190
    %v3192 = vpop.f32.mrf.mxu0
    %v3193 = vadd.f32 %v3004, %v3192
    %3194 = vmatmul.bf16.gmra.mxu0 %v1397
    %v3195 = vpop.f32.mrf.mxu0
    %v3196 = vadd.f32 %v3007, %v3195
    %v3197 = vpop.f32.mrf.mxu0
    %v3198 = vadd.f32 %v3009, %v3197
    %3199 = vmatmul.bf16.gmra.mxu0 %v1402
    %v3200 = vpop.f32.mrf.mxu0
    %v3201 = vadd.f32 %v3012, %v3200
    %v3202 = vpop.f32.mrf.mxu0
    %v3203 = vadd.f32 %v3014, %v3202
    %3204 = vmatmul.bf16.gmra.mxu0 %v1407
    %v3205 = vpop.f32.mrf.mxu0
    %v3206 = vadd.f32 %v3017, %v3205
    %v3207 = vpop.f32.mrf.mxu0
    %v3208 = vadd.f32 %v3019, %v3207
    %3209 = vmatmul.bf16.gmra.mxu0 %v1412
    %v3210 = vpop.f32.mrf.mxu0
    %v3211 = vadd.f32 %v3022, %v3210
    %v3212 = vpop.f32.mrf.mxu0
    %v3213 = vadd.f32 %v3024, %v3212
    %3214 = vmatmul.bf16.gmra.mxu0 %v1417
    %v3215 = vpop.f32.mrf.mxu0
    %v3216 = vadd.f32 %v3027, %v3215
    %v3217 = vpop.f32.mrf.mxu0
    %v3218 = vadd.f32 %v3029, %v3217
    %3219 = vmatmul.bf16.gmra.mxu0 %v1422
    %v3220 = vpop.f32.mrf.mxu0
    %v3221 = vadd.f32 %v3032, %v3220
    %v3222 = vpop.f32.mrf.mxu0
    %v3223 = vadd.f32 %v3034, %v3222
    %3224 = vmatmul.bf16.gmra.mxu0 %v1427
    %v3225 = vpop.f32.mrf.mxu0
    %v3226 = vadd.f32 %v3037, %v3225
    %v3227 = vpop.f32.mrf.mxu0
    %v3228 = vadd.f32 %v3039, %v3227
    %3229 = vmatmul.bf16.gmra.mxu0 %v1432
    %v3230 = vpop.f32.mrf.mxu0
    %v3231 = vadd.f32 %v3042, %v3230
    %v3232 = vpop.f32.mrf.mxu0
    %v3233 = vadd.f32 %v3044, %v3232
    %3234 = vmatmul.bf16.gmra.mxu0 %v1437
    %v3235 = vpop.f32.mrf.mxu0
    %v3236 = vadd.f32 %v3047, %v3235
    %v3237 = vpop.f32.mrf.mxu0
    %v3238 = vadd.f32 %v3049, %v3237
    %3239 = vmatmul.bf16.gmra.mxu0 %v1442
    %v3240 = vpop.f32.mrf.mxu0
    %v3241 = vadd.f32 %v3052, %v3240
    %v3242 = vpop.f32.mrf.mxu0
    %v3243 = vadd.f32 %v3054, %v3242
    %3244 = vmatmul.bf16.gmra.mxu0 %v1447
    %v3245 = vpop.f32.mrf.mxu0
    %v3246 = vadd.f32 %v3057, %v3245
    %v3247 = vpop.f32.mrf.mxu0
    %v3248 = vadd.f32 %v3059, %v3247
    %3249 = vmatmul.bf16.gmra.mxu0 %v1452
    %v3250 = vpop.f32.mrf.mxu0
    %v3251 = vadd.f32 %v3062, %v3250
    %v3252 = vpop.f32.mrf.mxu0
    %v3253 = vadd.f32 %v3064, %v3252
    %3254 = vmatmul.bf16.gmra.mxu0 %v1457
    %v3255 = vpop.f32.mrf.mxu0
    %v3256 = vadd.f32 %v3067, %v3255
    %v3257 = vpop.f32.mrf.mxu0
    %v3258 = vadd.f32 %v3069, %v3257
    %3259 = vmatmul.bf16.gmra.mxu0 %v1462
    %v3260 = vpop.f32.mrf.mxu0
    %v3261 = vadd.f32 %v3072, %v3260
    %v3262 = vpop.f32.mrf.mxu0
    %v3263 = vadd.f32 %v3074, %v3262
    %3264 = vmatmul.bf16.gmra.mxu0 %v1467
    %v3265 = vpop.f32.mrf.mxu0
    %v3266 = vadd.f32 %v3077, %v3265
    %v3267 = vpop.f32.mrf.mxu0
    %v3268 = vadd.f32 %v3079, %v3267
    %3269 = vmatmul.bf16.gmra.mxu0 %v1472
    %v3270 = vpop.f32.mrf.mxu0
    %v3271 = vadd.f32 %v3082, %v3270
    %v3272 = vpop.f32.mrf.mxu0
    %v3273 = vadd.f32 %v3084, %v3272
    %3274 = vmatmul.bf16.gmra.mxu0 %v1477
    %v3275 = vpop.f32.mrf.mxu0
    %v3276 = vadd.f32 %v3087, %v3275
    %v3277 = vpop.f32.mrf.mxu0
    %v3278 = vadd.f32 %v3089, %v3277
    %3279 = vmatmul.bf16.gmra.mxu0 %v1482
    %v3280 = vpop.f32.mrf.mxu0
    %v3281 = vadd.f32 %v3092, %v3280
    %v3282 = vpop.f32.mrf.mxu0
    %v3283 = vadd.f32 %v3094, %v3282
    %3284 = vmatmul.bf16.gmra.mxu0 %v1487
    %v3285 = vpop.f32.mrf.mxu0
    %v3286 = vadd.f32 %v3097, %v3285
    %v3287 = vpop.f32.mrf.mxu0
    %v3288 = vadd.f32 %v3099, %v3287
    %3289 = vmatmul.bf16.gmra.mxu0 %v1492
    %v3290 = vpop.f32.mrf.mxu0
    %v3291 = vadd.f32 %v3102, %v3290
    %v3292 = vpop.f32.mrf.mxu0
    %v3293 = vadd.f32 %v3104, %v3292
    %3294 = vmatmul.bf16.gmra.mxu0 %v1497
    %v3295 = vpop.f32.mrf.mxu0
    %v3296 = vadd.f32 %v3107, %v3295
    %v3297 = vpop.f32.mrf.mxu0
    %v3298 = vadd.f32 %v3109, %v3297
    %3299 = vmatmul.bf16.gmra.mxu0 %v1502
    %v3300 = vpop.f32.mrf.mxu0
    %v3301 = vadd.f32 %v3112, %v3300
    %v3302 = vpop.f32.mrf.mxu0
    %v3303 = vadd.f32 %v3114, %v3302
    %3304 = vdwg.mxu0
    %3305 = vmatpush.bf16.msra.mxu0 0
    %3306 = vmatpush.bf16.msra.mxu0 0
    %3307 = vmatpush.bf16.msra.mxu0 0
    %3308 = vmatpush.bf16.msra.mxu0 0
    %3309 = vmatpush.bf16.msra.mxu0 %v2366
    %3310 = vmatpush.bf16.msra.mxu0 %v2364
    %3311 = vmatpush.bf16.msra.mxu0 %v2362
    %3312 = vmatpush.bf16.msra.mxu0 %v2360
    %3313 = vmatmul.bf16.gmra.mxu0 %v2442
    %v3314 = vpop.f32.mrf.mxu0
    %v3315 = vadd.f32 %v3126, %v3314
    %v3316 = vpop.f32.mrf.mxu0
    %v3317 = vadd.f32 %v3128, %v3316
    %3318 = vmatmul.bf16.gmra.mxu0 %v2445
    %v3319 = vpop.f32.mrf.mxu0
    %v3320 = vadd.f32 %v3131, %v3319
    %v3321 = vpop.f32.mrf.mxu0
    %v3322 = vadd.f32 %v3133, %v3321
    %3323 = vmatmul.bf16.gmra.mxu0 %v2448
    %v3324 = vpop.f32.mrf.mxu0
    %v3325 = vadd.f32 %v3136, %v3324
    %v3326 = vpop.f32.mrf.mxu0
    %v3327 = vadd.f32 %v3138, %v3326
    %3328 = vmatmul.bf16.gmra.mxu0 %v2451
    %v3329 = vpop.f32.mrf.mxu0
    %v3330 = vadd.f32 %v3141, %v3329
    %v3331 = vpop.f32.mrf.mxu0
    %v3332 = vadd.f32 %v3143, %v3331
    %3333 = vmatmul.bf16.gmra.mxu0 %v2454
    %v3334 = vpop.f32.mrf.mxu0
    %v3335 = vadd.f32 %v3146, %v3334
    %v3336 = vpop.f32.mrf.mxu0
    %v3337 = vadd.f32 %v3148, %v3336
    %3338 = vmatmul.bf16.gmra.mxu0 %v2457
    %v3339 = vpop.f32.mrf.mxu0
    %v3340 = vadd.f32 %v3151, %v3339
    %v3341 = vpop.f32.mrf.mxu0
    %v3342 = vadd.f32 %v3153, %v3341
    %3343 = vmatmul.bf16.gmra.mxu0 %v2460
    %v3344 = vpop.f32.mrf.mxu0
    %v3345 = vadd.f32 %v3156, %v3344
    %v3346 = vpop.f32.mrf.mxu0
    %v3347 = vadd.f32 %v3158, %v3346
    %3348 = vmatmul.bf16.gmra.mxu0 %v2463
    %v3349 = vpop.f32.mrf.mxu0
    %v3350 = vadd.f32 %v3161, %v3349
    %v3351 = vpop.f32.mrf.mxu0
    %v3352 = vadd.f32 %v3163, %v3351
    %3353 = vmatmul.bf16.gmra.mxu0 %v2466
    %v3354 = vpop.f32.mrf.mxu0
    %v3355 = vadd.f32 %v3166, %v3354
    %v3356 = vpop.f32.mrf.mxu0
    %v3357 = vadd.f32 %v3168, %v3356
    %3358 = vmatmul.bf16.gmra.mxu0 %v2469
    %v3359 = vpop.f32.mrf.mxu0
    %v3360 = vadd.f32 %v3171, %v3359
    %v3361 = vpop.f32.mrf.mxu0
    %v3362 = vadd.f32 %v3173, %v3361
    %3363 = vmatmul.bf16.gmra.mxu0 %v2472
    %v3364 = vpop.f32.mrf.mxu0
    %v3365 = vadd.f32 %v3176, %v3364
    %v3366 = vpop.f32.mrf.mxu0
    %v3367 = vadd.f32 %v3178, %v3366
    %3368 = vmatmul.bf16.gmra.mxu0 %v2475
    %v3369 = vpop.f32.mrf.mxu0
    %v3370 = vadd.f32 %v3181, %v3369
    %v3371 = vpop.f32.mrf.mxu0
    %v3372 = vadd.f32 %v3183, %v3371
    %3373 = vmatmul.bf16.gmra.mxu0 %v2478
    %v3374 = vpop.f32.mrf.mxu0
    %v3375 = vadd.f32 %v3186, %v3374
    %v3376 = vpop.f32.mrf.mxu0
    %v3377 = vadd.f32 %v3188, %v3376
    %3378 = vmatmul.bf16.gmra.mxu0 %v2481
    %v3379 = vpop.f32.mrf.mxu0
    %v3380 = vadd.f32 %v3191, %v3379
    %v3381 = vpop.f32.mrf.mxu0
    %v3382 = vadd.f32 %v3193, %v3381
    %3383 = vmatmul.bf16.gmra.mxu0 %v2484
    %v3384 = vpop.f32.mrf.mxu0
    %v3385 = vadd.f32 %v3196, %v3384
    %v3386 = vpop.f32.mrf.mxu0
    %v3387 = vadd.f32 %v3198, %v3386
    %3388 = vmatmul.bf16.gmra.mxu0 %v2487
    %v3389 = vpop.f32.mrf.mxu0
    %v3390 = vadd.f32 %v3201, %v3389
    %v3391 = vpop.f32.mrf.mxu0
    %v3392 = vadd.f32 %v3203, %v3391
    %3393 = vmatmul.bf16.gmra.mxu0 %v2490
    %v3394 = vpop.f32.mrf.mxu0
    %v3395 = vadd.f32 %v3206, %v3394
    %v3396 = vpop.f32.mrf.mxu0
    %v3397 = vadd.f32 %v3208, %v3396
    %3398 = vmatmul.bf16.gmra.mxu0 %v2493
    %v3399 = vpop.f32.mrf.mxu0
    %v3400 = vadd.f32 %v3211, %v3399
    %v3401 = vpop.f32.mrf.mxu0
    %v3402 = vadd.f32 %v3213, %v3401
    %3403 = vmatmul.bf16.gmra.mxu0 %v2496
    %v3404 = vpop.f32.mrf.mxu0
    %v3405 = vadd.f32 %v3216, %v3404
    %v3406 = vpop.f32.mrf.mxu0
    %v3407 = vadd.f32 %v3218, %v3406
    %3408 = vmatmul.bf16.gmra.mxu0 %v2499
    %v3409 = vpop.f32.mrf.mxu0
    %v3410 = vadd.f32 %v3221, %v3409
    %v3411 = vpop.f32.mrf.mxu0
    %v3412 = vadd.f32 %v3223, %v3411
    %3413 = vmatmul.bf16.gmra.mxu0 %v2502
    %v3414 = vpop.f32.mrf.mxu0
    %v3415 = vadd.f32 %v3226, %v3414
    %v3416 = vpop.f32.mrf.mxu0
    %v3417 = vadd.f32 %v3228, %v3416
    %3418 = vmatmul.bf16.gmra.mxu0 %v2505
    %v3419 = vpop.f32.mrf.mxu0
    %v3420 = vadd.f32 %v3231, %v3419
    %v3421 = vpop.f32.mrf.mxu0
    %v3422 = vadd.f32 %v3233, %v3421
    %3423 = vmatmul.bf16.gmra.mxu0 %v2508
    %v3424 = vpop.f32.mrf.mxu0
    %v3425 = vadd.f32 %v3236, %v3424
    %v3426 = vpop.f32.mrf.mxu0
    %v3427 = vadd.f32 %v3238, %v3426
    %3428 = vmatmul.bf16.gmra.mxu0 %v2511
    %v3429 = vpop.f32.mrf.mxu0
    %v3430 = vadd.f32 %v3241, %v3429
    %v3431 = vpop.f32.mrf.mxu0
    %v3432 = vadd.f32 %v3243, %v3431
    %3433 = vmatmul.bf16.gmra.mxu0 %v2514
    %v3434 = vpop.f32.mrf.mxu0
    %v3435 = vadd.f32 %v3246, %v3434
    %v3436 = vpop.f32.mrf.mxu0
    %v3437 = vadd.f32 %v3248, %v3436
    %3438 = vmatmul.bf16.gmra.mxu0 %v2517
    %v3439 = vpop.f32.mrf.mxu0
    %v3440 = vadd.f32 %v3251, %v3439
    %v3441 = vpop.f32.mrf.mxu0
    %v3442 = vadd.f32 %v3253, %v3441
    %3443 = vmatmul.bf16.gmra.mxu0 %v2520
    %v3444 = vpop.f32.mrf.mxu0
    %v3445 = vadd.f32 %v3256, %v3444
    %v3446 = vpop.f32.mrf.mxu0
    %v3447 = vadd.f32 %v3258, %v3446
    %3448 = vmatmul.bf16.gmra.mxu0 %v2523
    %v3449 = vpop.f32.mrf.mxu0
    %v3450 = vadd.f32 %v3261, %v3449
    %v3451 = vpop.f32.mrf.mxu0
    %v3452 = vadd.f32 %v3263, %v3451
    %3453 = vmatmul.bf16.gmra.mxu0 %v2526
    %v3454 = vpop.f32.mrf.mxu0
    %v3455 = vadd.f32 %v3266, %v3454
    %v3456 = vpop.f32.mrf.mxu0
    %v3457 = vadd.f32 %v3268, %v3456
    %3458 = vmatmul.bf16.gmra.mxu0 %v2529
    %v3459 = vpop.f32.mrf.mxu0
    %v3460 = vadd.f32 %v3271, %v3459
    %v3461 = vpop.f32.mrf.mxu0
    %v3462 = vadd.f32 %v3273, %v3461
    %3463 = vmatmul.bf16.gmra.mxu0 %v2532
    %v3464 = vpop.f32.mrf.mxu0
    %v3465 = vadd.f32 %v3276, %v3464
    %v3466 = vpop.f32.mrf.mxu0
    %v3467 = vadd.f32 %v3278, %v3466
    %3468 = vmatmul.bf16.gmra.mxu0 %v2535
    %v3469 = vpop.f32.mrf.mxu0
    %v3470 = vadd.f32 %v3281, %v3469
    %v3471 = vpop.f32.mrf.mxu0
    %v3472 = vadd.f32 %v3283, %v3471
    %3473 = vmatmul.bf16.gmra.mxu0 %v2538
    %v3474 = vpop.f32.mrf.mxu0
    %v3475 = vadd.f32 %v3286, %v3474
    %v3476 = vpop.f32.mrf.mxu0
    %v3477 = vadd.f32 %v3288, %v3476
    %3478 = vmatmul.bf16.gmra.mxu0 %v2541
    %v3479 = vpop.f32.mrf.mxu0
    %v3480 = vadd.f32 %v3291, %v3479
    %v3481 = vpop.f32.mrf.mxu0
    %v3482 = vadd.f32 %v3293, %v3481
    %3483 = vmatmul.bf16.gmra.mxu0 %v2544
    %v3484 = vpop.f32.mrf.mxu0
    %v3485 = vadd.f32 %v3296, %v3484
    %v3486 = vpop.f32.mrf.mxu0
    %v3487 = vadd.f32 %v3298, %v3486
    %3488 = vmatmul.bf16.gmra.mxu0 %v2547
    %v3489 = vpop.f32.mrf.mxu0
    %v3490 = vadd.f32 %v3301, %v3489
    %v3491 = vpop.f32.mrf.mxu0
    %v3492 = vadd.f32 %v3303, %v3491
    %3493 = vdwg.mxu0
    %3494 = vmatpush.bf16.msra.mxu0 %v2311
    %3495 = vmatpush.bf16.msra.mxu0 %v2309
    %3496 = vmatpush.bf16.msra.mxu0 %v2307
    %3497 = vmatpush.bf16.msra.mxu0 %v2305
    %3498 = vmatpush.bf16.msra.mxu0 %v2303
    %3499 = vmatpush.bf16.msra.mxu0 %v2301
    %3500 = vmatpush.bf16.msra.mxu0 %v2299
    %3501 = vmatpush.bf16.msra.mxu0 %v2297
    %3502 = vmatmul.bf16.gmra.mxu0 %v1324
    %v3503 = vpop.f32.mrf.mxu0
    %v3504 = vadd.f32 0.0, %v3503
    %v3505 = vpop.f32.mrf.mxu0
    %v3506 = vadd.f32 0.0, %v3505
    %3507 = vmatmul.bf16.gmra.mxu0 %v1329
    %v3508 = vpop.f32.mrf.mxu0
    %v3509 = vadd.f32 0.0, %v3508
    %v3510 = vpop.f32.mrf.mxu0
    %v3511 = vadd.f32 0.0, %v3510
    %3512 = vmatmul.bf16.gmra.mxu0 %v1334
    %v3513 = vpop.f32.mrf.mxu0
    %v3514 = vadd.f32 0.0, %v3513
    %v3515 = vpop.f32.mrf.mxu0
    %v3516 = vadd.f32 0.0, %v3515
    %3517 = vmatmul.bf16.gmra.mxu0 %v1339
    %v3518 = vpop.f32.mrf.mxu0
    %v3519 = vadd.f32 0.0, %v3518
    %v3520 = vpop.f32.mrf.mxu0
    %v3521 = vadd.f32 0.0, %v3520
    %3522 = vmatmul.bf16.gmra.mxu0 %v1344
    %v3523 = vpop.f32.mrf.mxu0
    %v3524 = vadd.f32 0.0, %v3523
    %v3525 = vpop.f32.mrf.mxu0
    %v3526 = vadd.f32 0.0, %v3525
    %3527 = vmatmul.bf16.gmra.mxu0 %v1349
    %v3528 = vpop.f32.mrf.mxu0
    %v3529 = vadd.f32 0.0, %v3528
    %v3530 = vpop.f32.mrf.mxu0
    %v3531 = vadd.f32 0.0, %v3530
    %3532 = vmatmul.bf16.gmra.mxu0 %v1354
    %v3533 = vpop.f32.mrf.mxu0
    %v3534 = vadd.f32 0.0, %v3533
    %v3535 = vpop.f32.mrf.mxu0
    %v3536 = vadd.f32 0.0, %v3535
    %3537 = vmatmul.bf16.gmra.mxu0 %v1359
    %v3538 = vpop.f32.mrf.mxu0
    %v3539 = vadd.f32 0.0, %v3538
    %v3540 = vpop.f32.mrf.mxu0
    %v3541 = vadd.f32 0.0, %v3540
    %3542 = vmatmul.bf16.gmra.mxu0 %v1364
    %v3543 = vpop.f32.mrf.mxu0
    %v3544 = vadd.f32 0.0, %v3543
    %v3545 = vpop.f32.mrf.mxu0
    %v3546 = vadd.f32 0.0, %v3545
    %3547 = vmatmul.bf16.gmra.mxu0 %v1369
    %v3548 = vpop.f32.mrf.mxu0
    %v3549 = vadd.f32 0.0, %v3548
    %v3550 = vpop.f32.mrf.mxu0
    %v3551 = vadd.f32 0.0, %v3550
    %3552 = vmatmul.bf16.gmra.mxu0 %v1374
    %v3553 = vpop.f32.mrf.mxu0
    %v3554 = vadd.f32 0.0, %v3553
    %v3555 = vpop.f32.mrf.mxu0
    %v3556 = vadd.f32 0.0, %v3555
    %3557 = vmatmul.bf16.gmra.mxu0 %v1379
    %v3558 = vpop.f32.mrf.mxu0
    %v3559 = vadd.f32 0.0, %v3558
    %v3560 = vpop.f32.mrf.mxu0
    %v3561 = vadd.f32 0.0, %v3560
    %3562 = vmatmul.bf16.gmra.mxu0 %v1384
    %v3563 = vpop.f32.mrf.mxu0
    %v3564 = vadd.f32 0.0, %v3563
    %v3565 = vpop.f32.mrf.mxu0
    %v3566 = vadd.f32 0.0, %v3565
    %3567 = vmatmul.bf16.gmra.mxu0 %v1389
    %v3568 = vpop.f32.mrf.mxu0
    %v3569 = vadd.f32 0.0, %v3568
    %v3570 = vpop.f32.mrf.mxu0
    %v3571 = vadd.f32 0.0, %v3570
    %3572 = vmatmul.bf16.gmra.mxu0 %v1394
    %v3573 = vpop.f32.mrf.mxu0
    %v3574 = vadd.f32 0.0, %v3573
    %v3575 = vpop.f32.mrf.mxu0
    %v3576 = vadd.f32 0.0, %v3575
    %3577 = vmatmul.bf16.gmra.mxu0 %v1399
    %v3578 = vpop.f32.mrf.mxu0
    %v3579 = vadd.f32 0.0, %v3578
    %v3580 = vpop.f32.mrf.mxu0
    %v3581 = vadd.f32 0.0, %v3580
    %3582 = vmatmul.bf16.gmra.mxu0 %v1404
    %v3583 = vpop.f32.mrf.mxu0
    %v3584 = vadd.f32 0.0, %v3583
    %v3585 = vpop.f32.mrf.mxu0
    %v3586 = vadd.f32 0.0, %v3585
    %3587 = vmatmul.bf16.gmra.mxu0 %v1409
    %v3588 = vpop.f32.mrf.mxu0
    %v3589 = vadd.f32 0.0, %v3588
    %v3590 = vpop.f32.mrf.mxu0
    %v3591 = vadd.f32 0.0, %v3590
    %3592 = vmatmul.bf16.gmra.mxu0 %v1414
    %v3593 = vpop.f32.mrf.mxu0
    %v3594 = vadd.f32 0.0, %v3593
    %v3595 = vpop.f32.mrf.mxu0
    %v3596 = vadd.f32 0.0, %v3595
    %3597 = vmatmul.bf16.gmra.mxu0 %v1419
    %v3598 = vpop.f32.mrf.mxu0
    %v3599 = vadd.f32 0.0, %v3598
    %v3600 = vpop.f32.mrf.mxu0
    %v3601 = vadd.f32 0.0, %v3600
    %3602 = vmatmul.bf16.gmra.mxu0 %v1424
    %v3603 = vpop.f32.mrf.mxu0
    %v3604 = vadd.f32 0.0, %v3603
    %v3605 = vpop.f32.mrf.mxu0
    %v3606 = vadd.f32 0.0, %v3605
    %3607 = vmatmul.bf16.gmra.mxu0 %v1429
    %v3608 = vpop.f32.mrf.mxu0
    %v3609 = vadd.f32 0.0, %v3608
    %v3610 = vpop.f32.mrf.mxu0
    %v3611 = vadd.f32 0.0, %v3610
    %3612 = vmatmul.bf16.gmra.mxu0 %v1434
    %v3613 = vpop.f32.mrf.mxu0
    %v3614 = vadd.f32 0.0, %v3613
    %v3615 = vpop.f32.mrf.mxu0
    %v3616 = vadd.f32 0.0, %v3615
    %3617 = vmatmul.bf16.gmra.mxu0 %v1439
    %v3618 = vpop.f32.mrf.mxu0
    %v3619 = vadd.f32 0.0, %v3618
    %v3620 = vpop.f32.mrf.mxu0
    %v3621 = vadd.f32 0.0, %v3620
    %3622 = vmatmul.bf16.gmra.mxu0 %v1444
    %v3623 = vpop.f32.mrf.mxu0
    %v3624 = vadd.f32 0.0, %v3623
    %v3625 = vpop.f32.mrf.mxu0
    %v3626 = vadd.f32 0.0, %v3625
    %3627 = vmatmul.bf16.gmra.mxu0 %v1449
    %v3628 = vpop.f32.mrf.mxu0
    %v3629 = vadd.f32 0.0, %v3628
    %v3630 = vpop.f32.mrf.mxu0
    %v3631 = vadd.f32 0.0, %v3630
    %3632 = vmatmul.bf16.gmra.mxu0 %v1454
    %v3633 = vpop.f32.mrf.mxu0
    %v3634 = vadd.f32 0.0, %v3633
    %v3635 = vpop.f32.mrf.mxu0
    %v3636 = vadd.f32 0.0, %v3635
    %3637 = vmatmul.bf16.gmra.mxu0 %v1459
    %v3638 = vpop.f32.mrf.mxu0
    %v3639 = vadd.f32 0.0, %v3638
    %v3640 = vpop.f32.mrf.mxu0
    %v3641 = vadd.f32 0.0, %v3640
    %3642 = vmatmul.bf16.gmra.mxu0 %v1464
    %v3643 = vpop.f32.mrf.mxu0
    %v3644 = vadd.f32 0.0, %v3643
    %v3645 = vpop.f32.mrf.mxu0
    %v3646 = vadd.f32 0.0, %v3645
    %3647 = vmatmul.bf16.gmra.mxu0 %v1469
    %v3648 = vpop.f32.mrf.mxu0
    %v3649 = vadd.f32 0.0, %v3648
    %v3650 = vpop.f32.mrf.mxu0
    %v3651 = vadd.f32 0.0, %v3650
    %3652 = vmatmul.bf16.gmra.mxu0 %v1474
    %v3653 = vpop.f32.mrf.mxu0
    %v3654 = vadd.f32 0.0, %v3653
    %v3655 = vpop.f32.mrf.mxu0
    %v3656 = vadd.f32 0.0, %v3655
    %3657 = vmatmul.bf16.gmra.mxu0 %v1479
    %v3658 = vpop.f32.mrf.mxu0
    %v3659 = vadd.f32 0.0, %v3658
    %v3660 = vpop.f32.mrf.mxu0
    %v3661 = vadd.f32 0.0, %v3660
    %3662 = vmatmul.bf16.gmra.mxu0 %v1484
    %v3663 = vpop.f32.mrf.mxu0
    %v3664 = vadd.f32 0.0, %v3663
    %v3665 = vpop.f32.mrf.mxu0
    %v3666 = vadd.f32 0.0, %v3665
    %3667 = vmatmul.bf16.gmra.mxu0 %v1489
    %v3668 = vpop.f32.mrf.mxu0
    %v3669 = vadd.f32 0.0, %v3668
    %v3670 = vpop.f32.mrf.mxu0
    %v3671 = vadd.f32 0.0, %v3670
    %3672 = vmatmul.bf16.gmra.mxu0 %v1494
    %v3673 = vpop.f32.mrf.mxu0
    %v3674 = vadd.f32 0.0, %v3673
    %v3675 = vpop.f32.mrf.mxu0
    %v3676 = vadd.f32 0.0, %v3675
    %3677 = vmatmul.bf16.gmra.mxu0 %v1499
    %v3678 = vpop.f32.mrf.mxu0
    %v3679 = vadd.f32 0.0, %v3678
    %v3680 = vpop.f32.mrf.mxu0
    %v3681 = vadd.f32 0.0, %v3680
    %3682 = vdwg.mxu0
    %3683 = vmatpush.bf16.msra.mxu0 %v2327
    %3684 = vmatpush.bf16.msra.mxu0 %v2325
    %3685 = vmatpush.bf16.msra.mxu0 %v2323
    %3686 = vmatpush.bf16.msra.mxu0 %v2321
    %3687 = vmatpush.bf16.msra.mxu0 %v2319
    %3688 = vmatpush.bf16.msra.mxu0 %v2317
    %3689 = vmatpush.bf16.msra.mxu0 %v2315
    %3690 = vmatpush.bf16.msra.mxu0 %v2313
    %3691 = vmatmul.bf16.gmra.mxu0 %v1325
    %v3692 = vpop.f32.mrf.mxu0
    %v3693 = vadd.f32 %v3504, %v3692
    %v3694 = vpop.f32.mrf.mxu0
    %v3695 = vadd.f32 %v3506, %v3694
    %3696 = vmatmul.bf16.gmra.mxu0 %v1330
    %v3697 = vpop.f32.mrf.mxu0
    %v3698 = vadd.f32 %v3509, %v3697
    %v3699 = vpop.f32.mrf.mxu0
    %v3700 = vadd.f32 %v3511, %v3699
    %3701 = vmatmul.bf16.gmra.mxu0 %v1335
    %v3702 = vpop.f32.mrf.mxu0
    %v3703 = vadd.f32 %v3514, %v3702
    %v3704 = vpop.f32.mrf.mxu0
    %v3705 = vadd.f32 %v3516, %v3704
    %3706 = vmatmul.bf16.gmra.mxu0 %v1340
    %v3707 = vpop.f32.mrf.mxu0
    %v3708 = vadd.f32 %v3519, %v3707
    %v3709 = vpop.f32.mrf.mxu0
    %v3710 = vadd.f32 %v3521, %v3709
    %3711 = vmatmul.bf16.gmra.mxu0 %v1345
    %v3712 = vpop.f32.mrf.mxu0
    %v3713 = vadd.f32 %v3524, %v3712
    %v3714 = vpop.f32.mrf.mxu0
    %v3715 = vadd.f32 %v3526, %v3714
    %3716 = vmatmul.bf16.gmra.mxu0 %v1350
    %v3717 = vpop.f32.mrf.mxu0
    %v3718 = vadd.f32 %v3529, %v3717
    %v3719 = vpop.f32.mrf.mxu0
    %v3720 = vadd.f32 %v3531, %v3719
    %3721 = vmatmul.bf16.gmra.mxu0 %v1355
    %v3722 = vpop.f32.mrf.mxu0
    %v3723 = vadd.f32 %v3534, %v3722
    %v3724 = vpop.f32.mrf.mxu0
    %v3725 = vadd.f32 %v3536, %v3724
    %3726 = vmatmul.bf16.gmra.mxu0 %v1360
    %v3727 = vpop.f32.mrf.mxu0
    %v3728 = vadd.f32 %v3539, %v3727
    %v3729 = vpop.f32.mrf.mxu0
    %v3730 = vadd.f32 %v3541, %v3729
    %3731 = vmatmul.bf16.gmra.mxu0 %v1365
    %v3732 = vpop.f32.mrf.mxu0
    %v3733 = vadd.f32 %v3544, %v3732
    %v3734 = vpop.f32.mrf.mxu0
    %v3735 = vadd.f32 %v3546, %v3734
    %3736 = vmatmul.bf16.gmra.mxu0 %v1370
    %v3737 = vpop.f32.mrf.mxu0
    %v3738 = vadd.f32 %v3549, %v3737
    %v3739 = vpop.f32.mrf.mxu0
    %v3740 = vadd.f32 %v3551, %v3739
    %3741 = vmatmul.bf16.gmra.mxu0 %v1375
    %v3742 = vpop.f32.mrf.mxu0
    %v3743 = vadd.f32 %v3554, %v3742
    %v3744 = vpop.f32.mrf.mxu0
    %v3745 = vadd.f32 %v3556, %v3744
    %3746 = vmatmul.bf16.gmra.mxu0 %v1380
    %v3747 = vpop.f32.mrf.mxu0
    %v3748 = vadd.f32 %v3559, %v3747
    %v3749 = vpop.f32.mrf.mxu0
    %v3750 = vadd.f32 %v3561, %v3749
    %3751 = vmatmul.bf16.gmra.mxu0 %v1385
    %v3752 = vpop.f32.mrf.mxu0
    %v3753 = vadd.f32 %v3564, %v3752
    %v3754 = vpop.f32.mrf.mxu0
    %v3755 = vadd.f32 %v3566, %v3754
    %3756 = vmatmul.bf16.gmra.mxu0 %v1390
    %v3757 = vpop.f32.mrf.mxu0
    %v3758 = vadd.f32 %v3569, %v3757
    %v3759 = vpop.f32.mrf.mxu0
    %v3760 = vadd.f32 %v3571, %v3759
    %3761 = vmatmul.bf16.gmra.mxu0 %v1395
    %v3762 = vpop.f32.mrf.mxu0
    %v3763 = vadd.f32 %v3574, %v3762
    %v3764 = vpop.f32.mrf.mxu0
    %v3765 = vadd.f32 %v3576, %v3764
    %3766 = vmatmul.bf16.gmra.mxu0 %v1400
    %v3767 = vpop.f32.mrf.mxu0
    %v3768 = vadd.f32 %v3579, %v3767
    %v3769 = vpop.f32.mrf.mxu0
    %v3770 = vadd.f32 %v3581, %v3769
    %3771 = vmatmul.bf16.gmra.mxu0 %v1405
    %v3772 = vpop.f32.mrf.mxu0
    %v3773 = vadd.f32 %v3584, %v3772
    %v3774 = vpop.f32.mrf.mxu0
    %v3775 = vadd.f32 %v3586, %v3774
    %3776 = vmatmul.bf16.gmra.mxu0 %v1410
    %v3777 = vpop.f32.mrf.mxu0
    %v3778 = vadd.f32 %v3589, %v3777
    %v3779 = vpop.f32.mrf.mxu0
    %v3780 = vadd.f32 %v3591, %v3779
    %3781 = vmatmul.bf16.gmra.mxu0 %v1415
    %v3782 = vpop.f32.mrf.mxu0
    %v3783 = vadd.f32 %v3594, %v3782
    %v3784 = vpop.f32.mrf.mxu0
    %v3785 = vadd.f32 %v3596, %v3784
    %3786 = vmatmul.bf16.gmra.mxu0 %v1420
    %v3787 = vpop.f32.mrf.mxu0
    %v3788 = vadd.f32 %v3599, %v3787
    %v3789 = vpop.f32.mrf.mxu0
    %v3790 = vadd.f32 %v3601, %v3789
    %3791 = vmatmul.bf16.gmra.mxu0 %v1425
    %v3792 = vpop.f32.mrf.mxu0
    %v3793 = vadd.f32 %v3604, %v3792
    %v3794 = vpop.f32.mrf.mxu0
    %v3795 = vadd.f32 %v3606, %v3794
    %3796 = vmatmul.bf16.gmra.mxu0 %v1430
    %v3797 = vpop.f32.mrf.mxu0
    %v3798 = vadd.f32 %v3609, %v3797
    %v3799 = vpop.f32.mrf.mxu0
    %v3800 = vadd.f32 %v3611, %v3799
    %3801 = vmatmul.bf16.gmra.mxu0 %v1435
    %v3802 = vpop.f32.mrf.mxu0
    %v3803 = vadd.f32 %v3614, %v3802
    %v3804 = vpop.f32.mrf.mxu0
    %v3805 = vadd.f32 %v3616, %v3804
    %3806 = vmatmul.bf16.gmra.mxu0 %v1440
    %v3807 = vpop.f32.mrf.mxu0
    %v3808 = vadd.f32 %v3619, %v3807
    %v3809 = vpop.f32.mrf.mxu0
    %v3810 = vadd.f32 %v3621, %v3809
    %3811 = vmatmul.bf16.gmra.mxu0 %v1445
    %v3812 = vpop.f32.mrf.mxu0
    %v3813 = vadd.f32 %v3624, %v3812
    %v3814 = vpop.f32.mrf.mxu0
    %v3815 = vadd.f32 %v3626, %v3814
    %3816 = vmatmul.bf16.gmra.mxu0 %v1450
    %v3817 = vpop.f32.mrf.mxu0
    %v3818 = vadd.f32 %v3629, %v3817
    %v3819 = vpop.f32.mrf.mxu0
    %v3820 = vadd.f32 %v3631, %v3819
    %3821 = vmatmul.bf16.gmra.mxu0 %v1455
    %v3822 = vpop.f32.mrf.mxu0
    %v3823 = vadd.f32 %v3634, %v3822
    %v3824 = vpop.f32.mrf.mxu0
    %v3825 = vadd.f32 %v3636, %v3824
    %3826 = vmatmul.bf16.gmra.mxu0 %v1460
    %v3827 = vpop.f32.mrf.mxu0
    %v3828 = vadd.f32 %v3639, %v3827
    %v3829 = vpop.f32.mrf.mxu0
    %v3830 = vadd.f32 %v3641, %v3829
    %3831 = vmatmul.bf16.gmra.mxu0 %v1465
    %v3832 = vpop.f32.mrf.mxu0
    %v3833 = vadd.f32 %v3644, %v3832
    %v3834 = vpop.f32.mrf.mxu0
    %v3835 = vadd.f32 %v3646, %v3834
    %3836 = vmatmul.bf16.gmra.mxu0 %v1470
    %v3837 = vpop.f32.mrf.mxu0
    %v3838 = vadd.f32 %v3649, %v3837
    %v3839 = vpop.f32.mrf.mxu0
    %v3840 = vadd.f32 %v3651, %v3839
    %3841 = vmatmul.bf16.gmra.mxu0 %v1475
    %v3842 = vpop.f32.mrf.mxu0
    %v3843 = vadd.f32 %v3654, %v3842
    %v3844 = vpop.f32.mrf.mxu0
    %v3845 = vadd.f32 %v3656, %v3844
    %3846 = vmatmul.bf16.gmra.mxu0 %v1480
    %v3847 = vpop.f32.mrf.mxu0
    %v3848 = vadd.f32 %v3659, %v3847
    %v3849 = vpop.f32.mrf.mxu0
    %v3850 = vadd.f32 %v3661, %v3849
    %3851 = vmatmul.bf16.gmra.mxu0 %v1485
    %v3852 = vpop.f32.mrf.mxu0
    %v3853 = vadd.f32 %v3664, %v3852
    %v3854 = vpop.f32.mrf.mxu0
    %v3855 = vadd.f32 %v3666, %v3854
    %3856 = vmatmul.bf16.gmra.mxu0 %v1490
    %v3857 = vpop.f32.mrf.mxu0
    %v3858 = vadd.f32 %v3669, %v3857
    %v3859 = vpop.f32.mrf.mxu0
    %v3860 = vadd.f32 %v3671, %v3859
    %3861 = vmatmul.bf16.gmra.mxu0 %v1495
    %v3862 = vpop.f32.mrf.mxu0
    %v3863 = vadd.f32 %v3674, %v3862
    %v3864 = vpop.f32.mrf.mxu0
    %v3865 = vadd.f32 %v3676, %v3864
    %3866 = vmatmul.bf16.gmra.mxu0 %v1500
    %v3867 = vpop.f32.mrf.mxu0
    %v3868 = vadd.f32 %v3679, %v3867
    %v3869 = vpop.f32.mrf.mxu0
    %v3870 = vadd.f32 %v3681, %v3869
    %3871 = vdwg.mxu0
    %3872 = vmatpush.bf16.msra.mxu0 %v2343
    %3873 = vmatpush.bf16.msra.mxu0 %v2341
    %3874 = vmatpush.bf16.msra.mxu0 %v2339
    %3875 = vmatpush.bf16.msra.mxu0 %v2337
    %3876 = vmatpush.bf16.msra.mxu0 %v2335
    %3877 = vmatpush.bf16.msra.mxu0 %v2333
    %3878 = vmatpush.bf16.msra.mxu0 %v2331
    %3879 = vmatpush.bf16.msra.mxu0 %v2329
    %3880 = vmatmul.bf16.gmra.mxu0 %v1326
    %v3881 = vpop.f32.mrf.mxu0
    %v3882 = vadd.f32 %v3693, %v3881
    %v3883 = vpop.f32.mrf.mxu0
    %v3884 = vadd.f32 %v3695, %v3883
    %3885 = vmatmul.bf16.gmra.mxu0 %v1331
    %v3886 = vpop.f32.mrf.mxu0
    %v3887 = vadd.f32 %v3698, %v3886
    %v3888 = vpop.f32.mrf.mxu0
    %v3889 = vadd.f32 %v3700, %v3888
    %3890 = vmatmul.bf16.gmra.mxu0 %v1336
    %v3891 = vpop.f32.mrf.mxu0
    %v3892 = vadd.f32 %v3703, %v3891
    %v3893 = vpop.f32.mrf.mxu0
    %v3894 = vadd.f32 %v3705, %v3893
    %3895 = vmatmul.bf16.gmra.mxu0 %v1341
    %v3896 = vpop.f32.mrf.mxu0
    %v3897 = vadd.f32 %v3708, %v3896
    %v3898 = vpop.f32.mrf.mxu0
    %v3899 = vadd.f32 %v3710, %v3898
    %3900 = vmatmul.bf16.gmra.mxu0 %v1346
    %v3901 = vpop.f32.mrf.mxu0
    %v3902 = vadd.f32 %v3713, %v3901
    %v3903 = vpop.f32.mrf.mxu0
    %v3904 = vadd.f32 %v3715, %v3903
    %3905 = vmatmul.bf16.gmra.mxu0 %v1351
    %v3906 = vpop.f32.mrf.mxu0
    %v3907 = vadd.f32 %v3718, %v3906
    %v3908 = vpop.f32.mrf.mxu0
    %v3909 = vadd.f32 %v3720, %v3908
    %3910 = vmatmul.bf16.gmra.mxu0 %v1356
    %v3911 = vpop.f32.mrf.mxu0
    %v3912 = vadd.f32 %v3723, %v3911
    %v3913 = vpop.f32.mrf.mxu0
    %v3914 = vadd.f32 %v3725, %v3913
    %3915 = vmatmul.bf16.gmra.mxu0 %v1361
    %v3916 = vpop.f32.mrf.mxu0
    %v3917 = vadd.f32 %v3728, %v3916
    %v3918 = vpop.f32.mrf.mxu0
    %v3919 = vadd.f32 %v3730, %v3918
    %3920 = vmatmul.bf16.gmra.mxu0 %v1366
    %v3921 = vpop.f32.mrf.mxu0
    %v3922 = vadd.f32 %v3733, %v3921
    %v3923 = vpop.f32.mrf.mxu0
    %v3924 = vadd.f32 %v3735, %v3923
    %3925 = vmatmul.bf16.gmra.mxu0 %v1371
    %v3926 = vpop.f32.mrf.mxu0
    %v3927 = vadd.f32 %v3738, %v3926
    %v3928 = vpop.f32.mrf.mxu0
    %v3929 = vadd.f32 %v3740, %v3928
    %3930 = vmatmul.bf16.gmra.mxu0 %v1376
    %v3931 = vpop.f32.mrf.mxu0
    %v3932 = vadd.f32 %v3743, %v3931
    %v3933 = vpop.f32.mrf.mxu0
    %v3934 = vadd.f32 %v3745, %v3933
    %3935 = vmatmul.bf16.gmra.mxu0 %v1381
    %v3936 = vpop.f32.mrf.mxu0
    %v3937 = vadd.f32 %v3748, %v3936
    %v3938 = vpop.f32.mrf.mxu0
    %v3939 = vadd.f32 %v3750, %v3938
    %3940 = vmatmul.bf16.gmra.mxu0 %v1386
    %v3941 = vpop.f32.mrf.mxu0
    %v3942 = vadd.f32 %v3753, %v3941
    %v3943 = vpop.f32.mrf.mxu0
    %v3944 = vadd.f32 %v3755, %v3943
    %3945 = vmatmul.bf16.gmra.mxu0 %v1391
    %v3946 = vpop.f32.mrf.mxu0
    %v3947 = vadd.f32 %v3758, %v3946
    %v3948 = vpop.f32.mrf.mxu0
    %v3949 = vadd.f32 %v3760, %v3948
    %3950 = vmatmul.bf16.gmra.mxu0 %v1396
    %v3951 = vpop.f32.mrf.mxu0
    %v3952 = vadd.f32 %v3763, %v3951
    %v3953 = vpop.f32.mrf.mxu0
    %v3954 = vadd.f32 %v3765, %v3953
    %3955 = vmatmul.bf16.gmra.mxu0 %v1401
    %v3956 = vpop.f32.mrf.mxu0
    %v3957 = vadd.f32 %v3768, %v3956
    %v3958 = vpop.f32.mrf.mxu0
    %v3959 = vadd.f32 %v3770, %v3958
    %3960 = vmatmul.bf16.gmra.mxu0 %v1406
    %v3961 = vpop.f32.mrf.mxu0
    %v3962 = vadd.f32 %v3773, %v3961
    %v3963 = vpop.f32.mrf.mxu0
    %v3964 = vadd.f32 %v3775, %v3963
    %3965 = vmatmul.bf16.gmra.mxu0 %v1411
    %v3966 = vpop.f32.mrf.mxu0
    %v3967 = vadd.f32 %v3778, %v3966
    %v3968 = vpop.f32.mrf.mxu0
    %v3969 = vadd.f32 %v3780, %v3968
    %3970 = vmatmul.bf16.gmra.mxu0 %v1416
    %v3971 = vpop.f32.mrf.mxu0
    %v3972 = vadd.f32 %v3783, %v3971
    %v3973 = vpop.f32.mrf.mxu0
    %v3974 = vadd.f32 %v3785, %v3973
    %3975 = vmatmul.bf16.gmra.mxu0 %v1421
    %v3976 = vpop.f32.mrf.mxu0
    %v3977 = vadd.f32 %v3788, %v3976
    %v3978 = vpop.f32.mrf.mxu0
    %v3979 = vadd.f32 %v3790, %v3978
    %3980 = vmatmul.bf16.gmra.mxu0 %v1426
    %v3981 = vpop.f32.mrf.mxu0
    %v3982 = vadd.f32 %v3793, %v3981
    %v3983 = vpop.f32.mrf.mxu0
    %v3984 = vadd.f32 %v3795, %v3983
    %3985 = vmatmul.bf16.gmra.mxu0 %v1431
    %v3986 = vpop.f32.mrf.mxu0
    %v3987 = vadd.f32 %v3798, %v3986
    %v3988 = vpop.f32.mrf.mxu0
    %v3989 = vadd.f32 %v3800, %v3988
    %3990 = vmatmul.bf16.gmra.mxu0 %v1436
    %v3991 = vpop.f32.mrf.mxu0
    %v3992 = vadd.f32 %v3803, %v3991
    %v3993 = vpop.f32.mrf.mxu0
    %v3994 = vadd.f32 %v3805, %v3993
    %3995 = vmatmul.bf16.gmra.mxu0 %v1441
    %v3996 = vpop.f32.mrf.mxu0
    %v3997 = vadd.f32 %v3808, %v3996
    %v3998 = vpop.f32.mrf.mxu0
    %v3999 = vadd.f32 %v3810, %v3998
    %4000 = vmatmul.bf16.gmra.mxu0 %v1446
    %v4001 = vpop.f32.mrf.mxu0
    %v4002 = vadd.f32 %v3813, %v4001
    %v4003 = vpop.f32.mrf.mxu0
    %v4004 = vadd.f32 %v3815, %v4003
    %4005 = vmatmul.bf16.gmra.mxu0 %v1451
    %v4006 = vpop.f32.mrf.mxu0
    %v4007 = vadd.f32 %v3818, %v4006
    %v4008 = vpop.f32.mrf.mxu0
    %v4009 = vadd.f32 %v3820, %v4008
    %4010 = vmatmul.bf16.gmra.mxu0 %v1456
    %v4011 = vpop.f32.mrf.mxu0
    %v4012 = vadd.f32 %v3823, %v4011
    %v4013 = vpop.f32.mrf.mxu0
    %v4014 = vadd.f32 %v3825, %v4013
    %4015 = vmatmul.bf16.gmra.mxu0 %v1461
    %v4016 = vpop.f32.mrf.mxu0
    %v4017 = vadd.f32 %v3828, %v4016
    %v4018 = vpop.f32.mrf.mxu0
    %v4019 = vadd.f32 %v3830, %v4018
    %4020 = vmatmul.bf16.gmra.mxu0 %v1466
    %v4021 = vpop.f32.mrf.mxu0
    %v4022 = vadd.f32 %v3833, %v4021
    %v4023 = vpop.f32.mrf.mxu0
    %v4024 = vadd.f32 %v3835, %v4023
    %4025 = vmatmul.bf16.gmra.mxu0 %v1471
    %v4026 = vpop.f32.mrf.mxu0
    %v4027 = vadd.f32 %v3838, %v4026
    %v4028 = vpop.f32.mrf.mxu0
    %v4029 = vadd.f32 %v3840, %v4028
    %4030 = vmatmul.bf16.gmra.mxu0 %v1476
    %v4031 = vpop.f32.mrf.mxu0
    %v4032 = vadd.f32 %v3843, %v4031
    %v4033 = vpop.f32.mrf.mxu0
    %v4034 = vadd.f32 %v3845, %v4033
    %4035 = vmatmul.bf16.gmra.mxu0 %v1481
    %v4036 = vpop.f32.mrf.mxu0
    %v4037 = vadd.f32 %v3848, %v4036
    %v4038 = vpop.f32.mrf.mxu0
    %v4039 = vadd.f32 %v3850, %v4038
    %4040 = vmatmul.bf16.gmra.mxu0 %v1486
    %v4041 = vpop.f32.mrf.mxu0
    %v4042 = vadd.f32 %v3853, %v4041
    %v4043 = vpop.f32.mrf.mxu0
    %v4044 = vadd.f32 %v3855, %v4043
    %4045 = vmatmul.bf16.gmra.mxu0 %v1491
    %v4046 = vpop.f32.mrf.mxu0
    %v4047 = vadd.f32 %v3858, %v4046
    %v4048 = vpop.f32.mrf.mxu0
    %v4049 = vadd.f32 %v3860, %v4048
    %4050 = vmatmul.bf16.gmra.mxu0 %v1496
    %v4051 = vpop.f32.mrf.mxu0
    %v4052 = vadd.f32 %v3863, %v4051
    %v4053 = vpop.f32.mrf.mxu0
    %v4054 = vadd.f32 %v3865, %v4053
    %4055 = vmatmul.bf16.gmra.mxu0 %v1501
    %v4056 = vpop.f32.mrf.mxu0
    %v4057 = vadd.f32 %v3868, %v4056
    %v4058 = vpop.f32.mrf.mxu0
    %v4059 = vadd.f32 %v3870, %v4058
    %4060 = vdwg.mxu0
    %4061 = vmatpush.bf16.msra.mxu0 %v2359
    %4062 = vmatpush.bf16.msra.mxu0 %v2357
    %4063 = vmatpush.bf16.msra.mxu0 %v2355
    %4064 = vmatpush.bf16.msra.mxu0 %v2353
    %4065 = vmatpush.bf16.msra.mxu0 %v2351
    %4066 = vmatpush.bf16.msra.mxu0 %v2349
    %4067 = vmatpush.bf16.msra.mxu0 %v2347
    %4068 = vmatpush.bf16.msra.mxu0 %v2345
    %4069 = vmatmul.bf16.gmra.mxu0 %v1327
    %v4070 = vpop.f32.mrf.mxu0
    %v4071 = vadd.f32 %v3882, %v4070
    %v4072 = vpop.f32.mrf.mxu0
    %v4073 = vadd.f32 %v3884, %v4072
    %4074 = vmatmul.bf16.gmra.mxu0 %v1332
    %v4075 = vpop.f32.mrf.mxu0
    %v4076 = vadd.f32 %v3887, %v4075
    %v4077 = vpop.f32.mrf.mxu0
    %v4078 = vadd.f32 %v3889, %v4077
    %4079 = vmatmul.bf16.gmra.mxu0 %v1337
    %v4080 = vpop.f32.mrf.mxu0
    %v4081 = vadd.f32 %v3892, %v4080
    %v4082 = vpop.f32.mrf.mxu0
    %v4083 = vadd.f32 %v3894, %v4082
    %4084 = vmatmul.bf16.gmra.mxu0 %v1342
    %v4085 = vpop.f32.mrf.mxu0
    %v4086 = vadd.f32 %v3897, %v4085
    %v4087 = vpop.f32.mrf.mxu0
    %v4088 = vadd.f32 %v3899, %v4087
    %4089 = vmatmul.bf16.gmra.mxu0 %v1347
    %v4090 = vpop.f32.mrf.mxu0
    %v4091 = vadd.f32 %v3902, %v4090
    %v4092 = vpop.f32.mrf.mxu0
    %v4093 = vadd.f32 %v3904, %v4092
    %4094 = vmatmul.bf16.gmra.mxu0 %v1352
    %v4095 = vpop.f32.mrf.mxu0
    %v4096 = vadd.f32 %v3907, %v4095
    %v4097 = vpop.f32.mrf.mxu0
    %v4098 = vadd.f32 %v3909, %v4097
    %4099 = vmatmul.bf16.gmra.mxu0 %v1357
    %v4100 = vpop.f32.mrf.mxu0
    %v4101 = vadd.f32 %v3912, %v4100
    %v4102 = vpop.f32.mrf.mxu0
    %v4103 = vadd.f32 %v3914, %v4102
    %4104 = vmatmul.bf16.gmra.mxu0 %v1362
    %v4105 = vpop.f32.mrf.mxu0
    %v4106 = vadd.f32 %v3917, %v4105
    %v4107 = vpop.f32.mrf.mxu0
    %v4108 = vadd.f32 %v3919, %v4107
    %4109 = vmatmul.bf16.gmra.mxu0 %v1367
    %v4110 = vpop.f32.mrf.mxu0
    %v4111 = vadd.f32 %v3922, %v4110
    %v4112 = vpop.f32.mrf.mxu0
    %v4113 = vadd.f32 %v3924, %v4112
    %4114 = vmatmul.bf16.gmra.mxu0 %v1372
    %v4115 = vpop.f32.mrf.mxu0
    %v4116 = vadd.f32 %v3927, %v4115
    %v4117 = vpop.f32.mrf.mxu0
    %v4118 = vadd.f32 %v3929, %v4117
    %4119 = vmatmul.bf16.gmra.mxu0 %v1377
    %v4120 = vpop.f32.mrf.mxu0
    %v4121 = vadd.f32 %v3932, %v4120
    %v4122 = vpop.f32.mrf.mxu0
    %v4123 = vadd.f32 %v3934, %v4122
    %4124 = vmatmul.bf16.gmra.mxu0 %v1382
    %v4125 = vpop.f32.mrf.mxu0
    %v4126 = vadd.f32 %v3937, %v4125
    %v4127 = vpop.f32.mrf.mxu0
    %v4128 = vadd.f32 %v3939, %v4127
    %4129 = vmatmul.bf16.gmra.mxu0 %v1387
    %v4130 = vpop.f32.mrf.mxu0
    %v4131 = vadd.f32 %v3942, %v4130
    %v4132 = vpop.f32.mrf.mxu0
    %v4133 = vadd.f32 %v3944, %v4132
    %4134 = vmatmul.bf16.gmra.mxu0 %v1392
    %v4135 = vpop.f32.mrf.mxu0
    %v4136 = vadd.f32 %v3947, %v4135
    %v4137 = vpop.f32.mrf.mxu0
    %v4138 = vadd.f32 %v3949, %v4137
    %4139 = vmatmul.bf16.gmra.mxu0 %v1397
    %v4140 = vpop.f32.mrf.mxu0
    %v4141 = vadd.f32 %v3952, %v4140
    %v4142 = vpop.f32.mrf.mxu0
    %v4143 = vadd.f32 %v3954, %v4142
    %4144 = vmatmul.bf16.gmra.mxu0 %v1402
    %v4145 = vpop.f32.mrf.mxu0
    %v4146 = vadd.f32 %v3957, %v4145
    %v4147 = vpop.f32.mrf.mxu0
    %v4148 = vadd.f32 %v3959, %v4147
    %4149 = vmatmul.bf16.gmra.mxu0 %v1407
    %v4150 = vpop.f32.mrf.mxu0
    %v4151 = vadd.f32 %v3962, %v4150
    %v4152 = vpop.f32.mrf.mxu0
    %v4153 = vadd.f32 %v3964, %v4152
    %4154 = vmatmul.bf16.gmra.mxu0 %v1412
    %v4155 = vpop.f32.mrf.mxu0
    %v4156 = vadd.f32 %v3967, %v4155
    %v4157 = vpop.f32.mrf.mxu0
    %v4158 = vadd.f32 %v3969, %v4157
    %4159 = vmatmul.bf16.gmra.mxu0 %v1417
    %v4160 = vpop.f32.mrf.mxu0
    %v4161 = vadd.f32 %v3972, %v4160
    %v4162 = vpop.f32.mrf.mxu0
    %v4163 = vadd.f32 %v3974, %v4162
    %4164 = vmatmul.bf16.gmra.mxu0 %v1422
    %v4165 = vpop.f32.mrf.mxu0
    %v4166 = vadd.f32 %v3977, %v4165
    %v4167 = vpop.f32.mrf.mxu0
    %v4168 = vadd.f32 %v3979, %v4167
    %4169 = vmatmul.bf16.gmra.mxu0 %v1427
    %v4170 = vpop.f32.mrf.mxu0
    %v4171 = vadd.f32 %v3982, %v4170
    %v4172 = vpop.f32.mrf.mxu0
    %v4173 = vadd.f32 %v3984, %v4172
    %4174 = vmatmul.bf16.gmra.mxu0 %v1432
    %v4175 = vpop.f32.mrf.mxu0
    %v4176 = vadd.f32 %v3987, %v4175
    %v4177 = vpop.f32.mrf.mxu0
    %v4178 = vadd.f32 %v3989, %v4177
    %4179 = vmatmul.bf16.gmra.mxu0 %v1437
    %v4180 = vpop.f32.mrf.mxu0
    %v4181 = vadd.f32 %v3992, %v4180
    %v4182 = vpop.f32.mrf.mxu0
    %v4183 = vadd.f32 %v3994, %v4182
    %4184 = vmatmul.bf16.gmra.mxu0 %v1442
    %v4185 = vpop.f32.mrf.mxu0
    %v4186 = vadd.f32 %v3997, %v4185
    %v4187 = vpop.f32.mrf.mxu0
    %v4188 = vadd.f32 %v3999, %v4187
    %4189 = vmatmul.bf16.gmra.mxu0 %v1447
    %v4190 = vpop.f32.mrf.mxu0
    %v4191 = vadd.f32 %v4002, %v4190
    %v4192 = vpop.f32.mrf.mxu0
    %v4193 = vadd.f32 %v4004, %v4192
    %4194 = vmatmul.bf16.gmra.mxu0 %v1452
    %v4195 = vpop.f32.mrf.mxu0
    %v4196 = vadd.f32 %v4007, %v4195
    %v4197 = vpop.f32.mrf.mxu0
    %v4198 = vadd.f32 %v4009, %v4197
    %4199 = vmatmul.bf16.gmra.mxu0 %v1457
    %v4200 = vpop.f32.mrf.mxu0
    %v4201 = vadd.f32 %v4012, %v4200
    %v4202 = vpop.f32.mrf.mxu0
    %v4203 = vadd.f32 %v4014, %v4202
    %4204 = vmatmul.bf16.gmra.mxu0 %v1462
    %v4205 = vpop.f32.mrf.mxu0
    %v4206 = vadd.f32 %v4017, %v4205
    %v4207 = vpop.f32.mrf.mxu0
    %v4208 = vadd.f32 %v4019, %v4207
    %4209 = vmatmul.bf16.gmra.mxu0 %v1467
    %v4210 = vpop.f32.mrf.mxu0
    %v4211 = vadd.f32 %v4022, %v4210
    %v4212 = vpop.f32.mrf.mxu0
    %v4213 = vadd.f32 %v4024, %v4212
    %4214 = vmatmul.bf16.gmra.mxu0 %v1472
    %v4215 = vpop.f32.mrf.mxu0
    %v4216 = vadd.f32 %v4027, %v4215
    %v4217 = vpop.f32.mrf.mxu0
    %v4218 = vadd.f32 %v4029, %v4217
    %4219 = vmatmul.bf16.gmra.mxu0 %v1477
    %v4220 = vpop.f32.mrf.mxu0
    %v4221 = vadd.f32 %v4032, %v4220
    %v4222 = vpop.f32.mrf.mxu0
    %v4223 = vadd.f32 %v4034, %v4222
    %4224 = vmatmul.bf16.gmra.mxu0 %v1482
    %v4225 = vpop.f32.mrf.mxu0
    %v4226 = vadd.f32 %v4037, %v4225
    %v4227 = vpop.f32.mrf.mxu0
    %v4228 = vadd.f32 %v4039, %v4227
    %4229 = vmatmul.bf16.gmra.mxu0 %v1487
    %v4230 = vpop.f32.mrf.mxu0
    %v4231 = vadd.f32 %v4042, %v4230
    %v4232 = vpop.f32.mrf.mxu0
    %v4233 = vadd.f32 %v4044, %v4232
    %4234 = vmatmul.bf16.gmra.mxu0 %v1492
    %v4235 = vpop.f32.mrf.mxu0
    %v4236 = vadd.f32 %v4047, %v4235
    %v4237 = vpop.f32.mrf.mxu0
    %v4238 = vadd.f32 %v4049, %v4237
    %4239 = vmatmul.bf16.gmra.mxu0 %v1497
    %v4240 = vpop.f32.mrf.mxu0
    %v4241 = vadd.f32 %v4052, %v4240
    %v4242 = vpop.f32.mrf.mxu0
    %v4243 = vadd.f32 %v4054, %v4242
    %4244 = vmatmul.bf16.gmra.mxu0 %v1502
    %v4245 = vpop.f32.mrf.mxu0
    %v4246 = vadd.f32 %v4057, %v4245
    %v4247 = vpop.f32.mrf.mxu0
    %v4248 = vadd.f32 %v4059, %v4247
    %4249 = vdwg.mxu0
    %4250 = vmatpush.bf16.msra.mxu0 0
    %4251 = vmatpush.bf16.msra.mxu0 0
    %4252 = vmatpush.bf16.msra.mxu0 0
    %4253 = vmatpush.bf16.msra.mxu0 0
    %4254 = vmatpush.bf16.msra.mxu0 %v2367
    %4255 = vmatpush.bf16.msra.mxu0 %v2365
    %4256 = vmatpush.bf16.msra.mxu0 %v2363
    %4257 = vmatpush.bf16.msra.mxu0 %v2361
    %4258 = vmatmul.bf16.gmra.mxu0 %v2442
    %v4259 = vpop.f32.mrf.mxu0
    %v4260 = vadd.f32 %v4071, %v4259
    %v4261 = vpop.f32.mrf.mxu0
    %v4262 = vadd.f32 %v4073, %v4261
    %4263 = vmatmul.bf16.gmra.mxu0 %v2445
    %v4264 = vpop.f32.mrf.mxu0
    %v4265 = vadd.f32 %v4076, %v4264
    %v4266 = vpop.f32.mrf.mxu0
    %v4267 = vadd.f32 %v4078, %v4266
    %4268 = vmatmul.bf16.gmra.mxu0 %v2448
    %v4269 = vpop.f32.mrf.mxu0
    %v4270 = vadd.f32 %v4081, %v4269
    %v4271 = vpop.f32.mrf.mxu0
    %v4272 = vadd.f32 %v4083, %v4271
    %4273 = vmatmul.bf16.gmra.mxu0 %v2451
    %v4274 = vpop.f32.mrf.mxu0
    %v4275 = vadd.f32 %v4086, %v4274
    %v4276 = vpop.f32.mrf.mxu0
    %v4277 = vadd.f32 %v4088, %v4276
    %4278 = vmatmul.bf16.gmra.mxu0 %v2454
    %v4279 = vpop.f32.mrf.mxu0
    %v4280 = vadd.f32 %v4091, %v4279
    %v4281 = vpop.f32.mrf.mxu0
    %v4282 = vadd.f32 %v4093, %v4281
    %4283 = vmatmul.bf16.gmra.mxu0 %v2457
    %v4284 = vpop.f32.mrf.mxu0
    %v4285 = vadd.f32 %v4096, %v4284
    %v4286 = vpop.f32.mrf.mxu0
    %v4287 = vadd.f32 %v4098, %v4286
    %4288 = vmatmul.bf16.gmra.mxu0 %v2460
    %v4289 = vpop.f32.mrf.mxu0
    %v4290 = vadd.f32 %v4101, %v4289
    %v4291 = vpop.f32.mrf.mxu0
    %v4292 = vadd.f32 %v4103, %v4291
    %4293 = vmatmul.bf16.gmra.mxu0 %v2463
    %v4294 = vpop.f32.mrf.mxu0
    %v4295 = vadd.f32 %v4106, %v4294
    %v4296 = vpop.f32.mrf.mxu0
    %v4297 = vadd.f32 %v4108, %v4296
    %4298 = vmatmul.bf16.gmra.mxu0 %v2466
    %v4299 = vpop.f32.mrf.mxu0
    %v4300 = vadd.f32 %v4111, %v4299
    %v4301 = vpop.f32.mrf.mxu0
    %v4302 = vadd.f32 %v4113, %v4301
    %4303 = vmatmul.bf16.gmra.mxu0 %v2469
    %v4304 = vpop.f32.mrf.mxu0
    %v4305 = vadd.f32 %v4116, %v4304
    %v4306 = vpop.f32.mrf.mxu0
    %v4307 = vadd.f32 %v4118, %v4306
    %4308 = vmatmul.bf16.gmra.mxu0 %v2472
    %v4309 = vpop.f32.mrf.mxu0
    %v4310 = vadd.f32 %v4121, %v4309
    %v4311 = vpop.f32.mrf.mxu0
    %v4312 = vadd.f32 %v4123, %v4311
    %4313 = vmatmul.bf16.gmra.mxu0 %v2475
    %v4314 = vpop.f32.mrf.mxu0
    %v4315 = vadd.f32 %v4126, %v4314
    %v4316 = vpop.f32.mrf.mxu0
    %v4317 = vadd.f32 %v4128, %v4316
    %4318 = vmatmul.bf16.gmra.mxu0 %v2478
    %v4319 = vpop.f32.mrf.mxu0
    %v4320 = vadd.f32 %v4131, %v4319
    %v4321 = vpop.f32.mrf.mxu0
    %v4322 = vadd.f32 %v4133, %v4321
    %4323 = vmatmul.bf16.gmra.mxu0 %v2481
    %v4324 = vpop.f32.mrf.mxu0
    %v4325 = vadd.f32 %v4136, %v4324
    %v4326 = vpop.f32.mrf.mxu0
    %v4327 = vadd.f32 %v4138, %v4326
    %4328 = vmatmul.bf16.gmra.mxu0 %v2484
    %v4329 = vpop.f32.mrf.mxu0
    %v4330 = vadd.f32 %v4141, %v4329
    %v4331 = vpop.f32.mrf.mxu0
    %v4332 = vadd.f32 %v4143, %v4331
    %4333 = vmatmul.bf16.gmra.mxu0 %v2487
    %v4334 = vpop.f32.mrf.mxu0
    %v4335 = vadd.f32 %v4146, %v4334
    %v4336 = vpop.f32.mrf.mxu0
    %v4337 = vadd.f32 %v4148, %v4336
    %4338 = vmatmul.bf16.gmra.mxu0 %v2490
    %v4339 = vpop.f32.mrf.mxu0
    %v4340 = vadd.f32 %v4151, %v4339
    %v4341 = vpop.f32.mrf.mxu0
    %v4342 = vadd.f32 %v4153, %v4341
    %4343 = vmatmul.bf16.gmra.mxu0 %v2493
    %v4344 = vpop.f32.mrf.mxu0
    %v4345 = vadd.f32 %v4156, %v4344
    %v4346 = vpop.f32.mrf.mxu0
    %v4347 = vadd.f32 %v4158, %v4346
    %4348 = vmatmul.bf16.gmra.mxu0 %v2496
    %v4349 = vpop.f32.mrf.mxu0
    %v4350 = vadd.f32 %v4161, %v4349
    %v4351 = vpop.f32.mrf.mxu0
    %v4352 = vadd.f32 %v4163, %v4351
    %4353 = vmatmul.bf16.gmra.mxu0 %v2499
    %v4354 = vpop.f32.mrf.mxu0
    %v4355 = vadd.f32 %v4166, %v4354
    %v4356 = vpop.f32.mrf.mxu0
    %v4357 = vadd.f32 %v4168, %v4356
    %4358 = vmatmul.bf16.gmra.mxu0 %v2502
    %v4359 = vpop.f32.mrf.mxu0
    %v4360 = vadd.f32 %v4171, %v4359
    %v4361 = vpop.f32.mrf.mxu0
    %v4362 = vadd.f32 %v4173, %v4361
    %4363 = vmatmul.bf16.gmra.mxu0 %v2505
    %v4364 = vpop.f32.mrf.mxu0
    %v4365 = vadd.f32 %v4176, %v4364
    %v4366 = vpop.f32.mrf.mxu0
    %v4367 = vadd.f32 %v4178, %v4366
    %4368 = vmatmul.bf16.gmra.mxu0 %v2508
    %v4369 = vpop.f32.mrf.mxu0
    %v4370 = vadd.f32 %v4181, %v4369
    %v4371 = vpop.f32.mrf.mxu0
    %v4372 = vadd.f32 %v4183, %v4371
    %4373 = vmatmul.bf16.gmra.mxu0 %v2511
    %v4374 = vpop.f32.mrf.mxu0
    %v4375 = vadd.f32 %v4186, %v4374
    %v4376 = vpop.f32.mrf.mxu0
    %v4377 = vadd.f32 %v4188, %v4376
    %4378 = vmatmul.bf16.gmra.mxu0 %v2514
    %v4379 = vpop.f32.mrf.mxu0
    %v4380 = vadd.f32 %v4191, %v4379
    %v4381 = vpop.f32.mrf.mxu0
    %v4382 = vadd.f32 %v4193, %v4381
    %4383 = vmatmul.bf16.gmra.mxu0 %v2517
    %v4384 = vpop.f32.mrf.mxu0
    %v4385 = vadd.f32 %v4196, %v4384
    %v4386 = vpop.f32.mrf.mxu0
    %v4387 = vadd.f32 %v4198, %v4386
    %4388 = vmatmul.bf16.gmra.mxu0 %v2520
    %v4389 = vpop.f32.mrf.mxu0
    %v4390 = vadd.f32 %v4201, %v4389
    %v4391 = vpop.f32.mrf.mxu0
    %v4392 = vadd.f32 %v4203, %v4391
    %4393 = vmatmul.bf16.gmra.mxu0 %v2523
    %v4394 = vpop.f32.mrf.mxu0
    %v4395 = vadd.f32 %v4206, %v4394
    %v4396 = vpop.f32.mrf.mxu0
    %v4397 = vadd.f32 %v4208, %v4396
    %4398 = vmatmul.bf16.gmra.mxu0 %v2526
    %v4399 = vpop.f32.mrf.mxu0
    %v4400 = vadd.f32 %v4211, %v4399
    %v4401 = vpop.f32.mrf.mxu0
    %v4402 = vadd.f32 %v4213, %v4401
    %4403 = vmatmul.bf16.gmra.mxu0 %v2529
    %v4404 = vpop.f32.mrf.mxu0
    %v4405 = vadd.f32 %v4216, %v4404
    %v4406 = vpop.f32.mrf.mxu0
    %v4407 = vadd.f32 %v4218, %v4406
    %4408 = vmatmul.bf16.gmra.mxu0 %v2532
    %v4409 = vpop.f32.mrf.mxu0
    %v4410 = vadd.f32 %v4221, %v4409
    %v4411 = vpop.f32.mrf.mxu0
    %v4412 = vadd.f32 %v4223, %v4411
    %4413 = vmatmul.bf16.gmra.mxu0 %v2535
    %v4414 = vpop.f32.mrf.mxu0
    %v4415 = vadd.f32 %v4226, %v4414
    %v4416 = vpop.f32.mrf.mxu0
    %v4417 = vadd.f32 %v4228, %v4416
    %4418 = vmatmul.bf16.gmra.mxu0 %v2538
    %v4419 = vpop.f32.mrf.mxu0
    %v4420 = vadd.f32 %v4231, %v4419
    %v4421 = vpop.f32.mrf.mxu0
    %v4422 = vadd.f32 %v4233, %v4421
    %4423 = vmatmul.bf16.gmra.mxu0 %v2541
    %v4424 = vpop.f32.mrf.mxu0
    %v4425 = vadd.f32 %v4236, %v4424
    %v4426 = vpop.f32.mrf.mxu0
    %v4427 = vadd.f32 %v4238, %v4426
    %4428 = vmatmul.bf16.gmra.mxu0 %v2544
    %v4429 = vpop.f32.mrf.mxu0
    %v4430 = vadd.f32 %v4241, %v4429
    %v4431 = vpop.f32.mrf.mxu0
    %v4432 = vadd.f32 %v4243, %v4431
    %4433 = vmatmul.bf16.gmra.mxu0 %v2547
    %v4434 = vpop.f32.mrf.mxu0
    %v4435 = vadd.f32 %v4246, %v4434
    %v4436 = vpop.f32.mrf.mxu0
    %v4437 = vadd.f32 %v4248, %v4436
    %4438 = vdwg.mxu0
    %v4655 = vunpack.c.l.b16 %v388
    %v4656 = vunpack.c.h.b16 %v388
    %v4657 = vunpack.c.l.b16 %v389
    %v4658 = vunpack.c.h.b16 %v389
    %v4659 = vunpack.c.l.b16 %v390
    %v4660 = vunpack.c.l.b16 %v391
    %v4661 = vunpack.c.h.b16 %v391
    %v4662 = vunpack.c.l.b16 %v392
    %v4663 = vunpack.c.h.b16 %v392
    %v4664 = vunpack.c.l.b16 %v393
    %v4665 = vunpack.c.l.b16 %v394
    %v4666 = vunpack.c.h.b16 %v394
    %v4667 = vunpack.c.l.b16 %v395
    %v4668 = vunpack.c.h.b16 %v395
    %v4669 = vunpack.c.l.b16 %v396
    %v4670 = vunpack.c.l.b16 %v397
    %v4671 = vunpack.c.h.b16 %v397
    %v4672 = vunpack.c.l.b16 %v398
    %v4673 = vunpack.c.h.b16 %v398
    %v4674 = vunpack.c.l.b16 %v399
    %v4675 = vunpack.c.l.b16 %v400
    %v4676 = vunpack.c.h.b16 %v400
    %v4677 = vunpack.c.l.b16 %v401
    %v4678 = vunpack.c.h.b16 %v401
    %v4679 = vunpack.c.l.b16 %v402
    %v4680 = vunpack.c.l.b16 %v403
    %v4681 = vunpack.c.h.b16 %v403
    %v4682 = vunpack.c.l.b16 %v404
    %v4683 = vunpack.c.h.b16 %v404
    %v4684 = vunpack.c.l.b16 %v405
    %v4685 = vunpack.c.l.b16 %v406
    %v4686 = vunpack.c.h.b16 %v406
    %v4687 = vunpack.c.l.b16 %v407
    %v4688 = vunpack.c.h.b16 %v407
    %v4689 = vunpack.c.l.b16 %v408
    %v4690 = vunpack.c.l.b16 %v409
    %v4691 = vunpack.c.h.b16 %v409
    %v4692 = vunpack.c.l.b16 %v410
    %v4693 = vunpack.c.h.b16 %v410
    %v4694 = vunpack.c.l.b16 %v411
    %v4695 = vunpack.c.l.b16 %v412
    %v4696 = vunpack.c.h.b16 %v412
    %v4697 = vunpack.c.l.b16 %v413
    %v4698 = vunpack.c.h.b16 %v413
    %v4699 = vunpack.c.l.b16 %v414
    %v4700 = vunpack.c.l.b16 %v415
    %v4701 = vunpack.c.h.b16 %v415
    %v4702 = vunpack.c.l.b16 %v416
    %v4703 = vunpack.c.h.b16 %v416
    %v4704 = vunpack.c.l.b16 %v417
    %v4705 = vunpack.c.l.b16 %v418
    %v4706 = vunpack.c.h.b16 %v418
    %v4707 = vunpack.c.l.b16 %v419
    %v4708 = vunpack.c.h.b16 %v419
    %v4709 = vunpack.c.l.b16 %v420
    %v4710 = vunpack.c.l.b16 %v421
    %v4711 = vunpack.c.h.b16 %v421
    %v4712 = vunpack.c.l.b16 %v422
    %v4713 = vunpack.c.h.b16 %v422
    %v4714 = vunpack.c.l.b16 %v423
    %v4715 = vunpack.c.l.b16 %v424
    %v4716 = vunpack.c.h.b16 %v424
    %v4717 = vunpack.c.l.b16 %v425
    %v4718 = vunpack.c.h.b16 %v425
    %v4719 = vunpack.c.l.b16 %v426
    %v4720 = vunpack.c.l.b16 %v427
    %v4721 = vunpack.c.h.b16 %v427
    %v4722 = vunpack.c.l.b16 %v428
    %v4723 = vunpack.c.h.b16 %v428
    %v4724 = vunpack.c.l.b16 %v429
    %v4725 = vunpack.c.l.b16 %v430
    %v4726 = vunpack.c.h.b16 %v430
    %v4727 = vunpack.c.l.b16 %v431
    %v4728 = vunpack.c.h.b16 %v431
    %v4729 = vunpack.c.l.b16 %v432
    %v4730 = vunpack.c.l.b16 %v433
    %v4731 = vunpack.c.h.b16 %v433
    %v4732 = vunpack.c.l.b16 %v434
    %v4733 = vunpack.c.h.b16 %v434
    %v4734 = vunpack.c.l.b16 %v435
    %v4735 = vunpack.c.l.b16 %v436
    %v4736 = vunpack.c.h.b16 %v436
    %v4737 = vunpack.c.l.b16 %v437
    %v4738 = vunpack.c.h.b16 %v437
    %v4739 = vunpack.c.l.b16 %v438
    %v4740 = vunpack.c.l.b16 %v439
    %v4741 = vunpack.c.h.b16 %v439
    %v4742 = vunpack.c.l.b16 %v440
    %v4743 = vunpack.c.h.b16 %v440
    %v4744 = vunpack.c.l.b16 %v441
    %v4745 = vunpack.c.l.b16 %v442
    %v4746 = vunpack.c.h.b16 %v442
    %v4747 = vunpack.c.l.b16 %v443
    %v4748 = vunpack.c.h.b16 %v443
    %v4749 = vunpack.c.l.b16 %v444
    %v4750 = vunpack.c.l.b16 %v445
    %v4751 = vunpack.c.h.b16 %v445
    %v4752 = vunpack.c.l.b16 %v446
    %v4753 = vunpack.c.h.b16 %v446
    %v4754 = vunpack.c.l.b16 %v447
    %v4755 = vunpack.c.l.b16 %v448
    %v4756 = vunpack.c.h.b16 %v448
    %v4757 = vunpack.c.l.b16 %v449
    %v4758 = vunpack.c.h.b16 %v449
    %v4759 = vunpack.c.l.b16 %v450
    %v4760 = vunpack.c.l.b16 %v451
    %v4761 = vunpack.c.h.b16 %v451
    %v4762 = vunpack.c.l.b16 %v452
    %v4763 = vunpack.c.h.b16 %v452
    %v4764 = vunpack.c.l.b16 %v453
    %v4765 = vunpack.c.l.b16 %v454
    %v4766 = vunpack.c.h.b16 %v454
    %v4767 = vunpack.c.l.b16 %v455
    %v4768 = vunpack.c.h.b16 %v455
    %v4769 = vunpack.c.l.b16 %v456
    %v4770 = vunpack.c.l.b16 %v457
    %v4771 = vunpack.c.h.b16 %v457
    %v4772 = vunpack.c.l.b16 %v458
    %v4773 = vunpack.c.h.b16 %v458
    %v4774 = vunpack.c.l.b16 %v459
    %v4775 = vunpack.c.l.b16 %v460
    %v4776 = vunpack.c.h.b16 %v460
    %v4777 = vunpack.c.l.b16 %v461
    %v4778 = vunpack.c.h.b16 %v461
    %v4779 = vunpack.c.l.b16 %v462
    %v4780 = vunpack.c.l.b16 %v463
    %v4781 = vunpack.c.h.b16 %v463
    %v4782 = vunpack.c.l.b16 %v464
    %v4783 = vunpack.c.h.b16 %v464
    %v4784 = vunpack.c.l.b16 %v465
    %v4785 = vunpack.c.l.b16 %v466
    %v4786 = vunpack.c.h.b16 %v466
    %v4787 = vunpack.c.l.b16 %v467
    %v4788 = vunpack.c.h.b16 %v467
    %v4789 = vunpack.c.l.b16 %v468
    %v4790 = vunpack.c.l.b16 %v469
    %v4791 = vunpack.c.h.b16 %v469
    %v4792 = vunpack.c.l.b16 %v470
    %v4793 = vunpack.c.h.b16 %v470
    %v4794 = vunpack.c.l.b16 %v471
    %v4795 = vunpack.c.l.b16 %v472
    %v4796 = vunpack.c.h.b16 %v472
    %v4797 = vunpack.c.l.b16 %v473
    %v4798 = vunpack.c.h.b16 %v473
    %v4799 = vunpack.c.l.b16 %v474
    %v4800 = vunpack.c.l.b16 %v475
    %v4801 = vunpack.c.h.b16 %v475
    %v4802 = vunpack.c.l.b16 %v476
    %v4803 = vunpack.c.h.b16 %v476
    %v4804 = vunpack.c.l.b16 %v477
    %v4805 = vunpack.c.l.b16 %v478
    %v4806 = vunpack.c.h.b16 %v478
    %v4807 = vunpack.c.l.b16 %v479
    %v4808 = vunpack.c.h.b16 %v479
    %v4809 = vunpack.c.l.b16 %v480
    %v4810 = vunpack.c.l.b16 %v481
    %v4811 = vunpack.c.h.b16 %v481
    %v4812 = vunpack.c.l.b16 %v482
    %v4813 = vunpack.c.h.b16 %v482
    %v4814 = vunpack.c.l.b16 %v483
    %v4815 = vunpack.c.l.b16 %v484
    %v4816 = vunpack.c.h.b16 %v484
    %v4817 = vunpack.c.l.b16 %v485
    %v4818 = vunpack.c.h.b16 %v485
    %v4819 = vunpack.c.l.b16 %v486
    %v4820 = vunpack.c.l.b16 %v487
    %v4821 = vunpack.c.h.b16 %v487
    %v4822 = vunpack.c.l.b16 %v488
    %v4823 = vunpack.c.h.b16 %v488
    %v4824 = vunpack.c.l.b16 %v489
    %v4825 = vunpack.c.l.b16 %v490
    %v4826 = vunpack.c.h.b16 %v490
    %v4827 = vunpack.c.l.b16 %v491
    %v4828 = vunpack.c.h.b16 %v491
    %v4829 = vunpack.c.l.b16 %v492
    %v4830 = vunpack.c.l.b16 %v493
    %v4831 = vunpack.c.h.b16 %v493
    %v4832 = vunpack.c.l.b16 %v494
    %v4833 = vunpack.c.h.b16 %v494
    %v4834 = vunpack.c.l.b16 %v495
    %v4835 = vunpack.c.l.b16 %v496
    %v4836 = vunpack.c.h.b16 %v496
    %v4837 = vunpack.c.l.b16 %v497
    %v4838 = vunpack.c.h.b16 %v497
    %v4839 = vunpack.c.l.b16 %v498
    %v4840 = vunpack.c.l.b16 %v499
    %v4841 = vunpack.c.h.b16 %v499
    %v4842 = vunpack.c.l.b16 %v500
    %v4843 = vunpack.c.h.b16 %v500
    %v4844 = vunpack.c.l.b16 %v501
    %v4845 = vunpack.c.l.b16 %v502
    %v4846 = vunpack.c.h.b16 %v502
    %v4847 = vunpack.c.l.b16 %v503
    %v4848 = vunpack.c.h.b16 %v503
    %v4849 = vunpack.c.l.b16 %v504
    %v4850 = vunpack.c.l.b16 %v505
    %v4851 = vunpack.c.h.b16 %v505
    %v4852 = vunpack.c.l.b16 %v506
    %v4853 = vunpack.c.h.b16 %v506
    %v4854 = vunpack.c.l.b16 %v507
    %v4855 = vunpack.c.l.b16 %v508
    %v4856 = vunpack.c.h.b16 %v508
    %v4857 = vunpack.c.l.b16 %v509
    %v4858 = vunpack.c.h.b16 %v509
    %v4859 = vunpack.c.l.b16 %v510
    %v4860 = vunpack.c.l.b16 %v511
    %v4861 = vunpack.c.h.b16 %v511
    %v4862 = vunpack.c.l.b16 %v512
    %v4863 = vunpack.c.h.b16 %v512
    %v4864 = vunpack.c.l.b16 %v513
    %v4865 = vunpack.c.l.b16 %v514
    %v4866 = vunpack.c.h.b16 %v514
    %v4867 = vunpack.c.l.b16 %v515
    %v4868 = vunpack.c.h.b16 %v515
    %v4869 = vunpack.c.l.b16 %v516
    %v4870 = vunpack.c.l.b16 %v517
    %v4871 = vunpack.c.h.b16 %v517
    %v4872 = vunpack.c.l.b16 %v518
    %v4873 = vunpack.c.h.b16 %v518
    %v4874 = vunpack.c.l.b16 %v519
    %v4875 = vunpack.c.l.b16 %v520
    %v4876 = vunpack.c.h.b16 %v520
    %v4877 = vunpack.c.l.b16 %v521
    %v4878 = vunpack.c.h.b16 %v521
    %v4879 = vunpack.c.l.b16 %v522
    %v4880 = vunpack.c.l.b16 %v523
    %v4881 = vunpack.c.h.b16 %v523
    %v4882 = vunpack.c.l.b16 %v524
    %v4883 = vunpack.c.h.b16 %v524
    %v4884 = vunpack.c.l.b16 %v525
    %v4885 = vunpack.c.l.b16 %v526
    %v4886 = vunpack.c.h.b16 %v526
    %v4887 = vunpack.c.l.b16 %v527
    %v4888 = vunpack.c.h.b16 %v527
    %v4889 = vunpack.c.l.b16 %v528
    %v4890 = vunpack.c.l.b16 %v529
    %v4891 = vunpack.c.h.b16 %v529
    %v4892 = vunpack.c.l.b16 %v530
    %v4893 = vunpack.c.h.b16 %v530
    %v4894 = vunpack.c.l.b16 %v531
    %v4895 = vunpack.c.l.b16 %v532
    %v4896 = vunpack.c.h.b16 %v532
    %v4897 = vunpack.c.l.b16 %v533
    %v4898 = vunpack.c.h.b16 %v533
    %v4899 = vunpack.c.l.b16 %v534
    %v4900 = vunpack.c.l.b16 %v535
    %v4901 = vunpack.c.h.b16 %v535
    %v4902 = vunpack.c.l.b16 %v536
    %v4903 = vunpack.c.h.b16 %v536
    %v4904 = vunpack.c.l.b16 %v537
    %v4905 = vunpack.c.l.b16 %v538
    %v4906 = vunpack.c.h.b16 %v538
    %v4907 = vunpack.c.l.b16 %v539
    %v4908 = vunpack.c.h.b16 %v539
    %v4909 = vunpack.c.l.b16 %v540
    %v4910 = vunpack.c.l.b16 %v541
    %v4911 = vunpack.c.h.b16 %v541
    %v4912 = vunpack.c.l.b16 %v542
    %v4913 = vunpack.c.h.b16 %v542
    %v4914 = vunpack.c.l.b16 %v543
    %v4915 = vunpack.c.l.b16 %v544
    %v4916 = vunpack.c.h.b16 %v544
    %v4917 = vunpack.c.l.b16 %v545
    %v4918 = vunpack.c.h.b16 %v545
    %v4919 = vunpack.c.l.b16 %v546
    %v4920 = vunpack.c.l.b16 %v547
    %v4921 = vunpack.c.h.b16 %v547
    %v4922 = vunpack.c.l.b16 %v548
    %v4923 = vunpack.c.h.b16 %v548
    %v4924 = vunpack.c.l.b16 %v549
    %v4925 = vunpack.c.l.b16 %v550
    %v4926 = vunpack.c.h.b16 %v550
    %v4927 = vunpack.c.l.b16 %v551
    %v4928 = vunpack.c.h.b16 %v551
    %v4929 = vunpack.c.l.b16 %v552
    %v4930 = vunpack.c.l.b16 %v553
    %v4931 = vunpack.c.h.b16 %v553
    %v4932 = vunpack.c.l.b16 %v554
    %v4933 = vunpack.c.h.b16 %v554
    %v4934 = vunpack.c.l.b16 %v555
    %v4935 = vunpack.c.l.b16 %v556
    %v4936 = vunpack.c.h.b16 %v556
    %v4937 = vunpack.c.l.b16 %v557
    %v4938 = vunpack.c.h.b16 %v557
    %v4939 = vunpack.c.l.b16 %v558
    %v4940 = vunpack.c.l.b16 %v559
    %v4941 = vunpack.c.h.b16 %v559
    %v4942 = vunpack.c.l.b16 %v560
    %v4943 = vunpack.c.h.b16 %v560
    %v4944 = vunpack.c.l.b16 %v561
    %v4945 = vunpack.c.l.b16 %v562
    %v4946 = vunpack.c.h.b16 %v562
    %v4947 = vunpack.c.l.b16 %v563
    %v4948 = vunpack.c.h.b16 %v563
    %v4949 = vunpack.c.l.b16 %v564
    %v4950 = vunpack.c.l.b16 %v565
    %v4951 = vunpack.c.h.b16 %v565
    %v4952 = vunpack.c.l.b16 %v566
    %v4953 = vunpack.c.h.b16 %v566
    %v4954 = vunpack.c.l.b16 %v567
    %v4955 = vunpack.c.l.b16 %v568
    %v4956 = vunpack.c.h.b16 %v568
    %v4957 = vunpack.c.l.b16 %v569
    %v4958 = vunpack.c.h.b16 %v569
    %v4959 = vunpack.c.l.b16 %v570
    %v4960 = vunpack.c.l.b16 %v571
    %v4961 = vunpack.c.h.b16 %v571
    %v4962 = vunpack.c.l.b16 %v572
    %v4963 = vunpack.c.h.b16 %v572
    %v4964 = vunpack.c.l.b16 %v573
    %v4965 = vunpack.c.l.b16 %v574
    %v4966 = vunpack.c.h.b16 %v574
    %v4967 = vunpack.c.l.b16 %v575
    %v4968 = vunpack.c.h.b16 %v575
    %v4969 = vunpack.c.l.b16 %v576
    %v4970 = vunpack.c.l.b16 %v577
    %v4971 = vunpack.c.h.b16 %v577
    %v4972 = vunpack.c.l.b16 %v578
    %v4973 = vunpack.c.h.b16 %v578
    %v4974 = vunpack.c.l.b16 %v579
    %v4975 = vunpack.c.l.b16 %v580
    %v4976 = vunpack.c.h.b16 %v580
    %v4977 = vunpack.c.l.b16 %v581
    %v4978 = vunpack.c.h.b16 %v581
    %v4979 = vunpack.c.l.b16 %v582
    %v4980 = vunpack.c.l.b16 %v583
    %v4981 = vunpack.c.h.b16 %v583
    %v4982 = vunpack.c.l.b16 %v584
    %v4983 = vunpack.c.h.b16 %v584
    %v4984 = vunpack.c.l.b16 %v585
    %v4985 = vunpack.c.l.b16 %v586
    %v4986 = vunpack.c.h.b16 %v586
    %v4987 = vunpack.c.l.b16 %v587
    %v4988 = vunpack.c.h.b16 %v587
    %v4989 = vunpack.c.l.b16 %v588
    %v4990 = vunpack.c.l.b16 %v589
    %v4991 = vunpack.c.h.b16 %v589
    %v4992 = vunpack.c.l.b16 %v590
    %v4993 = vunpack.c.h.b16 %v590
    %v4994 = vunpack.c.l.b16 %v591
    %v4995 = vunpack.c.l.b16 %v592
    %v4996 = vunpack.c.h.b16 %v592
    %v4997 = vunpack.c.l.b16 %v593
    %v4998 = vunpack.c.h.b16 %v593
    %v4999 = vunpack.c.l.b16 %v594
    %v5000 = vunpack.c.l.b16 %v595
    %v5001 = vunpack.c.h.b16 %v595
    %v5002 = vunpack.c.l.b16 %v596
    %v5003 = vunpack.c.h.b16 %v596
    %v5004 = vunpack.c.l.b16 %v597
    %v5005 = vunpack.c.l.b16 %v598
    %v5006 = vunpack.c.h.b16 %v598
    %v5007 = vunpack.c.l.b16 %v599
    %v5008 = vunpack.c.h.b16 %v599
    %v5009 = vunpack.c.l.b16 %v600
    %v5010 = vunpack.c.l.b16 %v601
    %v5011 = vunpack.c.h.b16 %v601
    %v5012 = vunpack.c.l.b16 %v602
    %v5013 = vunpack.c.h.b16 %v602
    %v5014 = vunpack.c.l.b16 %v603
    %v5015 = vpack.c.b16 %v4660, %v4655
    %v5016 = vpack.c.b16 %v4661, %v4656
    %v5017 = vpack.c.b16 %v4662, %v4657
    %v5018 = vpack.c.b16 %v4663, %v4658
    %v5019 = vpack.c.b16 %v4664, %v4659
    %v5020 = vpack.c.b16 %v4670, %v4665
    %v5021 = vpack.c.b16 %v4671, %v4666
    %v5022 = vpack.c.b16 %v4672, %v4667
    %v5023 = vpack.c.b16 %v4673, %v4668
    %v5024 = vpack.c.b16 %v4674, %v4669
    %v5025 = vpack.c.b16 %v4680, %v4675
    %v5026 = vpack.c.b16 %v4681, %v4676
    %v5027 = vpack.c.b16 %v4682, %v4677
    %v5028 = vpack.c.b16 %v4683, %v4678
    %v5029 = vpack.c.b16 %v4684, %v4679
    %v5030 = vpack.c.b16 %v4690, %v4685
    %v5031 = vpack.c.b16 %v4691, %v4686
    %v5032 = vpack.c.b16 %v4692, %v4687
    %v5033 = vpack.c.b16 %v4693, %v4688
    %v5034 = vpack.c.b16 %v4694, %v4689
    %v5035 = vpack.c.b16 %v4700, %v4695
    %v5036 = vpack.c.b16 %v4701, %v4696
    %v5037 = vpack.c.b16 %v4702, %v4697
    %v5038 = vpack.c.b16 %v4703, %v4698
    %v5039 = vpack.c.b16 %v4704, %v4699
    %v5040 = vpack.c.b16 %v4710, %v4705
    %v5041 = vpack.c.b16 %v4711, %v4706
    %v5042 = vpack.c.b16 %v4712, %v4707
    %v5043 = vpack.c.b16 %v4713, %v4708
    %v5044 = vpack.c.b16 %v4714, %v4709
    %v5045 = vpack.c.b16 %v4720, %v4715
    %v5046 = vpack.c.b16 %v4721, %v4716
    %v5047 = vpack.c.b16 %v4722, %v4717
    %v5048 = vpack.c.b16 %v4723, %v4718
    %v5049 = vpack.c.b16 %v4724, %v4719
    %v5050 = vpack.c.b16 %v4730, %v4725
    %v5051 = vpack.c.b16 %v4731, %v4726
    %v5052 = vpack.c.b16 %v4732, %v4727
    %v5053 = vpack.c.b16 %v4733, %v4728
    %v5054 = vpack.c.b16 %v4734, %v4729
    %v5055 = vpack.c.b16 %v4740, %v4735
    %v5056 = vpack.c.b16 %v4741, %v4736
    %v5057 = vpack.c.b16 %v4742, %v4737
    %v5058 = vpack.c.b16 %v4743, %v4738
    %v5059 = vpack.c.b16 %v4744, %v4739
    %v5060 = vpack.c.b16 %v4750, %v4745
    %v5061 = vpack.c.b16 %v4751, %v4746
    %v5062 = vpack.c.b16 %v4752, %v4747
    %v5063 = vpack.c.b16 %v4753, %v4748
    %v5064 = vpack.c.b16 %v4754, %v4749
    %v5065 = vpack.c.b16 %v4760, %v4755
    %v5066 = vpack.c.b16 %v4761, %v4756
    %v5067 = vpack.c.b16 %v4762, %v4757
    %v5068 = vpack.c.b16 %v4763, %v4758
    %v5069 = vpack.c.b16 %v4764, %v4759
    %v5070 = vpack.c.b16 %v4770, %v4765
    %v5071 = vpack.c.b16 %v4771, %v4766
    %v5072 = vpack.c.b16 %v4772, %v4767
    %v5073 = vpack.c.b16 %v4773, %v4768
    %v5074 = vpack.c.b16 %v4774, %v4769
    %v5075 = vpack.c.b16 %v4780, %v4775
    %v5076 = vpack.c.b16 %v4781, %v4776
    %v5077 = vpack.c.b16 %v4782, %v4777
    %v5078 = vpack.c.b16 %v4783, %v4778
    %v5079 = vpack.c.b16 %v4784, %v4779
    %v5080 = vpack.c.b16 %v4790, %v4785
    %v5081 = vpack.c.b16 %v4791, %v4786
    %v5082 = vpack.c.b16 %v4792, %v4787
    %v5083 = vpack.c.b16 %v4793, %v4788
    %v5084 = vpack.c.b16 %v4794, %v4789
    %v5085 = vpack.c.b16 %v4800, %v4795
    %v5086 = vpack.c.b16 %v4801, %v4796
    %v5087 = vpack.c.b16 %v4802, %v4797
    %v5088 = vpack.c.b16 %v4803, %v4798
    %v5089 = vpack.c.b16 %v4804, %v4799
    %v5090 = vpack.c.b16 %v4810, %v4805
    %v5091 = vpack.c.b16 %v4811, %v4806
    %v5092 = vpack.c.b16 %v4812, %v4807
    %v5093 = vpack.c.b16 %v4813, %v4808
    %v5094 = vpack.c.b16 %v4814, %v4809
    %v5095 = vpack.c.b16 %v4820, %v4815
    %v5096 = vpack.c.b16 %v4821, %v4816
    %v5097 = vpack.c.b16 %v4822, %v4817
    %v5098 = vpack.c.b16 %v4823, %v4818
    %v5099 = vpack.c.b16 %v4824, %v4819
    %v5100 = vpack.c.b16 %v4830, %v4825
    %v5101 = vpack.c.b16 %v4831, %v4826
    %v5102 = vpack.c.b16 %v4832, %v4827
    %v5103 = vpack.c.b16 %v4833, %v4828
    %v5104 = vpack.c.b16 %v4834, %v4829
    %v5105 = vpack.c.b16 %v4840, %v4835
    %v5106 = vpack.c.b16 %v4841, %v4836
    %v5107 = vpack.c.b16 %v4842, %v4837
    %v5108 = vpack.c.b16 %v4843, %v4838
    %v5109 = vpack.c.b16 %v4844, %v4839
    %v5110 = vpack.c.b16 %v4850, %v4845
    %v5111 = vpack.c.b16 %v4851, %v4846
    %v5112 = vpack.c.b16 %v4852, %v4847
    %v5113 = vpack.c.b16 %v4853, %v4848
    %v5114 = vpack.c.b16 %v4854, %v4849
    %v5115 = vpack.c.b16 %v4860, %v4855
    %v5116 = vpack.c.b16 %v4861, %v4856
    %v5117 = vpack.c.b16 %v4862, %v4857
    %v5118 = vpack.c.b16 %v4863, %v4858
    %v5119 = vpack.c.b16 %v4864, %v4859
    %v5120 = vpack.c.b16 %v4870, %v4865
    %v5121 = vpack.c.b16 %v4871, %v4866
    %v5122 = vpack.c.b16 %v4872, %v4867
    %v5123 = vpack.c.b16 %v4873, %v4868
    %v5124 = vpack.c.b16 %v4874, %v4869
    %v5125 = vpack.c.b16 %v4880, %v4875
    %v5126 = vpack.c.b16 %v4881, %v4876
    %v5127 = vpack.c.b16 %v4882, %v4877
    %v5128 = vpack.c.b16 %v4883, %v4878
    %v5129 = vpack.c.b16 %v4884, %v4879
    %v5130 = vpack.c.b16 %v4890, %v4885
    %v5131 = vpack.c.b16 %v4891, %v4886
    %v5132 = vpack.c.b16 %v4892, %v4887
    %v5133 = vpack.c.b16 %v4893, %v4888
    %v5134 = vpack.c.b16 %v4894, %v4889
    %v5135 = vpack.c.b16 %v4900, %v4895
    %v5136 = vpack.c.b16 %v4901, %v4896
    %v5137 = vpack.c.b16 %v4902, %v4897
    %v5138 = vpack.c.b16 %v4903, %v4898
    %v5139 = vpack.c.b16 %v4904, %v4899
    %v5140 = vpack.c.b16 %v4910, %v4905
    %v5141 = vpack.c.b16 %v4911, %v4906
    %v5142 = vpack.c.b16 %v4912, %v4907
    %v5143 = vpack.c.b16 %v4913, %v4908
    %v5144 = vpack.c.b16 %v4914, %v4909
    %v5145 = vpack.c.b16 %v4920, %v4915
    %v5146 = vpack.c.b16 %v4921, %v4916
    %v5147 = vpack.c.b16 %v4922, %v4917
    %v5148 = vpack.c.b16 %v4923, %v4918
    %v5149 = vpack.c.b16 %v4924, %v4919
    %v5150 = vpack.c.b16 %v4930, %v4925
    %v5151 = vpack.c.b16 %v4931, %v4926
    %v5152 = vpack.c.b16 %v4932, %v4927
    %v5153 = vpack.c.b16 %v4933, %v4928
    %v5154 = vpack.c.b16 %v4934, %v4929
    %v5155 = vpack.c.b16 %v4940, %v4935
    %v5156 = vpack.c.b16 %v4941, %v4936
    %v5157 = vpack.c.b16 %v4942, %v4937
    %v5158 = vpack.c.b16 %v4943, %v4938
    %v5159 = vpack.c.b16 %v4944, %v4939
    %v5160 = vpack.c.b16 %v4950, %v4945
    %v5161 = vpack.c.b16 %v4951, %v4946
    %v5162 = vpack.c.b16 %v4952, %v4947
    %v5163 = vpack.c.b16 %v4953, %v4948
    %v5164 = vpack.c.b16 %v4954, %v4949
    %v5165 = vpack.c.b16 %v4960, %v4955
    %v5166 = vpack.c.b16 %v4961, %v4956
    %v5167 = vpack.c.b16 %v4962, %v4957
    %v5168 = vpack.c.b16 %v4963, %v4958
    %v5169 = vpack.c.b16 %v4964, %v4959
    %v5170 = vpack.c.b16 %v4970, %v4965
    %v5171 = vpack.c.b16 %v4971, %v4966
    %v5172 = vpack.c.b16 %v4972, %v4967
    %v5173 = vpack.c.b16 %v4973, %v4968
    %v5174 = vpack.c.b16 %v4974, %v4969
    %v5175 = vpack.c.b16 %v4980, %v4975
    %v5176 = vpack.c.b16 %v4981, %v4976
    %v5177 = vpack.c.b16 %v4982, %v4977
    %v5178 = vpack.c.b16 %v4983, %v4978
    %v5179 = vpack.c.b16 %v4984, %v4979
    %v5180 = vpack.c.b16 %v4990, %v4985
    %v5181 = vpack.c.b16 %v4991, %v4986
    %v5182 = vpack.c.b16 %v4992, %v4987
    %v5183 = vpack.c.b16 %v4993, %v4988
    %v5184 = vpack.c.b16 %v4994, %v4989
    %v5185 = vpack.c.b16 %v5000, %v4995
    %v5186 = vpack.c.b16 %v5001, %v4996
    %v5187 = vpack.c.b16 %v5002, %v4997
    %v5188 = vpack.c.b16 %v5003, %v4998
    %v5189 = vpack.c.b16 %v5004, %v4999
    %v5190 = vpack.c.b16 %v5010, %v5005
    %v5191 = vpack.c.b16 %v5011, %v5006
    %v5192 = vpack.c.b16 %v5012, %v5007
    %v5193 = vpack.c.b16 %v5013, %v5008
    %v5194 = vpack.c.b16 %v5014, %v5009
    %v5340 = vsel %vm2440, %v5019, 0
    %v5343 = vsel %vm2440, %v5024, 0
    %v5346 = vsel %vm2440, %v5029, 0
    %v5349 = vsel %vm2440, %v5034, 0
    %v5352 = vsel %vm2440, %v5039, 0
    %v5355 = vsel %vm2440, %v5044, 0
    %v5358 = vsel %vm2440, %v5049, 0
    %v5361 = vsel %vm2440, %v5054, 0
    %v5364 = vsel %vm2440, %v5059, 0
    %v5367 = vsel %vm2440, %v5064, 0
    %v5370 = vsel %vm2440, %v5069, 0
    %v5373 = vsel %vm2440, %v5074, 0
    %v5376 = vsel %vm2440, %v5079, 0
    %v5379 = vsel %vm2440, %v5084, 0
    %v5382 = vsel %vm2440, %v5089, 0
    %v5385 = vsel %vm2440, %v5094, 0
    %v5388 = vsel %vm2440, %v5099, 0
    %v5391 = vsel %vm2440, %v5104, 0
    %v5394 = vsel %vm2440, %v5109, 0
    %v5397 = vsel %vm2440, %v5114, 0
    %v5400 = vsel %vm2440, %v5119, 0
    %v5403 = vsel %vm2440, %v5124, 0
    %v5406 = vsel %vm2440, %v5129, 0
    %v5409 = vsel %vm2440, %v5134, 0
    %v5412 = vsel %vm2440, %v5139, 0
    %v5415 = vsel %vm2440, %v5144, 0
    %v5418 = vsel %vm2440, %v5149, 0
    %v5421 = vsel %vm2440, %v5154, 0
    %v5424 = vsel %vm2440, %v5159, 0
    %v5427 = vsel %vm2440, %v5164, 0
    %v5430 = vsel %vm2440, %v5169, 0
    %v5433 = vsel %vm2440, %v5174, 0
    %v5436 = vsel %vm2440, %v5179, 0
    %v5439 = vsel %vm2440, %v5184, 0
    %v5442 = vsel %vm2440, %v5189, 0
    %v5445 = vsel %vm2440, %v5194, 0
    %5447 = vmatpush.bf16.msra.mxu0 %v2022
    %5448 = vmatpush.bf16.msra.mxu0 %v2020
    %5449 = vmatpush.bf16.msra.mxu0 %v2018
    %5450 = vmatpush.bf16.msra.mxu0 %v2016
    %5451 = vmatpush.bf16.msra.mxu0 %v2014
    %5452 = vmatpush.bf16.msra.mxu0 %v2012
    %5453 = vmatpush.bf16.msra.mxu0 %v2010
    %5454 = vmatpush.bf16.msra.mxu0 %v2008
    %5455 = vmatmul.bf16.gmra.mxu0 %v5015
    %v5456 = vpop.f32.mrf.mxu0
    %v5457 = vadd.f32 %v3315, %v5456
    %v5458 = vpop.f32.mrf.mxu0
    %v5459 = vadd.f32 %v3317, %v5458
    %5460 = vmatmul.bf16.gmra.mxu0 %v5020
    %v5461 = vpop.f32.mrf.mxu0
    %v5462 = vadd.f32 %v3320, %v5461
    %v5463 = vpop.f32.mrf.mxu0
    %v5464 = vadd.f32 %v3322, %v5463
    %5465 = vmatmul.bf16.gmra.mxu0 %v5025
    %v5466 = vpop.f32.mrf.mxu0
    %v5467 = vadd.f32 %v3325, %v5466
    %v5468 = vpop.f32.mrf.mxu0
    %v5469 = vadd.f32 %v3327, %v5468
    %5470 = vmatmul.bf16.gmra.mxu0 %v5030
    %v5471 = vpop.f32.mrf.mxu0
    %v5472 = vadd.f32 %v3330, %v5471
    %v5473 = vpop.f32.mrf.mxu0
    %v5474 = vadd.f32 %v3332, %v5473
    %5475 = vmatmul.bf16.gmra.mxu0 %v5035
    %v5476 = vpop.f32.mrf.mxu0
    %v5477 = vadd.f32 %v3335, %v5476
    %v5478 = vpop.f32.mrf.mxu0
    %v5479 = vadd.f32 %v3337, %v5478
    %5480 = vmatmul.bf16.gmra.mxu0 %v5040
    %v5481 = vpop.f32.mrf.mxu0
    %v5482 = vadd.f32 %v3340, %v5481
    %v5483 = vpop.f32.mrf.mxu0
    %v5484 = vadd.f32 %v3342, %v5483
    %5485 = vmatmul.bf16.gmra.mxu0 %v5045
    %v5486 = vpop.f32.mrf.mxu0
    %v5487 = vadd.f32 %v3345, %v5486
    %v5488 = vpop.f32.mrf.mxu0
    %v5489 = vadd.f32 %v3347, %v5488
    %5490 = vmatmul.bf16.gmra.mxu0 %v5050
    %v5491 = vpop.f32.mrf.mxu0
    %v5492 = vadd.f32 %v3350, %v5491
    %v5493 = vpop.f32.mrf.mxu0
    %v5494 = vadd.f32 %v3352, %v5493
    %5495 = vmatmul.bf16.gmra.mxu0 %v5055
    %v5496 = vpop.f32.mrf.mxu0
    %v5497 = vadd.f32 %v3355, %v5496
    %v5498 = vpop.f32.mrf.mxu0
    %v5499 = vadd.f32 %v3357, %v5498
    %5500 = vmatmul.bf16.gmra.mxu0 %v5060
    %v5501 = vpop.f32.mrf.mxu0
    %v5502 = vadd.f32 %v3360, %v5501
    %v5503 = vpop.f32.mrf.mxu0
    %v5504 = vadd.f32 %v3362, %v5503
    %5505 = vmatmul.bf16.gmra.mxu0 %v5065
    %v5506 = vpop.f32.mrf.mxu0
    %v5507 = vadd.f32 %v3365, %v5506
    %v5508 = vpop.f32.mrf.mxu0
    %v5509 = vadd.f32 %v3367, %v5508
    %5510 = vmatmul.bf16.gmra.mxu0 %v5070
    %v5511 = vpop.f32.mrf.mxu0
    %v5512 = vadd.f32 %v3370, %v5511
    %v5513 = vpop.f32.mrf.mxu0
    %v5514 = vadd.f32 %v3372, %v5513
    %5515 = vmatmul.bf16.gmra.mxu0 %v5075
    %v5516 = vpop.f32.mrf.mxu0
    %v5517 = vadd.f32 %v3375, %v5516
    %v5518 = vpop.f32.mrf.mxu0
    %v5519 = vadd.f32 %v3377, %v5518
    %5520 = vmatmul.bf16.gmra.mxu0 %v5080
    %v5521 = vpop.f32.mrf.mxu0
    %v5522 = vadd.f32 %v3380, %v5521
    %v5523 = vpop.f32.mrf.mxu0
    %v5524 = vadd.f32 %v3382, %v5523
    %5525 = vmatmul.bf16.gmra.mxu0 %v5085
    %v5526 = vpop.f32.mrf.mxu0
    %v5527 = vadd.f32 %v3385, %v5526
    %v5528 = vpop.f32.mrf.mxu0
    %v5529 = vadd.f32 %v3387, %v5528
    %5530 = vmatmul.bf16.gmra.mxu0 %v5090
    %v5531 = vpop.f32.mrf.mxu0
    %v5532 = vadd.f32 %v3390, %v5531
    %v5533 = vpop.f32.mrf.mxu0
    %v5534 = vadd.f32 %v3392, %v5533
    %5535 = vmatmul.bf16.gmra.mxu0 %v5095
    %v5536 = vpop.f32.mrf.mxu0
    %v5537 = vadd.f32 %v3395, %v5536
    %v5538 = vpop.f32.mrf.mxu0
    %v5539 = vadd.f32 %v3397, %v5538
    %5540 = vmatmul.bf16.gmra.mxu0 %v5100
    %v5541 = vpop.f32.mrf.mxu0
    %v5542 = vadd.f32 %v3400, %v5541
    %v5543 = vpop.f32.mrf.mxu0
    %v5544 = vadd.f32 %v3402, %v5543
    %5545 = vmatmul.bf16.gmra.mxu0 %v5105
    %v5546 = vpop.f32.mrf.mxu0
    %v5547 = vadd.f32 %v3405, %v5546
    %v5548 = vpop.f32.mrf.mxu0
    %v5549 = vadd.f32 %v3407, %v5548
    %5550 = vmatmul.bf16.gmra.mxu0 %v5110
    %v5551 = vpop.f32.mrf.mxu0
    %v5552 = vadd.f32 %v3410, %v5551
    %v5553 = vpop.f32.mrf.mxu0
    %v5554 = vadd.f32 %v3412, %v5553
    %5555 = vmatmul.bf16.gmra.mxu0 %v5115
    %v5556 = vpop.f32.mrf.mxu0
    %v5557 = vadd.f32 %v3415, %v5556
    %v5558 = vpop.f32.mrf.mxu0
    %v5559 = vadd.f32 %v3417, %v5558
    %5560 = vmatmul.bf16.gmra.mxu0 %v5120
    %v5561 = vpop.f32.mrf.mxu0
    %v5562 = vadd.f32 %v3420, %v5561
    %v5563 = vpop.f32.mrf.mxu0
    %v5564 = vadd.f32 %v3422, %v5563
    %5565 = vmatmul.bf16.gmra.mxu0 %v5125
    %v5566 = vpop.f32.mrf.mxu0
    %v5567 = vadd.f32 %v3425, %v5566
    %v5568 = vpop.f32.mrf.mxu0
    %v5569 = vadd.f32 %v3427, %v5568
    %5570 = vmatmul.bf16.gmra.mxu0 %v5130
    %v5571 = vpop.f32.mrf.mxu0
    %v5572 = vadd.f32 %v3430, %v5571
    %v5573 = vpop.f32.mrf.mxu0
    %v5574 = vadd.f32 %v3432, %v5573
    %5575 = vmatmul.bf16.gmra.mxu0 %v5135
    %v5576 = vpop.f32.mrf.mxu0
    %v5577 = vadd.f32 %v3435, %v5576
    %v5578 = vpop.f32.mrf.mxu0
    %v5579 = vadd.f32 %v3437, %v5578
    %5580 = vmatmul.bf16.gmra.mxu0 %v5140
    %v5581 = vpop.f32.mrf.mxu0
    %v5582 = vadd.f32 %v3440, %v5581
    %v5583 = vpop.f32.mrf.mxu0
    %v5584 = vadd.f32 %v3442, %v5583
    %5585 = vmatmul.bf16.gmra.mxu0 %v5145
    %v5586 = vpop.f32.mrf.mxu0
    %v5587 = vadd.f32 %v3445, %v5586
    %v5588 = vpop.f32.mrf.mxu0
    %v5589 = vadd.f32 %v3447, %v5588
    %5590 = vmatmul.bf16.gmra.mxu0 %v5150
    %v5591 = vpop.f32.mrf.mxu0
    %v5592 = vadd.f32 %v3450, %v5591
    %v5593 = vpop.f32.mrf.mxu0
    %v5594 = vadd.f32 %v3452, %v5593
    %5595 = vmatmul.bf16.gmra.mxu0 %v5155
    %v5596 = vpop.f32.mrf.mxu0
    %v5597 = vadd.f32 %v3455, %v5596
    %v5598 = vpop.f32.mrf.mxu0
    %v5599 = vadd.f32 %v3457, %v5598
    %5600 = vmatmul.bf16.gmra.mxu0 %v5160
    %v5601 = vpop.f32.mrf.mxu0
    %v5602 = vadd.f32 %v3460, %v5601
    %v5603 = vpop.f32.mrf.mxu0
    %v5604 = vadd.f32 %v3462, %v5603
    %5605 = vmatmul.bf16.gmra.mxu0 %v5165
    %v5606 = vpop.f32.mrf.mxu0
    %v5607 = vadd.f32 %v3465, %v5606
    %v5608 = vpop.f32.mrf.mxu0
    %v5609 = vadd.f32 %v3467, %v5608
    %5610 = vmatmul.bf16.gmra.mxu0 %v5170
    %v5611 = vpop.f32.mrf.mxu0
    %v5612 = vadd.f32 %v3470, %v5611
    %v5613 = vpop.f32.mrf.mxu0
    %v5614 = vadd.f32 %v3472, %v5613
    %5615 = vmatmul.bf16.gmra.mxu0 %v5175
    %v5616 = vpop.f32.mrf.mxu0
    %v5617 = vadd.f32 %v3475, %v5616
    %v5618 = vpop.f32.mrf.mxu0
    %v5619 = vadd.f32 %v3477, %v5618
    %5620 = vmatmul.bf16.gmra.mxu0 %v5180
    %v5621 = vpop.f32.mrf.mxu0
    %v5622 = vadd.f32 %v3480, %v5621
    %v5623 = vpop.f32.mrf.mxu0
    %v5624 = vadd.f32 %v3482, %v5623
    %5625 = vmatmul.bf16.gmra.mxu0 %v5185
    %v5626 = vpop.f32.mrf.mxu0
    %v5627 = vadd.f32 %v3485, %v5626
    %v5628 = vpop.f32.mrf.mxu0
    %v5629 = vadd.f32 %v3487, %v5628
    %5630 = vmatmul.bf16.gmra.mxu0 %v5190
    %v5631 = vpop.f32.mrf.mxu0
    %v5632 = vadd.f32 %v3490, %v5631
    %v5633 = vpop.f32.mrf.mxu0
    %v5634 = vadd.f32 %v3492, %v5633
    %5635 = vdwg.mxu0
    %5636 = vmatpush.bf16.msra.mxu0 %v2038
    %5637 = vmatpush.bf16.msra.mxu0 %v2036
    %5638 = vmatpush.bf16.msra.mxu0 %v2034
    %5639 = vmatpush.bf16.msra.mxu0 %v2032
    %5640 = vmatpush.bf16.msra.mxu0 %v2030
    %5641 = vmatpush.bf16.msra.mxu0 %v2028
    %5642 = vmatpush.bf16.msra.mxu0 %v2026
    %5643 = vmatpush.bf16.msra.mxu0 %v2024
    %5644 = vmatmul.bf16.gmra.mxu0 %v5016
    %v5645 = vpop.f32.mrf.mxu0
    %v5646 = vadd.f32 %v5457, %v5645
    %v5647 = vpop.f32.mrf.mxu0
    %v5648 = vadd.f32 %v5459, %v5647
    %5649 = vmatmul.bf16.gmra.mxu0 %v5021
    %v5650 = vpop.f32.mrf.mxu0
    %v5651 = vadd.f32 %v5462, %v5650
    %v5652 = vpop.f32.mrf.mxu0
    %v5653 = vadd.f32 %v5464, %v5652
    %5654 = vmatmul.bf16.gmra.mxu0 %v5026
    %v5655 = vpop.f32.mrf.mxu0
    %v5656 = vadd.f32 %v5467, %v5655
    %v5657 = vpop.f32.mrf.mxu0
    %v5658 = vadd.f32 %v5469, %v5657
    %5659 = vmatmul.bf16.gmra.mxu0 %v5031
    %v5660 = vpop.f32.mrf.mxu0
    %v5661 = vadd.f32 %v5472, %v5660
    %v5662 = vpop.f32.mrf.mxu0
    %v5663 = vadd.f32 %v5474, %v5662
    %5664 = vmatmul.bf16.gmra.mxu0 %v5036
    %v5665 = vpop.f32.mrf.mxu0
    %v5666 = vadd.f32 %v5477, %v5665
    %v5667 = vpop.f32.mrf.mxu0
    %v5668 = vadd.f32 %v5479, %v5667
    %5669 = vmatmul.bf16.gmra.mxu0 %v5041
    %v5670 = vpop.f32.mrf.mxu0
    %v5671 = vadd.f32 %v5482, %v5670
    %v5672 = vpop.f32.mrf.mxu0
    %v5673 = vadd.f32 %v5484, %v5672
    %5674 = vmatmul.bf16.gmra.mxu0 %v5046
    %v5675 = vpop.f32.mrf.mxu0
    %v5676 = vadd.f32 %v5487, %v5675
    %v5677 = vpop.f32.mrf.mxu0
    %v5678 = vadd.f32 %v5489, %v5677
    %5679 = vmatmul.bf16.gmra.mxu0 %v5051
    %v5680 = vpop.f32.mrf.mxu0
    %v5681 = vadd.f32 %v5492, %v5680
    %v5682 = vpop.f32.mrf.mxu0
    %v5683 = vadd.f32 %v5494, %v5682
    %5684 = vmatmul.bf16.gmra.mxu0 %v5056
    %v5685 = vpop.f32.mrf.mxu0
    %v5686 = vadd.f32 %v5497, %v5685
    %v5687 = vpop.f32.mrf.mxu0
    %v5688 = vadd.f32 %v5499, %v5687
    %5689 = vmatmul.bf16.gmra.mxu0 %v5061
    %v5690 = vpop.f32.mrf.mxu0
    %v5691 = vadd.f32 %v5502, %v5690
    %v5692 = vpop.f32.mrf.mxu0
    %v5693 = vadd.f32 %v5504, %v5692
    %5694 = vmatmul.bf16.gmra.mxu0 %v5066
    %v5695 = vpop.f32.mrf.mxu0
    %v5696 = vadd.f32 %v5507, %v5695
    %v5697 = vpop.f32.mrf.mxu0
    %v5698 = vadd.f32 %v5509, %v5697
    %5699 = vmatmul.bf16.gmra.mxu0 %v5071
    %v5700 = vpop.f32.mrf.mxu0
    %v5701 = vadd.f32 %v5512, %v5700
    %v5702 = vpop.f32.mrf.mxu0
    %v5703 = vadd.f32 %v5514, %v5702
    %5704 = vmatmul.bf16.gmra.mxu0 %v5076
    %v5705 = vpop.f32.mrf.mxu0
    %v5706 = vadd.f32 %v5517, %v5705
    %v5707 = vpop.f32.mrf.mxu0
    %v5708 = vadd.f32 %v5519, %v5707
    %5709 = vmatmul.bf16.gmra.mxu0 %v5081
    %v5710 = vpop.f32.mrf.mxu0
    %v5711 = vadd.f32 %v5522, %v5710
    %v5712 = vpop.f32.mrf.mxu0
    %v5713 = vadd.f32 %v5524, %v5712
    %5714 = vmatmul.bf16.gmra.mxu0 %v5086
    %v5715 = vpop.f32.mrf.mxu0
    %v5716 = vadd.f32 %v5527, %v5715
    %v5717 = vpop.f32.mrf.mxu0
    %v5718 = vadd.f32 %v5529, %v5717
    %5719 = vmatmul.bf16.gmra.mxu0 %v5091
    %v5720 = vpop.f32.mrf.mxu0
    %v5721 = vadd.f32 %v5532, %v5720
    %v5722 = vpop.f32.mrf.mxu0
    %v5723 = vadd.f32 %v5534, %v5722
    %5724 = vmatmul.bf16.gmra.mxu0 %v5096
    %v5725 = vpop.f32.mrf.mxu0
    %v5726 = vadd.f32 %v5537, %v5725
    %v5727 = vpop.f32.mrf.mxu0
    %v5728 = vadd.f32 %v5539, %v5727
    %5729 = vmatmul.bf16.gmra.mxu0 %v5101
    %v5730 = vpop.f32.mrf.mxu0
    %v5731 = vadd.f32 %v5542, %v5730
    %v5732 = vpop.f32.mrf.mxu0
    %v5733 = vadd.f32 %v5544, %v5732
    %5734 = vmatmul.bf16.gmra.mxu0 %v5106
    %v5735 = vpop.f32.mrf.mxu0
    %v5736 = vadd.f32 %v5547, %v5735
    %v5737 = vpop.f32.mrf.mxu0
    %v5738 = vadd.f32 %v5549, %v5737
    %5739 = vmatmul.bf16.gmra.mxu0 %v5111
    %v5740 = vpop.f32.mrf.mxu0
    %v5741 = vadd.f32 %v5552, %v5740
    %v5742 = vpop.f32.mrf.mxu0
    %v5743 = vadd.f32 %v5554, %v5742
    %5744 = vmatmul.bf16.gmra.mxu0 %v5116
    %v5745 = vpop.f32.mrf.mxu0
    %v5746 = vadd.f32 %v5557, %v5745
    %v5747 = vpop.f32.mrf.mxu0
    %v5748 = vadd.f32 %v5559, %v5747
    %5749 = vmatmul.bf16.gmra.mxu0 %v5121
    %v5750 = vpop.f32.mrf.mxu0
    %v5751 = vadd.f32 %v5562, %v5750
    %v5752 = vpop.f32.mrf.mxu0
    %v5753 = vadd.f32 %v5564, %v5752
    %5754 = vmatmul.bf16.gmra.mxu0 %v5126
    %v5755 = vpop.f32.mrf.mxu0
    %v5756 = vadd.f32 %v5567, %v5755
    %v5757 = vpop.f32.mrf.mxu0
    %v5758 = vadd.f32 %v5569, %v5757
    %5759 = vmatmul.bf16.gmra.mxu0 %v5131
    %v5760 = vpop.f32.mrf.mxu0
    %v5761 = vadd.f32 %v5572, %v5760
    %v5762 = vpop.f32.mrf.mxu0
    %v5763 = vadd.f32 %v5574, %v5762
    %5764 = vmatmul.bf16.gmra.mxu0 %v5136
    %v5765 = vpop.f32.mrf.mxu0
    %v5766 = vadd.f32 %v5577, %v5765
    %v5767 = vpop.f32.mrf.mxu0
    %v5768 = vadd.f32 %v5579, %v5767
    %5769 = vmatmul.bf16.gmra.mxu0 %v5141
    %v5770 = vpop.f32.mrf.mxu0
    %v5771 = vadd.f32 %v5582, %v5770
    %v5772 = vpop.f32.mrf.mxu0
    %v5773 = vadd.f32 %v5584, %v5772
    %5774 = vmatmul.bf16.gmra.mxu0 %v5146
    %v5775 = vpop.f32.mrf.mxu0
    %v5776 = vadd.f32 %v5587, %v5775
    %v5777 = vpop.f32.mrf.mxu0
    %v5778 = vadd.f32 %v5589, %v5777
    %5779 = vmatmul.bf16.gmra.mxu0 %v5151
    %v5780 = vpop.f32.mrf.mxu0
    %v5781 = vadd.f32 %v5592, %v5780
    %v5782 = vpop.f32.mrf.mxu0
    %v5783 = vadd.f32 %v5594, %v5782
    %5784 = vmatmul.bf16.gmra.mxu0 %v5156
    %v5785 = vpop.f32.mrf.mxu0
    %v5786 = vadd.f32 %v5597, %v5785
    %v5787 = vpop.f32.mrf.mxu0
    %v5788 = vadd.f32 %v5599, %v5787
    %5789 = vmatmul.bf16.gmra.mxu0 %v5161
    %v5790 = vpop.f32.mrf.mxu0
    %v5791 = vadd.f32 %v5602, %v5790
    %v5792 = vpop.f32.mrf.mxu0
    %v5793 = vadd.f32 %v5604, %v5792
    %5794 = vmatmul.bf16.gmra.mxu0 %v5166
    %v5795 = vpop.f32.mrf.mxu0
    %v5796 = vadd.f32 %v5607, %v5795
    %v5797 = vpop.f32.mrf.mxu0
    %v5798 = vadd.f32 %v5609, %v5797
    %5799 = vmatmul.bf16.gmra.mxu0 %v5171
    %v5800 = vpop.f32.mrf.mxu0
    %v5801 = vadd.f32 %v5612, %v5800
    %v5802 = vpop.f32.mrf.mxu0
    %v5803 = vadd.f32 %v5614, %v5802
    %5804 = vmatmul.bf16.gmra.mxu0 %v5176
    %v5805 = vpop.f32.mrf.mxu0
    %v5806 = vadd.f32 %v5617, %v5805
    %v5807 = vpop.f32.mrf.mxu0
    %v5808 = vadd.f32 %v5619, %v5807
    %5809 = vmatmul.bf16.gmra.mxu0 %v5181
    %v5810 = vpop.f32.mrf.mxu0
    %v5811 = vadd.f32 %v5622, %v5810
    %v5812 = vpop.f32.mrf.mxu0
    %v5813 = vadd.f32 %v5624, %v5812
    %5814 = vmatmul.bf16.gmra.mxu0 %v5186
    %v5815 = vpop.f32.mrf.mxu0
    %v5816 = vadd.f32 %v5627, %v5815
    %v5817 = vpop.f32.mrf.mxu0
    %v5818 = vadd.f32 %v5629, %v5817
    %5819 = vmatmul.bf16.gmra.mxu0 %v5191
    %v5820 = vpop.f32.mrf.mxu0
    %v5821 = vadd.f32 %v5632, %v5820
    %v5822 = vpop.f32.mrf.mxu0
    %v5823 = vadd.f32 %v5634, %v5822
    %5824 = vdwg.mxu0
    %5825 = vmatpush.bf16.msra.mxu0 %v2054
    %5826 = vmatpush.bf16.msra.mxu0 %v2052
    %5827 = vmatpush.bf16.msra.mxu0 %v2050
    %5828 = vmatpush.bf16.msra.mxu0 %v2048
    %5829 = vmatpush.bf16.msra.mxu0 %v2046
    %5830 = vmatpush.bf16.msra.mxu0 %v2044
    %5831 = vmatpush.bf16.msra.mxu0 %v2042
    %5832 = vmatpush.bf16.msra.mxu0 %v2040
    %5833 = vmatmul.bf16.gmra.mxu0 %v5017
    %v5834 = vpop.f32.mrf.mxu0
    %v5835 = vadd.f32 %v5646, %v5834
    %v5836 = vpop.f32.mrf.mxu0
    %v5837 = vadd.f32 %v5648, %v5836
    %5838 = vmatmul.bf16.gmra.mxu0 %v5022
    %v5839 = vpop.f32.mrf.mxu0
    %v5840 = vadd.f32 %v5651, %v5839
    %v5841 = vpop.f32.mrf.mxu0
    %v5842 = vadd.f32 %v5653, %v5841
    %5843 = vmatmul.bf16.gmra.mxu0 %v5027
    %v5844 = vpop.f32.mrf.mxu0
    %v5845 = vadd.f32 %v5656, %v5844
    %v5846 = vpop.f32.mrf.mxu0
    %v5847 = vadd.f32 %v5658, %v5846
    %5848 = vmatmul.bf16.gmra.mxu0 %v5032
    %v5849 = vpop.f32.mrf.mxu0
    %v5850 = vadd.f32 %v5661, %v5849
    %v5851 = vpop.f32.mrf.mxu0
    %v5852 = vadd.f32 %v5663, %v5851
    %5853 = vmatmul.bf16.gmra.mxu0 %v5037
    %v5854 = vpop.f32.mrf.mxu0
    %v5855 = vadd.f32 %v5666, %v5854
    %v5856 = vpop.f32.mrf.mxu0
    %v5857 = vadd.f32 %v5668, %v5856
    %5858 = vmatmul.bf16.gmra.mxu0 %v5042
    %v5859 = vpop.f32.mrf.mxu0
    %v5860 = vadd.f32 %v5671, %v5859
    %v5861 = vpop.f32.mrf.mxu0
    %v5862 = vadd.f32 %v5673, %v5861
    %5863 = vmatmul.bf16.gmra.mxu0 %v5047
    %v5864 = vpop.f32.mrf.mxu0
    %v5865 = vadd.f32 %v5676, %v5864
    %v5866 = vpop.f32.mrf.mxu0
    %v5867 = vadd.f32 %v5678, %v5866
    %5868 = vmatmul.bf16.gmra.mxu0 %v5052
    %v5869 = vpop.f32.mrf.mxu0
    %v5870 = vadd.f32 %v5681, %v5869
    %v5871 = vpop.f32.mrf.mxu0
    %v5872 = vadd.f32 %v5683, %v5871
    %5873 = vmatmul.bf16.gmra.mxu0 %v5057
    %v5874 = vpop.f32.mrf.mxu0
    %v5875 = vadd.f32 %v5686, %v5874
    %v5876 = vpop.f32.mrf.mxu0
    %v5877 = vadd.f32 %v5688, %v5876
    %5878 = vmatmul.bf16.gmra.mxu0 %v5062
    %v5879 = vpop.f32.mrf.mxu0
    %v5880 = vadd.f32 %v5691, %v5879
    %v5881 = vpop.f32.mrf.mxu0
    %v5882 = vadd.f32 %v5693, %v5881
    %5883 = vmatmul.bf16.gmra.mxu0 %v5067
    %v5884 = vpop.f32.mrf.mxu0
    %v5885 = vadd.f32 %v5696, %v5884
    %v5886 = vpop.f32.mrf.mxu0
    %v5887 = vadd.f32 %v5698, %v5886
    %5888 = vmatmul.bf16.gmra.mxu0 %v5072
    %v5889 = vpop.f32.mrf.mxu0
    %v5890 = vadd.f32 %v5701, %v5889
    %v5891 = vpop.f32.mrf.mxu0
    %v5892 = vadd.f32 %v5703, %v5891
    %5893 = vmatmul.bf16.gmra.mxu0 %v5077
    %v5894 = vpop.f32.mrf.mxu0
    %v5895 = vadd.f32 %v5706, %v5894
    %v5896 = vpop.f32.mrf.mxu0
    %v5897 = vadd.f32 %v5708, %v5896
    %5898 = vmatmul.bf16.gmra.mxu0 %v5082
    %v5899 = vpop.f32.mrf.mxu0
    %v5900 = vadd.f32 %v5711, %v5899
    %v5901 = vpop.f32.mrf.mxu0
    %v5902 = vadd.f32 %v5713, %v5901
    %5903 = vmatmul.bf16.gmra.mxu0 %v5087
    %v5904 = vpop.f32.mrf.mxu0
    %v5905 = vadd.f32 %v5716, %v5904
    %v5906 = vpop.f32.mrf.mxu0
    %v5907 = vadd.f32 %v5718, %v5906
    %5908 = vmatmul.bf16.gmra.mxu0 %v5092
    %v5909 = vpop.f32.mrf.mxu0
    %v5910 = vadd.f32 %v5721, %v5909
    %v5911 = vpop.f32.mrf.mxu0
    %v5912 = vadd.f32 %v5723, %v5911
    %5913 = vmatmul.bf16.gmra.mxu0 %v5097
    %v5914 = vpop.f32.mrf.mxu0
    %v5915 = vadd.f32 %v5726, %v5914
    %v5916 = vpop.f32.mrf.mxu0
    %v5917 = vadd.f32 %v5728, %v5916
    %5918 = vmatmul.bf16.gmra.mxu0 %v5102
    %v5919 = vpop.f32.mrf.mxu0
    %v5920 = vadd.f32 %v5731, %v5919
    %v5921 = vpop.f32.mrf.mxu0
    %v5922 = vadd.f32 %v5733, %v5921
    %5923 = vmatmul.bf16.gmra.mxu0 %v5107
    %v5924 = vpop.f32.mrf.mxu0
    %v5925 = vadd.f32 %v5736, %v5924
    %v5926 = vpop.f32.mrf.mxu0
    %v5927 = vadd.f32 %v5738, %v5926
    %5928 = vmatmul.bf16.gmra.mxu0 %v5112
    %v5929 = vpop.f32.mrf.mxu0
    %v5930 = vadd.f32 %v5741, %v5929
    %v5931 = vpop.f32.mrf.mxu0
    %v5932 = vadd.f32 %v5743, %v5931
    %5933 = vmatmul.bf16.gmra.mxu0 %v5117
    %v5934 = vpop.f32.mrf.mxu0
    %v5935 = vadd.f32 %v5746, %v5934
    %v5936 = vpop.f32.mrf.mxu0
    %v5937 = vadd.f32 %v5748, %v5936
    %5938 = vmatmul.bf16.gmra.mxu0 %v5122
    %v5939 = vpop.f32.mrf.mxu0
    %v5940 = vadd.f32 %v5751, %v5939
    %v5941 = vpop.f32.mrf.mxu0
    %v5942 = vadd.f32 %v5753, %v5941
    %5943 = vmatmul.bf16.gmra.mxu0 %v5127
    %v5944 = vpop.f32.mrf.mxu0
    %v5945 = vadd.f32 %v5756, %v5944
    %v5946 = vpop.f32.mrf.mxu0
    %v5947 = vadd.f32 %v5758, %v5946
    %5948 = vmatmul.bf16.gmra.mxu0 %v5132
    %v5949 = vpop.f32.mrf.mxu0
    %v5950 = vadd.f32 %v5761, %v5949
    %v5951 = vpop.f32.mrf.mxu0
    %v5952 = vadd.f32 %v5763, %v5951
    %5953 = vmatmul.bf16.gmra.mxu0 %v5137
    %v5954 = vpop.f32.mrf.mxu0
    %v5955 = vadd.f32 %v5766, %v5954
    %v5956 = vpop.f32.mrf.mxu0
    %v5957 = vadd.f32 %v5768, %v5956
    %5958 = vmatmul.bf16.gmra.mxu0 %v5142
    %v5959 = vpop.f32.mrf.mxu0
    %v5960 = vadd.f32 %v5771, %v5959
    %v5961 = vpop.f32.mrf.mxu0
    %v5962 = vadd.f32 %v5773, %v5961
    %5963 = vmatmul.bf16.gmra.mxu0 %v5147
    %v5964 = vpop.f32.mrf.mxu0
    %v5965 = vadd.f32 %v5776, %v5964
    %v5966 = vpop.f32.mrf.mxu0
    %v5967 = vadd.f32 %v5778, %v5966
    %5968 = vmatmul.bf16.gmra.mxu0 %v5152
    %v5969 = vpop.f32.mrf.mxu0
    %v5970 = vadd.f32 %v5781, %v5969
    %v5971 = vpop.f32.mrf.mxu0
    %v5972 = vadd.f32 %v5783, %v5971
    %5973 = vmatmul.bf16.gmra.mxu0 %v5157
    %v5974 = vpop.f32.mrf.mxu0
    %v5975 = vadd.f32 %v5786, %v5974
    %v5976 = vpop.f32.mrf.mxu0
    %v5977 = vadd.f32 %v5788, %v5976
    %5978 = vmatmul.bf16.gmra.mxu0 %v5162
    %v5979 = vpop.f32.mrf.mxu0
    %v5980 = vadd.f32 %v5791, %v5979
    %v5981 = vpop.f32.mrf.mxu0
    %v5982 = vadd.f32 %v5793, %v5981
    %5983 = vmatmul.bf16.gmra.mxu0 %v5167
    %v5984 = vpop.f32.mrf.mxu0
    %v5985 = vadd.f32 %v5796, %v5984
    %v5986 = vpop.f32.mrf.mxu0
    %v5987 = vadd.f32 %v5798, %v5986
    %5988 = vmatmul.bf16.gmra.mxu0 %v5172
    %v5989 = vpop.f32.mrf.mxu0
    %v5990 = vadd.f32 %v5801, %v5989
    %v5991 = vpop.f32.mrf.mxu0
    %v5992 = vadd.f32 %v5803, %v5991
    %5993 = vmatmul.bf16.gmra.mxu0 %v5177
    %v5994 = vpop.f32.mrf.mxu0
    %v5995 = vadd.f32 %v5806, %v5994
    %v5996 = vpop.f32.mrf.mxu0
    %v5997 = vadd.f32 %v5808, %v5996
    %5998 = vmatmul.bf16.gmra.mxu0 %v5182
    %v5999 = vpop.f32.mrf.mxu0
    %v6000 = vadd.f32 %v5811, %v5999
    %v6001 = vpop.f32.mrf.mxu0
    %v6002 = vadd.f32 %v5813, %v6001
    %6003 = vmatmul.bf16.gmra.mxu0 %v5187
    %v6004 = vpop.f32.mrf.mxu0
    %v6005 = vadd.f32 %v5816, %v6004
    %v6006 = vpop.f32.mrf.mxu0
    %v6007 = vadd.f32 %v5818, %v6006
    %6008 = vmatmul.bf16.gmra.mxu0 %v5192
    %v6009 = vpop.f32.mrf.mxu0
    %v6010 = vadd.f32 %v5821, %v6009
    %v6011 = vpop.f32.mrf.mxu0
    %v6012 = vadd.f32 %v5823, %v6011
    %6013 = vdwg.mxu0
    %6014 = vmatpush.bf16.msra.mxu0 %v2070
    %6015 = vmatpush.bf16.msra.mxu0 %v2068
    %6016 = vmatpush.bf16.msra.mxu0 %v2066
    %6017 = vmatpush.bf16.msra.mxu0 %v2064
    %6018 = vmatpush.bf16.msra.mxu0 %v2062
    %6019 = vmatpush.bf16.msra.mxu0 %v2060
    %6020 = vmatpush.bf16.msra.mxu0 %v2058
    %6021 = vmatpush.bf16.msra.mxu0 %v2056
    %6022 = vmatmul.bf16.gmra.mxu0 %v5018
    %v6023 = vpop.f32.mrf.mxu0
    %v6024 = vadd.f32 %v5835, %v6023
    %v6025 = vpop.f32.mrf.mxu0
    %v6026 = vadd.f32 %v5837, %v6025
    %6027 = vmatmul.bf16.gmra.mxu0 %v5023
    %v6028 = vpop.f32.mrf.mxu0
    %v6029 = vadd.f32 %v5840, %v6028
    %v6030 = vpop.f32.mrf.mxu0
    %v6031 = vadd.f32 %v5842, %v6030
    %6032 = vmatmul.bf16.gmra.mxu0 %v5028
    %v6033 = vpop.f32.mrf.mxu0
    %v6034 = vadd.f32 %v5845, %v6033
    %v6035 = vpop.f32.mrf.mxu0
    %v6036 = vadd.f32 %v5847, %v6035
    %6037 = vmatmul.bf16.gmra.mxu0 %v5033
    %v6038 = vpop.f32.mrf.mxu0
    %v6039 = vadd.f32 %v5850, %v6038
    %v6040 = vpop.f32.mrf.mxu0
    %v6041 = vadd.f32 %v5852, %v6040
    %6042 = vmatmul.bf16.gmra.mxu0 %v5038
    %v6043 = vpop.f32.mrf.mxu0
    %v6044 = vadd.f32 %v5855, %v6043
    %v6045 = vpop.f32.mrf.mxu0
    %v6046 = vadd.f32 %v5857, %v6045
    %6047 = vmatmul.bf16.gmra.mxu0 %v5043
    %v6048 = vpop.f32.mrf.mxu0
    %v6049 = vadd.f32 %v5860, %v6048
    %v6050 = vpop.f32.mrf.mxu0
    %v6051 = vadd.f32 %v5862, %v6050
    %6052 = vmatmul.bf16.gmra.mxu0 %v5048
    %v6053 = vpop.f32.mrf.mxu0
    %v6054 = vadd.f32 %v5865, %v6053
    %v6055 = vpop.f32.mrf.mxu0
    %v6056 = vadd.f32 %v5867, %v6055
    %6057 = vmatmul.bf16.gmra.mxu0 %v5053
    %v6058 = vpop.f32.mrf.mxu0
    %v6059 = vadd.f32 %v5870, %v6058
    %v6060 = vpop.f32.mrf.mxu0
    %v6061 = vadd.f32 %v5872, %v6060
    %6062 = vmatmul.bf16.gmra.mxu0 %v5058
    %v6063 = vpop.f32.mrf.mxu0
    %v6064 = vadd.f32 %v5875, %v6063
    %v6065 = vpop.f32.mrf.mxu0
    %v6066 = vadd.f32 %v5877, %v6065
    %6067 = vmatmul.bf16.gmra.mxu0 %v5063
    %v6068 = vpop.f32.mrf.mxu0
    %v6069 = vadd.f32 %v5880, %v6068
    %v6070 = vpop.f32.mrf.mxu0
    %v6071 = vadd.f32 %v5882, %v6070
    %6072 = vmatmul.bf16.gmra.mxu0 %v5068
    %v6073 = vpop.f32.mrf.mxu0
    %v6074 = vadd.f32 %v5885, %v6073
    %v6075 = vpop.f32.mrf.mxu0
    %v6076 = vadd.f32 %v5887, %v6075
    %6077 = vmatmul.bf16.gmra.mxu0 %v5073
    %v6078 = vpop.f32.mrf.mxu0
    %v6079 = vadd.f32 %v5890, %v6078
    %v6080 = vpop.f32.mrf.mxu0
    %v6081 = vadd.f32 %v5892, %v6080
    %6082 = vmatmul.bf16.gmra.mxu0 %v5078
    %v6083 = vpop.f32.mrf.mxu0
    %v6084 = vadd.f32 %v5895, %v6083
    %v6085 = vpop.f32.mrf.mxu0
    %v6086 = vadd.f32 %v5897, %v6085
    %6087 = vmatmul.bf16.gmra.mxu0 %v5083
    %v6088 = vpop.f32.mrf.mxu0
    %v6089 = vadd.f32 %v5900, %v6088
    %v6090 = vpop.f32.mrf.mxu0
    %v6091 = vadd.f32 %v5902, %v6090
    %6092 = vmatmul.bf16.gmra.mxu0 %v5088
    %v6093 = vpop.f32.mrf.mxu0
    %v6094 = vadd.f32 %v5905, %v6093
    %v6095 = vpop.f32.mrf.mxu0
    %v6096 = vadd.f32 %v5907, %v6095
    %6097 = vmatmul.bf16.gmra.mxu0 %v5093
    %v6098 = vpop.f32.mrf.mxu0
    %v6099 = vadd.f32 %v5910, %v6098
    %v6100 = vpop.f32.mrf.mxu0
    %v6101 = vadd.f32 %v5912, %v6100
    %6102 = vmatmul.bf16.gmra.mxu0 %v5098
    %v6103 = vpop.f32.mrf.mxu0
    %v6104 = vadd.f32 %v5915, %v6103
    %v6105 = vpop.f32.mrf.mxu0
    %v6106 = vadd.f32 %v5917, %v6105
    %6107 = vmatmul.bf16.gmra.mxu0 %v5103
    %v6108 = vpop.f32.mrf.mxu0
    %v6109 = vadd.f32 %v5920, %v6108
    %v6110 = vpop.f32.mrf.mxu0
    %v6111 = vadd.f32 %v5922, %v6110
    %6112 = vmatmul.bf16.gmra.mxu0 %v5108
    %v6113 = vpop.f32.mrf.mxu0
    %v6114 = vadd.f32 %v5925, %v6113
    %v6115 = vpop.f32.mrf.mxu0
    %v6116 = vadd.f32 %v5927, %v6115
    %6117 = vmatmul.bf16.gmra.mxu0 %v5113
    %v6118 = vpop.f32.mrf.mxu0
    %v6119 = vadd.f32 %v5930, %v6118
    %v6120 = vpop.f32.mrf.mxu0
    %v6121 = vadd.f32 %v5932, %v6120
    %6122 = vmatmul.bf16.gmra.mxu0 %v5118
    %v6123 = vpop.f32.mrf.mxu0
    %v6124 = vadd.f32 %v5935, %v6123
    %v6125 = vpop.f32.mrf.mxu0
    %v6126 = vadd.f32 %v5937, %v6125
    %6127 = vmatmul.bf16.gmra.mxu0 %v5123
    %v6128 = vpop.f32.mrf.mxu0
    %v6129 = vadd.f32 %v5940, %v6128
    %v6130 = vpop.f32.mrf.mxu0
    %v6131 = vadd.f32 %v5942, %v6130
    %6132 = vmatmul.bf16.gmra.mxu0 %v5128
    %v6133 = vpop.f32.mrf.mxu0
    %v6134 = vadd.f32 %v5945, %v6133
    %v6135 = vpop.f32.mrf.mxu0
    %v6136 = vadd.f32 %v5947, %v6135
    %6137 = vmatmul.bf16.gmra.mxu0 %v5133
    %v6138 = vpop.f32.mrf.mxu0
    %v6139 = vadd.f32 %v5950, %v6138
    %v6140 = vpop.f32.mrf.mxu0
    %v6141 = vadd.f32 %v5952, %v6140
    %6142 = vmatmul.bf16.gmra.mxu0 %v5138
    %v6143 = vpop.f32.mrf.mxu0
    %v6144 = vadd.f32 %v5955, %v6143
    %v6145 = vpop.f32.mrf.mxu0
    %v6146 = vadd.f32 %v5957, %v6145
    %6147 = vmatmul.bf16.gmra.mxu0 %v5143
    %v6148 = vpop.f32.mrf.mxu0
    %v6149 = vadd.f32 %v5960, %v6148
    %v6150 = vpop.f32.mrf.mxu0
    %v6151 = vadd.f32 %v5962, %v6150
    %6152 = vmatmul.bf16.gmra.mxu0 %v5148
    %v6153 = vpop.f32.mrf.mxu0
    %v6154 = vadd.f32 %v5965, %v6153
    %v6155 = vpop.f32.mrf.mxu0
    %v6156 = vadd.f32 %v5967, %v6155
    %6157 = vmatmul.bf16.gmra.mxu0 %v5153
    %v6158 = vpop.f32.mrf.mxu0
    %v6159 = vadd.f32 %v5970, %v6158
    %v6160 = vpop.f32.mrf.mxu0
    %v6161 = vadd.f32 %v5972, %v6160
    %6162 = vmatmul.bf16.gmra.mxu0 %v5158
    %v6163 = vpop.f32.mrf.mxu0
    %v6164 = vadd.f32 %v5975, %v6163
    %v6165 = vpop.f32.mrf.mxu0
    %v6166 = vadd.f32 %v5977, %v6165
    %6167 = vmatmul.bf16.gmra.mxu0 %v5163
    %v6168 = vpop.f32.mrf.mxu0
    %v6169 = vadd.f32 %v5980, %v6168
    %v6170 = vpop.f32.mrf.mxu0
    %v6171 = vadd.f32 %v5982, %v6170
    %6172 = vmatmul.bf16.gmra.mxu0 %v5168
    %v6173 = vpop.f32.mrf.mxu0
    %v6174 = vadd.f32 %v5985, %v6173
    %v6175 = vpop.f32.mrf.mxu0
    %v6176 = vadd.f32 %v5987, %v6175
    %6177 = vmatmul.bf16.gmra.mxu0 %v5173
    %v6178 = vpop.f32.mrf.mxu0
    %v6179 = vadd.f32 %v5990, %v6178
    %v6180 = vpop.f32.mrf.mxu0
    %v6181 = vadd.f32 %v5992, %v6180
    %6182 = vmatmul.bf16.gmra.mxu0 %v5178
    %v6183 = vpop.f32.mrf.mxu0
    %v6184 = vadd.f32 %v5995, %v6183
    %v6185 = vpop.f32.mrf.mxu0
    %v6186 = vadd.f32 %v5997, %v6185
    %6187 = vmatmul.bf16.gmra.mxu0 %v5183
    %v6188 = vpop.f32.mrf.mxu0
    %v6189 = vadd.f32 %v6000, %v6188
    %v6190 = vpop.f32.mrf.mxu0
    %v6191 = vadd.f32 %v6002, %v6190
    %6192 = vmatmul.bf16.gmra.mxu0 %v5188
    %v6193 = vpop.f32.mrf.mxu0
    %v6194 = vadd.f32 %v6005, %v6193
    %v6195 = vpop.f32.mrf.mxu0
    %v6196 = vadd.f32 %v6007, %v6195
    %6197 = vmatmul.bf16.gmra.mxu0 %v5193
    %v6198 = vpop.f32.mrf.mxu0
    %v6199 = vadd.f32 %v6010, %v6198
    %v6200 = vpop.f32.mrf.mxu0
    %v6201 = vadd.f32 %v6012, %v6200
    %6202 = vdwg.mxu0
    %6203 = vmatpush.bf16.msra.mxu0 0
    %6204 = vmatpush.bf16.msra.mxu0 0
    %6205 = vmatpush.bf16.msra.mxu0 0
    %6206 = vmatpush.bf16.msra.mxu0 0
    %6207 = vmatpush.bf16.msra.mxu0 %v2078
    %6208 = vmatpush.bf16.msra.mxu0 %v2076
    %6209 = vmatpush.bf16.msra.mxu0 %v2074
    %6210 = vmatpush.bf16.msra.mxu0 %v2072
    %6211 = vmatmul.bf16.gmra.mxu0 %v5340
    %v6212 = vpop.f32.mrf.mxu0
    %v6213 = vadd.f32 %v6024, %v6212
    %v6214 = vpop.f32.mrf.mxu0
    %v6215 = vadd.f32 %v6026, %v6214
    %6216 = vmatmul.bf16.gmra.mxu0 %v5343
    %v6217 = vpop.f32.mrf.mxu0
    %v6218 = vadd.f32 %v6029, %v6217
    %v6219 = vpop.f32.mrf.mxu0
    %v6220 = vadd.f32 %v6031, %v6219
    %6221 = vmatmul.bf16.gmra.mxu0 %v5346
    %v6222 = vpop.f32.mrf.mxu0
    %v6223 = vadd.f32 %v6034, %v6222
    %v6224 = vpop.f32.mrf.mxu0
    %v6225 = vadd.f32 %v6036, %v6224
    %6226 = vmatmul.bf16.gmra.mxu0 %v5349
    %v6227 = vpop.f32.mrf.mxu0
    %v6228 = vadd.f32 %v6039, %v6227
    %v6229 = vpop.f32.mrf.mxu0
    %v6230 = vadd.f32 %v6041, %v6229
    %6231 = vmatmul.bf16.gmra.mxu0 %v5352
    %v6232 = vpop.f32.mrf.mxu0
    %v6233 = vadd.f32 %v6044, %v6232
    %v6234 = vpop.f32.mrf.mxu0
    %v6235 = vadd.f32 %v6046, %v6234
    %6236 = vmatmul.bf16.gmra.mxu0 %v5355
    %v6237 = vpop.f32.mrf.mxu0
    %v6238 = vadd.f32 %v6049, %v6237
    %v6239 = vpop.f32.mrf.mxu0
    %v6240 = vadd.f32 %v6051, %v6239
    %6241 = vmatmul.bf16.gmra.mxu0 %v5358
    %v6242 = vpop.f32.mrf.mxu0
    %v6243 = vadd.f32 %v6054, %v6242
    %v6244 = vpop.f32.mrf.mxu0
    %v6245 = vadd.f32 %v6056, %v6244
    %6246 = vmatmul.bf16.gmra.mxu0 %v5361
    %v6247 = vpop.f32.mrf.mxu0
    %v6248 = vadd.f32 %v6059, %v6247
    %v6249 = vpop.f32.mrf.mxu0
    %v6250 = vadd.f32 %v6061, %v6249
    %6251 = vmatmul.bf16.gmra.mxu0 %v5364
    %v6252 = vpop.f32.mrf.mxu0
    %v6253 = vadd.f32 %v6064, %v6252
    %v6254 = vpop.f32.mrf.mxu0
    %v6255 = vadd.f32 %v6066, %v6254
    %6256 = vmatmul.bf16.gmra.mxu0 %v5367
    %v6257 = vpop.f32.mrf.mxu0
    %v6258 = vadd.f32 %v6069, %v6257
    %v6259 = vpop.f32.mrf.mxu0
    %v6260 = vadd.f32 %v6071, %v6259
    %6261 = vmatmul.bf16.gmra.mxu0 %v5370
    %v6262 = vpop.f32.mrf.mxu0
    %v6263 = vadd.f32 %v6074, %v6262
    %v6264 = vpop.f32.mrf.mxu0
    %v6265 = vadd.f32 %v6076, %v6264
    %6266 = vmatmul.bf16.gmra.mxu0 %v5373
    %v6267 = vpop.f32.mrf.mxu0
    %v6268 = vadd.f32 %v6079, %v6267
    %v6269 = vpop.f32.mrf.mxu0
    %v6270 = vadd.f32 %v6081, %v6269
    %6271 = vmatmul.bf16.gmra.mxu0 %v5376
    %v6272 = vpop.f32.mrf.mxu0
    %v6273 = vadd.f32 %v6084, %v6272
    %v6274 = vpop.f32.mrf.mxu0
    %v6275 = vadd.f32 %v6086, %v6274
    %6276 = vmatmul.bf16.gmra.mxu0 %v5379
    %v6277 = vpop.f32.mrf.mxu0
    %v6278 = vadd.f32 %v6089, %v6277
    %v6279 = vpop.f32.mrf.mxu0
    %v6280 = vadd.f32 %v6091, %v6279
    %6281 = vmatmul.bf16.gmra.mxu0 %v5382
    %v6282 = vpop.f32.mrf.mxu0
    %v6283 = vadd.f32 %v6094, %v6282
    %v6284 = vpop.f32.mrf.mxu0
    %v6285 = vadd.f32 %v6096, %v6284
    %6286 = vmatmul.bf16.gmra.mxu0 %v5385
    %v6287 = vpop.f32.mrf.mxu0
    %v6288 = vadd.f32 %v6099, %v6287
    %v6289 = vpop.f32.mrf.mxu0
    %v6290 = vadd.f32 %v6101, %v6289
    %6291 = vmatmul.bf16.gmra.mxu0 %v5388
    %v6292 = vpop.f32.mrf.mxu0
    %v6293 = vadd.f32 %v6104, %v6292
    %v6294 = vpop.f32.mrf.mxu0
    %v6295 = vadd.f32 %v6106, %v6294
    %6296 = vmatmul.bf16.gmra.mxu0 %v5391
    %v6297 = vpop.f32.mrf.mxu0
    %v6298 = vadd.f32 %v6109, %v6297
    %v6299 = vpop.f32.mrf.mxu0
    %v6300 = vadd.f32 %v6111, %v6299
    %6301 = vmatmul.bf16.gmra.mxu0 %v5394
    %v6302 = vpop.f32.mrf.mxu0
    %v6303 = vadd.f32 %v6114, %v6302
    %v6304 = vpop.f32.mrf.mxu0
    %v6305 = vadd.f32 %v6116, %v6304
    %6306 = vmatmul.bf16.gmra.mxu0 %v5397
    %v6307 = vpop.f32.mrf.mxu0
    %v6308 = vadd.f32 %v6119, %v6307
    %v6309 = vpop.f32.mrf.mxu0
    %v6310 = vadd.f32 %v6121, %v6309
    %6311 = vmatmul.bf16.gmra.mxu0 %v5400
    %v6312 = vpop.f32.mrf.mxu0
    %v6313 = vadd.f32 %v6124, %v6312
    %v6314 = vpop.f32.mrf.mxu0
    %v6315 = vadd.f32 %v6126, %v6314
    %6316 = vmatmul.bf16.gmra.mxu0 %v5403
    %v6317 = vpop.f32.mrf.mxu0
    %v6318 = vadd.f32 %v6129, %v6317
    %v6319 = vpop.f32.mrf.mxu0
    %v6320 = vadd.f32 %v6131, %v6319
    %6321 = vmatmul.bf16.gmra.mxu0 %v5406
    %v6322 = vpop.f32.mrf.mxu0
    %v6323 = vadd.f32 %v6134, %v6322
    %v6324 = vpop.f32.mrf.mxu0
    %v6325 = vadd.f32 %v6136, %v6324
    %6326 = vmatmul.bf16.gmra.mxu0 %v5409
    %v6327 = vpop.f32.mrf.mxu0
    %v6328 = vadd.f32 %v6139, %v6327
    %v6329 = vpop.f32.mrf.mxu0
    %v6330 = vadd.f32 %v6141, %v6329
    %6331 = vmatmul.bf16.gmra.mxu0 %v5412
    %v6332 = vpop.f32.mrf.mxu0
    %v6333 = vadd.f32 %v6144, %v6332
    %v6334 = vpop.f32.mrf.mxu0
    %v6335 = vadd.f32 %v6146, %v6334
    %6336 = vmatmul.bf16.gmra.mxu0 %v5415
    %v6337 = vpop.f32.mrf.mxu0
    %v6338 = vadd.f32 %v6149, %v6337
    %v6339 = vpop.f32.mrf.mxu0
    %v6340 = vadd.f32 %v6151, %v6339
    %6341 = vmatmul.bf16.gmra.mxu0 %v5418
    %v6342 = vpop.f32.mrf.mxu0
    %v6343 = vadd.f32 %v6154, %v6342
    %v6344 = vpop.f32.mrf.mxu0
    %v6345 = vadd.f32 %v6156, %v6344
    %6346 = vmatmul.bf16.gmra.mxu0 %v5421
    %v6347 = vpop.f32.mrf.mxu0
    %v6348 = vadd.f32 %v6159, %v6347
    %v6349 = vpop.f32.mrf.mxu0
    %v6350 = vadd.f32 %v6161, %v6349
    %6351 = vmatmul.bf16.gmra.mxu0 %v5424
    %v6352 = vpop.f32.mrf.mxu0
    %v6353 = vadd.f32 %v6164, %v6352
    %v6354 = vpop.f32.mrf.mxu0
    %v6355 = vadd.f32 %v6166, %v6354
    %6356 = vmatmul.bf16.gmra.mxu0 %v5427
    %v6357 = vpop.f32.mrf.mxu0
    %v6358 = vadd.f32 %v6169, %v6357
    %v6359 = vpop.f32.mrf.mxu0
    %v6360 = vadd.f32 %v6171, %v6359
    %6361 = vmatmul.bf16.gmra.mxu0 %v5430
    %v6362 = vpop.f32.mrf.mxu0
    %v6363 = vadd.f32 %v6174, %v6362
    %v6364 = vpop.f32.mrf.mxu0
    %v6365 = vadd.f32 %v6176, %v6364
    %6366 = vmatmul.bf16.gmra.mxu0 %v5433
    %v6367 = vpop.f32.mrf.mxu0
    %v6368 = vadd.f32 %v6179, %v6367
    %v6369 = vpop.f32.mrf.mxu0
    %v6370 = vadd.f32 %v6181, %v6369
    %6371 = vmatmul.bf16.gmra.mxu0 %v5436
    %v6372 = vpop.f32.mrf.mxu0
    %v6373 = vadd.f32 %v6184, %v6372
    %v6374 = vpop.f32.mrf.mxu0
    %v6375 = vadd.f32 %v6186, %v6374
    %6376 = vmatmul.bf16.gmra.mxu0 %v5439
    %v6377 = vpop.f32.mrf.mxu0
    %v6378 = vadd.f32 %v6189, %v6377
    %v6379 = vpop.f32.mrf.mxu0
    %v6380 = vadd.f32 %v6191, %v6379
    %6381 = vmatmul.bf16.gmra.mxu0 %v5442
    %v6382 = vpop.f32.mrf.mxu0
    %v6383 = vadd.f32 %v6194, %v6382
    %v6384 = vpop.f32.mrf.mxu0
    %v6385 = vadd.f32 %v6196, %v6384
    %6386 = vmatmul.bf16.gmra.mxu0 %v5445
    %v6387 = vpop.f32.mrf.mxu0
    %v6388 = vadd.f32 %v6199, %v6387
    %v6389 = vpop.f32.mrf.mxu0
    %v6390 = vadd.f32 %v6201, %v6389
    %6391 = vdwg.mxu0
    %6392 = vmatpush.bf16.msra.mxu0 %v2023
    %6393 = vmatpush.bf16.msra.mxu0 %v2021
    %6394 = vmatpush.bf16.msra.mxu0 %v2019
    %6395 = vmatpush.bf16.msra.mxu0 %v2017
    %6396 = vmatpush.bf16.msra.mxu0 %v2015
    %6397 = vmatpush.bf16.msra.mxu0 %v2013
    %6398 = vmatpush.bf16.msra.mxu0 %v2011
    %6399 = vmatpush.bf16.msra.mxu0 %v2009
    %6400 = vmatmul.bf16.gmra.mxu0 %v5015
    %v6401 = vpop.f32.mrf.mxu0
    %v6402 = vadd.f32 %v4260, %v6401
    %v6403 = vpop.f32.mrf.mxu0
    %v6404 = vadd.f32 %v4262, %v6403
    %6405 = vmatmul.bf16.gmra.mxu0 %v5020
    %v6406 = vpop.f32.mrf.mxu0
    %v6407 = vadd.f32 %v4265, %v6406
    %v6408 = vpop.f32.mrf.mxu0
    %v6409 = vadd.f32 %v4267, %v6408
    %6410 = vmatmul.bf16.gmra.mxu0 %v5025
    %v6411 = vpop.f32.mrf.mxu0
    %v6412 = vadd.f32 %v4270, %v6411
    %v6413 = vpop.f32.mrf.mxu0
    %v6414 = vadd.f32 %v4272, %v6413
    %6415 = vmatmul.bf16.gmra.mxu0 %v5030
    %v6416 = vpop.f32.mrf.mxu0
    %v6417 = vadd.f32 %v4275, %v6416
    %v6418 = vpop.f32.mrf.mxu0
    %v6419 = vadd.f32 %v4277, %v6418
    %6420 = vmatmul.bf16.gmra.mxu0 %v5035
    %v6421 = vpop.f32.mrf.mxu0
    %v6422 = vadd.f32 %v4280, %v6421
    %v6423 = vpop.f32.mrf.mxu0
    %v6424 = vadd.f32 %v4282, %v6423
    %6425 = vmatmul.bf16.gmra.mxu0 %v5040
    %v6426 = vpop.f32.mrf.mxu0
    %v6427 = vadd.f32 %v4285, %v6426
    %v6428 = vpop.f32.mrf.mxu0
    %v6429 = vadd.f32 %v4287, %v6428
    %6430 = vmatmul.bf16.gmra.mxu0 %v5045
    %v6431 = vpop.f32.mrf.mxu0
    %v6432 = vadd.f32 %v4290, %v6431
    %v6433 = vpop.f32.mrf.mxu0
    %v6434 = vadd.f32 %v4292, %v6433
    %6435 = vmatmul.bf16.gmra.mxu0 %v5050
    %v6436 = vpop.f32.mrf.mxu0
    %v6437 = vadd.f32 %v4295, %v6436
    %v6438 = vpop.f32.mrf.mxu0
    %v6439 = vadd.f32 %v4297, %v6438
    %6440 = vmatmul.bf16.gmra.mxu0 %v5055
    %v6441 = vpop.f32.mrf.mxu0
    %v6442 = vadd.f32 %v4300, %v6441
    %v6443 = vpop.f32.mrf.mxu0
    %v6444 = vadd.f32 %v4302, %v6443
    %6445 = vmatmul.bf16.gmra.mxu0 %v5060
    %v6446 = vpop.f32.mrf.mxu0
    %v6447 = vadd.f32 %v4305, %v6446
    %v6448 = vpop.f32.mrf.mxu0
    %v6449 = vadd.f32 %v4307, %v6448
    %6450 = vmatmul.bf16.gmra.mxu0 %v5065
    %v6451 = vpop.f32.mrf.mxu0
    %v6452 = vadd.f32 %v4310, %v6451
    %v6453 = vpop.f32.mrf.mxu0
    %v6454 = vadd.f32 %v4312, %v6453
    %6455 = vmatmul.bf16.gmra.mxu0 %v5070
    %v6456 = vpop.f32.mrf.mxu0
    %v6457 = vadd.f32 %v4315, %v6456
    %v6458 = vpop.f32.mrf.mxu0
    %v6459 = vadd.f32 %v4317, %v6458
    %6460 = vmatmul.bf16.gmra.mxu0 %v5075
    %v6461 = vpop.f32.mrf.mxu0
    %v6462 = vadd.f32 %v4320, %v6461
    %v6463 = vpop.f32.mrf.mxu0
    %v6464 = vadd.f32 %v4322, %v6463
    %6465 = vmatmul.bf16.gmra.mxu0 %v5080
    %v6466 = vpop.f32.mrf.mxu0
    %v6467 = vadd.f32 %v4325, %v6466
    %v6468 = vpop.f32.mrf.mxu0
    %v6469 = vadd.f32 %v4327, %v6468
    %6470 = vmatmul.bf16.gmra.mxu0 %v5085
    %v6471 = vpop.f32.mrf.mxu0
    %v6472 = vadd.f32 %v4330, %v6471
    %v6473 = vpop.f32.mrf.mxu0
    %v6474 = vadd.f32 %v4332, %v6473
    %6475 = vmatmul.bf16.gmra.mxu0 %v5090
    %v6476 = vpop.f32.mrf.mxu0
    %v6477 = vadd.f32 %v4335, %v6476
    %v6478 = vpop.f32.mrf.mxu0
    %v6479 = vadd.f32 %v4337, %v6478
    %6480 = vmatmul.bf16.gmra.mxu0 %v5095
    %v6481 = vpop.f32.mrf.mxu0
    %v6482 = vadd.f32 %v4340, %v6481
    %v6483 = vpop.f32.mrf.mxu0
    %v6484 = vadd.f32 %v4342, %v6483
    %6485 = vmatmul.bf16.gmra.mxu0 %v5100
    %v6486 = vpop.f32.mrf.mxu0
    %v6487 = vadd.f32 %v4345, %v6486
    %v6488 = vpop.f32.mrf.mxu0
    %v6489 = vadd.f32 %v4347, %v6488
    %6490 = vmatmul.bf16.gmra.mxu0 %v5105
    %v6491 = vpop.f32.mrf.mxu0
    %v6492 = vadd.f32 %v4350, %v6491
    %v6493 = vpop.f32.mrf.mxu0
    %v6494 = vadd.f32 %v4352, %v6493
    %6495 = vmatmul.bf16.gmra.mxu0 %v5110
    %v6496 = vpop.f32.mrf.mxu0
    %v6497 = vadd.f32 %v4355, %v6496
    %v6498 = vpop.f32.mrf.mxu0
    %v6499 = vadd.f32 %v4357, %v6498
    %6500 = vmatmul.bf16.gmra.mxu0 %v5115
    %v6501 = vpop.f32.mrf.mxu0
    %v6502 = vadd.f32 %v4360, %v6501
    %v6503 = vpop.f32.mrf.mxu0
    %v6504 = vadd.f32 %v4362, %v6503
    %6505 = vmatmul.bf16.gmra.mxu0 %v5120
    %v6506 = vpop.f32.mrf.mxu0
    %v6507 = vadd.f32 %v4365, %v6506
    %v6508 = vpop.f32.mrf.mxu0
    %v6509 = vadd.f32 %v4367, %v6508
    %6510 = vmatmul.bf16.gmra.mxu0 %v5125
    %v6511 = vpop.f32.mrf.mxu0
    %v6512 = vadd.f32 %v4370, %v6511
    %v6513 = vpop.f32.mrf.mxu0
    %v6514 = vadd.f32 %v4372, %v6513
    %6515 = vmatmul.bf16.gmra.mxu0 %v5130
    %v6516 = vpop.f32.mrf.mxu0
    %v6517 = vadd.f32 %v4375, %v6516
    %v6518 = vpop.f32.mrf.mxu0
    %v6519 = vadd.f32 %v4377, %v6518
    %6520 = vmatmul.bf16.gmra.mxu0 %v5135
    %v6521 = vpop.f32.mrf.mxu0
    %v6522 = vadd.f32 %v4380, %v6521
    %v6523 = vpop.f32.mrf.mxu0
    %v6524 = vadd.f32 %v4382, %v6523
    %6525 = vmatmul.bf16.gmra.mxu0 %v5140
    %v6526 = vpop.f32.mrf.mxu0
    %v6527 = vadd.f32 %v4385, %v6526
    %v6528 = vpop.f32.mrf.mxu0
    %v6529 = vadd.f32 %v4387, %v6528
    %6530 = vmatmul.bf16.gmra.mxu0 %v5145
    %v6531 = vpop.f32.mrf.mxu0
    %v6532 = vadd.f32 %v4390, %v6531
    %v6533 = vpop.f32.mrf.mxu0
    %v6534 = vadd.f32 %v4392, %v6533
    %6535 = vmatmul.bf16.gmra.mxu0 %v5150
    %v6536 = vpop.f32.mrf.mxu0
    %v6537 = vadd.f32 %v4395, %v6536
    %v6538 = vpop.f32.mrf.mxu0
    %v6539 = vadd.f32 %v4397, %v6538
    %6540 = vmatmul.bf16.gmra.mxu0 %v5155
    %v6541 = vpop.f32.mrf.mxu0
    %v6542 = vadd.f32 %v4400, %v6541
    %v6543 = vpop.f32.mrf.mxu0
    %v6544 = vadd.f32 %v4402, %v6543
    %6545 = vmatmul.bf16.gmra.mxu0 %v5160
    %v6546 = vpop.f32.mrf.mxu0
    %v6547 = vadd.f32 %v4405, %v6546
    %v6548 = vpop.f32.mrf.mxu0
    %v6549 = vadd.f32 %v4407, %v6548
    %6550 = vmatmul.bf16.gmra.mxu0 %v5165
    %v6551 = vpop.f32.mrf.mxu0
    %v6552 = vadd.f32 %v4410, %v6551
    %v6553 = vpop.f32.mrf.mxu0
    %v6554 = vadd.f32 %v4412, %v6553
    %6555 = vmatmul.bf16.gmra.mxu0 %v5170
    %v6556 = vpop.f32.mrf.mxu0
    %v6557 = vadd.f32 %v4415, %v6556
    %v6558 = vpop.f32.mrf.mxu0
    %v6559 = vadd.f32 %v4417, %v6558
    %6560 = vmatmul.bf16.gmra.mxu0 %v5175
    %v6561 = vpop.f32.mrf.mxu0
    %v6562 = vadd.f32 %v4420, %v6561
    %v6563 = vpop.f32.mrf.mxu0
    %v6564 = vadd.f32 %v4422, %v6563
    %6565 = vmatmul.bf16.gmra.mxu0 %v5180
    %v6566 = vpop.f32.mrf.mxu0
    %v6567 = vadd.f32 %v4425, %v6566
    %v6568 = vpop.f32.mrf.mxu0
    %v6569 = vadd.f32 %v4427, %v6568
    %6570 = vmatmul.bf16.gmra.mxu0 %v5185
    %v6571 = vpop.f32.mrf.mxu0
    %v6572 = vadd.f32 %v4430, %v6571
    %v6573 = vpop.f32.mrf.mxu0
    %v6574 = vadd.f32 %v4432, %v6573
    %6575 = vmatmul.bf16.gmra.mxu0 %v5190
    %v6576 = vpop.f32.mrf.mxu0
    %v6577 = vadd.f32 %v4435, %v6576
    %v6578 = vpop.f32.mrf.mxu0
    %v6579 = vadd.f32 %v4437, %v6578
    %6580 = vdwg.mxu0
    %6581 = vmatpush.bf16.msra.mxu0 %v2039
    %6582 = vmatpush.bf16.msra.mxu0 %v2037
    %6583 = vmatpush.bf16.msra.mxu0 %v2035
    %6584 = vmatpush.bf16.msra.mxu0 %v2033
    %6585 = vmatpush.bf16.msra.mxu0 %v2031
    %6586 = vmatpush.bf16.msra.mxu0 %v2029
    %6587 = vmatpush.bf16.msra.mxu0 %v2027
    %6588 = vmatpush.bf16.msra.mxu0 %v2025
    %6589 = vmatmul.bf16.gmra.mxu0 %v5016
    %v6590 = vpop.f32.mrf.mxu0
    %v6591 = vadd.f32 %v6402, %v6590
    %v6592 = vpop.f32.mrf.mxu0
    %v6593 = vadd.f32 %v6404, %v6592
    %6594 = vmatmul.bf16.gmra.mxu0 %v5021
    %v6595 = vpop.f32.mrf.mxu0
    %v6596 = vadd.f32 %v6407, %v6595
    %v6597 = vpop.f32.mrf.mxu0
    %v6598 = vadd.f32 %v6409, %v6597
    %6599 = vmatmul.bf16.gmra.mxu0 %v5026
    %v6600 = vpop.f32.mrf.mxu0
    %v6601 = vadd.f32 %v6412, %v6600
    %v6602 = vpop.f32.mrf.mxu0
    %v6603 = vadd.f32 %v6414, %v6602
    %6604 = vmatmul.bf16.gmra.mxu0 %v5031
    %v6605 = vpop.f32.mrf.mxu0
    %v6606 = vadd.f32 %v6417, %v6605
    %v6607 = vpop.f32.mrf.mxu0
    %v6608 = vadd.f32 %v6419, %v6607
    %6609 = vmatmul.bf16.gmra.mxu0 %v5036
    %v6610 = vpop.f32.mrf.mxu0
    %v6611 = vadd.f32 %v6422, %v6610
    %v6612 = vpop.f32.mrf.mxu0
    %v6613 = vadd.f32 %v6424, %v6612
    %6614 = vmatmul.bf16.gmra.mxu0 %v5041
    %v6615 = vpop.f32.mrf.mxu0
    %v6616 = vadd.f32 %v6427, %v6615
    %v6617 = vpop.f32.mrf.mxu0
    %v6618 = vadd.f32 %v6429, %v6617
    %6619 = vmatmul.bf16.gmra.mxu0 %v5046
    %v6620 = vpop.f32.mrf.mxu0
    %v6621 = vadd.f32 %v6432, %v6620
    %v6622 = vpop.f32.mrf.mxu0
    %v6623 = vadd.f32 %v6434, %v6622
    %6624 = vmatmul.bf16.gmra.mxu0 %v5051
    %v6625 = vpop.f32.mrf.mxu0
    %v6626 = vadd.f32 %v6437, %v6625
    %v6627 = vpop.f32.mrf.mxu0
    %v6628 = vadd.f32 %v6439, %v6627
    %6629 = vmatmul.bf16.gmra.mxu0 %v5056
    %v6630 = vpop.f32.mrf.mxu0
    %v6631 = vadd.f32 %v6442, %v6630
    %v6632 = vpop.f32.mrf.mxu0
    %v6633 = vadd.f32 %v6444, %v6632
    %6634 = vmatmul.bf16.gmra.mxu0 %v5061
    %v6635 = vpop.f32.mrf.mxu0
    %v6636 = vadd.f32 %v6447, %v6635
    %v6637 = vpop.f32.mrf.mxu0
    %v6638 = vadd.f32 %v6449, %v6637
    %6639 = vmatmul.bf16.gmra.mxu0 %v5066
    %v6640 = vpop.f32.mrf.mxu0
    %v6641 = vadd.f32 %v6452, %v6640
    %v6642 = vpop.f32.mrf.mxu0
    %v6643 = vadd.f32 %v6454, %v6642
    %6644 = vmatmul.bf16.gmra.mxu0 %v5071
    %v6645 = vpop.f32.mrf.mxu0
    %v6646 = vadd.f32 %v6457, %v6645
    %v6647 = vpop.f32.mrf.mxu0
    %v6648 = vadd.f32 %v6459, %v6647
    %6649 = vmatmul.bf16.gmra.mxu0 %v5076
    %v6650 = vpop.f32.mrf.mxu0
    %v6651 = vadd.f32 %v6462, %v6650
    %v6652 = vpop.f32.mrf.mxu0
    %v6653 = vadd.f32 %v6464, %v6652
    %6654 = vmatmul.bf16.gmra.mxu0 %v5081
    %v6655 = vpop.f32.mrf.mxu0
    %v6656 = vadd.f32 %v6467, %v6655
    %v6657 = vpop.f32.mrf.mxu0
    %v6658 = vadd.f32 %v6469, %v6657
    %6659 = vmatmul.bf16.gmra.mxu0 %v5086
    %v6660 = vpop.f32.mrf.mxu0
    %v6661 = vadd.f32 %v6472, %v6660
    %v6662 = vpop.f32.mrf.mxu0
    %v6663 = vadd.f32 %v6474, %v6662
    %6664 = vmatmul.bf16.gmra.mxu0 %v5091
    %v6665 = vpop.f32.mrf.mxu0
    %v6666 = vadd.f32 %v6477, %v6665
    %v6667 = vpop.f32.mrf.mxu0
    %v6668 = vadd.f32 %v6479, %v6667
    %6669 = vmatmul.bf16.gmra.mxu0 %v5096
    %v6670 = vpop.f32.mrf.mxu0
    %v6671 = vadd.f32 %v6482, %v6670
    %v6672 = vpop.f32.mrf.mxu0
    %v6673 = vadd.f32 %v6484, %v6672
    %6674 = vmatmul.bf16.gmra.mxu0 %v5101
    %v6675 = vpop.f32.mrf.mxu0
    %v6676 = vadd.f32 %v6487, %v6675
    %v6677 = vpop.f32.mrf.mxu0
    %v6678 = vadd.f32 %v6489, %v6677
    %6679 = vmatmul.bf16.gmra.mxu0 %v5106
    %v6680 = vpop.f32.mrf.mxu0
    %v6681 = vadd.f32 %v6492, %v6680
    %v6682 = vpop.f32.mrf.mxu0
    %v6683 = vadd.f32 %v6494, %v6682
    %6684 = vmatmul.bf16.gmra.mxu0 %v5111
    %v6685 = vpop.f32.mrf.mxu0
    %v6686 = vadd.f32 %v6497, %v6685
    %v6687 = vpop.f32.mrf.mxu0
    %v6688 = vadd.f32 %v6499, %v6687
    %6689 = vmatmul.bf16.gmra.mxu0 %v5116
    %v6690 = vpop.f32.mrf.mxu0
    %v6691 = vadd.f32 %v6502, %v6690
    %v6692 = vpop.f32.mrf.mxu0
    %v6693 = vadd.f32 %v6504, %v6692
    %6694 = vmatmul.bf16.gmra.mxu0 %v5121
    %v6695 = vpop.f32.mrf.mxu0
    %v6696 = vadd.f32 %v6507, %v6695
    %v6697 = vpop.f32.mrf.mxu0
    %v6698 = vadd.f32 %v6509, %v6697
    %6699 = vmatmul.bf16.gmra.mxu0 %v5126
    %v6700 = vpop.f32.mrf.mxu0
    %v6701 = vadd.f32 %v6512, %v6700
    %v6702 = vpop.f32.mrf.mxu0
    %v6703 = vadd.f32 %v6514, %v6702
    %6704 = vmatmul.bf16.gmra.mxu0 %v5131
    %v6705 = vpop.f32.mrf.mxu0
    %v6706 = vadd.f32 %v6517, %v6705
    %v6707 = vpop.f32.mrf.mxu0
    %v6708 = vadd.f32 %v6519, %v6707
    %6709 = vmatmul.bf16.gmra.mxu0 %v5136
    %v6710 = vpop.f32.mrf.mxu0
    %v6711 = vadd.f32 %v6522, %v6710
    %v6712 = vpop.f32.mrf.mxu0
    %v6713 = vadd.f32 %v6524, %v6712
    %6714 = vmatmul.bf16.gmra.mxu0 %v5141
    %v6715 = vpop.f32.mrf.mxu0
    %v6716 = vadd.f32 %v6527, %v6715
    %v6717 = vpop.f32.mrf.mxu0
    %v6718 = vadd.f32 %v6529, %v6717
    %6719 = vmatmul.bf16.gmra.mxu0 %v5146
    %v6720 = vpop.f32.mrf.mxu0
    %v6721 = vadd.f32 %v6532, %v6720
    %v6722 = vpop.f32.mrf.mxu0
    %v6723 = vadd.f32 %v6534, %v6722
    %6724 = vmatmul.bf16.gmra.mxu0 %v5151
    %v6725 = vpop.f32.mrf.mxu0
    %v6726 = vadd.f32 %v6537, %v6725
    %v6727 = vpop.f32.mrf.mxu0
    %v6728 = vadd.f32 %v6539, %v6727
    %6729 = vmatmul.bf16.gmra.mxu0 %v5156
    %v6730 = vpop.f32.mrf.mxu0
    %v6731 = vadd.f32 %v6542, %v6730
    %v6732 = vpop.f32.mrf.mxu0
    %v6733 = vadd.f32 %v6544, %v6732
    %6734 = vmatmul.bf16.gmra.mxu0 %v5161
    %v6735 = vpop.f32.mrf.mxu0
    %v6736 = vadd.f32 %v6547, %v6735
    %v6737 = vpop.f32.mrf.mxu0
    %v6738 = vadd.f32 %v6549, %v6737
    %6739 = vmatmul.bf16.gmra.mxu0 %v5166
    %v6740 = vpop.f32.mrf.mxu0
    %v6741 = vadd.f32 %v6552, %v6740
    %v6742 = vpop.f32.mrf.mxu0
    %v6743 = vadd.f32 %v6554, %v6742
    %6744 = vmatmul.bf16.gmra.mxu0 %v5171
    %v6745 = vpop.f32.mrf.mxu0
    %v6746 = vadd.f32 %v6557, %v6745
    %v6747 = vpop.f32.mrf.mxu0
    %v6748 = vadd.f32 %v6559, %v6747
    %6749 = vmatmul.bf16.gmra.mxu0 %v5176
    %v6750 = vpop.f32.mrf.mxu0
    %v6751 = vadd.f32 %v6562, %v6750
    %v6752 = vpop.f32.mrf.mxu0
    %v6753 = vadd.f32 %v6564, %v6752
    %6754 = vmatmul.bf16.gmra.mxu0 %v5181
    %v6755 = vpop.f32.mrf.mxu0
    %v6756 = vadd.f32 %v6567, %v6755
    %v6757 = vpop.f32.mrf.mxu0
    %v6758 = vadd.f32 %v6569, %v6757
    %6759 = vmatmul.bf16.gmra.mxu0 %v5186
    %v6760 = vpop.f32.mrf.mxu0
    %v6761 = vadd.f32 %v6572, %v6760
    %v6762 = vpop.f32.mrf.mxu0
    %v6763 = vadd.f32 %v6574, %v6762
    %6764 = vmatmul.bf16.gmra.mxu0 %v5191
    %v6765 = vpop.f32.mrf.mxu0
    %v6766 = vadd.f32 %v6577, %v6765
    %v6767 = vpop.f32.mrf.mxu0
    %v6768 = vadd.f32 %v6579, %v6767
    %6769 = vdwg.mxu0
    %6770 = vmatpush.bf16.msra.mxu0 %v2055
    %6771 = vmatpush.bf16.msra.mxu0 %v2053
    %6772 = vmatpush.bf16.msra.mxu0 %v2051
    %6773 = vmatpush.bf16.msra.mxu0 %v2049
    %6774 = vmatpush.bf16.msra.mxu0 %v2047
    %6775 = vmatpush.bf16.msra.mxu0 %v2045
    %6776 = vmatpush.bf16.msra.mxu0 %v2043
    %6777 = vmatpush.bf16.msra.mxu0 %v2041
    %6778 = vmatmul.bf16.gmra.mxu0 %v5017
    %v6779 = vpop.f32.mrf.mxu0
    %v6780 = vadd.f32 %v6591, %v6779
    %v6781 = vpop.f32.mrf.mxu0
    %v6782 = vadd.f32 %v6593, %v6781
    %6783 = vmatmul.bf16.gmra.mxu0 %v5022
    %v6784 = vpop.f32.mrf.mxu0
    %v6785 = vadd.f32 %v6596, %v6784
    %v6786 = vpop.f32.mrf.mxu0
    %v6787 = vadd.f32 %v6598, %v6786
    %6788 = vmatmul.bf16.gmra.mxu0 %v5027
    %v6789 = vpop.f32.mrf.mxu0
    %v6790 = vadd.f32 %v6601, %v6789
    %v6791 = vpop.f32.mrf.mxu0
    %v6792 = vadd.f32 %v6603, %v6791
    %6793 = vmatmul.bf16.gmra.mxu0 %v5032
    %v6794 = vpop.f32.mrf.mxu0
    %v6795 = vadd.f32 %v6606, %v6794
    %v6796 = vpop.f32.mrf.mxu0
    %v6797 = vadd.f32 %v6608, %v6796
    %6798 = vmatmul.bf16.gmra.mxu0 %v5037
    %v6799 = vpop.f32.mrf.mxu0
    %v6800 = vadd.f32 %v6611, %v6799
    %v6801 = vpop.f32.mrf.mxu0
    %v6802 = vadd.f32 %v6613, %v6801
    %6803 = vmatmul.bf16.gmra.mxu0 %v5042
    %v6804 = vpop.f32.mrf.mxu0
    %v6805 = vadd.f32 %v6616, %v6804
    %v6806 = vpop.f32.mrf.mxu0
    %v6807 = vadd.f32 %v6618, %v6806
    %6808 = vmatmul.bf16.gmra.mxu0 %v5047
    %v6809 = vpop.f32.mrf.mxu0
    %v6810 = vadd.f32 %v6621, %v6809
    %v6811 = vpop.f32.mrf.mxu0
    %v6812 = vadd.f32 %v6623, %v6811
    %6813 = vmatmul.bf16.gmra.mxu0 %v5052
    %v6814 = vpop.f32.mrf.mxu0
    %v6815 = vadd.f32 %v6626, %v6814
    %v6816 = vpop.f32.mrf.mxu0
    %v6817 = vadd.f32 %v6628, %v6816
    %6818 = vmatmul.bf16.gmra.mxu0 %v5057
    %v6819 = vpop.f32.mrf.mxu0
    %v6820 = vadd.f32 %v6631, %v6819
    %v6821 = vpop.f32.mrf.mxu0
    %v6822 = vadd.f32 %v6633, %v6821
    %6823 = vmatmul.bf16.gmra.mxu0 %v5062
    %v6824 = vpop.f32.mrf.mxu0
    %v6825 = vadd.f32 %v6636, %v6824
    %v6826 = vpop.f32.mrf.mxu0
    %v6827 = vadd.f32 %v6638, %v6826
    %6828 = vmatmul.bf16.gmra.mxu0 %v5067
    %v6829 = vpop.f32.mrf.mxu0
    %v6830 = vadd.f32 %v6641, %v6829
    %v6831 = vpop.f32.mrf.mxu0
    %v6832 = vadd.f32 %v6643, %v6831
    %6833 = vmatmul.bf16.gmra.mxu0 %v5072
    %v6834 = vpop.f32.mrf.mxu0
    %v6835 = vadd.f32 %v6646, %v6834
    %v6836 = vpop.f32.mrf.mxu0
    %v6837 = vadd.f32 %v6648, %v6836
    %6838 = vmatmul.bf16.gmra.mxu0 %v5077
    %v6839 = vpop.f32.mrf.mxu0
    %v6840 = vadd.f32 %v6651, %v6839
    %v6841 = vpop.f32.mrf.mxu0
    %v6842 = vadd.f32 %v6653, %v6841
    %6843 = vmatmul.bf16.gmra.mxu0 %v5082
    %v6844 = vpop.f32.mrf.mxu0
    %v6845 = vadd.f32 %v6656, %v6844
    %v6846 = vpop.f32.mrf.mxu0
    %v6847 = vadd.f32 %v6658, %v6846
    %6848 = vmatmul.bf16.gmra.mxu0 %v5087
    %v6849 = vpop.f32.mrf.mxu0
    %v6850 = vadd.f32 %v6661, %v6849
    %v6851 = vpop.f32.mrf.mxu0
    %v6852 = vadd.f32 %v6663, %v6851
    %6853 = vmatmul.bf16.gmra.mxu0 %v5092
    %v6854 = vpop.f32.mrf.mxu0
    %v6855 = vadd.f32 %v6666, %v6854
    %v6856 = vpop.f32.mrf.mxu0
    %v6857 = vadd.f32 %v6668, %v6856
    %6858 = vmatmul.bf16.gmra.mxu0 %v5097
    %v6859 = vpop.f32.mrf.mxu0
    %v6860 = vadd.f32 %v6671, %v6859
    %v6861 = vpop.f32.mrf.mxu0
    %v6862 = vadd.f32 %v6673, %v6861
    %6863 = vmatmul.bf16.gmra.mxu0 %v5102
    %v6864 = vpop.f32.mrf.mxu0
    %v6865 = vadd.f32 %v6676, %v6864
    %v6866 = vpop.f32.mrf.mxu0
    %v6867 = vadd.f32 %v6678, %v6866
    %6868 = vmatmul.bf16.gmra.mxu0 %v5107
    %v6869 = vpop.f32.mrf.mxu0
    %v6870 = vadd.f32 %v6681, %v6869
    %v6871 = vpop.f32.mrf.mxu0
    %v6872 = vadd.f32 %v6683, %v6871
    %6873 = vmatmul.bf16.gmra.mxu0 %v5112
    %v6874 = vpop.f32.mrf.mxu0
    %v6875 = vadd.f32 %v6686, %v6874
    %v6876 = vpop.f32.mrf.mxu0
    %v6877 = vadd.f32 %v6688, %v6876
    %6878 = vmatmul.bf16.gmra.mxu0 %v5117
    %v6879 = vpop.f32.mrf.mxu0
    %v6880 = vadd.f32 %v6691, %v6879
    %v6881 = vpop.f32.mrf.mxu0
    %v6882 = vadd.f32 %v6693, %v6881
    %6883 = vmatmul.bf16.gmra.mxu0 %v5122
    %v6884 = vpop.f32.mrf.mxu0
    %v6885 = vadd.f32 %v6696, %v6884
    %v6886 = vpop.f32.mrf.mxu0
    %v6887 = vadd.f32 %v6698, %v6886
    %6888 = vmatmul.bf16.gmra.mxu0 %v5127
    %v6889 = vpop.f32.mrf.mxu0
    %v6890 = vadd.f32 %v6701, %v6889
    %v6891 = vpop.f32.mrf.mxu0
    %v6892 = vadd.f32 %v6703, %v6891
    %6893 = vmatmul.bf16.gmra.mxu0 %v5132
    %v6894 = vpop.f32.mrf.mxu0
    %v6895 = vadd.f32 %v6706, %v6894
    %v6896 = vpop.f32.mrf.mxu0
    %v6897 = vadd.f32 %v6708, %v6896
    %6898 = vmatmul.bf16.gmra.mxu0 %v5137
    %v6899 = vpop.f32.mrf.mxu0
    %v6900 = vadd.f32 %v6711, %v6899
    %v6901 = vpop.f32.mrf.mxu0
    %v6902 = vadd.f32 %v6713, %v6901
    %6903 = vmatmul.bf16.gmra.mxu0 %v5142
    %v6904 = vpop.f32.mrf.mxu0
    %v6905 = vadd.f32 %v6716, %v6904
    %v6906 = vpop.f32.mrf.mxu0
    %v6907 = vadd.f32 %v6718, %v6906
    %6908 = vmatmul.bf16.gmra.mxu0 %v5147
    %v6909 = vpop.f32.mrf.mxu0
    %v6910 = vadd.f32 %v6721, %v6909
    %v6911 = vpop.f32.mrf.mxu0
    %v6912 = vadd.f32 %v6723, %v6911
    %6913 = vmatmul.bf16.gmra.mxu0 %v5152
    %v6914 = vpop.f32.mrf.mxu0
    %v6915 = vadd.f32 %v6726, %v6914
    %v6916 = vpop.f32.mrf.mxu0
    %v6917 = vadd.f32 %v6728, %v6916
    %6918 = vmatmul.bf16.gmra.mxu0 %v5157
    %v6919 = vpop.f32.mrf.mxu0
    %v6920 = vadd.f32 %v6731, %v6919
    %v6921 = vpop.f32.mrf.mxu0
    %v6922 = vadd.f32 %v6733, %v6921
    %6923 = vmatmul.bf16.gmra.mxu0 %v5162
    %v6924 = vpop.f32.mrf.mxu0
    %v6925 = vadd.f32 %v6736, %v6924
    %v6926 = vpop.f32.mrf.mxu0
    %v6927 = vadd.f32 %v6738, %v6926
    %6928 = vmatmul.bf16.gmra.mxu0 %v5167
    %v6929 = vpop.f32.mrf.mxu0
    %v6930 = vadd.f32 %v6741, %v6929
    %v6931 = vpop.f32.mrf.mxu0
    %v6932 = vadd.f32 %v6743, %v6931
    %6933 = vmatmul.bf16.gmra.mxu0 %v5172
    %v6934 = vpop.f32.mrf.mxu0
    %v6935 = vadd.f32 %v6746, %v6934
    %v6936 = vpop.f32.mrf.mxu0
    %v6937 = vadd.f32 %v6748, %v6936
    %6938 = vmatmul.bf16.gmra.mxu0 %v5177
    %v6939 = vpop.f32.mrf.mxu0
    %v6940 = vadd.f32 %v6751, %v6939
    %v6941 = vpop.f32.mrf.mxu0
    %v6942 = vadd.f32 %v6753, %v6941
    %6943 = vmatmul.bf16.gmra.mxu0 %v5182
    %v6944 = vpop.f32.mrf.mxu0
    %v6945 = vadd.f32 %v6756, %v6944
    %v6946 = vpop.f32.mrf.mxu0
    %v6947 = vadd.f32 %v6758, %v6946
    %6948 = vmatmul.bf16.gmra.mxu0 %v5187
    %v6949 = vpop.f32.mrf.mxu0
    %v6950 = vadd.f32 %v6761, %v6949
    %v6951 = vpop.f32.mrf.mxu0
    %v6952 = vadd.f32 %v6763, %v6951
    %6953 = vmatmul.bf16.gmra.mxu0 %v5192
    %v6954 = vpop.f32.mrf.mxu0
    %v6955 = vadd.f32 %v6766, %v6954
    %v6956 = vpop.f32.mrf.mxu0
    %v6957 = vadd.f32 %v6768, %v6956
    %6958 = vdwg.mxu0
    %6959 = vmatpush.bf16.msra.mxu0 %v2071
    %6960 = vmatpush.bf16.msra.mxu0 %v2069
    %6961 = vmatpush.bf16.msra.mxu0 %v2067
    %6962 = vmatpush.bf16.msra.mxu0 %v2065
    %6963 = vmatpush.bf16.msra.mxu0 %v2063
    %6964 = vmatpush.bf16.msra.mxu0 %v2061
    %6965 = vmatpush.bf16.msra.mxu0 %v2059
    %6966 = vmatpush.bf16.msra.mxu0 %v2057
    %6967 = vmatmul.bf16.gmra.mxu0 %v5018
    %v6968 = vpop.f32.mrf.mxu0
    %v6969 = vadd.f32 %v6780, %v6968
    %v6970 = vpop.f32.mrf.mxu0
    %v6971 = vadd.f32 %v6782, %v6970
    %6972 = vmatmul.bf16.gmra.mxu0 %v5023
    %v6973 = vpop.f32.mrf.mxu0
    %v6974 = vadd.f32 %v6785, %v6973
    %v6975 = vpop.f32.mrf.mxu0
    %v6976 = vadd.f32 %v6787, %v6975
    %6977 = vmatmul.bf16.gmra.mxu0 %v5028
    %v6978 = vpop.f32.mrf.mxu0
    %v6979 = vadd.f32 %v6790, %v6978
    %v6980 = vpop.f32.mrf.mxu0
    %v6981 = vadd.f32 %v6792, %v6980
    %6982 = vmatmul.bf16.gmra.mxu0 %v5033
    %v6983 = vpop.f32.mrf.mxu0
    %v6984 = vadd.f32 %v6795, %v6983
    %v6985 = vpop.f32.mrf.mxu0
    %v6986 = vadd.f32 %v6797, %v6985
    %6987 = vmatmul.bf16.gmra.mxu0 %v5038
    %v6988 = vpop.f32.mrf.mxu0
    %v6989 = vadd.f32 %v6800, %v6988
    %v6990 = vpop.f32.mrf.mxu0
    %v6991 = vadd.f32 %v6802, %v6990
    %6992 = vmatmul.bf16.gmra.mxu0 %v5043
    %v6993 = vpop.f32.mrf.mxu0
    %v6994 = vadd.f32 %v6805, %v6993
    %v6995 = vpop.f32.mrf.mxu0
    %v6996 = vadd.f32 %v6807, %v6995
    %6997 = vmatmul.bf16.gmra.mxu0 %v5048
    %v6998 = vpop.f32.mrf.mxu0
    %v6999 = vadd.f32 %v6810, %v6998
    %v7000 = vpop.f32.mrf.mxu0
    %v7001 = vadd.f32 %v6812, %v7000
    %7002 = vmatmul.bf16.gmra.mxu0 %v5053
    %v7003 = vpop.f32.mrf.mxu0
    %v7004 = vadd.f32 %v6815, %v7003
    %v7005 = vpop.f32.mrf.mxu0
    %v7006 = vadd.f32 %v6817, %v7005
    %7007 = vmatmul.bf16.gmra.mxu0 %v5058
    %v7008 = vpop.f32.mrf.mxu0
    %v7009 = vadd.f32 %v6820, %v7008
    %v7010 = vpop.f32.mrf.mxu0
    %v7011 = vadd.f32 %v6822, %v7010
    %7012 = vmatmul.bf16.gmra.mxu0 %v5063
    %v7013 = vpop.f32.mrf.mxu0
    %v7014 = vadd.f32 %v6825, %v7013
    %v7015 = vpop.f32.mrf.mxu0
    %v7016 = vadd.f32 %v6827, %v7015
    %7017 = vmatmul.bf16.gmra.mxu0 %v5068
    %v7018 = vpop.f32.mrf.mxu0
    %v7019 = vadd.f32 %v6830, %v7018
    %v7020 = vpop.f32.mrf.mxu0
    %v7021 = vadd.f32 %v6832, %v7020
    %7022 = vmatmul.bf16.gmra.mxu0 %v5073
    %v7023 = vpop.f32.mrf.mxu0
    %v7024 = vadd.f32 %v6835, %v7023
    %v7025 = vpop.f32.mrf.mxu0
    %v7026 = vadd.f32 %v6837, %v7025
    %7027 = vmatmul.bf16.gmra.mxu0 %v5078
    %v7028 = vpop.f32.mrf.mxu0
    %v7029 = vadd.f32 %v6840, %v7028
    %v7030 = vpop.f32.mrf.mxu0
    %v7031 = vadd.f32 %v6842, %v7030
    %7032 = vmatmul.bf16.gmra.mxu0 %v5083
    %v7033 = vpop.f32.mrf.mxu0
    %v7034 = vadd.f32 %v6845, %v7033
    %v7035 = vpop.f32.mrf.mxu0
    %v7036 = vadd.f32 %v6847, %v7035
    %7037 = vmatmul.bf16.gmra.mxu0 %v5088
    %v7038 = vpop.f32.mrf.mxu0
    %v7039 = vadd.f32 %v6850, %v7038
    %v7040 = vpop.f32.mrf.mxu0
    %v7041 = vadd.f32 %v6852, %v7040
    %7042 = vmatmul.bf16.gmra.mxu0 %v5093
    %v7043 = vpop.f32.mrf.mxu0
    %v7044 = vadd.f32 %v6855, %v7043
    %v7045 = vpop.f32.mrf.mxu0
    %v7046 = vadd.f32 %v6857, %v7045
    %7047 = vmatmul.bf16.gmra.mxu0 %v5098
    %v7048 = vpop.f32.mrf.mxu0
    %v7049 = vadd.f32 %v6860, %v7048
    %v7050 = vpop.f32.mrf.mxu0
    %v7051 = vadd.f32 %v6862, %v7050
    %7052 = vmatmul.bf16.gmra.mxu0 %v5103
    %v7053 = vpop.f32.mrf.mxu0
    %v7054 = vadd.f32 %v6865, %v7053
    %v7055 = vpop.f32.mrf.mxu0
    %v7056 = vadd.f32 %v6867, %v7055
    %7057 = vmatmul.bf16.gmra.mxu0 %v5108
    %v7058 = vpop.f32.mrf.mxu0
    %v7059 = vadd.f32 %v6870, %v7058
    %v7060 = vpop.f32.mrf.mxu0
    %v7061 = vadd.f32 %v6872, %v7060
    %7062 = vmatmul.bf16.gmra.mxu0 %v5113
    %v7063 = vpop.f32.mrf.mxu0
    %v7064 = vadd.f32 %v6875, %v7063
    %v7065 = vpop.f32.mrf.mxu0
    %v7066 = vadd.f32 %v6877, %v7065
    %7067 = vmatmul.bf16.gmra.mxu0 %v5118
    %v7068 = vpop.f32.mrf.mxu0
    %v7069 = vadd.f32 %v6880, %v7068
    %v7070 = vpop.f32.mrf.mxu0
    %v7071 = vadd.f32 %v6882, %v7070
    %7072 = vmatmul.bf16.gmra.mxu0 %v5123
    %v7073 = vpop.f32.mrf.mxu0
    %v7074 = vadd.f32 %v6885, %v7073
    %v7075 = vpop.f32.mrf.mxu0
    %v7076 = vadd.f32 %v6887, %v7075
    %7077 = vmatmul.bf16.gmra.mxu0 %v5128
    %v7078 = vpop.f32.mrf.mxu0
    %v7079 = vadd.f32 %v6890, %v7078
    %v7080 = vpop.f32.mrf.mxu0
    %v7081 = vadd.f32 %v6892, %v7080
    %7082 = vmatmul.bf16.gmra.mxu0 %v5133
    %v7083 = vpop.f32.mrf.mxu0
    %v7084 = vadd.f32 %v6895, %v7083
    %v7085 = vpop.f32.mrf.mxu0
    %v7086 = vadd.f32 %v6897, %v7085
    %7087 = vmatmul.bf16.gmra.mxu0 %v5138
    %v7088 = vpop.f32.mrf.mxu0
    %v7089 = vadd.f32 %v6900, %v7088
    %v7090 = vpop.f32.mrf.mxu0
    %v7091 = vadd.f32 %v6902, %v7090
    %7092 = vmatmul.bf16.gmra.mxu0 %v5143
    %v7093 = vpop.f32.mrf.mxu0
    %v7094 = vadd.f32 %v6905, %v7093
    %v7095 = vpop.f32.mrf.mxu0
    %v7096 = vadd.f32 %v6907, %v7095
    %7097 = vmatmul.bf16.gmra.mxu0 %v5148
    %v7098 = vpop.f32.mrf.mxu0
    %v7099 = vadd.f32 %v6910, %v7098
    %v7100 = vpop.f32.mrf.mxu0
    %v7101 = vadd.f32 %v6912, %v7100
    %7102 = vmatmul.bf16.gmra.mxu0 %v5153
    %v7103 = vpop.f32.mrf.mxu0
    %v7104 = vadd.f32 %v6915, %v7103
    %v7105 = vpop.f32.mrf.mxu0
    %v7106 = vadd.f32 %v6917, %v7105
    %7107 = vmatmul.bf16.gmra.mxu0 %v5158
    %v7108 = vpop.f32.mrf.mxu0
    %v7109 = vadd.f32 %v6920, %v7108
    %v7110 = vpop.f32.mrf.mxu0
    %v7111 = vadd.f32 %v6922, %v7110
    %7112 = vmatmul.bf16.gmra.mxu0 %v5163
    %v7113 = vpop.f32.mrf.mxu0
    %v7114 = vadd.f32 %v6925, %v7113
    %v7115 = vpop.f32.mrf.mxu0
    %v7116 = vadd.f32 %v6927, %v7115
    %7117 = vmatmul.bf16.gmra.mxu0 %v5168
    %v7118 = vpop.f32.mrf.mxu0
    %v7119 = vadd.f32 %v6930, %v7118
    %v7120 = vpop.f32.mrf.mxu0
    %v7121 = vadd.f32 %v6932, %v7120
    %7122 = vmatmul.bf16.gmra.mxu0 %v5173
    %v7123 = vpop.f32.mrf.mxu0
    %v7124 = vadd.f32 %v6935, %v7123
    %v7125 = vpop.f32.mrf.mxu0
    %v7126 = vadd.f32 %v6937, %v7125
    %7127 = vmatmul.bf16.gmra.mxu0 %v5178
    %v7128 = vpop.f32.mrf.mxu0
    %v7129 = vadd.f32 %v6940, %v7128
    %v7130 = vpop.f32.mrf.mxu0
    %v7131 = vadd.f32 %v6942, %v7130
    %7132 = vmatmul.bf16.gmra.mxu0 %v5183
    %v7133 = vpop.f32.mrf.mxu0
    %v7134 = vadd.f32 %v6945, %v7133
    %v7135 = vpop.f32.mrf.mxu0
    %v7136 = vadd.f32 %v6947, %v7135
    %7137 = vmatmul.bf16.gmra.mxu0 %v5188
    %v7138 = vpop.f32.mrf.mxu0
    %v7139 = vadd.f32 %v6950, %v7138
    %v7140 = vpop.f32.mrf.mxu0
    %v7141 = vadd.f32 %v6952, %v7140
    %7142 = vmatmul.bf16.gmra.mxu0 %v5193
    %v7143 = vpop.f32.mrf.mxu0
    %v7144 = vadd.f32 %v6955, %v7143
    %v7145 = vpop.f32.mrf.mxu0
    %v7146 = vadd.f32 %v6957, %v7145
    %7147 = vdwg.mxu0
    %7148 = vmatpush.bf16.msra.mxu0 0
    %7149 = vmatpush.bf16.msra.mxu0 0
    %7150 = vmatpush.bf16.msra.mxu0 0
    %7151 = vmatpush.bf16.msra.mxu0 0
    %7152 = vmatpush.bf16.msra.mxu0 %v2079
    %7153 = vmatpush.bf16.msra.mxu0 %v2077
    %7154 = vmatpush.bf16.msra.mxu0 %v2075
    %7155 = vmatpush.bf16.msra.mxu0 %v2073
    %7156 = vmatmul.bf16.gmra.mxu0 %v5340
    %v7157 = vpop.f32.mrf.mxu0
    %v7158 = vadd.f32 %v6969, %v7157
    %v7159 = vpop.f32.mrf.mxu0
    %v7160 = vadd.f32 %v6971, %v7159
    %7161 = vmatmul.bf16.gmra.mxu0 %v5343
    %v7162 = vpop.f32.mrf.mxu0
    %v7163 = vadd.f32 %v6974, %v7162
    %v7164 = vpop.f32.mrf.mxu0
    %v7165 = vadd.f32 %v6976, %v7164
    %7166 = vmatmul.bf16.gmra.mxu0 %v5346
    %v7167 = vpop.f32.mrf.mxu0
    %v7168 = vadd.f32 %v6979, %v7167
    %v7169 = vpop.f32.mrf.mxu0
    %v7170 = vadd.f32 %v6981, %v7169
    %7171 = vmatmul.bf16.gmra.mxu0 %v5349
    %v7172 = vpop.f32.mrf.mxu0
    %v7173 = vadd.f32 %v6984, %v7172
    %v7174 = vpop.f32.mrf.mxu0
    %v7175 = vadd.f32 %v6986, %v7174
    %7176 = vmatmul.bf16.gmra.mxu0 %v5352
    %v7177 = vpop.f32.mrf.mxu0
    %v7178 = vadd.f32 %v6989, %v7177
    %v7179 = vpop.f32.mrf.mxu0
    %v7180 = vadd.f32 %v6991, %v7179
    %7181 = vmatmul.bf16.gmra.mxu0 %v5355
    %v7182 = vpop.f32.mrf.mxu0
    %v7183 = vadd.f32 %v6994, %v7182
    %v7184 = vpop.f32.mrf.mxu0
    %v7185 = vadd.f32 %v6996, %v7184
    %7186 = vmatmul.bf16.gmra.mxu0 %v5358
    %v7187 = vpop.f32.mrf.mxu0
    %v7188 = vadd.f32 %v6999, %v7187
    %v7189 = vpop.f32.mrf.mxu0
    %v7190 = vadd.f32 %v7001, %v7189
    %7191 = vmatmul.bf16.gmra.mxu0 %v5361
    %v7192 = vpop.f32.mrf.mxu0
    %v7193 = vadd.f32 %v7004, %v7192
    %v7194 = vpop.f32.mrf.mxu0
    %v7195 = vadd.f32 %v7006, %v7194
    %7196 = vmatmul.bf16.gmra.mxu0 %v5364
    %v7197 = vpop.f32.mrf.mxu0
    %v7198 = vadd.f32 %v7009, %v7197
    %v7199 = vpop.f32.mrf.mxu0
    %v7200 = vadd.f32 %v7011, %v7199
    %7201 = vmatmul.bf16.gmra.mxu0 %v5367
    %v7202 = vpop.f32.mrf.mxu0
    %v7203 = vadd.f32 %v7014, %v7202
    %v7204 = vpop.f32.mrf.mxu0
    %v7205 = vadd.f32 %v7016, %v7204
    %7206 = vmatmul.bf16.gmra.mxu0 %v5370
    %v7207 = vpop.f32.mrf.mxu0
    %v7208 = vadd.f32 %v7019, %v7207
    %v7209 = vpop.f32.mrf.mxu0
    %v7210 = vadd.f32 %v7021, %v7209
    %7211 = vmatmul.bf16.gmra.mxu0 %v5373
    %v7212 = vpop.f32.mrf.mxu0
    %v7213 = vadd.f32 %v7024, %v7212
    %v7214 = vpop.f32.mrf.mxu0
    %v7215 = vadd.f32 %v7026, %v7214
    %7216 = vmatmul.bf16.gmra.mxu0 %v5376
    %v7217 = vpop.f32.mrf.mxu0
    %v7218 = vadd.f32 %v7029, %v7217
    %v7219 = vpop.f32.mrf.mxu0
    %v7220 = vadd.f32 %v7031, %v7219
    %7221 = vmatmul.bf16.gmra.mxu0 %v5379
    %v7222 = vpop.f32.mrf.mxu0
    %v7223 = vadd.f32 %v7034, %v7222
    %v7224 = vpop.f32.mrf.mxu0
    %v7225 = vadd.f32 %v7036, %v7224
    %7226 = vmatmul.bf16.gmra.mxu0 %v5382
    %v7227 = vpop.f32.mrf.mxu0
    %v7228 = vadd.f32 %v7039, %v7227
    %v7229 = vpop.f32.mrf.mxu0
    %v7230 = vadd.f32 %v7041, %v7229
    %7231 = vmatmul.bf16.gmra.mxu0 %v5385
    %v7232 = vpop.f32.mrf.mxu0
    %v7233 = vadd.f32 %v7044, %v7232
    %v7234 = vpop.f32.mrf.mxu0
    %v7235 = vadd.f32 %v7046, %v7234
    %7236 = vmatmul.bf16.gmra.mxu0 %v5388
    %v7237 = vpop.f32.mrf.mxu0
    %v7238 = vadd.f32 %v7049, %v7237
    %v7239 = vpop.f32.mrf.mxu0
    %v7240 = vadd.f32 %v7051, %v7239
    %7241 = vmatmul.bf16.gmra.mxu0 %v5391
    %v7242 = vpop.f32.mrf.mxu0
    %v7243 = vadd.f32 %v7054, %v7242
    %v7244 = vpop.f32.mrf.mxu0
    %v7245 = vadd.f32 %v7056, %v7244
    %7246 = vmatmul.bf16.gmra.mxu0 %v5394
    %v7247 = vpop.f32.mrf.mxu0
    %v7248 = vadd.f32 %v7059, %v7247
    %v7249 = vpop.f32.mrf.mxu0
    %v7250 = vadd.f32 %v7061, %v7249
    %7251 = vmatmul.bf16.gmra.mxu0 %v5397
    %v7252 = vpop.f32.mrf.mxu0
    %v7253 = vadd.f32 %v7064, %v7252
    %v7254 = vpop.f32.mrf.mxu0
    %v7255 = vadd.f32 %v7066, %v7254
    %7256 = vmatmul.bf16.gmra.mxu0 %v5400
    %v7257 = vpop.f32.mrf.mxu0
    %v7258 = vadd.f32 %v7069, %v7257
    %v7259 = vpop.f32.mrf.mxu0
    %v7260 = vadd.f32 %v7071, %v7259
    %7261 = vmatmul.bf16.gmra.mxu0 %v5403
    %v7262 = vpop.f32.mrf.mxu0
    %v7263 = vadd.f32 %v7074, %v7262
    %v7264 = vpop.f32.mrf.mxu0
    %v7265 = vadd.f32 %v7076, %v7264
    %7266 = vmatmul.bf16.gmra.mxu0 %v5406
    %v7267 = vpop.f32.mrf.mxu0
    %v7268 = vadd.f32 %v7079, %v7267
    %v7269 = vpop.f32.mrf.mxu0
    %v7270 = vadd.f32 %v7081, %v7269
    %7271 = vmatmul.bf16.gmra.mxu0 %v5409
    %v7272 = vpop.f32.mrf.mxu0
    %v7273 = vadd.f32 %v7084, %v7272
    %v7274 = vpop.f32.mrf.mxu0
    %v7275 = vadd.f32 %v7086, %v7274
    %7276 = vmatmul.bf16.gmra.mxu0 %v5412
    %v7277 = vpop.f32.mrf.mxu0
    %v7278 = vadd.f32 %v7089, %v7277
    %v7279 = vpop.f32.mrf.mxu0
    %v7280 = vadd.f32 %v7091, %v7279
    %7281 = vmatmul.bf16.gmra.mxu0 %v5415
    %v7282 = vpop.f32.mrf.mxu0
    %v7283 = vadd.f32 %v7094, %v7282
    %v7284 = vpop.f32.mrf.mxu0
    %v7285 = vadd.f32 %v7096, %v7284
    %7286 = vmatmul.bf16.gmra.mxu0 %v5418
    %v7287 = vpop.f32.mrf.mxu0
    %v7288 = vadd.f32 %v7099, %v7287
    %v7289 = vpop.f32.mrf.mxu0
    %v7290 = vadd.f32 %v7101, %v7289
    %7291 = vmatmul.bf16.gmra.mxu0 %v5421
    %v7292 = vpop.f32.mrf.mxu0
    %v7293 = vadd.f32 %v7104, %v7292
    %v7294 = vpop.f32.mrf.mxu0
    %v7295 = vadd.f32 %v7106, %v7294
    %7296 = vmatmul.bf16.gmra.mxu0 %v5424
    %v7297 = vpop.f32.mrf.mxu0
    %v7298 = vadd.f32 %v7109, %v7297
    %v7299 = vpop.f32.mrf.mxu0
    %v7300 = vadd.f32 %v7111, %v7299
    %7301 = vmatmul.bf16.gmra.mxu0 %v5427
    %v7302 = vpop.f32.mrf.mxu0
    %v7303 = vadd.f32 %v7114, %v7302
    %v7304 = vpop.f32.mrf.mxu0
    %v7305 = vadd.f32 %v7116, %v7304
    %7306 = vmatmul.bf16.gmra.mxu0 %v5430
    %v7307 = vpop.f32.mrf.mxu0
    %v7308 = vadd.f32 %v7119, %v7307
    %v7309 = vpop.f32.mrf.mxu0
    %v7310 = vadd.f32 %v7121, %v7309
    %7311 = vmatmul.bf16.gmra.mxu0 %v5433
    %v7312 = vpop.f32.mrf.mxu0
    %v7313 = vadd.f32 %v7124, %v7312
    %v7314 = vpop.f32.mrf.mxu0
    %v7315 = vadd.f32 %v7126, %v7314
    %7316 = vmatmul.bf16.gmra.mxu0 %v5436
    %v7317 = vpop.f32.mrf.mxu0
    %v7318 = vadd.f32 %v7129, %v7317
    %v7319 = vpop.f32.mrf.mxu0
    %v7320 = vadd.f32 %v7131, %v7319
    %7321 = vmatmul.bf16.gmra.mxu0 %v5439
    %v7322 = vpop.f32.mrf.mxu0
    %v7323 = vadd.f32 %v7134, %v7322
    %v7324 = vpop.f32.mrf.mxu0
    %v7325 = vadd.f32 %v7136, %v7324
    %7326 = vmatmul.bf16.gmra.mxu0 %v5442
    %v7327 = vpop.f32.mrf.mxu0
    %v7328 = vadd.f32 %v7139, %v7327
    %v7329 = vpop.f32.mrf.mxu0
    %v7330 = vadd.f32 %v7141, %v7329
    %7331 = vmatmul.bf16.gmra.mxu0 %v5445
    %v7332 = vpop.f32.mrf.mxu0
    %v7333 = vadd.f32 %v7144, %v7332
    %v7334 = vpop.f32.mrf.mxu0
    %v7335 = vadd.f32 %v7146, %v7334
    %7336 = vdwg.mxu0
    %7337 = vmatpush.bf16.msra.mxu0 %v2310
    %7338 = vmatpush.bf16.msra.mxu0 %v2308
    %7339 = vmatpush.bf16.msra.mxu0 %v2306
    %7340 = vmatpush.bf16.msra.mxu0 %v2304
    %7341 = vmatpush.bf16.msra.mxu0 %v2302
    %7342 = vmatpush.bf16.msra.mxu0 %v2300
    %7343 = vmatpush.bf16.msra.mxu0 %v2298
    %7344 = vmatpush.bf16.msra.mxu0 %v2296
    %7345 = vmatmul.bf16.gmra.mxu0 %v5015
    %v7346 = vpop.f32.mrf.mxu0
    %v7347 = vadd.f32 0.0, %v7346
    %v7348 = vpop.f32.mrf.mxu0
    %v7349 = vadd.f32 0.0, %v7348
    %7350 = vmatmul.bf16.gmra.mxu0 %v5020
    %v7351 = vpop.f32.mrf.mxu0
    %v7352 = vadd.f32 0.0, %v7351
    %v7353 = vpop.f32.mrf.mxu0
    %v7354 = vadd.f32 0.0, %v7353
    %7355 = vmatmul.bf16.gmra.mxu0 %v5025
    %v7356 = vpop.f32.mrf.mxu0
    %v7357 = vadd.f32 0.0, %v7356
    %v7358 = vpop.f32.mrf.mxu0
    %v7359 = vadd.f32 0.0, %v7358
    %7360 = vmatmul.bf16.gmra.mxu0 %v5030
    %v7361 = vpop.f32.mrf.mxu0
    %v7362 = vadd.f32 0.0, %v7361
    %v7363 = vpop.f32.mrf.mxu0
    %v7364 = vadd.f32 0.0, %v7363
    %7365 = vmatmul.bf16.gmra.mxu0 %v5035
    %v7366 = vpop.f32.mrf.mxu0
    %v7367 = vadd.f32 0.0, %v7366
    %v7368 = vpop.f32.mrf.mxu0
    %v7369 = vadd.f32 0.0, %v7368
    %7370 = vmatmul.bf16.gmra.mxu0 %v5040
    %v7371 = vpop.f32.mrf.mxu0
    %v7372 = vadd.f32 0.0, %v7371
    %v7373 = vpop.f32.mrf.mxu0
    %v7374 = vadd.f32 0.0, %v7373
    %7375 = vmatmul.bf16.gmra.mxu0 %v5045
    %v7376 = vpop.f32.mrf.mxu0
    %v7377 = vadd.f32 0.0, %v7376
    %v7378 = vpop.f32.mrf.mxu0
    %v7379 = vadd.f32 0.0, %v7378
    %7380 = vmatmul.bf16.gmra.mxu0 %v5050
    %v7381 = vpop.f32.mrf.mxu0
    %v7382 = vadd.f32 0.0, %v7381
    %v7383 = vpop.f32.mrf.mxu0
    %v7384 = vadd.f32 0.0, %v7383
    %7385 = vmatmul.bf16.gmra.mxu0 %v5055
    %v7386 = vpop.f32.mrf.mxu0
    %v7387 = vadd.f32 0.0, %v7386
    %v7388 = vpop.f32.mrf.mxu0
    %v7389 = vadd.f32 0.0, %v7388
    %7390 = vmatmul.bf16.gmra.mxu0 %v5060
    %v7391 = vpop.f32.mrf.mxu0
    %v7392 = vadd.f32 0.0, %v7391
    %v7393 = vpop.f32.mrf.mxu0
    %v7394 = vadd.f32 0.0, %v7393
    %7395 = vmatmul.bf16.gmra.mxu0 %v5065
    %v7396 = vpop.f32.mrf.mxu0
    %v7397 = vadd.f32 0.0, %v7396
    %v7398 = vpop.f32.mrf.mxu0
    %v7399 = vadd.f32 0.0, %v7398
    %7400 = vmatmul.bf16.gmra.mxu0 %v5070
    %v7401 = vpop.f32.mrf.mxu0
    %v7402 = vadd.f32 0.0, %v7401
    %v7403 = vpop.f32.mrf.mxu0
    %v7404 = vadd.f32 0.0, %v7403
    %7405 = vmatmul.bf16.gmra.mxu0 %v5075
    %v7406 = vpop.f32.mrf.mxu0
    %v7407 = vadd.f32 0.0, %v7406
    %v7408 = vpop.f32.mrf.mxu0
    %v7409 = vadd.f32 0.0, %v7408
    %7410 = vmatmul.bf16.gmra.mxu0 %v5080
    %v7411 = vpop.f32.mrf.mxu0
    %v7412 = vadd.f32 0.0, %v7411
    %v7413 = vpop.f32.mrf.mxu0
    %v7414 = vadd.f32 0.0, %v7413
    %7415 = vmatmul.bf16.gmra.mxu0 %v5085
    %v7416 = vpop.f32.mrf.mxu0
    %v7417 = vadd.f32 0.0, %v7416
    %v7418 = vpop.f32.mrf.mxu0
    %v7419 = vadd.f32 0.0, %v7418
    %7420 = vmatmul.bf16.gmra.mxu0 %v5090
    %v7421 = vpop.f32.mrf.mxu0
    %v7422 = vadd.f32 0.0, %v7421
    %v7423 = vpop.f32.mrf.mxu0
    %v7424 = vadd.f32 0.0, %v7423
    %7425 = vmatmul.bf16.gmra.mxu0 %v5095
    %v7426 = vpop.f32.mrf.mxu0
    %v7427 = vadd.f32 0.0, %v7426
    %v7428 = vpop.f32.mrf.mxu0
    %v7429 = vadd.f32 0.0, %v7428
    %7430 = vmatmul.bf16.gmra.mxu0 %v5100
    %v7431 = vpop.f32.mrf.mxu0
    %v7432 = vadd.f32 0.0, %v7431
    %v7433 = vpop.f32.mrf.mxu0
    %v7434 = vadd.f32 0.0, %v7433
    %7435 = vmatmul.bf16.gmra.mxu0 %v5105
    %v7436 = vpop.f32.mrf.mxu0
    %v7437 = vadd.f32 0.0, %v7436
    %v7438 = vpop.f32.mrf.mxu0
    %v7439 = vadd.f32 0.0, %v7438
    %7440 = vmatmul.bf16.gmra.mxu0 %v5110
    %v7441 = vpop.f32.mrf.mxu0
    %v7442 = vadd.f32 0.0, %v7441
    %v7443 = vpop.f32.mrf.mxu0
    %v7444 = vadd.f32 0.0, %v7443
    %7445 = vmatmul.bf16.gmra.mxu0 %v5115
    %v7446 = vpop.f32.mrf.mxu0
    %v7447 = vadd.f32 0.0, %v7446
    %v7448 = vpop.f32.mrf.mxu0
    %v7449 = vadd.f32 0.0, %v7448
    %7450 = vmatmul.bf16.gmra.mxu0 %v5120
    %v7451 = vpop.f32.mrf.mxu0
    %v7452 = vadd.f32 0.0, %v7451
    %v7453 = vpop.f32.mrf.mxu0
    %v7454 = vadd.f32 0.0, %v7453
    %7455 = vmatmul.bf16.gmra.mxu0 %v5125
    %v7456 = vpop.f32.mrf.mxu0
    %v7457 = vadd.f32 0.0, %v7456
    %v7458 = vpop.f32.mrf.mxu0
    %v7459 = vadd.f32 0.0, %v7458
    %7460 = vmatmul.bf16.gmra.mxu0 %v5130
    %v7461 = vpop.f32.mrf.mxu0
    %v7462 = vadd.f32 0.0, %v7461
    %v7463 = vpop.f32.mrf.mxu0
    %v7464 = vadd.f32 0.0, %v7463
    %7465 = vmatmul.bf16.gmra.mxu0 %v5135
    %v7466 = vpop.f32.mrf.mxu0
    %v7467 = vadd.f32 0.0, %v7466
    %v7468 = vpop.f32.mrf.mxu0
    %v7469 = vadd.f32 0.0, %v7468
    %7470 = vmatmul.bf16.gmra.mxu0 %v5140
    %v7471 = vpop.f32.mrf.mxu0
    %v7472 = vadd.f32 0.0, %v7471
    %v7473 = vpop.f32.mrf.mxu0
    %v7474 = vadd.f32 0.0, %v7473
    %7475 = vmatmul.bf16.gmra.mxu0 %v5145
    %v7476 = vpop.f32.mrf.mxu0
    %v7477 = vadd.f32 0.0, %v7476
    %v7478 = vpop.f32.mrf.mxu0
    %v7479 = vadd.f32 0.0, %v7478
    %7480 = vmatmul.bf16.gmra.mxu0 %v5150
    %v7481 = vpop.f32.mrf.mxu0
    %v7482 = vadd.f32 0.0, %v7481
    %v7483 = vpop.f32.mrf.mxu0
    %v7484 = vadd.f32 0.0, %v7483
    %7485 = vmatmul.bf16.gmra.mxu0 %v5155
    %v7486 = vpop.f32.mrf.mxu0
    %v7487 = vadd.f32 0.0, %v7486
    %v7488 = vpop.f32.mrf.mxu0
    %v7489 = vadd.f32 0.0, %v7488
    %7490 = vmatmul.bf16.gmra.mxu0 %v5160
    %v7491 = vpop.f32.mrf.mxu0
    %v7492 = vadd.f32 0.0, %v7491
    %v7493 = vpop.f32.mrf.mxu0
    %v7494 = vadd.f32 0.0, %v7493
    %7495 = vmatmul.bf16.gmra.mxu0 %v5165
    %v7496 = vpop.f32.mrf.mxu0
    %v7497 = vadd.f32 0.0, %v7496
    %v7498 = vpop.f32.mrf.mxu0
    %v7499 = vadd.f32 0.0, %v7498
    %7500 = vmatmul.bf16.gmra.mxu0 %v5170
    %v7501 = vpop.f32.mrf.mxu0
    %v7502 = vadd.f32 0.0, %v7501
    %v7503 = vpop.f32.mrf.mxu0
    %v7504 = vadd.f32 0.0, %v7503
    %7505 = vmatmul.bf16.gmra.mxu0 %v5175
    %v7506 = vpop.f32.mrf.mxu0
    %v7507 = vadd.f32 0.0, %v7506
    %v7508 = vpop.f32.mrf.mxu0
    %v7509 = vadd.f32 0.0, %v7508
    %7510 = vmatmul.bf16.gmra.mxu0 %v5180
    %v7511 = vpop.f32.mrf.mxu0
    %v7512 = vadd.f32 0.0, %v7511
    %v7513 = vpop.f32.mrf.mxu0
    %v7514 = vadd.f32 0.0, %v7513
    %7515 = vmatmul.bf16.gmra.mxu0 %v5185
    %v7516 = vpop.f32.mrf.mxu0
    %v7517 = vadd.f32 0.0, %v7516
    %v7518 = vpop.f32.mrf.mxu0
    %v7519 = vadd.f32 0.0, %v7518
    %7520 = vmatmul.bf16.gmra.mxu0 %v5190
    %v7521 = vpop.f32.mrf.mxu0
    %v7522 = vadd.f32 0.0, %v7521
    %v7523 = vpop.f32.mrf.mxu0
    %v7524 = vadd.f32 0.0, %v7523
    %7525 = vdwg.mxu0
    %7526 = vmatpush.bf16.msra.mxu0 %v2326
    %7527 = vmatpush.bf16.msra.mxu0 %v2324
    %7528 = vmatpush.bf16.msra.mxu0 %v2322
    %7529 = vmatpush.bf16.msra.mxu0 %v2320
    %7530 = vmatpush.bf16.msra.mxu0 %v2318
    %7531 = vmatpush.bf16.msra.mxu0 %v2316
    %7532 = vmatpush.bf16.msra.mxu0 %v2314
    %7533 = vmatpush.bf16.msra.mxu0 %v2312
    %7534 = vmatmul.bf16.gmra.mxu0 %v5016
    %v7535 = vpop.f32.mrf.mxu0
    %v7536 = vadd.f32 %v7347, %v7535
    %v7537 = vpop.f32.mrf.mxu0
    %v7538 = vadd.f32 %v7349, %v7537
    %7539 = vmatmul.bf16.gmra.mxu0 %v5021
    %v7540 = vpop.f32.mrf.mxu0
    %v7541 = vadd.f32 %v7352, %v7540
    %v7542 = vpop.f32.mrf.mxu0
    %v7543 = vadd.f32 %v7354, %v7542
    %7544 = vmatmul.bf16.gmra.mxu0 %v5026
    %v7545 = vpop.f32.mrf.mxu0
    %v7546 = vadd.f32 %v7357, %v7545
    %v7547 = vpop.f32.mrf.mxu0
    %v7548 = vadd.f32 %v7359, %v7547
    %7549 = vmatmul.bf16.gmra.mxu0 %v5031
    %v7550 = vpop.f32.mrf.mxu0
    %v7551 = vadd.f32 %v7362, %v7550
    %v7552 = vpop.f32.mrf.mxu0
    %v7553 = vadd.f32 %v7364, %v7552
    %7554 = vmatmul.bf16.gmra.mxu0 %v5036
    %v7555 = vpop.f32.mrf.mxu0
    %v7556 = vadd.f32 %v7367, %v7555
    %v7557 = vpop.f32.mrf.mxu0
    %v7558 = vadd.f32 %v7369, %v7557
    %7559 = vmatmul.bf16.gmra.mxu0 %v5041
    %v7560 = vpop.f32.mrf.mxu0
    %v7561 = vadd.f32 %v7372, %v7560
    %v7562 = vpop.f32.mrf.mxu0
    %v7563 = vadd.f32 %v7374, %v7562
    %7564 = vmatmul.bf16.gmra.mxu0 %v5046
    %v7565 = vpop.f32.mrf.mxu0
    %v7566 = vadd.f32 %v7377, %v7565
    %v7567 = vpop.f32.mrf.mxu0
    %v7568 = vadd.f32 %v7379, %v7567
    %7569 = vmatmul.bf16.gmra.mxu0 %v5051
    %v7570 = vpop.f32.mrf.mxu0
    %v7571 = vadd.f32 %v7382, %v7570
    %v7572 = vpop.f32.mrf.mxu0
    %v7573 = vadd.f32 %v7384, %v7572
    %7574 = vmatmul.bf16.gmra.mxu0 %v5056
    %v7575 = vpop.f32.mrf.mxu0
    %v7576 = vadd.f32 %v7387, %v7575
    %v7577 = vpop.f32.mrf.mxu0
    %v7578 = vadd.f32 %v7389, %v7577
    %7579 = vmatmul.bf16.gmra.mxu0 %v5061
    %v7580 = vpop.f32.mrf.mxu0
    %v7581 = vadd.f32 %v7392, %v7580
    %v7582 = vpop.f32.mrf.mxu0
    %v7583 = vadd.f32 %v7394, %v7582
    %7584 = vmatmul.bf16.gmra.mxu0 %v5066
    %v7585 = vpop.f32.mrf.mxu0
    %v7586 = vadd.f32 %v7397, %v7585
    %v7587 = vpop.f32.mrf.mxu0
    %v7588 = vadd.f32 %v7399, %v7587
    %7589 = vmatmul.bf16.gmra.mxu0 %v5071
    %v7590 = vpop.f32.mrf.mxu0
    %v7591 = vadd.f32 %v7402, %v7590
    %v7592 = vpop.f32.mrf.mxu0
    %v7593 = vadd.f32 %v7404, %v7592
    %7594 = vmatmul.bf16.gmra.mxu0 %v5076
    %v7595 = vpop.f32.mrf.mxu0
    %v7596 = vadd.f32 %v7407, %v7595
    %v7597 = vpop.f32.mrf.mxu0
    %v7598 = vadd.f32 %v7409, %v7597
    %7599 = vmatmul.bf16.gmra.mxu0 %v5081
    %v7600 = vpop.f32.mrf.mxu0
    %v7601 = vadd.f32 %v7412, %v7600
    %v7602 = vpop.f32.mrf.mxu0
    %v7603 = vadd.f32 %v7414, %v7602
    %7604 = vmatmul.bf16.gmra.mxu0 %v5086
    %v7605 = vpop.f32.mrf.mxu0
    %v7606 = vadd.f32 %v7417, %v7605
    %v7607 = vpop.f32.mrf.mxu0
    %v7608 = vadd.f32 %v7419, %v7607
    %7609 = vmatmul.bf16.gmra.mxu0 %v5091
    %v7610 = vpop.f32.mrf.mxu0
    %v7611 = vadd.f32 %v7422, %v7610
    %v7612 = vpop.f32.mrf.mxu0
    %v7613 = vadd.f32 %v7424, %v7612
    %7614 = vmatmul.bf16.gmra.mxu0 %v5096
    %v7615 = vpop.f32.mrf.mxu0
    %v7616 = vadd.f32 %v7427, %v7615
    %v7617 = vpop.f32.mrf.mxu0
    %v7618 = vadd.f32 %v7429, %v7617
    %7619 = vmatmul.bf16.gmra.mxu0 %v5101
    %v7620 = vpop.f32.mrf.mxu0
    %v7621 = vadd.f32 %v7432, %v7620
    %v7622 = vpop.f32.mrf.mxu0
    %v7623 = vadd.f32 %v7434, %v7622
    %7624 = vmatmul.bf16.gmra.mxu0 %v5106
    %v7625 = vpop.f32.mrf.mxu0
    %v7626 = vadd.f32 %v7437, %v7625
    %v7627 = vpop.f32.mrf.mxu0
    %v7628 = vadd.f32 %v7439, %v7627
    %7629 = vmatmul.bf16.gmra.mxu0 %v5111
    %v7630 = vpop.f32.mrf.mxu0
    %v7631 = vadd.f32 %v7442, %v7630
    %v7632 = vpop.f32.mrf.mxu0
    %v7633 = vadd.f32 %v7444, %v7632
    %7634 = vmatmul.bf16.gmra.mxu0 %v5116
    %v7635 = vpop.f32.mrf.mxu0
    %v7636 = vadd.f32 %v7447, %v7635
    %v7637 = vpop.f32.mrf.mxu0
    %v7638 = vadd.f32 %v7449, %v7637
    %7639 = vmatmul.bf16.gmra.mxu0 %v5121
    %v7640 = vpop.f32.mrf.mxu0
    %v7641 = vadd.f32 %v7452, %v7640
    %v7642 = vpop.f32.mrf.mxu0
    %v7643 = vadd.f32 %v7454, %v7642
    %7644 = vmatmul.bf16.gmra.mxu0 %v5126
    %v7645 = vpop.f32.mrf.mxu0
    %v7646 = vadd.f32 %v7457, %v7645
    %v7647 = vpop.f32.mrf.mxu0
    %v7648 = vadd.f32 %v7459, %v7647
    %7649 = vmatmul.bf16.gmra.mxu0 %v5131
    %v7650 = vpop.f32.mrf.mxu0
    %v7651 = vadd.f32 %v7462, %v7650
    %v7652 = vpop.f32.mrf.mxu0
    %v7653 = vadd.f32 %v7464, %v7652
    %7654 = vmatmul.bf16.gmra.mxu0 %v5136
    %v7655 = vpop.f32.mrf.mxu0
    %v7656 = vadd.f32 %v7467, %v7655
    %v7657 = vpop.f32.mrf.mxu0
    %v7658 = vadd.f32 %v7469, %v7657
    %7659 = vmatmul.bf16.gmra.mxu0 %v5141
    %v7660 = vpop.f32.mrf.mxu0
    %v7661 = vadd.f32 %v7472, %v7660
    %v7662 = vpop.f32.mrf.mxu0
    %v7663 = vadd.f32 %v7474, %v7662
    %7664 = vmatmul.bf16.gmra.mxu0 %v5146
    %v7665 = vpop.f32.mrf.mxu0
    %v7666 = vadd.f32 %v7477, %v7665
    %v7667 = vpop.f32.mrf.mxu0
    %v7668 = vadd.f32 %v7479, %v7667
    %7669 = vmatmul.bf16.gmra.mxu0 %v5151
    %v7670 = vpop.f32.mrf.mxu0
    %v7671 = vadd.f32 %v7482, %v7670
    %v7672 = vpop.f32.mrf.mxu0
    %v7673 = vadd.f32 %v7484, %v7672
    %7674 = vmatmul.bf16.gmra.mxu0 %v5156
    %v7675 = vpop.f32.mrf.mxu0
    %v7676 = vadd.f32 %v7487, %v7675
    %v7677 = vpop.f32.mrf.mxu0
    %v7678 = vadd.f32 %v7489, %v7677
    %7679 = vmatmul.bf16.gmra.mxu0 %v5161
    %v7680 = vpop.f32.mrf.mxu0
    %v7681 = vadd.f32 %v7492, %v7680
    %v7682 = vpop.f32.mrf.mxu0
    %v7683 = vadd.f32 %v7494, %v7682
    %7684 = vmatmul.bf16.gmra.mxu0 %v5166
    %v7685 = vpop.f32.mrf.mxu0
    %v7686 = vadd.f32 %v7497, %v7685
    %v7687 = vpop.f32.mrf.mxu0
    %v7688 = vadd.f32 %v7499, %v7687
    %7689 = vmatmul.bf16.gmra.mxu0 %v5171
    %v7690 = vpop.f32.mrf.mxu0
    %v7691 = vadd.f32 %v7502, %v7690
    %v7692 = vpop.f32.mrf.mxu0
    %v7693 = vadd.f32 %v7504, %v7692
    %7694 = vmatmul.bf16.gmra.mxu0 %v5176
    %v7695 = vpop.f32.mrf.mxu0
    %v7696 = vadd.f32 %v7507, %v7695
    %v7697 = vpop.f32.mrf.mxu0
    %v7698 = vadd.f32 %v7509, %v7697
    %7699 = vmatmul.bf16.gmra.mxu0 %v5181
    %v7700 = vpop.f32.mrf.mxu0
    %v7701 = vadd.f32 %v7512, %v7700
    %v7702 = vpop.f32.mrf.mxu0
    %v7703 = vadd.f32 %v7514, %v7702
    %7704 = vmatmul.bf16.gmra.mxu0 %v5186
    %v7705 = vpop.f32.mrf.mxu0
    %v7706 = vadd.f32 %v7517, %v7705
    %v7707 = vpop.f32.mrf.mxu0
    %v7708 = vadd.f32 %v7519, %v7707
    %7709 = vmatmul.bf16.gmra.mxu0 %v5191
    %v7710 = vpop.f32.mrf.mxu0
    %v7711 = vadd.f32 %v7522, %v7710
    %v7712 = vpop.f32.mrf.mxu0
    %v7713 = vadd.f32 %v7524, %v7712
    %7714 = vdwg.mxu0
    %7715 = vmatpush.bf16.msra.mxu0 %v2342
    %7716 = vmatpush.bf16.msra.mxu0 %v2340
    %7717 = vmatpush.bf16.msra.mxu0 %v2338
    %7718 = vmatpush.bf16.msra.mxu0 %v2336
    %7719 = vmatpush.bf16.msra.mxu0 %v2334
    %7720 = vmatpush.bf16.msra.mxu0 %v2332
    %7721 = vmatpush.bf16.msra.mxu0 %v2330
    %7722 = vmatpush.bf16.msra.mxu0 %v2328
    %7723 = vmatmul.bf16.gmra.mxu0 %v5017
    %v7724 = vpop.f32.mrf.mxu0
    %v7725 = vadd.f32 %v7536, %v7724
    %v7726 = vpop.f32.mrf.mxu0
    %v7727 = vadd.f32 %v7538, %v7726
    %7728 = vmatmul.bf16.gmra.mxu0 %v5022
    %v7729 = vpop.f32.mrf.mxu0
    %v7730 = vadd.f32 %v7541, %v7729
    %v7731 = vpop.f32.mrf.mxu0
    %v7732 = vadd.f32 %v7543, %v7731
    %7733 = vmatmul.bf16.gmra.mxu0 %v5027
    %v7734 = vpop.f32.mrf.mxu0
    %v7735 = vadd.f32 %v7546, %v7734
    %v7736 = vpop.f32.mrf.mxu0
    %v7737 = vadd.f32 %v7548, %v7736
    %7738 = vmatmul.bf16.gmra.mxu0 %v5032
    %v7739 = vpop.f32.mrf.mxu0
    %v7740 = vadd.f32 %v7551, %v7739
    %v7741 = vpop.f32.mrf.mxu0
    %v7742 = vadd.f32 %v7553, %v7741
    %7743 = vmatmul.bf16.gmra.mxu0 %v5037
    %v7744 = vpop.f32.mrf.mxu0
    %v7745 = vadd.f32 %v7556, %v7744
    %v7746 = vpop.f32.mrf.mxu0
    %v7747 = vadd.f32 %v7558, %v7746
    %7748 = vmatmul.bf16.gmra.mxu0 %v5042
    %v7749 = vpop.f32.mrf.mxu0
    %v7750 = vadd.f32 %v7561, %v7749
    %v7751 = vpop.f32.mrf.mxu0
    %v7752 = vadd.f32 %v7563, %v7751
    %7753 = vmatmul.bf16.gmra.mxu0 %v5047
    %v7754 = vpop.f32.mrf.mxu0
    %v7755 = vadd.f32 %v7566, %v7754
    %v7756 = vpop.f32.mrf.mxu0
    %v7757 = vadd.f32 %v7568, %v7756
    %7758 = vmatmul.bf16.gmra.mxu0 %v5052
    %v7759 = vpop.f32.mrf.mxu0
    %v7760 = vadd.f32 %v7571, %v7759
    %v7761 = vpop.f32.mrf.mxu0
    %v7762 = vadd.f32 %v7573, %v7761
    %7763 = vmatmul.bf16.gmra.mxu0 %v5057
    %v7764 = vpop.f32.mrf.mxu0
    %v7765 = vadd.f32 %v7576, %v7764
    %v7766 = vpop.f32.mrf.mxu0
    %v7767 = vadd.f32 %v7578, %v7766
    %7768 = vmatmul.bf16.gmra.mxu0 %v5062
    %v7769 = vpop.f32.mrf.mxu0
    %v7770 = vadd.f32 %v7581, %v7769
    %v7771 = vpop.f32.mrf.mxu0
    %v7772 = vadd.f32 %v7583, %v7771
    %7773 = vmatmul.bf16.gmra.mxu0 %v5067
    %v7774 = vpop.f32.mrf.mxu0
    %v7775 = vadd.f32 %v7586, %v7774
    %v7776 = vpop.f32.mrf.mxu0
    %v7777 = vadd.f32 %v7588, %v7776
    %7778 = vmatmul.bf16.gmra.mxu0 %v5072
    %v7779 = vpop.f32.mrf.mxu0
    %v7780 = vadd.f32 %v7591, %v7779
    %v7781 = vpop.f32.mrf.mxu0
    %v7782 = vadd.f32 %v7593, %v7781
    %7783 = vmatmul.bf16.gmra.mxu0 %v5077
    %v7784 = vpop.f32.mrf.mxu0
    %v7785 = vadd.f32 %v7596, %v7784
    %v7786 = vpop.f32.mrf.mxu0
    %v7787 = vadd.f32 %v7598, %v7786
    %7788 = vmatmul.bf16.gmra.mxu0 %v5082
    %v7789 = vpop.f32.mrf.mxu0
    %v7790 = vadd.f32 %v7601, %v7789
    %v7791 = vpop.f32.mrf.mxu0
    %v7792 = vadd.f32 %v7603, %v7791
    %7793 = vmatmul.bf16.gmra.mxu0 %v5087
    %v7794 = vpop.f32.mrf.mxu0
    %v7795 = vadd.f32 %v7606, %v7794
    %v7796 = vpop.f32.mrf.mxu0
    %v7797 = vadd.f32 %v7608, %v7796
    %7798 = vmatmul.bf16.gmra.mxu0 %v5092
    %v7799 = vpop.f32.mrf.mxu0
    %v7800 = vadd.f32 %v7611, %v7799
    %v7801 = vpop.f32.mrf.mxu0
    %v7802 = vadd.f32 %v7613, %v7801
    %7803 = vmatmul.bf16.gmra.mxu0 %v5097
    %v7804 = vpop.f32.mrf.mxu0
    %v7805 = vadd.f32 %v7616, %v7804
    %v7806 = vpop.f32.mrf.mxu0
    %v7807 = vadd.f32 %v7618, %v7806
    %7808 = vmatmul.bf16.gmra.mxu0 %v5102
    %v7809 = vpop.f32.mrf.mxu0
    %v7810 = vadd.f32 %v7621, %v7809
    %v7811 = vpop.f32.mrf.mxu0
    %v7812 = vadd.f32 %v7623, %v7811
    %7813 = vmatmul.bf16.gmra.mxu0 %v5107
    %v7814 = vpop.f32.mrf.mxu0
    %v7815 = vadd.f32 %v7626, %v7814
    %v7816 = vpop.f32.mrf.mxu0
    %v7817 = vadd.f32 %v7628, %v7816
    %7818 = vmatmul.bf16.gmra.mxu0 %v5112
    %v7819 = vpop.f32.mrf.mxu0
    %v7820 = vadd.f32 %v7631, %v7819
    %v7821 = vpop.f32.mrf.mxu0
    %v7822 = vadd.f32 %v7633, %v7821
    %7823 = vmatmul.bf16.gmra.mxu0 %v5117
    %v7824 = vpop.f32.mrf.mxu0
    %v7825 = vadd.f32 %v7636, %v7824
    %v7826 = vpop.f32.mrf.mxu0
    %v7827 = vadd.f32 %v7638, %v7826
    %7828 = vmatmul.bf16.gmra.mxu0 %v5122
    %v7829 = vpop.f32.mrf.mxu0
    %v7830 = vadd.f32 %v7641, %v7829
    %v7831 = vpop.f32.mrf.mxu0
    %v7832 = vadd.f32 %v7643, %v7831
    %7833 = vmatmul.bf16.gmra.mxu0 %v5127
    %v7834 = vpop.f32.mrf.mxu0
    %v7835 = vadd.f32 %v7646, %v7834
    %v7836 = vpop.f32.mrf.mxu0
    %v7837 = vadd.f32 %v7648, %v7836
    %7838 = vmatmul.bf16.gmra.mxu0 %v5132
    %v7839 = vpop.f32.mrf.mxu0
    %v7840 = vadd.f32 %v7651, %v7839
    %v7841 = vpop.f32.mrf.mxu0
    %v7842 = vadd.f32 %v7653, %v7841
    %7843 = vmatmul.bf16.gmra.mxu0 %v5137
    %v7844 = vpop.f32.mrf.mxu0
    %v7845 = vadd.f32 %v7656, %v7844
    %v7846 = vpop.f32.mrf.mxu0
    %v7847 = vadd.f32 %v7658, %v7846
    %7848 = vmatmul.bf16.gmra.mxu0 %v5142
    %v7849 = vpop.f32.mrf.mxu0
    %v7850 = vadd.f32 %v7661, %v7849
    %v7851 = vpop.f32.mrf.mxu0
    %v7852 = vadd.f32 %v7663, %v7851
    %7853 = vmatmul.bf16.gmra.mxu0 %v5147
    %v7854 = vpop.f32.mrf.mxu0
    %v7855 = vadd.f32 %v7666, %v7854
    %v7856 = vpop.f32.mrf.mxu0
    %v7857 = vadd.f32 %v7668, %v7856
    %7858 = vmatmul.bf16.gmra.mxu0 %v5152
    %v7859 = vpop.f32.mrf.mxu0
    %v7860 = vadd.f32 %v7671, %v7859
    %v7861 = vpop.f32.mrf.mxu0
    %v7862 = vadd.f32 %v7673, %v7861
    %7863 = vmatmul.bf16.gmra.mxu0 %v5157
    %v7864 = vpop.f32.mrf.mxu0
    %v7865 = vadd.f32 %v7676, %v7864
    %v7866 = vpop.f32.mrf.mxu0
    %v7867 = vadd.f32 %v7678, %v7866
    %7868 = vmatmul.bf16.gmra.mxu0 %v5162
    %v7869 = vpop.f32.mrf.mxu0
    %v7870 = vadd.f32 %v7681, %v7869
    %v7871 = vpop.f32.mrf.mxu0
    %v7872 = vadd.f32 %v7683, %v7871
    %7873 = vmatmul.bf16.gmra.mxu0 %v5167
    %v7874 = vpop.f32.mrf.mxu0
    %v7875 = vadd.f32 %v7686, %v7874
    %v7876 = vpop.f32.mrf.mxu0
    %v7877 = vadd.f32 %v7688, %v7876
    %7878 = vmatmul.bf16.gmra.mxu0 %v5172
    %v7879 = vpop.f32.mrf.mxu0
    %v7880 = vadd.f32 %v7691, %v7879
    %v7881 = vpop.f32.mrf.mxu0
    %v7882 = vadd.f32 %v7693, %v7881
    %7883 = vmatmul.bf16.gmra.mxu0 %v5177
    %v7884 = vpop.f32.mrf.mxu0
    %v7885 = vadd.f32 %v7696, %v7884
    %v7886 = vpop.f32.mrf.mxu0
    %v7887 = vadd.f32 %v7698, %v7886
    %7888 = vmatmul.bf16.gmra.mxu0 %v5182
    %v7889 = vpop.f32.mrf.mxu0
    %v7890 = vadd.f32 %v7701, %v7889
    %v7891 = vpop.f32.mrf.mxu0
    %v7892 = vadd.f32 %v7703, %v7891
    %7893 = vmatmul.bf16.gmra.mxu0 %v5187
    %v7894 = vpop.f32.mrf.mxu0
    %v7895 = vadd.f32 %v7706, %v7894
    %v7896 = vpop.f32.mrf.mxu0
    %v7897 = vadd.f32 %v7708, %v7896
    %7898 = vmatmul.bf16.gmra.mxu0 %v5192
    %v7899 = vpop.f32.mrf.mxu0
    %v7900 = vadd.f32 %v7711, %v7899
    %v7901 = vpop.f32.mrf.mxu0
    %v7902 = vadd.f32 %v7713, %v7901
    %7903 = vdwg.mxu0
    %7904 = vmatpush.bf16.msra.mxu0 %v2358
    %7905 = vmatpush.bf16.msra.mxu0 %v2356
    %7906 = vmatpush.bf16.msra.mxu0 %v2354
    %7907 = vmatpush.bf16.msra.mxu0 %v2352
    %7908 = vmatpush.bf16.msra.mxu0 %v2350
    %7909 = vmatpush.bf16.msra.mxu0 %v2348
    %7910 = vmatpush.bf16.msra.mxu0 %v2346
    %7911 = vmatpush.bf16.msra.mxu0 %v2344
    %7912 = vmatmul.bf16.gmra.mxu0 %v5018
    %v7913 = vpop.f32.mrf.mxu0
    %v7914 = vadd.f32 %v7725, %v7913
    %v7915 = vpop.f32.mrf.mxu0
    %v7916 = vadd.f32 %v7727, %v7915
    %7917 = vmatmul.bf16.gmra.mxu0 %v5023
    %v7918 = vpop.f32.mrf.mxu0
    %v7919 = vadd.f32 %v7730, %v7918
    %v7920 = vpop.f32.mrf.mxu0
    %v7921 = vadd.f32 %v7732, %v7920
    %7922 = vmatmul.bf16.gmra.mxu0 %v5028
    %v7923 = vpop.f32.mrf.mxu0
    %v7924 = vadd.f32 %v7735, %v7923
    %v7925 = vpop.f32.mrf.mxu0
    %v7926 = vadd.f32 %v7737, %v7925
    %7927 = vmatmul.bf16.gmra.mxu0 %v5033
    %v7928 = vpop.f32.mrf.mxu0
    %v7929 = vadd.f32 %v7740, %v7928
    %v7930 = vpop.f32.mrf.mxu0
    %v7931 = vadd.f32 %v7742, %v7930
    %7932 = vmatmul.bf16.gmra.mxu0 %v5038
    %v7933 = vpop.f32.mrf.mxu0
    %v7934 = vadd.f32 %v7745, %v7933
    %v7935 = vpop.f32.mrf.mxu0
    %v7936 = vadd.f32 %v7747, %v7935
    %7937 = vmatmul.bf16.gmra.mxu0 %v5043
    %v7938 = vpop.f32.mrf.mxu0
    %v7939 = vadd.f32 %v7750, %v7938
    %v7940 = vpop.f32.mrf.mxu0
    %v7941 = vadd.f32 %v7752, %v7940
    %7942 = vmatmul.bf16.gmra.mxu0 %v5048
    %v7943 = vpop.f32.mrf.mxu0
    %v7944 = vadd.f32 %v7755, %v7943
    %v7945 = vpop.f32.mrf.mxu0
    %v7946 = vadd.f32 %v7757, %v7945
    %7947 = vmatmul.bf16.gmra.mxu0 %v5053
    %v7948 = vpop.f32.mrf.mxu0
    %v7949 = vadd.f32 %v7760, %v7948
    %v7950 = vpop.f32.mrf.mxu0
    %v7951 = vadd.f32 %v7762, %v7950
    %7952 = vmatmul.bf16.gmra.mxu0 %v5058
    %v7953 = vpop.f32.mrf.mxu0
    %v7954 = vadd.f32 %v7765, %v7953
    %v7955 = vpop.f32.mrf.mxu0
    %v7956 = vadd.f32 %v7767, %v7955
    %7957 = vmatmul.bf16.gmra.mxu0 %v5063
    %v7958 = vpop.f32.mrf.mxu0
    %v7959 = vadd.f32 %v7770, %v7958
    %v7960 = vpop.f32.mrf.mxu0
    %v7961 = vadd.f32 %v7772, %v7960
    %7962 = vmatmul.bf16.gmra.mxu0 %v5068
    %v7963 = vpop.f32.mrf.mxu0
    %v7964 = vadd.f32 %v7775, %v7963
    %v7965 = vpop.f32.mrf.mxu0
    %v7966 = vadd.f32 %v7777, %v7965
    %7967 = vmatmul.bf16.gmra.mxu0 %v5073
    %v7968 = vpop.f32.mrf.mxu0
    %v7969 = vadd.f32 %v7780, %v7968
    %v7970 = vpop.f32.mrf.mxu0
    %v7971 = vadd.f32 %v7782, %v7970
    %7972 = vmatmul.bf16.gmra.mxu0 %v5078
    %v7973 = vpop.f32.mrf.mxu0
    %v7974 = vadd.f32 %v7785, %v7973
    %v7975 = vpop.f32.mrf.mxu0
    %v7976 = vadd.f32 %v7787, %v7975
    %7977 = vmatmul.bf16.gmra.mxu0 %v5083
    %v7978 = vpop.f32.mrf.mxu0
    %v7979 = vadd.f32 %v7790, %v7978
    %v7980 = vpop.f32.mrf.mxu0
    %v7981 = vadd.f32 %v7792, %v7980
    %7982 = vmatmul.bf16.gmra.mxu0 %v5088
    %v7983 = vpop.f32.mrf.mxu0
    %v7984 = vadd.f32 %v7795, %v7983
    %v7985 = vpop.f32.mrf.mxu0
    %v7986 = vadd.f32 %v7797, %v7985
    %7987 = vmatmul.bf16.gmra.mxu0 %v5093
    %v7988 = vpop.f32.mrf.mxu0
    %v7989 = vadd.f32 %v7800, %v7988
    %v7990 = vpop.f32.mrf.mxu0
    %v7991 = vadd.f32 %v7802, %v7990
    %7992 = vmatmul.bf16.gmra.mxu0 %v5098
    %v7993 = vpop.f32.mrf.mxu0
    %v7994 = vadd.f32 %v7805, %v7993
    %v7995 = vpop.f32.mrf.mxu0
    %v7996 = vadd.f32 %v7807, %v7995
    %7997 = vmatmul.bf16.gmra.mxu0 %v5103
    %v7998 = vpop.f32.mrf.mxu0
    %v7999 = vadd.f32 %v7810, %v7998
    %v8000 = vpop.f32.mrf.mxu0
    %v8001 = vadd.f32 %v7812, %v8000
    %8002 = vmatmul.bf16.gmra.mxu0 %v5108
    %v8003 = vpop.f32.mrf.mxu0
    %v8004 = vadd.f32 %v7815, %v8003
    %v8005 = vpop.f32.mrf.mxu0
    %v8006 = vadd.f32 %v7817, %v8005
    %8007 = vmatmul.bf16.gmra.mxu0 %v5113
    %v8008 = vpop.f32.mrf.mxu0
    %v8009 = vadd.f32 %v7820, %v8008
    %v8010 = vpop.f32.mrf.mxu0
    %v8011 = vadd.f32 %v7822, %v8010
    %8012 = vmatmul.bf16.gmra.mxu0 %v5118
    %v8013 = vpop.f32.mrf.mxu0
    %v8014 = vadd.f32 %v7825, %v8013
    %v8015 = vpop.f32.mrf.mxu0
    %v8016 = vadd.f32 %v7827, %v8015
    %8017 = vmatmul.bf16.gmra.mxu0 %v5123
    %v8018 = vpop.f32.mrf.mxu0
    %v8019 = vadd.f32 %v7830, %v8018
    %v8020 = vpop.f32.mrf.mxu0
    %v8021 = vadd.f32 %v7832, %v8020
    %8022 = vmatmul.bf16.gmra.mxu0 %v5128
    %v8023 = vpop.f32.mrf.mxu0
    %v8024 = vadd.f32 %v7835, %v8023
    %v8025 = vpop.f32.mrf.mxu0
    %v8026 = vadd.f32 %v7837, %v8025
    %8027 = vmatmul.bf16.gmra.mxu0 %v5133
    %v8028 = vpop.f32.mrf.mxu0
    %v8029 = vadd.f32 %v7840, %v8028
    %v8030 = vpop.f32.mrf.mxu0
    %v8031 = vadd.f32 %v7842, %v8030
    %8032 = vmatmul.bf16.gmra.mxu0 %v5138
    %v8033 = vpop.f32.mrf.mxu0
    %v8034 = vadd.f32 %v7845, %v8033
    %v8035 = vpop.f32.mrf.mxu0
    %v8036 = vadd.f32 %v7847, %v8035
    %8037 = vmatmul.bf16.gmra.mxu0 %v5143
    %v8038 = vpop.f32.mrf.mxu0
    %v8039 = vadd.f32 %v7850, %v8038
    %v8040 = vpop.f32.mrf.mxu0
    %v8041 = vadd.f32 %v7852, %v8040
    %8042 = vmatmul.bf16.gmra.mxu0 %v5148
    %v8043 = vpop.f32.mrf.mxu0
    %v8044 = vadd.f32 %v7855, %v8043
    %v8045 = vpop.f32.mrf.mxu0
    %v8046 = vadd.f32 %v7857, %v8045
    %8047 = vmatmul.bf16.gmra.mxu0 %v5153
    %v8048 = vpop.f32.mrf.mxu0
    %v8049 = vadd.f32 %v7860, %v8048
    %v8050 = vpop.f32.mrf.mxu0
    %v8051 = vadd.f32 %v7862, %v8050
    %8052 = vmatmul.bf16.gmra.mxu0 %v5158
    %v8053 = vpop.f32.mrf.mxu0
    %v8054 = vadd.f32 %v7865, %v8053
    %v8055 = vpop.f32.mrf.mxu0
    %v8056 = vadd.f32 %v7867, %v8055
    %8057 = vmatmul.bf16.gmra.mxu0 %v5163
    %v8058 = vpop.f32.mrf.mxu0
    %v8059 = vadd.f32 %v7870, %v8058
    %v8060 = vpop.f32.mrf.mxu0
    %v8061 = vadd.f32 %v7872, %v8060
    %8062 = vmatmul.bf16.gmra.mxu0 %v5168
    %v8063 = vpop.f32.mrf.mxu0
    %v8064 = vadd.f32 %v7875, %v8063
    %v8065 = vpop.f32.mrf.mxu0
    %v8066 = vadd.f32 %v7877, %v8065
    %8067 = vmatmul.bf16.gmra.mxu0 %v5173
    %v8068 = vpop.f32.mrf.mxu0
    %v8069 = vadd.f32 %v7880, %v8068
    %v8070 = vpop.f32.mrf.mxu0
    %v8071 = vadd.f32 %v7882, %v8070
    %8072 = vmatmul.bf16.gmra.mxu0 %v5178
    %v8073 = vpop.f32.mrf.mxu0
    %v8074 = vadd.f32 %v7885, %v8073
    %v8075 = vpop.f32.mrf.mxu0
    %v8076 = vadd.f32 %v7887, %v8075
    %8077 = vmatmul.bf16.gmra.mxu0 %v5183
    %v8078 = vpop.f32.mrf.mxu0
    %v8079 = vadd.f32 %v7890, %v8078
    %v8080 = vpop.f32.mrf.mxu0
    %v8081 = vadd.f32 %v7892, %v8080
    %8082 = vmatmul.bf16.gmra.mxu0 %v5188
    %v8083 = vpop.f32.mrf.mxu0
    %v8084 = vadd.f32 %v7895, %v8083
    %v8085 = vpop.f32.mrf.mxu0
    %v8086 = vadd.f32 %v7897, %v8085
    %8087 = vmatmul.bf16.gmra.mxu0 %v5193
    %v8088 = vpop.f32.mrf.mxu0
    %v8089 = vadd.f32 %v7900, %v8088
    %v8090 = vpop.f32.mrf.mxu0
    %v8091 = vadd.f32 %v7902, %v8090
    %8092 = vdwg.mxu0
    %8093 = vmatpush.bf16.msra.mxu0 0
    %8094 = vmatpush.bf16.msra.mxu0 0
    %8095 = vmatpush.bf16.msra.mxu0 0
    %8096 = vmatpush.bf16.msra.mxu0 0
    %8097 = vmatpush.bf16.msra.mxu0 %v2366
    %8098 = vmatpush.bf16.msra.mxu0 %v2364
    %8099 = vmatpush.bf16.msra.mxu0 %v2362
    %8100 = vmatpush.bf16.msra.mxu0 %v2360
    %8101 = vmatmul.bf16.gmra.mxu0 %v5340
    %v8102 = vpop.f32.mrf.mxu0
    %v8103 = vadd.f32 %v7914, %v8102
    %v8104 = vpop.f32.mrf.mxu0
    %v8105 = vadd.f32 %v7916, %v8104
    %8106 = vmatmul.bf16.gmra.mxu0 %v5343
    %v8107 = vpop.f32.mrf.mxu0
    %v8108 = vadd.f32 %v7919, %v8107
    %v8109 = vpop.f32.mrf.mxu0
    %v8110 = vadd.f32 %v7921, %v8109
    %8111 = vmatmul.bf16.gmra.mxu0 %v5346
    %v8112 = vpop.f32.mrf.mxu0
    %v8113 = vadd.f32 %v7924, %v8112
    %v8114 = vpop.f32.mrf.mxu0
    %v8115 = vadd.f32 %v7926, %v8114
    %8116 = vmatmul.bf16.gmra.mxu0 %v5349
    %v8117 = vpop.f32.mrf.mxu0
    %v8118 = vadd.f32 %v7929, %v8117
    %v8119 = vpop.f32.mrf.mxu0
    %v8120 = vadd.f32 %v7931, %v8119
    %8121 = vmatmul.bf16.gmra.mxu0 %v5352
    %v8122 = vpop.f32.mrf.mxu0
    %v8123 = vadd.f32 %v7934, %v8122
    %v8124 = vpop.f32.mrf.mxu0
    %v8125 = vadd.f32 %v7936, %v8124
    %8126 = vmatmul.bf16.gmra.mxu0 %v5355
    %v8127 = vpop.f32.mrf.mxu0
    %v8128 = vadd.f32 %v7939, %v8127
    %v8129 = vpop.f32.mrf.mxu0
    %v8130 = vadd.f32 %v7941, %v8129
    %8131 = vmatmul.bf16.gmra.mxu0 %v5358
    %v8132 = vpop.f32.mrf.mxu0
    %v8133 = vadd.f32 %v7944, %v8132
    %v8134 = vpop.f32.mrf.mxu0
    %v8135 = vadd.f32 %v7946, %v8134
    %8136 = vmatmul.bf16.gmra.mxu0 %v5361
    %v8137 = vpop.f32.mrf.mxu0
    %v8138 = vadd.f32 %v7949, %v8137
    %v8139 = vpop.f32.mrf.mxu0
    %v8140 = vadd.f32 %v7951, %v8139
    %8141 = vmatmul.bf16.gmra.mxu0 %v5364
    %v8142 = vpop.f32.mrf.mxu0
    %v8143 = vadd.f32 %v7954, %v8142
    %v8144 = vpop.f32.mrf.mxu0
    %v8145 = vadd.f32 %v7956, %v8144
    %8146 = vmatmul.bf16.gmra.mxu0 %v5367
    %v8147 = vpop.f32.mrf.mxu0
    %v8148 = vadd.f32 %v7959, %v8147
    %v8149 = vpop.f32.mrf.mxu0
    %v8150 = vadd.f32 %v7961, %v8149
    %8151 = vmatmul.bf16.gmra.mxu0 %v5370
    %v8152 = vpop.f32.mrf.mxu0
    %v8153 = vadd.f32 %v7964, %v8152
    %v8154 = vpop.f32.mrf.mxu0
    %v8155 = vadd.f32 %v7966, %v8154
    %8156 = vmatmul.bf16.gmra.mxu0 %v5373
    %v8157 = vpop.f32.mrf.mxu0
    %v8158 = vadd.f32 %v7969, %v8157
    %v8159 = vpop.f32.mrf.mxu0
    %v8160 = vadd.f32 %v7971, %v8159
    %8161 = vmatmul.bf16.gmra.mxu0 %v5376
    %v8162 = vpop.f32.mrf.mxu0
    %v8163 = vadd.f32 %v7974, %v8162
    %v8164 = vpop.f32.mrf.mxu0
    %v8165 = vadd.f32 %v7976, %v8164
    %8166 = vmatmul.bf16.gmra.mxu0 %v5379
    %v8167 = vpop.f32.mrf.mxu0
    %v8168 = vadd.f32 %v7979, %v8167
    %v8169 = vpop.f32.mrf.mxu0
    %v8170 = vadd.f32 %v7981, %v8169
    %8171 = vmatmul.bf16.gmra.mxu0 %v5382
    %v8172 = vpop.f32.mrf.mxu0
    %v8173 = vadd.f32 %v7984, %v8172
    %v8174 = vpop.f32.mrf.mxu0
    %v8175 = vadd.f32 %v7986, %v8174
    %8176 = vmatmul.bf16.gmra.mxu0 %v5385
    %v8177 = vpop.f32.mrf.mxu0
    %v8178 = vadd.f32 %v7989, %v8177
    %v8179 = vpop.f32.mrf.mxu0
    %v8180 = vadd.f32 %v7991, %v8179
    %8181 = vmatmul.bf16.gmra.mxu0 %v5388
    %v8182 = vpop.f32.mrf.mxu0
    %v8183 = vadd.f32 %v7994, %v8182
    %v8184 = vpop.f32.mrf.mxu0
    %v8185 = vadd.f32 %v7996, %v8184
    %8186 = vmatmul.bf16.gmra.mxu0 %v5391
    %v8187 = vpop.f32.mrf.mxu0
    %v8188 = vadd.f32 %v7999, %v8187
    %v8189 = vpop.f32.mrf.mxu0
    %v8190 = vadd.f32 %v8001, %v8189
    %8191 = vmatmul.bf16.gmra.mxu0 %v5394
    %v8192 = vpop.f32.mrf.mxu0
    %v8193 = vadd.f32 %v8004, %v8192
    %v8194 = vpop.f32.mrf.mxu0
    %v8195 = vadd.f32 %v8006, %v8194
    %8196 = vmatmul.bf16.gmra.mxu0 %v5397
    %v8197 = vpop.f32.mrf.mxu0
    %v8198 = vadd.f32 %v8009, %v8197
    %v8199 = vpop.f32.mrf.mxu0
    %v8200 = vadd.f32 %v8011, %v8199
    %8201 = vmatmul.bf16.gmra.mxu0 %v5400
    %v8202 = vpop.f32.mrf.mxu0
    %v8203 = vadd.f32 %v8014, %v8202
    %v8204 = vpop.f32.mrf.mxu0
    %v8205 = vadd.f32 %v8016, %v8204
    %8206 = vmatmul.bf16.gmra.mxu0 %v5403
    %v8207 = vpop.f32.mrf.mxu0
    %v8208 = vadd.f32 %v8019, %v8207
    %v8209 = vpop.f32.mrf.mxu0
    %v8210 = vadd.f32 %v8021, %v8209
    %8211 = vmatmul.bf16.gmra.mxu0 %v5406
    %v8212 = vpop.f32.mrf.mxu0
    %v8213 = vadd.f32 %v8024, %v8212
    %v8214 = vpop.f32.mrf.mxu0
    %v8215 = vadd.f32 %v8026, %v8214
    %8216 = vmatmul.bf16.gmra.mxu0 %v5409
    %v8217 = vpop.f32.mrf.mxu0
    %v8218 = vadd.f32 %v8029, %v8217
    %v8219 = vpop.f32.mrf.mxu0
    %v8220 = vadd.f32 %v8031, %v8219
    %8221 = vmatmul.bf16.gmra.mxu0 %v5412
    %v8222 = vpop.f32.mrf.mxu0
    %v8223 = vadd.f32 %v8034, %v8222
    %v8224 = vpop.f32.mrf.mxu0
    %v8225 = vadd.f32 %v8036, %v8224
    %8226 = vmatmul.bf16.gmra.mxu0 %v5415
    %v8227 = vpop.f32.mrf.mxu0
    %v8228 = vadd.f32 %v8039, %v8227
    %v8229 = vpop.f32.mrf.mxu0
    %v8230 = vadd.f32 %v8041, %v8229
    %8231 = vmatmul.bf16.gmra.mxu0 %v5418
    %v8232 = vpop.f32.mrf.mxu0
    %v8233 = vadd.f32 %v8044, %v8232
    %v8234 = vpop.f32.mrf.mxu0
    %v8235 = vadd.f32 %v8046, %v8234
    %8236 = vmatmul.bf16.gmra.mxu0 %v5421
    %v8237 = vpop.f32.mrf.mxu0
    %v8238 = vadd.f32 %v8049, %v8237
    %v8239 = vpop.f32.mrf.mxu0
    %v8240 = vadd.f32 %v8051, %v8239
    %8241 = vmatmul.bf16.gmra.mxu0 %v5424
    %v8242 = vpop.f32.mrf.mxu0
    %v8243 = vadd.f32 %v8054, %v8242
    %v8244 = vpop.f32.mrf.mxu0
    %v8245 = vadd.f32 %v8056, %v8244
    %8246 = vmatmul.bf16.gmra.mxu0 %v5427
    %v8247 = vpop.f32.mrf.mxu0
    %v8248 = vadd.f32 %v8059, %v8247
    %v8249 = vpop.f32.mrf.mxu0
    %v8250 = vadd.f32 %v8061, %v8249
    %8251 = vmatmul.bf16.gmra.mxu0 %v5430
    %v8252 = vpop.f32.mrf.mxu0
    %v8253 = vadd.f32 %v8064, %v8252
    %v8254 = vpop.f32.mrf.mxu0
    %v8255 = vadd.f32 %v8066, %v8254
    %8256 = vmatmul.bf16.gmra.mxu0 %v5433
    %v8257 = vpop.f32.mrf.mxu0
    %v8258 = vadd.f32 %v8069, %v8257
    %v8259 = vpop.f32.mrf.mxu0
    %v8260 = vadd.f32 %v8071, %v8259
    %8261 = vmatmul.bf16.gmra.mxu0 %v5436
    %v8262 = vpop.f32.mrf.mxu0
    %v8263 = vadd.f32 %v8074, %v8262
    %v8264 = vpop.f32.mrf.mxu0
    %v8265 = vadd.f32 %v8076, %v8264
    %8266 = vmatmul.bf16.gmra.mxu0 %v5439
    %v8267 = vpop.f32.mrf.mxu0
    %v8268 = vadd.f32 %v8079, %v8267
    %v8269 = vpop.f32.mrf.mxu0
    %v8270 = vadd.f32 %v8081, %v8269
    %8271 = vmatmul.bf16.gmra.mxu0 %v5442
    %v8272 = vpop.f32.mrf.mxu0
    %v8273 = vadd.f32 %v8084, %v8272
    %v8274 = vpop.f32.mrf.mxu0
    %v8275 = vadd.f32 %v8086, %v8274
    %8276 = vmatmul.bf16.gmra.mxu0 %v5445
    %v8277 = vpop.f32.mrf.mxu0
    %v8278 = vadd.f32 %v8089, %v8277
    %v8279 = vpop.f32.mrf.mxu0
    %v8280 = vadd.f32 %v8091, %v8279
    %8281 = vdwg.mxu0
    %8282 = vmatpush.bf16.msra.mxu0 %v2311
    %8283 = vmatpush.bf16.msra.mxu0 %v2309
    %8284 = vmatpush.bf16.msra.mxu0 %v2307
    %8285 = vmatpush.bf16.msra.mxu0 %v2305
    %8286 = vmatpush.bf16.msra.mxu0 %v2303
    %8287 = vmatpush.bf16.msra.mxu0 %v2301
    %8288 = vmatpush.bf16.msra.mxu0 %v2299
    %8289 = vmatpush.bf16.msra.mxu0 %v2297
    %8290 = vmatmul.bf16.gmra.mxu0 %v5015
    %v8291 = vpop.f32.mrf.mxu0
    %v8292 = vadd.f32 0.0, %v8291
    %v8293 = vpop.f32.mrf.mxu0
    %v8294 = vadd.f32 0.0, %v8293
    %8295 = vmatmul.bf16.gmra.mxu0 %v5020
    %v8296 = vpop.f32.mrf.mxu0
    %v8297 = vadd.f32 0.0, %v8296
    %v8298 = vpop.f32.mrf.mxu0
    %v8299 = vadd.f32 0.0, %v8298
    %8300 = vmatmul.bf16.gmra.mxu0 %v5025
    %v8301 = vpop.f32.mrf.mxu0
    %v8302 = vadd.f32 0.0, %v8301
    %v8303 = vpop.f32.mrf.mxu0
    %v8304 = vadd.f32 0.0, %v8303
    %8305 = vmatmul.bf16.gmra.mxu0 %v5030
    %v8306 = vpop.f32.mrf.mxu0
    %v8307 = vadd.f32 0.0, %v8306
    %v8308 = vpop.f32.mrf.mxu0
    %v8309 = vadd.f32 0.0, %v8308
    %8310 = vmatmul.bf16.gmra.mxu0 %v5035
    %v8311 = vpop.f32.mrf.mxu0
    %v8312 = vadd.f32 0.0, %v8311
    %v8313 = vpop.f32.mrf.mxu0
    %v8314 = vadd.f32 0.0, %v8313
    %8315 = vmatmul.bf16.gmra.mxu0 %v5040
    %v8316 = vpop.f32.mrf.mxu0
    %v8317 = vadd.f32 0.0, %v8316
    %v8318 = vpop.f32.mrf.mxu0
    %v8319 = vadd.f32 0.0, %v8318
    %8320 = vmatmul.bf16.gmra.mxu0 %v5045
    %v8321 = vpop.f32.mrf.mxu0
    %v8322 = vadd.f32 0.0, %v8321
    %v8323 = vpop.f32.mrf.mxu0
    %v8324 = vadd.f32 0.0, %v8323
    %8325 = vmatmul.bf16.gmra.mxu0 %v5050
    %v8326 = vpop.f32.mrf.mxu0
    %v8327 = vadd.f32 0.0, %v8326
    %v8328 = vpop.f32.mrf.mxu0
    %v8329 = vadd.f32 0.0, %v8328
    %8330 = vmatmul.bf16.gmra.mxu0 %v5055
    %v8331 = vpop.f32.mrf.mxu0
    %v8332 = vadd.f32 0.0, %v8331
    %v8333 = vpop.f32.mrf.mxu0
    %v8334 = vadd.f32 0.0, %v8333
    %8335 = vmatmul.bf16.gmra.mxu0 %v5060
    %v8336 = vpop.f32.mrf.mxu0
    %v8337 = vadd.f32 0.0, %v8336
    %v8338 = vpop.f32.mrf.mxu0
    %v8339 = vadd.f32 0.0, %v8338
    %8340 = vmatmul.bf16.gmra.mxu0 %v5065
    %v8341 = vpop.f32.mrf.mxu0
    %v8342 = vadd.f32 0.0, %v8341
    %v8343 = vpop.f32.mrf.mxu0
    %v8344 = vadd.f32 0.0, %v8343
    %8345 = vmatmul.bf16.gmra.mxu0 %v5070
    %v8346 = vpop.f32.mrf.mxu0
    %v8347 = vadd.f32 0.0, %v8346
    %v8348 = vpop.f32.mrf.mxu0
    %v8349 = vadd.f32 0.0, %v8348
    %8350 = vmatmul.bf16.gmra.mxu0 %v5075
    %v8351 = vpop.f32.mrf.mxu0
    %v8352 = vadd.f32 0.0, %v8351
    %v8353 = vpop.f32.mrf.mxu0
    %v8354 = vadd.f32 0.0, %v8353
    %8355 = vmatmul.bf16.gmra.mxu0 %v5080
    %v8356 = vpop.f32.mrf.mxu0
    %v8357 = vadd.f32 0.0, %v8356
    %v8358 = vpop.f32.mrf.mxu0
    %v8359 = vadd.f32 0.0, %v8358
    %8360 = vmatmul.bf16.gmra.mxu0 %v5085
    %v8361 = vpop.f32.mrf.mxu0
    %v8362 = vadd.f32 0.0, %v8361
    %v8363 = vpop.f32.mrf.mxu0
    %v8364 = vadd.f32 0.0, %v8363
    %8365 = vmatmul.bf16.gmra.mxu0 %v5090
    %v8366 = vpop.f32.mrf.mxu0
    %v8367 = vadd.f32 0.0, %v8366
    %v8368 = vpop.f32.mrf.mxu0
    %v8369 = vadd.f32 0.0, %v8368
    %8370 = vmatmul.bf16.gmra.mxu0 %v5095
    %v8371 = vpop.f32.mrf.mxu0
    %v8372 = vadd.f32 0.0, %v8371
    %v8373 = vpop.f32.mrf.mxu0
    %v8374 = vadd.f32 0.0, %v8373
    %8375 = vmatmul.bf16.gmra.mxu0 %v5100
    %v8376 = vpop.f32.mrf.mxu0
    %v8377 = vadd.f32 0.0, %v8376
    %v8378 = vpop.f32.mrf.mxu0
    %v8379 = vadd.f32 0.0, %v8378
    %8380 = vmatmul.bf16.gmra.mxu0 %v5105
    %v8381 = vpop.f32.mrf.mxu0
    %v8382 = vadd.f32 0.0, %v8381
    %v8383 = vpop.f32.mrf.mxu0
    %v8384 = vadd.f32 0.0, %v8383
    %8385 = vmatmul.bf16.gmra.mxu0 %v5110
    %v8386 = vpop.f32.mrf.mxu0
    %v8387 = vadd.f32 0.0, %v8386
    %v8388 = vpop.f32.mrf.mxu0
    %v8389 = vadd.f32 0.0, %v8388
    %8390 = vmatmul.bf16.gmra.mxu0 %v5115
    %v8391 = vpop.f32.mrf.mxu0
    %v8392 = vadd.f32 0.0, %v8391
    %v8393 = vpop.f32.mrf.mxu0
    %v8394 = vadd.f32 0.0, %v8393
    %8395 = vmatmul.bf16.gmra.mxu0 %v5120
    %v8396 = vpop.f32.mrf.mxu0
    %v8397 = vadd.f32 0.0, %v8396
    %v8398 = vpop.f32.mrf.mxu0
    %v8399 = vadd.f32 0.0, %v8398
    %8400 = vmatmul.bf16.gmra.mxu0 %v5125
    %v8401 = vpop.f32.mrf.mxu0
    %v8402 = vadd.f32 0.0, %v8401
    %v8403 = vpop.f32.mrf.mxu0
    %v8404 = vadd.f32 0.0, %v8403
    %8405 = vmatmul.bf16.gmra.mxu0 %v5130
    %v8406 = vpop.f32.mrf.mxu0
    %v8407 = vadd.f32 0.0, %v8406
    %v8408 = vpop.f32.mrf.mxu0
    %v8409 = vadd.f32 0.0, %v8408
    %8410 = vmatmul.bf16.gmra.mxu0 %v5135
    %v8411 = vpop.f32.mrf.mxu0
    %v8412 = vadd.f32 0.0, %v8411
    %v8413 = vpop.f32.mrf.mxu0
    %v8414 = vadd.f32 0.0, %v8413
    %8415 = vmatmul.bf16.gmra.mxu0 %v5140
    %v8416 = vpop.f32.mrf.mxu0
    %v8417 = vadd.f32 0.0, %v8416
    %v8418 = vpop.f32.mrf.mxu0
    %v8419 = vadd.f32 0.0, %v8418
    %8420 = vmatmul.bf16.gmra.mxu0 %v5145
    %v8421 = vpop.f32.mrf.mxu0
    %v8422 = vadd.f32 0.0, %v8421
    %v8423 = vpop.f32.mrf.mxu0
    %v8424 = vadd.f32 0.0, %v8423
    %8425 = vmatmul.bf16.gmra.mxu0 %v5150
    %v8426 = vpop.f32.mrf.mxu0
    %v8427 = vadd.f32 0.0, %v8426
    %v8428 = vpop.f32.mrf.mxu0
    %v8429 = vadd.f32 0.0, %v8428
    %8430 = vmatmul.bf16.gmra.mxu0 %v5155
    %v8431 = vpop.f32.mrf.mxu0
    %v8432 = vadd.f32 0.0, %v8431
    %v8433 = vpop.f32.mrf.mxu0
    %v8434 = vadd.f32 0.0, %v8433
    %8435 = vmatmul.bf16.gmra.mxu0 %v5160
    %v8436 = vpop.f32.mrf.mxu0
    %v8437 = vadd.f32 0.0, %v8436
    %v8438 = vpop.f32.mrf.mxu0
    %v8439 = vadd.f32 0.0, %v8438
    %8440 = vmatmul.bf16.gmra.mxu0 %v5165
    %v8441 = vpop.f32.mrf.mxu0
    %v8442 = vadd.f32 0.0, %v8441
    %v8443 = vpop.f32.mrf.mxu0
    %v8444 = vadd.f32 0.0, %v8443
    %8445 = vmatmul.bf16.gmra.mxu0 %v5170
    %v8446 = vpop.f32.mrf.mxu0
    %v8447 = vadd.f32 0.0, %v8446
    %v8448 = vpop.f32.mrf.mxu0
    %v8449 = vadd.f32 0.0, %v8448
    %8450 = vmatmul.bf16.gmra.mxu0 %v5175
    %v8451 = vpop.f32.mrf.mxu0
    %v8452 = vadd.f32 0.0, %v8451
    %v8453 = vpop.f32.mrf.mxu0
    %v8454 = vadd.f32 0.0, %v8453
    %8455 = vmatmul.bf16.gmra.mxu0 %v5180
    %v8456 = vpop.f32.mrf.mxu0
    %v8457 = vadd.f32 0.0, %v8456
    %v8458 = vpop.f32.mrf.mxu0
    %v8459 = vadd.f32 0.0, %v8458
    %8460 = vmatmul.bf16.gmra.mxu0 %v5185
    %v8461 = vpop.f32.mrf.mxu0
    %v8462 = vadd.f32 0.0, %v8461
    %v8463 = vpop.f32.mrf.mxu0
    %v8464 = vadd.f32 0.0, %v8463
    %8465 = vmatmul.bf16.gmra.mxu0 %v5190
    %v8466 = vpop.f32.mrf.mxu0
    %v8467 = vadd.f32 0.0, %v8466
    %v8468 = vpop.f32.mrf.mxu0
    %v8469 = vadd.f32 0.0, %v8468
    %8470 = vdwg.mxu0
    %8471 = vmatpush.bf16.msra.mxu0 %v2327
    %8472 = vmatpush.bf16.msra.mxu0 %v2325
    %8473 = vmatpush.bf16.msra.mxu0 %v2323
    %8474 = vmatpush.bf16.msra.mxu0 %v2321
    %8475 = vmatpush.bf16.msra.mxu0 %v2319
    %8476 = vmatpush.bf16.msra.mxu0 %v2317
    %8477 = vmatpush.bf16.msra.mxu0 %v2315
    %8478 = vmatpush.bf16.msra.mxu0 %v2313
    %8479 = vmatmul.bf16.gmra.mxu0 %v5016
    %v8480 = vpop.f32.mrf.mxu0
    %v8481 = vadd.f32 %v8292, %v8480
    %v8482 = vpop.f32.mrf.mxu0
    %v8483 = vadd.f32 %v8294, %v8482
    %8484 = vmatmul.bf16.gmra.mxu0 %v5021
    %v8485 = vpop.f32.mrf.mxu0
    %v8486 = vadd.f32 %v8297, %v8485
    %v8487 = vpop.f32.mrf.mxu0
    %v8488 = vadd.f32 %v8299, %v8487
    %8489 = vmatmul.bf16.gmra.mxu0 %v5026
    %v8490 = vpop.f32.mrf.mxu0
    %v8491 = vadd.f32 %v8302, %v8490
    %v8492 = vpop.f32.mrf.mxu0
    %v8493 = vadd.f32 %v8304, %v8492
    %8494 = vmatmul.bf16.gmra.mxu0 %v5031
    %v8495 = vpop.f32.mrf.mxu0
    %v8496 = vadd.f32 %v8307, %v8495
    %v8497 = vpop.f32.mrf.mxu0
    %v8498 = vadd.f32 %v8309, %v8497
    %8499 = vmatmul.bf16.gmra.mxu0 %v5036
    %v8500 = vpop.f32.mrf.mxu0
    %v8501 = vadd.f32 %v8312, %v8500
    %v8502 = vpop.f32.mrf.mxu0
    %v8503 = vadd.f32 %v8314, %v8502
    %8504 = vmatmul.bf16.gmra.mxu0 %v5041
    %v8505 = vpop.f32.mrf.mxu0
    %v8506 = vadd.f32 %v8317, %v8505
    %v8507 = vpop.f32.mrf.mxu0
    %v8508 = vadd.f32 %v8319, %v8507
    %8509 = vmatmul.bf16.gmra.mxu0 %v5046
    %v8510 = vpop.f32.mrf.mxu0
    %v8511 = vadd.f32 %v8322, %v8510
    %v8512 = vpop.f32.mrf.mxu0
    %v8513 = vadd.f32 %v8324, %v8512
    %8514 = vmatmul.bf16.gmra.mxu0 %v5051
    %v8515 = vpop.f32.mrf.mxu0
    %v8516 = vadd.f32 %v8327, %v8515
    %v8517 = vpop.f32.mrf.mxu0
    %v8518 = vadd.f32 %v8329, %v8517
    %8519 = vmatmul.bf16.gmra.mxu0 %v5056
    %v8520 = vpop.f32.mrf.mxu0
    %v8521 = vadd.f32 %v8332, %v8520
    %v8522 = vpop.f32.mrf.mxu0
    %v8523 = vadd.f32 %v8334, %v8522
    %8524 = vmatmul.bf16.gmra.mxu0 %v5061
    %v8525 = vpop.f32.mrf.mxu0
    %v8526 = vadd.f32 %v8337, %v8525
    %v8527 = vpop.f32.mrf.mxu0
    %v8528 = vadd.f32 %v8339, %v8527
    %8529 = vmatmul.bf16.gmra.mxu0 %v5066
    %v8530 = vpop.f32.mrf.mxu0
    %v8531 = vadd.f32 %v8342, %v8530
    %v8532 = vpop.f32.mrf.mxu0
    %v8533 = vadd.f32 %v8344, %v8532
    %8534 = vmatmul.bf16.gmra.mxu0 %v5071
    %v8535 = vpop.f32.mrf.mxu0
    %v8536 = vadd.f32 %v8347, %v8535
    %v8537 = vpop.f32.mrf.mxu0
    %v8538 = vadd.f32 %v8349, %v8537
    %8539 = vmatmul.bf16.gmra.mxu0 %v5076
    %v8540 = vpop.f32.mrf.mxu0
    %v8541 = vadd.f32 %v8352, %v8540
    %v8542 = vpop.f32.mrf.mxu0
    %v8543 = vadd.f32 %v8354, %v8542
    %8544 = vmatmul.bf16.gmra.mxu0 %v5081
    %v8545 = vpop.f32.mrf.mxu0
    %v8546 = vadd.f32 %v8357, %v8545
    %v8547 = vpop.f32.mrf.mxu0
    %v8548 = vadd.f32 %v8359, %v8547
    %8549 = vmatmul.bf16.gmra.mxu0 %v5086
    %v8550 = vpop.f32.mrf.mxu0
    %v8551 = vadd.f32 %v8362, %v8550
    %v8552 = vpop.f32.mrf.mxu0
    %v8553 = vadd.f32 %v8364, %v8552
    %8554 = vmatmul.bf16.gmra.mxu0 %v5091
    %v8555 = vpop.f32.mrf.mxu0
    %v8556 = vadd.f32 %v8367, %v8555
    %v8557 = vpop.f32.mrf.mxu0
    %v8558 = vadd.f32 %v8369, %v8557
    %8559 = vmatmul.bf16.gmra.mxu0 %v5096
    %v8560 = vpop.f32.mrf.mxu0
    %v8561 = vadd.f32 %v8372, %v8560
    %v8562 = vpop.f32.mrf.mxu0
    %v8563 = vadd.f32 %v8374, %v8562
    %8564 = vmatmul.bf16.gmra.mxu0 %v5101
    %v8565 = vpop.f32.mrf.mxu0
    %v8566 = vadd.f32 %v8377, %v8565
    %v8567 = vpop.f32.mrf.mxu0
    %v8568 = vadd.f32 %v8379, %v8567
    %8569 = vmatmul.bf16.gmra.mxu0 %v5106
    %v8570 = vpop.f32.mrf.mxu0
    %v8571 = vadd.f32 %v8382, %v8570
    %v8572 = vpop.f32.mrf.mxu0
    %v8573 = vadd.f32 %v8384, %v8572
    %8574 = vmatmul.bf16.gmra.mxu0 %v5111
    %v8575 = vpop.f32.mrf.mxu0
    %v8576 = vadd.f32 %v8387, %v8575
    %v8577 = vpop.f32.mrf.mxu0
    %v8578 = vadd.f32 %v8389, %v8577
    %8579 = vmatmul.bf16.gmra.mxu0 %v5116
    %v8580 = vpop.f32.mrf.mxu0
    %v8581 = vadd.f32 %v8392, %v8580
    %v8582 = vpop.f32.mrf.mxu0
    %v8583 = vadd.f32 %v8394, %v8582
    %8584 = vmatmul.bf16.gmra.mxu0 %v5121
    %v8585 = vpop.f32.mrf.mxu0
    %v8586 = vadd.f32 %v8397, %v8585
    %v8587 = vpop.f32.mrf.mxu0
    %v8588 = vadd.f32 %v8399, %v8587
    %8589 = vmatmul.bf16.gmra.mxu0 %v5126
    %v8590 = vpop.f32.mrf.mxu0
    %v8591 = vadd.f32 %v8402, %v8590
    %v8592 = vpop.f32.mrf.mxu0
    %v8593 = vadd.f32 %v8404, %v8592
    %8594 = vmatmul.bf16.gmra.mxu0 %v5131
    %v8595 = vpop.f32.mrf.mxu0
    %v8596 = vadd.f32 %v8407, %v8595
    %v8597 = vpop.f32.mrf.mxu0
    %v8598 = vadd.f32 %v8409, %v8597
    %8599 = vmatmul.bf16.gmra.mxu0 %v5136
    %v8600 = vpop.f32.mrf.mxu0
    %v8601 = vadd.f32 %v8412, %v8600
    %v8602 = vpop.f32.mrf.mxu0
    %v8603 = vadd.f32 %v8414, %v8602
    %8604 = vmatmul.bf16.gmra.mxu0 %v5141
    %v8605 = vpop.f32.mrf.mxu0
    %v8606 = vadd.f32 %v8417, %v8605
    %v8607 = vpop.f32.mrf.mxu0
    %v8608 = vadd.f32 %v8419, %v8607
    %8609 = vmatmul.bf16.gmra.mxu0 %v5146
    %v8610 = vpop.f32.mrf.mxu0
    %v8611 = vadd.f32 %v8422, %v8610
    %v8612 = vpop.f32.mrf.mxu0
    %v8613 = vadd.f32 %v8424, %v8612
    %8614 = vmatmul.bf16.gmra.mxu0 %v5151
    %v8615 = vpop.f32.mrf.mxu0
    %v8616 = vadd.f32 %v8427, %v8615
    %v8617 = vpop.f32.mrf.mxu0
    %v8618 = vadd.f32 %v8429, %v8617
    %8619 = vmatmul.bf16.gmra.mxu0 %v5156
    %v8620 = vpop.f32.mrf.mxu0
    %v8621 = vadd.f32 %v8432, %v8620
    %v8622 = vpop.f32.mrf.mxu0
    %v8623 = vadd.f32 %v8434, %v8622
    %8624 = vmatmul.bf16.gmra.mxu0 %v5161
    %v8625 = vpop.f32.mrf.mxu0
    %v8626 = vadd.f32 %v8437, %v8625
    %v8627 = vpop.f32.mrf.mxu0
    %v8628 = vadd.f32 %v8439, %v8627
    %8629 = vmatmul.bf16.gmra.mxu0 %v5166
    %v8630 = vpop.f32.mrf.mxu0
    %v8631 = vadd.f32 %v8442, %v8630
    %v8632 = vpop.f32.mrf.mxu0
    %v8633 = vadd.f32 %v8444, %v8632
    %8634 = vmatmul.bf16.gmra.mxu0 %v5171
    %v8635 = vpop.f32.mrf.mxu0
    %v8636 = vadd.f32 %v8447, %v8635
    %v8637 = vpop.f32.mrf.mxu0
    %v8638 = vadd.f32 %v8449, %v8637
    %8639 = vmatmul.bf16.gmra.mxu0 %v5176
    %v8640 = vpop.f32.mrf.mxu0
    %v8641 = vadd.f32 %v8452, %v8640
    %v8642 = vpop.f32.mrf.mxu0
    %v8643 = vadd.f32 %v8454, %v8642
    %8644 = vmatmul.bf16.gmra.mxu0 %v5181
    %v8645 = vpop.f32.mrf.mxu0
    %v8646 = vadd.f32 %v8457, %v8645
    %v8647 = vpop.f32.mrf.mxu0
    %v8648 = vadd.f32 %v8459, %v8647
    %8649 = vmatmul.bf16.gmra.mxu0 %v5186
    %v8650 = vpop.f32.mrf.mxu0
    %v8651 = vadd.f32 %v8462, %v8650
    %v8652 = vpop.f32.mrf.mxu0
    %v8653 = vadd.f32 %v8464, %v8652
    %8654 = vmatmul.bf16.gmra.mxu0 %v5191
    %v8655 = vpop.f32.mrf.mxu0
    %v8656 = vadd.f32 %v8467, %v8655
    %v8657 = vpop.f32.mrf.mxu0
    %v8658 = vadd.f32 %v8469, %v8657
    %8659 = vdwg.mxu0
    %8660 = vmatpush.bf16.msra.mxu0 %v2343
    %8661 = vmatpush.bf16.msra.mxu0 %v2341
    %8662 = vmatpush.bf16.msra.mxu0 %v2339
    %8663 = vmatpush.bf16.msra.mxu0 %v2337
    %8664 = vmatpush.bf16.msra.mxu0 %v2335
    %8665 = vmatpush.bf16.msra.mxu0 %v2333
    %8666 = vmatpush.bf16.msra.mxu0 %v2331
    %8667 = vmatpush.bf16.msra.mxu0 %v2329
    %8668 = vmatmul.bf16.gmra.mxu0 %v5017
    %v8669 = vpop.f32.mrf.mxu0
    %v8670 = vadd.f32 %v8481, %v8669
    %v8671 = vpop.f32.mrf.mxu0
    %v8672 = vadd.f32 %v8483, %v8671
    %8673 = vmatmul.bf16.gmra.mxu0 %v5022
    %v8674 = vpop.f32.mrf.mxu0
    %v8675 = vadd.f32 %v8486, %v8674
    %v8676 = vpop.f32.mrf.mxu0
    %v8677 = vadd.f32 %v8488, %v8676
    %8678 = vmatmul.bf16.gmra.mxu0 %v5027
    %v8679 = vpop.f32.mrf.mxu0
    %v8680 = vadd.f32 %v8491, %v8679
    %v8681 = vpop.f32.mrf.mxu0
    %v8682 = vadd.f32 %v8493, %v8681
    %8683 = vmatmul.bf16.gmra.mxu0 %v5032
    %v8684 = vpop.f32.mrf.mxu0
    %v8685 = vadd.f32 %v8496, %v8684
    %v8686 = vpop.f32.mrf.mxu0
    %v8687 = vadd.f32 %v8498, %v8686
    %8688 = vmatmul.bf16.gmra.mxu0 %v5037
    %v8689 = vpop.f32.mrf.mxu0
    %v8690 = vadd.f32 %v8501, %v8689
    %v8691 = vpop.f32.mrf.mxu0
    %v8692 = vadd.f32 %v8503, %v8691
    %8693 = vmatmul.bf16.gmra.mxu0 %v5042
    %v8694 = vpop.f32.mrf.mxu0
    %v8695 = vadd.f32 %v8506, %v8694
    %v8696 = vpop.f32.mrf.mxu0
    %v8697 = vadd.f32 %v8508, %v8696
    %8698 = vmatmul.bf16.gmra.mxu0 %v5047
    %v8699 = vpop.f32.mrf.mxu0
    %v8700 = vadd.f32 %v8511, %v8699
    %v8701 = vpop.f32.mrf.mxu0
    %v8702 = vadd.f32 %v8513, %v8701
    %8703 = vmatmul.bf16.gmra.mxu0 %v5052
    %v8704 = vpop.f32.mrf.mxu0
    %v8705 = vadd.f32 %v8516, %v8704
    %v8706 = vpop.f32.mrf.mxu0
    %v8707 = vadd.f32 %v8518, %v8706
    %8708 = vmatmul.bf16.gmra.mxu0 %v5057
    %v8709 = vpop.f32.mrf.mxu0
    %v8710 = vadd.f32 %v8521, %v8709
    %v8711 = vpop.f32.mrf.mxu0
    %v8712 = vadd.f32 %v8523, %v8711
    %8713 = vmatmul.bf16.gmra.mxu0 %v5062
    %v8714 = vpop.f32.mrf.mxu0
    %v8715 = vadd.f32 %v8526, %v8714
    %v8716 = vpop.f32.mrf.mxu0
    %v8717 = vadd.f32 %v8528, %v8716
    %8718 = vmatmul.bf16.gmra.mxu0 %v5067
    %v8719 = vpop.f32.mrf.mxu0
    %v8720 = vadd.f32 %v8531, %v8719
    %v8721 = vpop.f32.mrf.mxu0
    %v8722 = vadd.f32 %v8533, %v8721
    %8723 = vmatmul.bf16.gmra.mxu0 %v5072
    %v8724 = vpop.f32.mrf.mxu0
    %v8725 = vadd.f32 %v8536, %v8724
    %v8726 = vpop.f32.mrf.mxu0
    %v8727 = vadd.f32 %v8538, %v8726
    %8728 = vmatmul.bf16.gmra.mxu0 %v5077
    %v8729 = vpop.f32.mrf.mxu0
    %v8730 = vadd.f32 %v8541, %v8729
    %v8731 = vpop.f32.mrf.mxu0
    %v8732 = vadd.f32 %v8543, %v8731
    %8733 = vmatmul.bf16.gmra.mxu0 %v5082
    %v8734 = vpop.f32.mrf.mxu0
    %v8735 = vadd.f32 %v8546, %v8734
    %v8736 = vpop.f32.mrf.mxu0
    %v8737 = vadd.f32 %v8548, %v8736
    %8738 = vmatmul.bf16.gmra.mxu0 %v5087
    %v8739 = vpop.f32.mrf.mxu0
    %v8740 = vadd.f32 %v8551, %v8739
    %v8741 = vpop.f32.mrf.mxu0
    %v8742 = vadd.f32 %v8553, %v8741
    %8743 = vmatmul.bf16.gmra.mxu0 %v5092
    %v8744 = vpop.f32.mrf.mxu0
    %v8745 = vadd.f32 %v8556, %v8744
    %v8746 = vpop.f32.mrf.mxu0
    %v8747 = vadd.f32 %v8558, %v8746
    %8748 = vmatmul.bf16.gmra.mxu0 %v5097
    %v8749 = vpop.f32.mrf.mxu0
    %v8750 = vadd.f32 %v8561, %v8749
    %v8751 = vpop.f32.mrf.mxu0
    %v8752 = vadd.f32 %v8563, %v8751
    %8753 = vmatmul.bf16.gmra.mxu0 %v5102
    %v8754 = vpop.f32.mrf.mxu0
    %v8755 = vadd.f32 %v8566, %v8754
    %v8756 = vpop.f32.mrf.mxu0
    %v8757 = vadd.f32 %v8568, %v8756
    %8758 = vmatmul.bf16.gmra.mxu0 %v5107
    %v8759 = vpop.f32.mrf.mxu0
    %v8760 = vadd.f32 %v8571, %v8759
    %v8761 = vpop.f32.mrf.mxu0
    %v8762 = vadd.f32 %v8573, %v8761
    %8763 = vmatmul.bf16.gmra.mxu0 %v5112
    %v8764 = vpop.f32.mrf.mxu0
    %v8765 = vadd.f32 %v8576, %v8764
    %v8766 = vpop.f32.mrf.mxu0
    %v8767 = vadd.f32 %v8578, %v8766
    %8768 = vmatmul.bf16.gmra.mxu0 %v5117
    %v8769 = vpop.f32.mrf.mxu0
    %v8770 = vadd.f32 %v8581, %v8769
    %v8771 = vpop.f32.mrf.mxu0
    %v8772 = vadd.f32 %v8583, %v8771
    %8773 = vmatmul.bf16.gmra.mxu0 %v5122
    %v8774 = vpop.f32.mrf.mxu0
    %v8775 = vadd.f32 %v8586, %v8774
    %v8776 = vpop.f32.mrf.mxu0
    %v8777 = vadd.f32 %v8588, %v8776
    %8778 = vmatmul.bf16.gmra.mxu0 %v5127
    %v8779 = vpop.f32.mrf.mxu0
    %v8780 = vadd.f32 %v8591, %v8779
    %v8781 = vpop.f32.mrf.mxu0
    %v8782 = vadd.f32 %v8593, %v8781
    %8783 = vmatmul.bf16.gmra.mxu0 %v5132
    %v8784 = vpop.f32.mrf.mxu0
    %v8785 = vadd.f32 %v8596, %v8784
    %v8786 = vpop.f32.mrf.mxu0
    %v8787 = vadd.f32 %v8598, %v8786
    %8788 = vmatmul.bf16.gmra.mxu0 %v5137
    %v8789 = vpop.f32.mrf.mxu0
    %v8790 = vadd.f32 %v8601, %v8789
    %v8791 = vpop.f32.mrf.mxu0
    %v8792 = vadd.f32 %v8603, %v8791
    %8793 = vmatmul.bf16.gmra.mxu0 %v5142
    %v8794 = vpop.f32.mrf.mxu0
    %v8795 = vadd.f32 %v8606, %v8794
    %v8796 = vpop.f32.mrf.mxu0
    %v8797 = vadd.f32 %v8608, %v8796
    %8798 = vmatmul.bf16.gmra.mxu0 %v5147
    %v8799 = vpop.f32.mrf.mxu0
    %v8800 = vadd.f32 %v8611, %v8799
    %v8801 = vpop.f32.mrf.mxu0
    %v8802 = vadd.f32 %v8613, %v8801
    %8803 = vmatmul.bf16.gmra.mxu0 %v5152
    %v8804 = vpop.f32.mrf.mxu0
    %v8805 = vadd.f32 %v8616, %v8804
    %v8806 = vpop.f32.mrf.mxu0
    %v8807 = vadd.f32 %v8618, %v8806
    %8808 = vmatmul.bf16.gmra.mxu0 %v5157
    %v8809 = vpop.f32.mrf.mxu0
    %v8810 = vadd.f32 %v8621, %v8809
    %v8811 = vpop.f32.mrf.mxu0
    %v8812 = vadd.f32 %v8623, %v8811
    %8813 = vmatmul.bf16.gmra.mxu0 %v5162
    %v8814 = vpop.f32.mrf.mxu0
    %v8815 = vadd.f32 %v8626, %v8814
    %v8816 = vpop.f32.mrf.mxu0
    %v8817 = vadd.f32 %v8628, %v8816
    %8818 = vmatmul.bf16.gmra.mxu0 %v5167
    %v8819 = vpop.f32.mrf.mxu0
    %v8820 = vadd.f32 %v8631, %v8819
    %v8821 = vpop.f32.mrf.mxu0
    %v8822 = vadd.f32 %v8633, %v8821
    %8823 = vmatmul.bf16.gmra.mxu0 %v5172
    %v8824 = vpop.f32.mrf.mxu0
    %v8825 = vadd.f32 %v8636, %v8824
    %v8826 = vpop.f32.mrf.mxu0
    %v8827 = vadd.f32 %v8638, %v8826
    %8828 = vmatmul.bf16.gmra.mxu0 %v5177
    %v8829 = vpop.f32.mrf.mxu0
    %v8830 = vadd.f32 %v8641, %v8829
    %v8831 = vpop.f32.mrf.mxu0
    %v8832 = vadd.f32 %v8643, %v8831
    %8833 = vmatmul.bf16.gmra.mxu0 %v5182
    %v8834 = vpop.f32.mrf.mxu0
    %v8835 = vadd.f32 %v8646, %v8834
    %v8836 = vpop.f32.mrf.mxu0
    %v8837 = vadd.f32 %v8648, %v8836
    %8838 = vmatmul.bf16.gmra.mxu0 %v5187
    %v8839 = vpop.f32.mrf.mxu0
    %v8840 = vadd.f32 %v8651, %v8839
    %v8841 = vpop.f32.mrf.mxu0
    %v8842 = vadd.f32 %v8653, %v8841
    %8843 = vmatmul.bf16.gmra.mxu0 %v5192
    %v8844 = vpop.f32.mrf.mxu0
    %v8845 = vadd.f32 %v8656, %v8844
    %v8846 = vpop.f32.mrf.mxu0
    %v8847 = vadd.f32 %v8658, %v8846
    %8848 = vdwg.mxu0
    %8849 = vmatpush.bf16.msra.mxu0 %v2359
    %8850 = vmatpush.bf16.msra.mxu0 %v2357
    %8851 = vmatpush.bf16.msra.mxu0 %v2355
    %8852 = vmatpush.bf16.msra.mxu0 %v2353
    %8853 = vmatpush.bf16.msra.mxu0 %v2351
    %8854 = vmatpush.bf16.msra.mxu0 %v2349
    %8855 = vmatpush.bf16.msra.mxu0 %v2347
    %8856 = vmatpush.bf16.msra.mxu0 %v2345
    %8857 = vmatmul.bf16.gmra.mxu0 %v5018
    %v8858 = vpop.f32.mrf.mxu0
    %v8859 = vadd.f32 %v8670, %v8858
    %v8860 = vpop.f32.mrf.mxu0
    %v8861 = vadd.f32 %v8672, %v8860
    %8862 = vmatmul.bf16.gmra.mxu0 %v5023
    %v8863 = vpop.f32.mrf.mxu0
    %v8864 = vadd.f32 %v8675, %v8863
    %v8865 = vpop.f32.mrf.mxu0
    %v8866 = vadd.f32 %v8677, %v8865
    %8867 = vmatmul.bf16.gmra.mxu0 %v5028
    %v8868 = vpop.f32.mrf.mxu0
    %v8869 = vadd.f32 %v8680, %v8868
    %v8870 = vpop.f32.mrf.mxu0
    %v8871 = vadd.f32 %v8682, %v8870
    %8872 = vmatmul.bf16.gmra.mxu0 %v5033
    %v8873 = vpop.f32.mrf.mxu0
    %v8874 = vadd.f32 %v8685, %v8873
    %v8875 = vpop.f32.mrf.mxu0
    %v8876 = vadd.f32 %v8687, %v8875
    %8877 = vmatmul.bf16.gmra.mxu0 %v5038
    %v8878 = vpop.f32.mrf.mxu0
    %v8879 = vadd.f32 %v8690, %v8878
    %v8880 = vpop.f32.mrf.mxu0
    %v8881 = vadd.f32 %v8692, %v8880
    %8882 = vmatmul.bf16.gmra.mxu0 %v5043
    %v8883 = vpop.f32.mrf.mxu0
    %v8884 = vadd.f32 %v8695, %v8883
    %v8885 = vpop.f32.mrf.mxu0
    %v8886 = vadd.f32 %v8697, %v8885
    %8887 = vmatmul.bf16.gmra.mxu0 %v5048
    %v8888 = vpop.f32.mrf.mxu0
    %v8889 = vadd.f32 %v8700, %v8888
    %v8890 = vpop.f32.mrf.mxu0
    %v8891 = vadd.f32 %v8702, %v8890
    %8892 = vmatmul.bf16.gmra.mxu0 %v5053
    %v8893 = vpop.f32.mrf.mxu0
    %v8894 = vadd.f32 %v8705, %v8893
    %v8895 = vpop.f32.mrf.mxu0
    %v8896 = vadd.f32 %v8707, %v8895
    %8897 = vmatmul.bf16.gmra.mxu0 %v5058
    %v8898 = vpop.f32.mrf.mxu0
    %v8899 = vadd.f32 %v8710, %v8898
    %v8900 = vpop.f32.mrf.mxu0
    %v8901 = vadd.f32 %v8712, %v8900
    %8902 = vmatmul.bf16.gmra.mxu0 %v5063
    %v8903 = vpop.f32.mrf.mxu0
    %v8904 = vadd.f32 %v8715, %v8903
    %v8905 = vpop.f32.mrf.mxu0
    %v8906 = vadd.f32 %v8717, %v8905
    %8907 = vmatmul.bf16.gmra.mxu0 %v5068
    %v8908 = vpop.f32.mrf.mxu0
    %v8909 = vadd.f32 %v8720, %v8908
    %v8910 = vpop.f32.mrf.mxu0
    %v8911 = vadd.f32 %v8722, %v8910
    %8912 = vmatmul.bf16.gmra.mxu0 %v5073
    %v8913 = vpop.f32.mrf.mxu0
    %v8914 = vadd.f32 %v8725, %v8913
    %v8915 = vpop.f32.mrf.mxu0
    %v8916 = vadd.f32 %v8727, %v8915
    %8917 = vmatmul.bf16.gmra.mxu0 %v5078
    %v8918 = vpop.f32.mrf.mxu0
    %v8919 = vadd.f32 %v8730, %v8918
    %v8920 = vpop.f32.mrf.mxu0
    %v8921 = vadd.f32 %v8732, %v8920
    %8922 = vmatmul.bf16.gmra.mxu0 %v5083
    %v8923 = vpop.f32.mrf.mxu0
    %v8924 = vadd.f32 %v8735, %v8923
    %v8925 = vpop.f32.mrf.mxu0
    %v8926 = vadd.f32 %v8737, %v8925
    %8927 = vmatmul.bf16.gmra.mxu0 %v5088
    %v8928 = vpop.f32.mrf.mxu0
    %v8929 = vadd.f32 %v8740, %v8928
    %v8930 = vpop.f32.mrf.mxu0
    %v8931 = vadd.f32 %v8742, %v8930
    %8932 = vmatmul.bf16.gmra.mxu0 %v5093
    %v8933 = vpop.f32.mrf.mxu0
    %v8934 = vadd.f32 %v8745, %v8933
    %v8935 = vpop.f32.mrf.mxu0
    %v8936 = vadd.f32 %v8747, %v8935
    %8937 = vmatmul.bf16.gmra.mxu0 %v5098
    %v8938 = vpop.f32.mrf.mxu0
    %v8939 = vadd.f32 %v8750, %v8938
    %v8940 = vpop.f32.mrf.mxu0
    %v8941 = vadd.f32 %v8752, %v8940
    %8942 = vmatmul.bf16.gmra.mxu0 %v5103
    %v8943 = vpop.f32.mrf.mxu0
    %v8944 = vadd.f32 %v8755, %v8943
    %v8945 = vpop.f32.mrf.mxu0
    %v8946 = vadd.f32 %v8757, %v8945
    %8947 = vmatmul.bf16.gmra.mxu0 %v5108
    %v8948 = vpop.f32.mrf.mxu0
    %v8949 = vadd.f32 %v8760, %v8948
    %v8950 = vpop.f32.mrf.mxu0
    %v8951 = vadd.f32 %v8762, %v8950
    %8952 = vmatmul.bf16.gmra.mxu0 %v5113
    %v8953 = vpop.f32.mrf.mxu0
    %v8954 = vadd.f32 %v8765, %v8953
    %v8955 = vpop.f32.mrf.mxu0
    %v8956 = vadd.f32 %v8767, %v8955
    %8957 = vmatmul.bf16.gmra.mxu0 %v5118
    %v8958 = vpop.f32.mrf.mxu0
    %v8959 = vadd.f32 %v8770, %v8958
    %v8960 = vpop.f32.mrf.mxu0
    %v8961 = vadd.f32 %v8772, %v8960
    %8962 = vmatmul.bf16.gmra.mxu0 %v5123
    %v8963 = vpop.f32.mrf.mxu0
    %v8964 = vadd.f32 %v8775, %v8963
    %v8965 = vpop.f32.mrf.mxu0
    %v8966 = vadd.f32 %v8777, %v8965
    %8967 = vmatmul.bf16.gmra.mxu0 %v5128
    %v8968 = vpop.f32.mrf.mxu0
    %v8969 = vadd.f32 %v8780, %v8968
    %v8970 = vpop.f32.mrf.mxu0
    %v8971 = vadd.f32 %v8782, %v8970
    %8972 = vmatmul.bf16.gmra.mxu0 %v5133
    %v8973 = vpop.f32.mrf.mxu0
    %v8974 = vadd.f32 %v8785, %v8973
    %v8975 = vpop.f32.mrf.mxu0
    %v8976 = vadd.f32 %v8787, %v8975
    %8977 = vmatmul.bf16.gmra.mxu0 %v5138
    %v8978 = vpop.f32.mrf.mxu0
    %v8979 = vadd.f32 %v8790, %v8978
    %v8980 = vpop.f32.mrf.mxu0
    %v8981 = vadd.f32 %v8792, %v8980
    %8982 = vmatmul.bf16.gmra.mxu0 %v5143
    %v8983 = vpop.f32.mrf.mxu0
    %v8984 = vadd.f32 %v8795, %v8983
    %v8985 = vpop.f32.mrf.mxu0
    %v8986 = vadd.f32 %v8797, %v8985
    %8987 = vmatmul.bf16.gmra.mxu0 %v5148
    %v8988 = vpop.f32.mrf.mxu0
    %v8989 = vadd.f32 %v8800, %v8988
    %v8990 = vpop.f32.mrf.mxu0
    %v8991 = vadd.f32 %v8802, %v8990
    %8992 = vmatmul.bf16.gmra.mxu0 %v5153
    %v8993 = vpop.f32.mrf.mxu0
    %v8994 = vadd.f32 %v8805, %v8993
    %v8995 = vpop.f32.mrf.mxu0
    %v8996 = vadd.f32 %v8807, %v8995
    %8997 = vmatmul.bf16.gmra.mxu0 %v5158
    %v8998 = vpop.f32.mrf.mxu0
    %v8999 = vadd.f32 %v8810, %v8998
    %v9000 = vpop.f32.mrf.mxu0
    %v9001 = vadd.f32 %v8812, %v9000
    %9002 = vmatmul.bf16.gmra.mxu0 %v5163
    %v9003 = vpop.f32.mrf.mxu0
    %v9004 = vadd.f32 %v8815, %v9003
    %v9005 = vpop.f32.mrf.mxu0
    %v9006 = vadd.f32 %v8817, %v9005
    %9007 = vmatmul.bf16.gmra.mxu0 %v5168
    %v9008 = vpop.f32.mrf.mxu0
    %v9009 = vadd.f32 %v8820, %v9008
    %v9010 = vpop.f32.mrf.mxu0
    %v9011 = vadd.f32 %v8822, %v9010
    %9012 = vmatmul.bf16.gmra.mxu0 %v5173
    %v9013 = vpop.f32.mrf.mxu0
    %v9014 = vadd.f32 %v8825, %v9013
    %v9015 = vpop.f32.mrf.mxu0
    %v9016 = vadd.f32 %v8827, %v9015
    %9017 = vmatmul.bf16.gmra.mxu0 %v5178
    %v9018 = vpop.f32.mrf.mxu0
    %v9019 = vadd.f32 %v8830, %v9018
    %v9020 = vpop.f32.mrf.mxu0
    %v9021 = vadd.f32 %v8832, %v9020
    %9022 = vmatmul.bf16.gmra.mxu0 %v5183
    %v9023 = vpop.f32.mrf.mxu0
    %v9024 = vadd.f32 %v8835, %v9023
    %v9025 = vpop.f32.mrf.mxu0
    %v9026 = vadd.f32 %v8837, %v9025
    %9027 = vmatmul.bf16.gmra.mxu0 %v5188
    %v9028 = vpop.f32.mrf.mxu0
    %v9029 = vadd.f32 %v8840, %v9028
    %v9030 = vpop.f32.mrf.mxu0
    %v9031 = vadd.f32 %v8842, %v9030
    %9032 = vmatmul.bf16.gmra.mxu0 %v5193
    %v9033 = vpop.f32.mrf.mxu0
    %v9034 = vadd.f32 %v8845, %v9033
    %v9035 = vpop.f32.mrf.mxu0
    %v9036 = vadd.f32 %v8847, %v9035
    %9037 = vdwg.mxu0
    %9038 = vmatpush.bf16.msra.mxu0 0
    %9039 = vmatpush.bf16.msra.mxu0 0
    %9040 = vmatpush.bf16.msra.mxu0 0
    %9041 = vmatpush.bf16.msra.mxu0 0
    %9042 = vmatpush.bf16.msra.mxu0 %v2367
    %9043 = vmatpush.bf16.msra.mxu0 %v2365
    %9044 = vmatpush.bf16.msra.mxu0 %v2363
    %9045 = vmatpush.bf16.msra.mxu0 %v2361
    %9046 = vmatmul.bf16.gmra.mxu0 %v5340
    %v9047 = vpop.f32.mrf.mxu0
    %v9048 = vadd.f32 %v8859, %v9047
    %v9049 = vpop.f32.mrf.mxu0
    %v9050 = vadd.f32 %v8861, %v9049
    %9051 = vmatmul.bf16.gmra.mxu0 %v5343
    %v9052 = vpop.f32.mrf.mxu0
    %v9053 = vadd.f32 %v8864, %v9052
    %v9054 = vpop.f32.mrf.mxu0
    %v9055 = vadd.f32 %v8866, %v9054
    %9056 = vmatmul.bf16.gmra.mxu0 %v5346
    %v9057 = vpop.f32.mrf.mxu0
    %v9058 = vadd.f32 %v8869, %v9057
    %v9059 = vpop.f32.mrf.mxu0
    %v9060 = vadd.f32 %v8871, %v9059
    %9061 = vmatmul.bf16.gmra.mxu0 %v5349
    %v9062 = vpop.f32.mrf.mxu0
    %v9063 = vadd.f32 %v8874, %v9062
    %v9064 = vpop.f32.mrf.mxu0
    %v9065 = vadd.f32 %v8876, %v9064
    %9066 = vmatmul.bf16.gmra.mxu0 %v5352
    %v9067 = vpop.f32.mrf.mxu0
    %v9068 = vadd.f32 %v8879, %v9067
    %v9069 = vpop.f32.mrf.mxu0
    %v9070 = vadd.f32 %v8881, %v9069
    %9071 = vmatmul.bf16.gmra.mxu0 %v5355
    %v9072 = vpop.f32.mrf.mxu0
    %v9073 = vadd.f32 %v8884, %v9072
    %v9074 = vpop.f32.mrf.mxu0
    %v9075 = vadd.f32 %v8886, %v9074
    %9076 = vmatmul.bf16.gmra.mxu0 %v5358
    %v9077 = vpop.f32.mrf.mxu0
    %v9078 = vadd.f32 %v8889, %v9077
    %v9079 = vpop.f32.mrf.mxu0
    %v9080 = vadd.f32 %v8891, %v9079
    %9081 = vmatmul.bf16.gmra.mxu0 %v5361
    %v9082 = vpop.f32.mrf.mxu0
    %v9083 = vadd.f32 %v8894, %v9082
    %v9084 = vpop.f32.mrf.mxu0
    %v9085 = vadd.f32 %v8896, %v9084
    %9086 = vmatmul.bf16.gmra.mxu0 %v5364
    %v9087 = vpop.f32.mrf.mxu0
    %v9088 = vadd.f32 %v8899, %v9087
    %v9089 = vpop.f32.mrf.mxu0
    %v9090 = vadd.f32 %v8901, %v9089
    %9091 = vmatmul.bf16.gmra.mxu0 %v5367
    %v9092 = vpop.f32.mrf.mxu0
    %v9093 = vadd.f32 %v8904, %v9092
    %v9094 = vpop.f32.mrf.mxu0
    %v9095 = vadd.f32 %v8906, %v9094
    %9096 = vmatmul.bf16.gmra.mxu0 %v5370
    %v9097 = vpop.f32.mrf.mxu0
    %v9098 = vadd.f32 %v8909, %v9097
    %v9099 = vpop.f32.mrf.mxu0
    %v9100 = vadd.f32 %v8911, %v9099
    %9101 = vmatmul.bf16.gmra.mxu0 %v5373
    %v9102 = vpop.f32.mrf.mxu0
    %v9103 = vadd.f32 %v8914, %v9102
    %v9104 = vpop.f32.mrf.mxu0
    %v9105 = vadd.f32 %v8916, %v9104
    %9106 = vmatmul.bf16.gmra.mxu0 %v5376
    %v9107 = vpop.f32.mrf.mxu0
    %v9108 = vadd.f32 %v8919, %v9107
    %v9109 = vpop.f32.mrf.mxu0
    %v9110 = vadd.f32 %v8921, %v9109
    %9111 = vmatmul.bf16.gmra.mxu0 %v5379
    %v9112 = vpop.f32.mrf.mxu0
    %v9113 = vadd.f32 %v8924, %v9112
    %v9114 = vpop.f32.mrf.mxu0
    %v9115 = vadd.f32 %v8926, %v9114
    %9116 = vmatmul.bf16.gmra.mxu0 %v5382
    %v9117 = vpop.f32.mrf.mxu0
    %v9118 = vadd.f32 %v8929, %v9117
    %v9119 = vpop.f32.mrf.mxu0
    %v9120 = vadd.f32 %v8931, %v9119
    %9121 = vmatmul.bf16.gmra.mxu0 %v5385
    %v9122 = vpop.f32.mrf.mxu0
    %v9123 = vadd.f32 %v8934, %v9122
    %v9124 = vpop.f32.mrf.mxu0
    %v9125 = vadd.f32 %v8936, %v9124
    %9126 = vmatmul.bf16.gmra.mxu0 %v5388
    %v9127 = vpop.f32.mrf.mxu0
    %v9128 = vadd.f32 %v8939, %v9127
    %v9129 = vpop.f32.mrf.mxu0
    %v9130 = vadd.f32 %v8941, %v9129
    %9131 = vmatmul.bf16.gmra.mxu0 %v5391
    %v9132 = vpop.f32.mrf.mxu0
    %v9133 = vadd.f32 %v8944, %v9132
    %v9134 = vpop.f32.mrf.mxu0
    %v9135 = vadd.f32 %v8946, %v9134
    %9136 = vmatmul.bf16.gmra.mxu0 %v5394
    %v9137 = vpop.f32.mrf.mxu0
    %v9138 = vadd.f32 %v8949, %v9137
    %v9139 = vpop.f32.mrf.mxu0
    %v9140 = vadd.f32 %v8951, %v9139
    %9141 = vmatmul.bf16.gmra.mxu0 %v5397
    %v9142 = vpop.f32.mrf.mxu0
    %v9143 = vadd.f32 %v8954, %v9142
    %v9144 = vpop.f32.mrf.mxu0
    %v9145 = vadd.f32 %v8956, %v9144
    %9146 = vmatmul.bf16.gmra.mxu0 %v5400
    %v9147 = vpop.f32.mrf.mxu0
    %v9148 = vadd.f32 %v8959, %v9147
    %v9149 = vpop.f32.mrf.mxu0
    %v9150 = vadd.f32 %v8961, %v9149
    %9151 = vmatmul.bf16.gmra.mxu0 %v5403
    %v9152 = vpop.f32.mrf.mxu0
    %v9153 = vadd.f32 %v8964, %v9152
    %v9154 = vpop.f32.mrf.mxu0
    %v9155 = vadd.f32 %v8966, %v9154
    %9156 = vmatmul.bf16.gmra.mxu0 %v5406
    %v9157 = vpop.f32.mrf.mxu0
    %v9158 = vadd.f32 %v8969, %v9157
    %v9159 = vpop.f32.mrf.mxu0
    %v9160 = vadd.f32 %v8971, %v9159
    %9161 = vmatmul.bf16.gmra.mxu0 %v5409
    %v9162 = vpop.f32.mrf.mxu0
    %v9163 = vadd.f32 %v8974, %v9162
    %v9164 = vpop.f32.mrf.mxu0
    %v9165 = vadd.f32 %v8976, %v9164
    %9166 = vmatmul.bf16.gmra.mxu0 %v5412
    %v9167 = vpop.f32.mrf.mxu0
    %v9168 = vadd.f32 %v8979, %v9167
    %v9169 = vpop.f32.mrf.mxu0
    %v9170 = vadd.f32 %v8981, %v9169
    %9171 = vmatmul.bf16.gmra.mxu0 %v5415
    %v9172 = vpop.f32.mrf.mxu0
    %v9173 = vadd.f32 %v8984, %v9172
    %v9174 = vpop.f32.mrf.mxu0
    %v9175 = vadd.f32 %v8986, %v9174
    %9176 = vmatmul.bf16.gmra.mxu0 %v5418
    %v9177 = vpop.f32.mrf.mxu0
    %v9178 = vadd.f32 %v8989, %v9177
    %v9179 = vpop.f32.mrf.mxu0
    %v9180 = vadd.f32 %v8991, %v9179
    %9181 = vmatmul.bf16.gmra.mxu0 %v5421
    %v9182 = vpop.f32.mrf.mxu0
    %v9183 = vadd.f32 %v8994, %v9182
    %v9184 = vpop.f32.mrf.mxu0
    %v9185 = vadd.f32 %v8996, %v9184
    %9186 = vmatmul.bf16.gmra.mxu0 %v5424
    %v9187 = vpop.f32.mrf.mxu0
    %v9188 = vadd.f32 %v8999, %v9187
    %v9189 = vpop.f32.mrf.mxu0
    %v9190 = vadd.f32 %v9001, %v9189
    %9191 = vmatmul.bf16.gmra.mxu0 %v5427
    %v9192 = vpop.f32.mrf.mxu0
    %v9193 = vadd.f32 %v9004, %v9192
    %v9194 = vpop.f32.mrf.mxu0
    %v9195 = vadd.f32 %v9006, %v9194
    %9196 = vmatmul.bf16.gmra.mxu0 %v5430
    %v9197 = vpop.f32.mrf.mxu0
    %v9198 = vadd.f32 %v9009, %v9197
    %v9199 = vpop.f32.mrf.mxu0
    %v9200 = vadd.f32 %v9011, %v9199
    %9201 = vmatmul.bf16.gmra.mxu0 %v5433
    %v9202 = vpop.f32.mrf.mxu0
    %v9203 = vadd.f32 %v9014, %v9202
    %v9204 = vpop.f32.mrf.mxu0
    %v9205 = vadd.f32 %v9016, %v9204
    %9206 = vmatmul.bf16.gmra.mxu0 %v5436
    %v9207 = vpop.f32.mrf.mxu0
    %v9208 = vadd.f32 %v9019, %v9207
    %v9209 = vpop.f32.mrf.mxu0
    %v9210 = vadd.f32 %v9021, %v9209
    %9211 = vmatmul.bf16.gmra.mxu0 %v5439
    %v9212 = vpop.f32.mrf.mxu0
    %v9213 = vadd.f32 %v9024, %v9212
    %v9214 = vpop.f32.mrf.mxu0
    %v9215 = vadd.f32 %v9026, %v9214
    %9216 = vmatmul.bf16.gmra.mxu0 %v5442
    %v9217 = vpop.f32.mrf.mxu0
    %v9218 = vadd.f32 %v9029, %v9217
    %v9219 = vpop.f32.mrf.mxu0
    %v9220 = vadd.f32 %v9031, %v9219
    %9221 = vmatmul.bf16.gmra.mxu0 %v5445
    %v9222 = vpop.f32.mrf.mxu0
    %v9223 = vadd.f32 %v9034, %v9222
    %v9224 = vpop.f32.mrf.mxu0
    %v9225 = vadd.f32 %v9036, %v9224
    %9226 = vdwg.mxu0
    %v9227 = vadd.f32 %v6213, %v8103
    %v9228 = vadd.f32 %v7158, %v9048
    %v9229 = vadd.f32 %v6215, %v8105
    %v9230 = vadd.f32 %v7160, %v9050
    %v9231 = vadd.f32 %v6218, %v8108
    %v9232 = vadd.f32 %v7163, %v9053
    %v9233 = vadd.f32 %v6220, %v8110
    %v9234 = vadd.f32 %v7165, %v9055
    %v9235 = vadd.f32 %v6223, %v8113
    %v9236 = vadd.f32 %v7168, %v9058
    %v9237 = vadd.f32 %v6225, %v8115
    %v9238 = vadd.f32 %v7170, %v9060
    %v9239 = vadd.f32 %v6228, %v8118
    %v9240 = vadd.f32 %v7173, %v9063
    %v9241 = vadd.f32 %v6230, %v8120
    %v9242 = vadd.f32 %v7175, %v9065
    %v9243 = vadd.f32 %v6233, %v8123
    %v9244 = vadd.f32 %v7178, %v9068
    %v9245 = vadd.f32 %v6235, %v8125
    %v9246 = vadd.f32 %v7180, %v9070
    %v9247 = vadd.f32 %v6238, %v8128
    %v9248 = vadd.f32 %v7183, %v9073
    %v9249 = vadd.f32 %v6240, %v8130
    %v9250 = vadd.f32 %v7185, %v9075
    %v9251 = vadd.f32 %v6243, %v8133
    %v9252 = vadd.f32 %v7188, %v9078
    %v9253 = vadd.f32 %v6245, %v8135
    %v9254 = vadd.f32 %v7190, %v9080
    %v9255 = vadd.f32 %v6248, %v8138
    %v9256 = vadd.f32 %v7193, %v9083
    %v9257 = vadd.f32 %v6250, %v8140
    %v9258 = vadd.f32 %v7195, %v9085
    %v9259 = vadd.f32 %v6253, %v8143
    %v9260 = vadd.f32 %v7198, %v9088
    %v9261 = vadd.f32 %v6255, %v8145
    %v9262 = vadd.f32 %v7200, %v9090
    %v9263 = vadd.f32 %v6258, %v8148
    %v9264 = vadd.f32 %v7203, %v9093
    %v9265 = vadd.f32 %v6260, %v8150
    %v9266 = vadd.f32 %v7205, %v9095
    %v9267 = vadd.f32 %v6263, %v8153
    %v9268 = vadd.f32 %v7208, %v9098
    %v9269 = vadd.f32 %v6265, %v8155
    %v9270 = vadd.f32 %v7210, %v9100
    %v9271 = vadd.f32 %v6268, %v8158
    %v9272 = vadd.f32 %v7213, %v9103
    %v9273 = vadd.f32 %v6270, %v8160
    %v9274 = vadd.f32 %v7215, %v9105
    %v9275 = vadd.f32 %v6273, %v8163
    %v9276 = vadd.f32 %v7218, %v9108
    %v9277 = vadd.f32 %v6275, %v8165
    %v9278 = vadd.f32 %v7220, %v9110
    %v9279 = vadd.f32 %v6278, %v8168
    %v9280 = vadd.f32 %v7223, %v9113
    %v9281 = vadd.f32 %v6280, %v8170
    %v9282 = vadd.f32 %v7225, %v9115
    %v9283 = vadd.f32 %v6283, %v8173
    %v9284 = vadd.f32 %v7228, %v9118
    %v9285 = vadd.f32 %v6285, %v8175
    %v9286 = vadd.f32 %v7230, %v9120
    %v9287 = vadd.f32 %v6288, %v8178
    %v9288 = vadd.f32 %v7233, %v9123
    %v9289 = vadd.f32 %v6290, %v8180
    %v9290 = vadd.f32 %v7235, %v9125
    %v9291 = vadd.f32 %v6293, %v8183
    %v9292 = vadd.f32 %v7238, %v9128
    %v9293 = vadd.f32 %v6295, %v8185
    %v9294 = vadd.f32 %v7240, %v9130
    %v9295 = vadd.f32 %v6298, %v8188
    %v9296 = vadd.f32 %v7243, %v9133
    %v9297 = vadd.f32 %v6300, %v8190
    %v9298 = vadd.f32 %v7245, %v9135
    %v9299 = vadd.f32 %v6303, %v8193
    %v9300 = vadd.f32 %v7248, %v9138
    %v9301 = vadd.f32 %v6305, %v8195
    %v9302 = vadd.f32 %v7250, %v9140
    %v9303 = vadd.f32 %v6308, %v8198
    %v9304 = vadd.f32 %v7253, %v9143
    %v9305 = vadd.f32 %v6310, %v8200
    %v9306 = vadd.f32 %v7255, %v9145
    %v9307 = vadd.f32 %v6313, %v8203
    %v9308 = vadd.f32 %v7258, %v9148
    %v9309 = vadd.f32 %v6315, %v8205
    %v9310 = vadd.f32 %v7260, %v9150
    %v9311 = vadd.f32 %v6318, %v8208
    %v9312 = vadd.f32 %v7263, %v9153
    %v9313 = vadd.f32 %v6320, %v8210
    %v9314 = vadd.f32 %v7265, %v9155
    %v9315 = vadd.f32 %v6323, %v8213
    %v9316 = vadd.f32 %v7268, %v9158
    %v9317 = vadd.f32 %v6325, %v8215
    %v9318 = vadd.f32 %v7270, %v9160
    %v9319 = vadd.f32 %v6328, %v8218
    %v9320 = vadd.f32 %v7273, %v9163
    %v9321 = vadd.f32 %v6330, %v8220
    %v9322 = vadd.f32 %v7275, %v9165
    %v9323 = vadd.f32 %v6333, %v8223
    %v9324 = vadd.f32 %v7278, %v9168
    %v9325 = vadd.f32 %v6335, %v8225
    %v9326 = vadd.f32 %v7280, %v9170
    %v9327 = vadd.f32 %v6338, %v8228
    %v9328 = vadd.f32 %v7283, %v9173
    %v9329 = vadd.f32 %v6340, %v8230
    %v9330 = vadd.f32 %v7285, %v9175
    %v9331 = vadd.f32 %v6343, %v8233
    %v9332 = vadd.f32 %v7288, %v9178
    %v9333 = vadd.f32 %v6345, %v8235
    %v9334 = vadd.f32 %v7290, %v9180
    %v9335 = vadd.f32 %v6348, %v8238
    %v9336 = vadd.f32 %v7293, %v9183
    %v9337 = vadd.f32 %v6350, %v8240
    %v9338 = vadd.f32 %v7295, %v9185
    %v9339 = vadd.f32 %v6353, %v8243
    %v9340 = vadd.f32 %v7298, %v9188
    %v9341 = vadd.f32 %v6355, %v8245
    %v9342 = vadd.f32 %v7300, %v9190
    %v9343 = vadd.f32 %v6358, %v8248
    %v9344 = vadd.f32 %v7303, %v9193
    %v9345 = vadd.f32 %v6360, %v8250
    %v9346 = vadd.f32 %v7305, %v9195
    %v9347 = vadd.f32 %v6363, %v8253
    %v9348 = vadd.f32 %v7308, %v9198
    %v9349 = vadd.f32 %v6365, %v8255
    %v9350 = vadd.f32 %v7310, %v9200
    %v9351 = vadd.f32 %v6368, %v8258
    %v9352 = vadd.f32 %v7313, %v9203
    %v9353 = vadd.f32 %v6370, %v8260
    %v9354 = vadd.f32 %v7315, %v9205
    %v9355 = vadd.f32 %v6373, %v8263
    %v9356 = vadd.f32 %v7318, %v9208
    %v9357 = vadd.f32 %v6375, %v8265
    %v9358 = vadd.f32 %v7320, %v9210
    %v9359 = vadd.f32 %v6378, %v8268
    %v9360 = vadd.f32 %v7323, %v9213
    %v9361 = vadd.f32 %v6380, %v8270
    %v9362 = vadd.f32 %v7325, %v9215
    %v9363 = vadd.f32 %v6383, %v8273
    %v9364 = vadd.f32 %v7328, %v9218
    %v9365 = vadd.f32 %v6385, %v8275
    %v9366 = vadd.f32 %v7330, %v9220
    %v9367 = vadd.f32 %v6388, %v8278
    %v9368 = vadd.f32 %v7333, %v9223
    %v9369 = vadd.f32 %v6390, %v8280
    %v9370 = vadd.f32 %v7335, %v9225
    %9371 = vst [vmem:[%s2] sm:$0xff] %v9227
    %vm9372 = vcmask 556032
    %9373 = vst.msk [vmem:[%s2 + $0x8] sm:$0xff] %vm9372, %v9228
    %9374 = vst [vmem:[%s2 + $0x10] sm:$0xff] %v9229
    %9375 = vst.msk [vmem:[%s2 + $0x18] sm:$0xff] %vm9372, %v9230
    %9376 = vst [vmem:[%s2 + $0x20] sm:$0xff] %v9231
    %9377 = vst.msk [vmem:[%s2 + $0x28] sm:$0xff] %vm9372, %v9232
    %9378 = vst [vmem:[%s2 + $0x30] sm:$0xff] %v9233
    %9379 = vst.msk [vmem:[%s2 + $0x38] sm:$0xff] %vm9372, %v9234
    %9380 = vst [vmem:[%s2 + $0x40] sm:$0xff] %v9235
    %9381 = vst.msk [vmem:[%s2 + $0x48] sm:$0xff] %vm9372, %v9236
    %9382 = vst [vmem:[%s2 + $0x50] sm:$0xff] %v9237
    %9383 = vst.msk [vmem:[%s2 + $0x58] sm:$0xff] %vm9372, %v9238
    %9384 = vst [vmem:[%s2 + $0x60] sm:$0xff] %v9239
    %9385 = vst.msk [vmem:[%s2 + $0x68] sm:$0xff] %vm9372, %v9240
    %9386 = vst [vmem:[%s2 + $0x70] sm:$0xff] %v9241
    %9387 = vst.msk [vmem:[%s2 + $0x78] sm:$0xff] %vm9372, %v9242
    %9388 = vst [vmem:[%s2 + $0x80] sm:$0xff] %v9243
    %9389 = vst.msk [vmem:[%s2 + $0x88] sm:$0xff] %vm9372, %v9244
    %9390 = vst [vmem:[%s2 + $0x90] sm:$0xff] %v9245
    %9391 = vst.msk [vmem:[%s2 + $0x98] sm:$0xff] %vm9372, %v9246
    %9392 = vst [vmem:[%s2 + $0xa0] sm:$0xff] %v9247
    %9393 = vst.msk [vmem:[%s2 + $0xa8] sm:$0xff] %vm9372, %v9248
    %9394 = vst [vmem:[%s2 + $0xb0] sm:$0xff] %v9249
    %9395 = vst.msk [vmem:[%s2 + $0xb8] sm:$0xff] %vm9372, %v9250
    %9396 = vst [vmem:[%s2 + $0xc0] sm:$0xff] %v9251
    %9397 = vst.msk [vmem:[%s2 + $0xc8] sm:$0xff] %vm9372, %v9252
    %9398 = vst [vmem:[%s2 + $0xd0] sm:$0xff] %v9253
    %9399 = vst.msk [vmem:[%s2 + $0xd8] sm:$0xff] %vm9372, %v9254
    %9400 = vst [vmem:[%s2 + $0xe0] sm:$0xff] %v9255
    %9401 = vst.msk [vmem:[%s2 + $0xe8] sm:$0xff] %vm9372, %v9256
    %9402 = vst [vmem:[%s2 + $0xf0] sm:$0xff] %v9257
    %9403 = vst.msk [vmem:[%s2 + $0xf8] sm:$0xff] %vm9372, %v9258
    %9404 = vst [vmem:[%s2 + $0x100] sm:$0xff] %v9259
    %9405 = vst.msk [vmem:[%s2 + $0x108] sm:$0xff] %vm9372, %v9260
    %9406 = vst [vmem:[%s2 + $0x110] sm:$0xff] %v9261
    %9407 = vst.msk [vmem:[%s2 + $0x118] sm:$0xff] %vm9372, %v9262
    %9408 = vst [vmem:[%s2 + $0x120] sm:$0xff] %v9263
    %9409 = vst.msk [vmem:[%s2 + $0x128] sm:$0xff] %vm9372, %v9264
    %9410 = vst [vmem:[%s2 + $0x130] sm:$0xff] %v9265
    %9411 = vst.msk [vmem:[%s2 + $0x138] sm:$0xff] %vm9372, %v9266
    %9412 = vst [vmem:[%s2 + $0x140] sm:$0xff] %v9267
    %9413 = vst.msk [vmem:[%s2 + $0x148] sm:$0xff] %vm9372, %v9268
    %9414 = vst [vmem:[%s2 + $0x150] sm:$0xff] %v9269
    %9415 = vst.msk [vmem:[%s2 + $0x158] sm:$0xff] %vm9372, %v9270
    %9416 = vst [vmem:[%s2 + $0x160] sm:$0xff] %v9271
    %9417 = vst.msk [vmem:[%s2 + $0x168] sm:$0xff] %vm9372, %v9272
    %9418 = vst [vmem:[%s2 + $0x170] sm:$0xff] %v9273
    %9419 = vst.msk [vmem:[%s2 + $0x178] sm:$0xff] %vm9372, %v9274
    %9420 = vst [vmem:[%s2 + $0x180] sm:$0xff] %v9275
    %9421 = vst.msk [vmem:[%s2 + $0x188] sm:$0xff] %vm9372, %v9276
    %9422 = vst [vmem:[%s2 + $0x190] sm:$0xff] %v9277
    %9423 = vst.msk [vmem:[%s2 + $0x198] sm:$0xff] %vm9372, %v9278
    %9424 = vst [vmem:[%s2 + $0x1a0] sm:$0xff] %v9279
    %9425 = vst.msk [vmem:[%s2 + $0x1a8] sm:$0xff] %vm9372, %v9280
    %9426 = vst [vmem:[%s2 + $0x1b0] sm:$0xff] %v9281
    %9427 = vst.msk [vmem:[%s2 + $0x1b8] sm:$0xff] %vm9372, %v9282
    %9428 = vst [vmem:[%s2 + $0x1c0] sm:$0xff] %v9283
    %9429 = vst.msk [vmem:[%s2 + $0x1c8] sm:$0xff] %vm9372, %v9284
    %9430 = vst [vmem:[%s2 + $0x1d0] sm:$0xff] %v9285
    %9431 = vst.msk [vmem:[%s2 + $0x1d8] sm:$0xff] %vm9372, %v9286
    %9432 = vst [vmem:[%s2 + $0x1e0] sm:$0xff] %v9287
    %9433 = vst.msk [vmem:[%s2 + $0x1e8] sm:$0xff] %vm9372, %v9288
    %9434 = vst [vmem:[%s2 + $0x1f0] sm:$0xff] %v9289
    %9435 = vst.msk [vmem:[%s2 + $0x1f8] sm:$0xff] %vm9372, %v9290
    %9436 = vst [vmem:[%s2 + $0x200] sm:$0xff] %v9291
    %9437 = vst.msk [vmem:[%s2 + $0x208] sm:$0xff] %vm9372, %v9292
    %9438 = vst [vmem:[%s2 + $0x210] sm:$0xff] %v9293
    %9439 = vst.msk [vmem:[%s2 + $0x218] sm:$0xff] %vm9372, %v9294
    %9440 = vst [vmem:[%s2 + $0x220] sm:$0xff] %v9295
    %9441 = vst.msk [vmem:[%s2 + $0x228] sm:$0xff] %vm9372, %v9296
    %9442 = vst [vmem:[%s2 + $0x230] sm:$0xff] %v9297
    %9443 = vst.msk [vmem:[%s2 + $0x238] sm:$0xff] %vm9372, %v9298
    %9444 = vst [vmem:[%s2 + $0x240] sm:$0xff] %v9299
    %9445 = vst.msk [vmem:[%s2 + $0x248] sm:$0xff] %vm9372, %v9300
    %9446 = vst [vmem:[%s2 + $0x250] sm:$0xff] %v9301
    %9447 = vst.msk [vmem:[%s2 + $0x258] sm:$0xff] %vm9372, %v9302
    %9448 = vst [vmem:[%s2 + $0x260] sm:$0xff] %v9303
    %9449 = vst.msk [vmem:[%s2 + $0x268] sm:$0xff] %vm9372, %v9304
    %9450 = vst [vmem:[%s2 + $0x270] sm:$0xff] %v9305
    %9451 = vst.msk [vmem:[%s2 + $0x278] sm:$0xff] %vm9372, %v9306
    %9452 = vst [vmem:[%s2 + $0x280] sm:$0xff] %v9307
    %9453 = vst.msk [vmem:[%s2 + $0x288] sm:$0xff] %vm9372, %v9308
    %9454 = vst [vmem:[%s2 + $0x290] sm:$0xff] %v9309
    %9455 = vst.msk [vmem:[%s2 + $0x298] sm:$0xff] %vm9372, %v9310
    %9456 = vst [vmem:[%s2 + $0x2a0] sm:$0xff] %v9311
    %9457 = vst.msk [vmem:[%s2 + $0x2a8] sm:$0xff] %vm9372, %v9312
    %9458 = vst [vmem:[%s2 + $0x2b0] sm:$0xff] %v9313
    %9459 = vst.msk [vmem:[%s2 + $0x2b8] sm:$0xff] %vm9372, %v9314
    %9460 = vst [vmem:[%s2 + $0x2c0] sm:$0xff] %v9315
    %9461 = vst.msk [vmem:[%s2 + $0x2c8] sm:$0xff] %vm9372, %v9316
    %9462 = vst [vmem:[%s2 + $0x2d0] sm:$0xff] %v9317
    %9463 = vst.msk [vmem:[%s2 + $0x2d8] sm:$0xff] %vm9372, %v9318
    %9464 = vst [vmem:[%s2 + $0x2e0] sm:$0xff] %v9319
    %9465 = vst.msk [vmem:[%s2 + $0x2e8] sm:$0xff] %vm9372, %v9320
    %9466 = vst [vmem:[%s2 + $0x2f0] sm:$0xff] %v9321
    %9467 = vst.msk [vmem:[%s2 + $0x2f8] sm:$0xff] %vm9372, %v9322
    %9468 = vst [vmem:[%s2 + $0x300] sm:$0xff] %v9323
    %9469 = vst.msk [vmem:[%s2 + $0x308] sm:$0xff] %vm9372, %v9324
    %9470 = vst [vmem:[%s2 + $0x310] sm:$0xff] %v9325
    %9471 = vst.msk [vmem:[%s2 + $0x318] sm:$0xff] %vm9372, %v9326
    %9472 = vst [vmem:[%s2 + $0x320] sm:$0xff] %v9327
    %9473 = vst.msk [vmem:[%s2 + $0x328] sm:$0xff] %vm9372, %v9328
    %9474 = vst [vmem:[%s2 + $0x330] sm:$0xff] %v9329
    %9475 = vst.msk [vmem:[%s2 + $0x338] sm:$0xff] %vm9372, %v9330
    %9476 = vst [vmem:[%s2 + $0x340] sm:$0xff] %v9331
    %9477 = vst.msk [vmem:[%s2 + $0x348] sm:$0xff] %vm9372, %v9332
    %9478 = vst [vmem:[%s2 + $0x350] sm:$0xff] %v9333
    %9479 = vst.msk [vmem:[%s2 + $0x358] sm:$0xff] %vm9372, %v9334
    %9480 = vst [vmem:[%s2 + $0x360] sm:$0xff] %v9335
    %9481 = vst.msk [vmem:[%s2 + $0x368] sm:$0xff] %vm9372, %v9336
    %9482 = vst [vmem:[%s2 + $0x370] sm:$0xff] %v9337
    %9483 = vst.msk [vmem:[%s2 + $0x378] sm:$0xff] %vm9372, %v9338
    %9484 = vst [vmem:[%s2 + $0x380] sm:$0xff] %v9339
    %9485 = vst.msk [vmem:[%s2 + $0x388] sm:$0xff] %vm9372, %v9340
    %9486 = vst [vmem:[%s2 + $0x390] sm:$0xff] %v9341
    %9487 = vst.msk [vmem:[%s2 + $0x398] sm:$0xff] %vm9372, %v9342
    %9488 = vst [vmem:[%s2 + $0x3a0] sm:$0xff] %v9343
    %9489 = vst.msk [vmem:[%s2 + $0x3a8] sm:$0xff] %vm9372, %v9344
    %9490 = vst [vmem:[%s2 + $0x3b0] sm:$0xff] %v9345
    %9491 = vst.msk [vmem:[%s2 + $0x3b8] sm:$0xff] %vm9372, %v9346
    %9492 = vst [vmem:[%s2 + $0x3c0] sm:$0xff] %v9347
    %9493 = vst.msk [vmem:[%s2 + $0x3c8] sm:$0xff] %vm9372, %v9348
    %9494 = vst [vmem:[%s2 + $0x3d0] sm:$0xff] %v9349
    %9495 = vst.msk [vmem:[%s2 + $0x3d8] sm:$0xff] %vm9372, %v9350
    %9496 = vst [vmem:[%s2 + $0x3e0] sm:$0xff] %v9351
    %9497 = vst.msk [vmem:[%s2 + $0x3e8] sm:$0xff] %vm9372, %v9352
    %9498 = vst [vmem:[%s2 + $0x3f0] sm:$0xff] %v9353
    %9499 = vst.msk [vmem:[%s2 + $0x3f8] sm:$0xff] %vm9372, %v9354
    %9500 = vst [vmem:[%s2 + $0x400] sm:$0xff] %v9355
    %9501 = vst.msk [vmem:[%s2 + $0x408] sm:$0xff] %vm9372, %v9356
    %9502 = vst [vmem:[%s2 + $0x410] sm:$0xff] %v9357
    %9503 = vst.msk [vmem:[%s2 + $0x418] sm:$0xff] %vm9372, %v9358
    %9504 = vst [vmem:[%s2 + $0x420] sm:$0xff] %v9359
    %9505 = vst.msk [vmem:[%s2 + $0x428] sm:$0xff] %vm9372, %v9360
    %9506 = vst [vmem:[%s2 + $0x430] sm:$0xff] %v9361
    %9507 = vst.msk [vmem:[%s2 + $0x438] sm:$0xff] %vm9372, %v9362
    %9508 = vst [vmem:[%s2 + $0x440] sm:$0xff] %v9363
    %9509 = vst.msk [vmem:[%s2 + $0x448] sm:$0xff] %vm9372, %v9364
    %9510 = vst [vmem:[%s2 + $0x450] sm:$0xff] %v9365
    %9511 = vst.msk [vmem:[%s2 + $0x458] sm:$0xff] %vm9372, %v9366
    %9512 = vst [vmem:[%s2 + $0x460] sm:$0xff] %v9367
    %9513 = vst.msk [vmem:[%s2 + $0x468] sm:$0xff] %vm9372, %v9368
    %9514 = vst [vmem:[%s2 + $0x470] sm:$0xff] %v9369
    %9515 = vst.msk [vmem:[%s2 + $0x478] sm:$0xff] %vm9372, %v9370
    // Predicated region
    $region14: #{tpu_custom_call.1} parent=1 // pred_check
      _
    $region15: #{tpu_custom_call.1} parent=1 // pred_check_branch
      %9517 = sbr.rel (0) target = $region17
    $region16: #{tpu_custom_call.1} parent=1 // pred_region
      _
    $region17: #{tpu_custom_call.1} parent=1 // pred_fallthru
      _
    // Predicated region
    $region18: #{tpu_custom_call.1} parent=1 // pred_check
      _
    $region19: #{tpu_custom_call.1} parent=1 // pred_check_branch
      %9519 = sbr.rel (0) target = $region21
    $region20: #{tpu_custom_call.1} parent=1 // pred_region
      _
    $region21: #{tpu_custom_call.1} parent=1 // pred_fallthru
      _
    %9520 = vsyncpa [#allocation3], 1

</llo_original>
